<compile_context>
chip_gen: v6e
topology: v6e:2x2x1
jax: 0.10.0
libtpu: 0.0.40
codegen_flags: <defaults>
</compile_context>

<pallas_src>
import functools
import math

import jax
import jax.numpy as jnp
from jax import lax
from jax.experimental import pallas as pl
from jax.experimental.pallas import tpu as pltpu

# bf16 matmul operands / inter-kernel activations (halves HBM traffic, feeds MXU at
# full rate on v6e/v7x; v5e MXU also takes bf16). Accumulation is always f32.
MATMUL_DTYPE = jnp.bfloat16
ACT_DTYPE = jnp.bfloat16


# ------------------------------ tiling helpers ------------------------------

def _pick_tile(dim, target, align):
    """Largest multiple of `align` that divides `dim` and is <= target.

    Falls back to the full dim when dim <= target or no aligned divisor exists
    (small dims then rely on the "block == full array dim" exemption)."""
    if dim <= target:
        return dim
    t = (target // align) * align
    while t >= align:
        if dim % t == 0:
            return t
        t -= align
    return dim


# ----------------------------- in-kernel math --------------------------------

def _ln(x, g, b, eps=1e-12):
    mu = jnp.mean(x, axis=-1, keepdims=True)
    var = jnp.mean(jnp.square(x - mu), axis=-1, keepdims=True)
    return (x - mu) * lax.rsqrt(var + eps) * g + b


def _gelu_exact(x):
    # exact erf GELU (matches HF BERT), goes through EUP/poly lowering on TPU
    return 0.5 * x * (1.0 + lax.erf(x * (1.0 / math.sqrt(2.0))))


# ----------------------------- Pallas kernels -------------------------------

def _linear_kernel(x_ref, w_ref, b_ref, o_ref):
    """y = x @ W + b for one (tm, tn) output tile; K is a single full block."""
    y = jnp.dot(x_ref[...], w_ref[...],
                preferred_element_type=jnp.float32) + b_ref[...]
    o_ref[...] = y.astype(o_ref.dtype)


def pallas_linear(x, w, b, out_dtype=ACT_DTYPE):
    """x: [M, K] bf16, w: [K, N] bf16, b: [N] f32 -> [M, N] out_dtype."""
    M, K = x.shape
    N = w.shape[1]
    tm = _pick_tile(M, 128, 8)
    tn = _pick_tile(N, 512, 128)
    grid = (M // tm, N // tn)
    return pl.pallas_call(
        _linear_kernel,
        out_shape=jax.ShapeDtypeStruct((M, N), out_dtype),
        grid=grid,
        in_specs=[
            pl.BlockSpec((tm, K), lambda i, j: (i, 0)),
            pl.BlockSpec((K, tn), lambda i, j: (0, j)),
            pl.BlockSpec((1, tn), lambda i, j: (0, j)),
        ],
        out_specs=pl.BlockSpec((tm, tn), lambda i, j: (i, j)),
        compiler_params=pltpu.CompilerParams(
            dimension_semantics=("parallel", "parallel")),
    )(x, w, b.reshape(1, N).astype(jnp.float32))


def _layernorm_kernel(x_ref, g_ref, b_ref, o_ref):
    o_ref[...] = _ln(x_ref[...].astype(jnp.float32),
                     g_ref[...], b_ref[...]).astype(o_ref.dtype)


def pallas_layernorm(x, gamma, beta, out_dtype=ACT_DTYPE):
    """Row-tiled LayerNorm over [M, H]; emits bf16 for the downstream matmul."""
    M, H = x.shape
    tm = _pick_tile(M, 128, 8)
    grid = (M // tm,)
    row_spec = pl.BlockSpec((tm, H), lambda i: (i, 0))
    vec_spec = pl.BlockSpec((1, H), lambda i: (0, 0))
    return pl.pallas_call(
        _layernorm_kernel,
        out_shape=jax.ShapeDtypeStruct((M, H), out_dtype),
        grid=grid,
        in_specs=[row_spec, vec_spec, vec_spec],
        out_specs=row_spec,
        compiler_params=pltpu.CompilerParams(dimension_semantics=("parallel",)),
    )(x, gamma.reshape(1, H), beta.reshape(1, H))


def _linear_add_ln_kernel(x_ref, w_ref, b_ref, r_ref, g_ref, be_ref, o_ref):
    """Fused: out = LN(x @ W + b + residual). N == H so the tile holds full rows."""
    y = jnp.dot(x_ref[...], w_ref[...],
                preferred_element_type=jnp.float32) + b_ref[...]
    z = y + r_ref[...].astype(jnp.float32)
    o_ref[...] = _ln(z, g_ref[...], be_ref[...]).astype(o_ref.dtype)


def pallas_linear_add_ln(x, w, b, residual, gamma, beta, out_dtype=ACT_DTYPE):
    M, K = x.shape
    N = w.shape[1]
    assert residual.shape == (M, N)
    tm = _pick_tile(M, 128, 8)
    grid = (M // tm,)
    return pl.pallas_call(
        _linear_add_ln_kernel,
        out_shape=jax.ShapeDtypeStruct((M, N), out_dtype),
        grid=grid,
        in_specs=[
            pl.BlockSpec((tm, K), lambda i: (i, 0)),
            pl.BlockSpec((K, N), lambda i: (0, 0)),
            pl.BlockSpec((1, N), lambda i: (0, 0)),
            pl.BlockSpec((tm, N), lambda i: (i, 0)),
            pl.BlockSpec((1, N), lambda i: (0, 0)),
            pl.BlockSpec((1, N), lambda i: (0, 0)),
        ],
        out_specs=pl.BlockSpec((tm, N), lambda i: (i, 0)),
        compiler_params=pltpu.CompilerParams(dimension_semantics=("parallel",)),
    )(x, w, b.reshape(1, N).astype(jnp.float32), residual,
      gamma.reshape(1, N), beta.reshape(1, N))


def _ffn_add_ln_kernel(x_ref, wi_ref, bi_ref, wo_ref, bo_ref, g_ref, be_ref, o_ref):
    """Fused FFN block: out = LN(gelu(x@Wi + bi) @ Wo2 + bo2 + x).

    The [tm, I] GELU intermediate lives only in VMEM/vregs (never hits HBM)."""
    x = x_ref[...]
    h = jnp.dot(x, wi_ref[...], preferred_element_type=jnp.float32) + bi_ref[...]
    h = _gelu_exact(h)
    y = jnp.dot(h.astype(wo_ref.dtype), wo_ref[...],
                preferred_element_type=jnp.float32) + bo_ref[...]
    z = y + x.astype(jnp.float32)
    o_ref[...] = _ln(z, g_ref[...], be_ref[...]).astype(o_ref.dtype)


def pallas_ffn_add_ln(x, wi, bi, wo2, bo2, gamma, beta, out_dtype=ACT_DTYPE):
    M, H = x.shape
    I = wi.shape[1]
    tm = _pick_tile(M, 128, 8)
    grid = (M // tm,)
    return pl.pallas_call(
        _ffn_add_ln_kernel,
        out_shape=jax.ShapeDtypeStruct((M, H), out_dtype),
        grid=grid,
        in_specs=[
            pl.BlockSpec((tm, H), lambda i: (i, 0)),
            pl.BlockSpec((H, I), lambda i: (0, 0)),
            pl.BlockSpec((1, I), lambda i: (0, 0)),
            pl.BlockSpec((I, H), lambda i: (0, 0)),
            pl.BlockSpec((1, H), lambda i: (0, 0)),
            pl.BlockSpec((1, H), lambda i: (0, 0)),
            pl.BlockSpec((1, H), lambda i: (0, 0)),
        ],
        out_specs=pl.BlockSpec((tm, H), lambda i: (i, 0)),
        compiler_params=pltpu.CompilerParams(dimension_semantics=("parallel",)),
    )(x, wi, bi.reshape(1, I).astype(jnp.float32),
      wo2, bo2.reshape(1, H).astype(jnp.float32),
      gamma.reshape(1, H), beta.reshape(1, H))


def _attn_kernel(qkv_ref, m_ref, o_ref, *, scale, nh, dh, H):
    """Masked multi-head self-attention for one batch element.

    qkv_ref is the fused lane-dense [S, 3H] projection; Q/K/V and the heads are
    static 128-aligned lane slices (dh == 128), so every load/store is unmasked.
    QK^T contracts the last dims via dot_general (no K transpose materialized)."""
    bias = m_ref[...]                                     # [1, S] f32 additive mask
    for h in range(nh):                                   # nh is small & static
        q = qkv_ref[:, h * dh:(h + 1) * dh]               # [S, dh] bf16
        k = qkv_ref[:, H + h * dh:H + (h + 1) * dh]
        v = qkv_ref[:, 2 * H + h * dh:2 * H + (h + 1) * dh]
        s = lax.dot_general(q, k, (((1,), (1,)), ((), ())),
                            preferred_element_type=jnp.float32) * scale + bias
        s = s - jnp.max(s, axis=-1, keepdims=True)        # f32 softmax (exact div)
        p = jnp.exp(s)
        p = p / jnp.sum(p, axis=-1, keepdims=True)
        ctx = jnp.dot(p.astype(v.dtype), v, preferred_element_type=jnp.float32)
        o_ref[:, h * dh:(h + 1) * dh] = ctx.astype(o_ref.dtype)


def pallas_mha(qkv, mask_bias, scale, nh, H, out_dtype=ACT_DTYPE):
    """qkv: [B, S, 3H] bf16; mask_bias: [B, 1, S] f32 -> [B, S, H] bf16."""
    B, S, _ = qkv.shape
    dh = H // nh
    qkv_spec = pl.BlockSpec((pl.Squeezed(), S, 3 * H), lambda b: (b, 0, 0))
    m_spec = pl.BlockSpec((pl.Squeezed(), 1, S), lambda b: (b, 0, 0))
    o_spec = pl.BlockSpec((pl.Squeezed(), S, H), lambda b: (b, 0, 0))
    return pl.pallas_call(
        functools.partial(_attn_kernel, scale=scale, nh=nh, dh=dh, H=H),
        out_shape=jax.ShapeDtypeStruct((B, S, H), out_dtype),
        grid=(B,),
        in_specs=[qkv_spec, m_spec],
        out_specs=o_spec,
        compiler_params=pltpu.CompilerParams(dimension_semantics=("parallel",)),
    )(qkv, mask_bias)


def _proj_score_ce_kernel(q_ref, d_ref, wq_ref, bq_ref, wd_ref, bd_ref, o_ref,
                          *, bs, docnum):
    """Fused query/doc projection heads + per-query scores + CE (label == 0)."""
    qf = jnp.dot(q_ref[...], wq_ref[...],
                 preferred_element_type=jnp.float32) + bq_ref[...]   # [bs, E]
    df = jnp.dot(d_ref[...], wd_ref[...],
                 preferred_element_type=jnp.float32) + bd_ref[...]   # [bs*docnum, E]
    # all-pairs scores, then mask each query down to its own contiguous doc block
    s_all = lax.dot_general(qf, df, (((1,), (1,)), ((), ())),
                            preferred_element_type=jnp.float32)      # [bs, bs*docnum]
    row = lax.broadcasted_iota(jnp.int32, s_all.shape, 0)
    col = lax.broadcasted_iota(jnp.int32, s_all.shape, 1)
    valid = (col >= row * docnum) & (col < (row + 1) * docnum)
    pos = col == (row * docnum)                                      # label 0 = first doc
    s_masked = jnp.where(valid, s_all, jnp.float32(-1e30))
    m = jnp.max(s_masked, axis=-1, keepdims=True)
    lse = m + jnp.log(jnp.sum(jnp.exp(s_masked - m), axis=-1, keepdims=True))
    pos_score = jnp.sum(jnp.where(pos, s_all, 0.0), axis=-1, keepdims=True)
    loss = jnp.mean(lse - pos_score)                                 # mean-reduced CE
    o_ref[...] = jnp.reshape(loss, (1, 1))


def pallas_proj_score_ce(q_cls, d_cls, wq, bq, wd, bd, bs, docnum):
    """q_cls: [bs, H] bf16, d_cls: [bs*docnum, H] bf16 -> [1, 1] f32 loss."""
    E = wq.shape[1]
    return pl.pallas_call(
        functools.partial(_proj_score_ce_kernel, bs=bs, docnum=docnum),
        out_shape=jax.ShapeDtypeStruct((1, 1), jnp.float32),
    )(q_cls, d_cls, wq, bq.reshape(1, E).astype(jnp.float32),
      wd, bd.reshape(1, E).astype(jnp.float32))


# ----------------------- synthetic BERT text encoder ------------------------

def init_params(key, cfg):
    H, I, E = cfg["hidden"], cfg["intermediate"], cfg["embed_dim"]
    V, P, L = cfg["vocab"], cfg["max_pos"], cfg["layers"]
    std = 0.02

    def nrm(k, shape, dtype=jnp.float32):
        return (std * jax.random.normal(k, shape, dtype=jnp.float32)).astype(dtype)

    keys = jax.random.split(key, 8 + L)
    params = {
        "word_emb": nrm(keys[0], (V, H)),
        "pos_emb": nrm(keys[1], (P, H)),
        "type_emb": nrm(keys[2], (2, H)),
        "emb_ln_g": jnp.ones((H,), jnp.float32),
        "emb_ln_b": jnp.zeros((H,), jnp.float32),
        "query_proj_w": nrm(keys[3], (H, E), MATMUL_DTYPE),
        "query_proj_b": jnp.zeros((E,), jnp.float32),
        "doc_proj_w": nrm(keys[4], (H, E), MATMUL_DTYPE),
        "doc_proj_b": jnp.zeros((E,), jnp.float32),
        "layers": [],
    }
    for l in range(L):
        lk = jax.random.split(keys[8 + l], 4)
        params["layers"].append({
            # fused QKV projection: W [H, 3H], columns ordered (Q | K | V)
            "wqkv": nrm(lk[0], (H, 3 * H), MATMUL_DTYPE),
            "bqkv": jnp.zeros((3 * H,), jnp.float32),
            "wo": nrm(lk[1], (H, H), MATMUL_DTYPE),
            "bo": jnp.zeros((H,), jnp.float32),
            "ln1_g": jnp.ones((H,), jnp.float32),
            "ln1_b": jnp.zeros((H,), jnp.float32),
            "wi": nrm(lk[2], (H, I), MATMUL_DTYPE),
            "bi": jnp.zeros((I,), jnp.float32),
            "wo2": nrm(lk[3], (I, H), MATMUL_DTYPE),
            "bo2": jnp.zeros((H,), jnp.float32),
            "ln2_g": jnp.ones((H,), jnp.float32),
            "ln2_b": jnp.zeros((H,), jnp.float32),
        })
    return params


def bert_encode(params, input_ids, attention_mask, cfg):
    B, S = input_ids.shape
    H, nh = cfg["hidden"], cfg["heads"]
    dh = H // nh
    scale = 1.0 / math.sqrt(dh)

    # embedding table gathers stay in plain XLA (data-dependent gather)
    emb = (params["word_emb"][input_ids]
           + params["pos_emb"][None, :S, :]
           + params["type_emb"][0][None, None, :])
    x = pallas_layernorm(emb.reshape(B * S, H),
                         params["emb_ln_g"], params["emb_ln_b"])        # bf16 [B*S, H]
    mask_bias = ((1.0 - attention_mask.astype(jnp.float32)) * -10000.0
                 ).reshape(B, 1, S)

    for layer in params["layers"]:
        # --- self attention: fused QKV, attention reads the fused tensor directly ---
        qkv = pallas_linear(x, layer["wqkv"], layer["bqkv"])            # bf16 [B*S, 3H]
        ctx = pallas_mha(qkv.reshape(B, S, 3 * H), mask_bias, scale, nh, H
                         ).reshape(B * S, H)                            # bf16 [B*S, H]
        # --- output projection + residual + LayerNorm fused ---
        x = pallas_linear_add_ln(ctx, layer["wo"], layer["bo"], x,
                                 layer["ln1_g"], layer["ln1_b"])
        # --- FFN (wi + GELU + wo2) + residual + LayerNorm fused ---
        x = pallas_ffn_add_ln(x, layer["wi"], layer["bi"],
                              layer["wo2"], layer["bo2"],
                              layer["ln2_g"], layer["ln2_b"])

    return x.reshape(B, S, H)


def albef_forward(params, query_ids, query_mask, doc_ids, doc_mask, bs, docnum, cfg):
    loss_constrain = 0.0
    # query + doc branches share the text encoder -> encode both in ONE batched pass
    ids = jnp.concatenate([query_ids, doc_ids], axis=0)                 # [bs + bs*docnum, S]
    mask = jnp.concatenate([query_mask, doc_mask], axis=0)
    hidden = bert_encode(params, ids, mask, cfg)
    cls = hidden[:, 0, :]                                               # get_diff_embeds (CLS)
    q_cls, d_cls = cls[:bs], cls[bs:]
    # projection heads + scores (q . d^T per batch) + CE(label==0), all in one kernel
    loss = pallas_proj_score_ce(q_cls, d_cls,
                                params["query_proj_w"], params["query_proj_b"],
                                params["doc_proj_w"], params["doc_proj_b"],
                                bs, docnum)
    return loss[0, 0], loss_constrain


# --------------------------------- driver -----------------------------------

if __name__ == "__main__":
    # dims padded to lane/sublane-friendly sizes: H, I, E multiples of 128,
    # dh = H / heads = 128 so in-kernel Q/K/V + head slices are 128-aligned lane tiles.
    cfg = dict(vocab=512, hidden=256, heads=2, layers=2, intermediate=512,
               max_pos=64, embed_dim=128)
    bs, docnum, S = 2, 2, 64

    key = jax.random.PRNGKey(0)
    k_par, k_q, k_d = jax.random.split(key, 3)
    params = init_params(k_par, cfg)

    query_ids = jax.random.randint(k_q, (bs, S), 1, cfg["vocab"], dtype=jnp.int32)
    doc_ids = jax.random.randint(k_d, (bs * docnum, S), 1, cfg["vocab"], dtype=jnp.int32)

    # attention masks with some trailing padding
    pos = jnp.arange(S)[None, :]
    query_mask = (pos < jnp.array([[50], [60]])).astype(jnp.int32)             # [bs, S]
    doc_mask = (pos < jnp.array([[64], [40], [30], [55]])).astype(jnp.int32)   # [bs*docnum, S]

    fwd = jax.jit(functools.partial(albef_forward, bs=bs, docnum=docnum, cfg=cfg))
    loss, loss_constrain = fwd(params, query_ids, query_mask, doc_ids, doc_mask)
    loss = jax.block_until_ready(loss)
    assert jnp.isfinite(loss)
    print("KERNEL_OK")
</pallas_src>

<mosaic_0001>
module attributes {stable_mosaic.version = 11 : i64} {
  func.func @_layernorm_kernel(%arg0: i32, %arg1: memref<128x256xf32, #tpu.memory_space<vmem>>, %arg2: memref<1x256xf32, #tpu.memory_space<vmem>>, %arg3: memref<1x256xf32, #tpu.memory_space<vmem>>, %arg4: memref<128x256xbf16, #tpu.memory_space<vmem>>) attributes {dimension_semantics = [#tpu.dimension_semantics<parallel>], iteration_bounds = array<i64: 3>, scalar_prefetch = 0 : i64, scratch_operands = 0 : i64, tpu.core_type = #tpu.core_type<tc>, window_params = [{transform_indices = @transform_0, window_bounds = array<i64: 128, 256>}, {pipeline_mode = #tpu.pipeline_mode<synchronous>, transform_indices = @transform_1, window_bounds = array<i64: 1, 256>}, {pipeline_mode = #tpu.pipeline_mode<synchronous>, transform_indices = @transform_2, window_bounds = array<i64: 1, 256>}, {transform_indices = @transform_3, window_bounds = array<i64: 128, 256>}]} {
    %c0 = arith.constant 0 : index
    %c0_0 = arith.constant 0 : index
    %0 = vector.load %arg1[%c0, %c0_0] : memref<128x256xf32, #tpu.memory_space<vmem>>, vector<128x256xf32>
    %c0_1 = arith.constant 0 : index
    %c0_2 = arith.constant 0 : index
    %1 = vector.load %arg2[%c0_1, %c0_2] : memref<1x256xf32, #tpu.memory_space<vmem>>, vector<1x256xf32>
    %c0_3 = arith.constant 0 : index
    %c0_4 = arith.constant 0 : index
    %2 = vector.load %arg3[%c0_3, %c0_4] : memref<1x256xf32, #tpu.memory_space<vmem>>, vector<1x256xf32>
    %cst = arith.constant dense<0.000000e+00> : vector<128xf32>
    %3 = vector.multi_reduction <add>, %0, %cst [1] : vector<128x256xf32> to vector<128xf32>
    %4 = vector.shape_cast %3 : vector<128xf32> to vector<128x1xf32>
    %cst_5 = arith.constant 2.560000e+02 : f32
    %5 = vector.broadcast %cst_5 : f32 to vector<128x1xf32>
    %6 = arith.divf %4, %5 : vector<128x1xf32>
    %7 = vector.broadcast %6 : vector<128x1xf32> to vector<128x256xf32>
    %8 = arith.subf %0, %7 : vector<128x256xf32>
    %9 = arith.mulf %8, %8 : vector<128x256xf32>
    %cst_6 = arith.constant dense<0.000000e+00> : vector<128xf32>
    %10 = vector.multi_reduction <add>, %9, %cst_6 [1] : vector<128x256xf32> to vector<128xf32>
    %11 = vector.shape_cast %10 : vector<128xf32> to vector<128x1xf32>
    %cst_7 = arith.constant 2.560000e+02 : f32
    %12 = vector.broadcast %cst_7 : f32 to vector<128x1xf32>
    %13 = arith.divf %11, %12 : vector<128x1xf32>
    %14 = vector.broadcast %6 : vector<128x1xf32> to vector<128x256xf32>
    %15 = arith.subf %0, %14 : vector<128x256xf32>
    %cst_8 = arith.constant 9.99999996E-13 : f32
    %16 = vector.broadcast %cst_8 : f32 to vector<128x1xf32>
    %17 = arith.addf %13, %16 : vector<128x1xf32>
    %18 = math.rsqrt %17 : vector<128x1xf32>
    %19 = vector.broadcast %18 : vector<128x1xf32> to vector<128x256xf32>
    %20 = arith.mulf %15, %19 : vector<128x256xf32>
    %21 = vector.broadcast %1 : vector<1x256xf32> to vector<128x256xf32>
    %22 = arith.mulf %20, %21 : vector<128x256xf32>
    %23 = vector.broadcast %2 : vector<1x256xf32> to vector<128x256xf32>
    %24 = arith.addf %22, %23 : vector<128x256xf32>
    %25 = arith.truncf %24 : vector<128x256xf32> to vector<128x256xbf16>
    %c0_9 = arith.constant 0 : index
    %c0_10 = arith.constant 0 : index
    %26 = vector.load %arg4[%c0_9, %c0_10] : memref<128x256xbf16, #tpu.memory_space<vmem>>, vector<128x256xbf16>
    tpu.vector_store %arg4[%c0_9, %c0_10], %25 {strides = array<i32>} : memref<128x256xbf16, #tpu.memory_space<vmem>>, vector<128x256xbf16>,
    return
  }
  func.func @transform_0(%arg0: i32) -> (i32, i32) {
    %c0_i32 = arith.constant 0 : i32
    %c0_i32_0 = arith.constant 0 : i32
    return %arg0, %c0_i32 : i32, i32
  }
  func.func @transform_1(%arg0: i32) -> (i32, i32) {
    %c0_i32 = arith.constant 0 : i32
    %c0_i32_0 = arith.constant 0 : i32
    %c0_i32_1 = arith.constant 0 : i32
    return %c0_i32, %c0_i32_0 : i32, i32
  }
  func.func @transform_2(%arg0: i32) -> (i32, i32) {
    %c0_i32 = arith.constant 0 : i32
    %c0_i32_0 = arith.constant 0 : i32
    %c0_i32_1 = arith.constant 0 : i32
    return %c0_i32, %c0_i32_0 : i32, i32
  }
  func.func @transform_3(%arg0: i32) -> (i32, i32) {
    %c0_i32 = arith.constant 0 : i32
    %c0_i32_0 = arith.constant 0 : i32
    return %arg0, %c0_i32 : i32, i32
  }
}

module attributes {stable_mosaic.version = 11 : i64} {
  func.func @_linear_kernel(%arg0: i32, %arg1: i32, %arg2: memref<128x256xbf16, #tpu.memory_space<vmem>>, %arg3: memref<256x384xbf16, #tpu.memory_space<vmem>>, %arg4: memref<1x384xf32, #tpu.memory_space<vmem>>, %arg5: memref<128x384xbf16, #tpu.memory_space<vmem>>) attributes {dimension_semantics = [#tpu.dimension_semantics<parallel>, #tpu.dimension_semantics<parallel>], iteration_bounds = array<i64: 3, 2>, scalar_prefetch = 0 : i64, scratch_operands = 0 : i64, tpu.core_type = #tpu.core_type<tc>, window_params = [{transform_indices = @transform_0, window_bounds = array<i64: 128, 256>}, {transform_indices = @transform_1, window_bounds = array<i64: 256, 384>}, {transform_indices = @transform_2, window_bounds = array<i64: 1, 384>}, {transform_indices = @transform_3, window_bounds = array<i64: 128, 384>}]} {
    %c0 = arith.constant 0 : index
    %c0_0 = arith.constant 0 : index
    %0 = vector.load %arg2[%c0, %c0_0] : memref<128x256xbf16, #tpu.memory_space<vmem>>, vector<128x256xbf16>
    %c0_1 = arith.constant 0 : index
    %c0_2 = arith.constant 0 : index
    %1 = vector.load %arg3[%c0_1, %c0_2] : memref<256x384xbf16, #tpu.memory_space<vmem>>, vector<256x384xbf16>
    %cst = arith.constant dense<0.000000e+00> : vector<128x384xf32>
    %2 = tpu.matmul %0, %1, %cst {dimension_numbers = #tpu.dot_dimension_numbers<[1], [0], [0], [1], [0, 0, 1, 1], [], []>} : vector<128x256xbf16>, vector<256x384xbf16>, vector<128x384xf32> -> vector<128x384xf32>
    %c0_3 = arith.constant 0 : index
    %c0_4 = arith.constant 0 : index
    %3 = vector.load %arg4[%c0_3, %c0_4] : memref<1x384xf32, #tpu.memory_space<vmem>>, vector<1x384xf32>
    %4 = vector.broadcast %3 : vector<1x384xf32> to vector<128x384xf32>
    %5 = arith.addf %2, %4 : vector<128x384xf32>
    %6 = arith.truncf %5 : vector<128x384xf32> to vector<128x384xbf16>
    %c0_5 = arith.constant 0 : index
    %c0_6 = arith.constant 0 : index
    %7 = vector.load %arg5[%c0_5, %c0_6] : memref<128x384xbf16, #tpu.memory_space<vmem>>, vector<128x384xbf16>
    tpu.vector_store %arg5[%c0_5, %c0_6], %6 {strides = array<i32>} : memref<128x384xbf16, #tpu.memory_space<vmem>>, vector<128x384xbf16>,
    return
  }
  func.func @transform_0(%arg0: i32, %arg1: i32) -> (i32, i32) {
    %c0_i32 = arith.constant 0 : i32
    %c0_i32_0 = arith.constant 0 : i32
    return %arg0, %c0_i32 : i32, i32
  }
  func.func @transform_1(%arg0: i32, %arg1: i32) -> (i32, i32) {
    %c0_i32 = arith.constant 0 : i32
    %c0_i32_0 = arith.constant 0 : i32
    return %c0_i32, %arg1 : i32, i32
  }
  func.func @transform_2(%arg0: i32, %arg1: i32) -> (i32, i32) {
    %c0_i32 = arith.constant 0 : i32
    %c0_i32_0 = arith.constant 0 : i32
    return %c0_i32, %arg1 : i32, i32
  }
  func.func @transform_3(%arg0: i32, %arg1: i32) -> (i32, i32) {
    %c0_i32 = arith.constant 0 : i32
    return %arg0, %arg1 : i32, i32
  }
}

module attributes {stable_mosaic.version = 11 : i64} {
  func.func @_attn_kernel(%arg0: i32, %arg1: memref<1x64x768xbf16, #tpu.memory_space<vmem>>, %arg2: memref<1x1x64xf32, #tpu.memory_space<vmem>>, %arg3: memref<1x64x256xbf16, #tpu.memory_space<vmem>>) attributes {dimension_semantics = [#tpu.dimension_semantics<parallel>], iteration_bounds = array<i64: 6>, scalar_prefetch = 0 : i64, scratch_operands = 0 : i64, tpu.core_type = #tpu.core_type<tc>, window_params = [{transform_indices = @transform_0, window_bounds = array<i64: 1, 64, 768>}, {transform_indices = @transform_1, window_bounds = array<i64: 1, 1, 64>}, {transform_indices = @transform_2, window_bounds = array<i64: 1, 64, 256>}]} {
    %c0 = arith.constant 0 : index
    %c0_0 = arith.constant 0 : index
    %c0_1 = arith.constant 0 : index
    %0 = vector.load %arg2[%c0, %c0_0, %c0_1] : memref<1x1x64xf32, #tpu.memory_space<vmem>>, vector<1x1x64xf32>
    %1 = vector.shape_cast %0 : vector<1x1x64xf32> to vector<1x64xf32>
    %c0_2 = arith.constant 0 : index
    %c0_3 = arith.constant 0 : index
    %c0_4 = arith.constant 0 : index
    %2 = vector.load %arg1[%c0_2, %c0_3, %c0_4] : memref<1x64x768xbf16, #tpu.memory_space<vmem>>, vector<1x64x128xbf16>
    %3 = vector.shape_cast %2 : vector<1x64x128xbf16> to vector<64x128xbf16>
    %c0_5 = arith.constant 0 : index
    %c0_6 = arith.constant 0 : index
    %c256 = arith.constant 256 : index
    %4 = vector.load %arg1[%c0_5, %c0_6, %c256] : memref<1x64x768xbf16, #tpu.memory_space<vmem>>, vector<1x64x128xbf16>
    %5 = vector.shape_cast %4 : vector<1x64x128xbf16> to vector<64x128xbf16>
    %c0_7 = arith.constant 0 : index
    %c0_8 = arith.constant 0 : index
    %c512 = arith.constant 512 : index
    %6 = vector.load %arg1[%c0_7, %c0_8, %c512] : memref<1x64x768xbf16, #tpu.memory_space<vmem>>, vector<1x64x128xbf16>
    %7 = vector.shape_cast %6 : vector<1x64x128xbf16> to vector<64x128xbf16>
    %cst = arith.constant dense<0.000000e+00> : vector<64x64xf32>
    %8 = tpu.matmul %3, %5, %cst {dimension_numbers = #tpu.dot_dimension_numbers<[1], [1], [0], [0], [0, 0, 1, 0], [], []>} : vector<64x128xbf16>, vector<64x128xbf16>, vector<64x64xf32> -> vector<64x64xf32>
    %cst_9 = arith.constant 0.0883883461 : f32
    %9 = vector.broadcast %cst_9 : f32 to vector<64x64xf32>
    %10 = arith.mulf %8, %9 : vector<64x64xf32>
    %11 = vector.broadcast %1 : vector<1x64xf32> to vector<64x64xf32>
    %12 = arith.addf %10, %11 : vector<64x64xf32>
    %cst_10 = arith.constant dense<0xFF800000> : vector<64xf32>
    %13 = vector.multi_reduction <maximumf>, %12, %cst_10 [1] : vector<64x64xf32> to vector<64xf32>
    %14 = vector.shape_cast %13 : vector<64xf32> to vector<64x1xf32>
    %15 = vector.broadcast %14 : vector<64x1xf32> to vector<64x64xf32>
    %16 = arith.subf %12, %15 : vector<64x64xf32>
    %17 = math.exp %16 : vector<64x64xf32>
    %cst_11 = arith.constant dense<0.000000e+00> : vector<64xf32>
    %18 = vector.multi_reduction <add>, %17, %cst_11 [1] : vector<64x64xf32> to vector<64xf32>
    %19 = vector.shape_cast %18 : vector<64xf32> to vector<64x1xf32>
    %20 = vector.broadcast %19 : vector<64x1xf32> to vector<64x64xf32>
    %21 = arith.divf %17, %20 : vector<64x64xf32>
    %22 = arith.truncf %21 : vector<64x64xf32> to vector<64x64xbf16>
    %cst_12 = arith.constant dense<0.000000e+00> : vector<64x128xf32>
    %23 = tpu.matmul %22, %7, %cst_12 {dimension_numbers = #tpu.dot_dimension_numbers<[1], [0], [0], [1], [0, 0, 1, 1], [], []>} : vector<64x64xbf16>, vector<64x128xbf16>, vector<64x128xf32> -> vector<64x128xf32>
    %24 = arith.truncf %23 : vector<64x128xf32> to vector<64x128xbf16>
    %c0_13 = arith.constant 0 : index
    %c0_14 = arith.constant 0 : index
    %c0_15 = arith.constant 0 : index
    %25 = vector.load %arg3[%c0_13, %c0_14, %c0_15] : memref<1x64x256xbf16, #tpu.memory_space<vmem>>, vector<1x64x128xbf16>
    %26 = vector.shape_cast %25 : vector<1x64x128xbf16> to vector<64x128xbf16>
    %27 = vector.shape_cast %24 : vector<64x128xbf16> to vector<1x64x128xbf16>
    tpu.vector_store %arg3[%c0_13, %c0_14, %c0_15], %27 {strides = array<i32>} : memref<1x64x256xbf16, #tpu.memory_space<vmem>>, vector<1x64x128xbf16>,
    %c0_16 = arith.constant 0 : index
    %c0_17 = arith.constant 0 : index
    %c128 = arith.constant 128 : index
    %28 = vector.load %arg1[%c0_16, %c0_17, %c128] : memref<1x64x768xbf16, #tpu.memory_space<vmem>>, vector<1x64x128xbf16>
    %29 = vector.shape_cast %28 : vector<1x64x128xbf16> to vector<64x128xbf16>
    %c0_18 = arith.constant 0 : index
    %c0_19 = arith.constant 0 : index
    %c384 = arith.constant 384 : index
    %30 = vector.load %arg1[%c0_18, %c0_19, %c384] : memref<1x64x768xbf16, #tpu.memory_space<vmem>>, vector<1x64x128xbf16>
    %31 = vector.shape_cast %30 : vector<1x64x128xbf16> to vector<64x128xbf16>
    %c0_20 = arith.constant 0 : index
    %c0_21 = arith.constant 0 : index
    %c640 = arith.constant 640 : index
    %32 = vector.load %arg1[%c0_20, %c0_21, %c640] : memref<1x64x768xbf16, #tpu.memory_space<vmem>>, vector<1x64x128xbf16>
    %33 = vector.shape_cast %32 : vector<1x64x128xbf16> to vector<64x128xbf16>
    %cst_22 = arith.constant dense<0.000000e+00> : vector<64x64xf32>
    %34 = tpu.matmul %29, %31, %cst_22 {dimension_numbers = #tpu.dot_dimension_numbers<[1], [1], [0], [0], [0, 0, 1, 0], [], []>} : vector<64x128xbf16>, vector<64x128xbf16>, vector<64x64xf32> -> vector<64x64xf32>
    %cst_23 = arith.constant 0.0883883461 : f32
    %35 = vector.broadcast %cst_23 : f32 to vector<64x64xf32>
    %36 = arith.mulf %34, %35 : vector<64x64xf32>
    %37 = vector.broadcast %1 : vector<1x64xf32> to vector<64x64xf32>
    %38 = arith.addf %36, %37 : vector<64x64xf32>
    %cst_24 = arith.constant dense<0xFF800000> : vector<64xf32>
    %39 = vector.multi_reduction <maximumf>, %38, %cst_24 [1] : vector<64x64xf32> to vector<64xf32>
    %40 = vector.shape_cast %39 : vector<64xf32> to vector<64x1xf32>
    %41 = vector.broadcast %40 : vector<64x1xf32> to vector<64x64xf32>
    %42 = arith.subf %38, %41 : vector<64x64xf32>
    %43 = math.exp %42 : vector<64x64xf32>
    %cst_25 = arith.constant dense<0.000000e+00> : vector<64xf32>
    %44 = vector.multi_reduction <add>, %43, %cst_25 [1] : vector<64x64xf32> to vector<64xf32>
    %45 = vector.shape_cast %44 : vector<64xf32> to vector<64x1xf32>
    %46 = vector.broadcast %45 : vector<64x1xf32> to vector<64x64xf32>
    %47 = arith.divf %43, %46 : vector<64x64xf32>
    %48 = arith.truncf %47 : vector<64x64xf32> to vector<64x64xbf16>
    %cst_26 = arith.constant dense<0.000000e+00> : vector<64x128xf32>
    %49 = tpu.matmul %48, %33, %cst_26 {dimension_numbers = #tpu.dot_dimension_numbers<[1], [0], [0], [1], [0, 0, 1, 1], [], []>} : vector<64x64xbf16>, vector<64x128xbf16>, vector<64x128xf32> -> vector<64x128xf32>
    %50 = arith.truncf %49 : vector<64x128xf32> to vector<64x128xbf16>
    %c0_27 = arith.constant 0 : index
    %c0_28 = arith.constant 0 : index
    %c128_29 = arith.constant 128 : index
    %51 = vector.load %arg3[%c0_27, %c0_28, %c128_29] : memref<1x64x256xbf16, #tpu.memory_space<vmem>>, vector<1x64x128xbf16>
    %52 = vector.shape_cast %51 : vector<1x64x128xbf16> to vector<64x128xbf16>
    %53 = vector.shape_cast %50 : vector<64x128xbf16> to vector<1x64x128xbf16>
    tpu.vector_store %arg3[%c0_27, %c0_28, %c128_29], %53 {strides = array<i32>} : memref<1x64x256xbf16, #tpu.memory_space<vmem>>, vector<1x64x128xbf16>,
    return
  }
  func.func @transform_0(%arg0: i32) -> (i32, i32, i32) {
    %c0_i32 = arith.constant 0 : i32
    %c0_i32_0 = arith.constant 0 : i32
    %c0_i32_1 = arith.constant 0 : i32
    return %arg0, %c0_i32, %c0_i32_0 : i32, i32, i32
  }
  func.func @transform_1(%arg0: i32) -> (i32, i32, i32) {
    %c0_i32 = arith.constant 0 : i32
    %c0_i32_0 = arith.constant 0 : i32
    %c0_i32_1 = arith.constant 0 : i32
    return %arg0, %c0_i32, %c0_i32_0 : i32, i32, i32
  }
  func.func @transform_2(%arg0: i32) -> (i32, i32, i32) {
    %c0_i32 = arith.constant 0 : i32
    %c0_i32_0 = arith.constant 0 : i32
    %c0_i32_1 = arith.constant 0 : i32
    return %arg0, %c0_i32, %c0_i32_0 : i32, i32, i32
  }
}

module attributes {stable_mosaic.version = 11 : i64} {
  func.func @_linear_add_ln_kernel(%arg0: i32, %arg1: memref<128x256xbf16, #tpu.memory_space<vmem>>, %arg2: memref<256x256xbf16, #tpu.memory_space<vmem>>, %arg3: memref<1x256xf32, #tpu.memory_space<vmem>>, %arg4: memref<128x256xbf16, #tpu.memory_space<vmem>>, %arg5: memref<1x256xf32, #tpu.memory_space<vmem>>, %arg6: memref<1x256xf32, #tpu.memory_space<vmem>>, %arg7: memref<128x256xbf16, #tpu.memory_space<vmem>>) attributes {dimension_semantics = [#tpu.dimension_semantics<parallel>], iteration_bounds = array<i64: 3>, scalar_prefetch = 0 : i64, scratch_operands = 0 : i64, tpu.core_type = #tpu.core_type<tc>, window_params = [{transform_indices = @transform_0, window_bounds = array<i64: 128, 256>}, {pipeline_mode = #tpu.pipeline_mode<synchronous>, transform_indices = @transform_1, window_bounds = array<i64: 256, 256>}, {pipeline_mode = #tpu.pipeline_mode<synchronous>, transform_indices = @transform_2, window_bounds = array<i64: 1, 256>}, {transform_indices = @transform_3, window_bounds = array<i64: 128, 256>}, {pipeline_mode = #tpu.pipeline_mode<synchronous>, transform_indices = @transform_4, window_bounds = array<i64: 1, 256>}, {pipeline_mode = #tpu.pipeline_mode<synchronous>, transform_indices = @transform_5, window_bounds = array<i64: 1, 256>}, {transform_indices = @transform_6, window_bounds = array<i64: 128, 256>}]} {
    %c0 = arith.constant 0 : index
    %c0_0 = arith.constant 0 : index
    %0 = vector.load %arg1[%c0, %c0_0] : memref<128x256xbf16, #tpu.memory_space<vmem>>, vector<128x256xbf16>
    %c0_1 = arith.constant 0 : index
    %c0_2 = arith.constant 0 : index
    %1 = vector.load %arg2[%c0_1, %c0_2] : memref<256x256xbf16, #tpu.memory_space<vmem>>, vector<256x256xbf16>
    %cst = arith.constant dense<0.000000e+00> : vector<128x256xf32>
    %2 = tpu.matmul %0, %1, %cst {dimension_numbers = #tpu.dot_dimension_numbers<[1], [0], [0], [1], [0, 0, 1, 1], [], []>} : vector<128x256xbf16>, vector<256x256xbf16>, vector<128x256xf32> -> vector<128x256xf32>
    %c0_3 = arith.constant 0 : index
    %c0_4 = arith.constant 0 : index
    %3 = vector.load %arg3[%c0_3, %c0_4] : memref<1x256xf32, #tpu.memory_space<vmem>>, vector<1x256xf32>
    %4 = vector.broadcast %3 : vector<1x256xf32> to vector<128x256xf32>
    %5 = arith.addf %2, %4 : vector<128x256xf32>
    %c0_5 = arith.constant 0 : index
    %c0_6 = arith.constant 0 : index
    %6 = vector.load %arg4[%c0_5, %c0_6] : memref<128x256xbf16, #tpu.memory_space<vmem>>, vector<128x256xbf16>
    %7 = arith.extf %6 : vector<128x256xbf16> to vector<128x256xf32>
    %8 = arith.addf %5, %7 : vector<128x256xf32>
    %c0_7 = arith.constant 0 : index
    %c0_8 = arith.constant 0 : index
    %9 = vector.load %arg5[%c0_7, %c0_8] : memref<1x256xf32, #tpu.memory_space<vmem>>, vector<1x256xf32>
    %c0_9 = arith.constant 0 : index
    %c0_10 = arith.constant 0 : index
    %10 = vector.load %arg6[%c0_9, %c0_10] : memref<1x256xf32, #tpu.memory_space<vmem>>, vector<1x256xf32>
    %cst_11 = arith.constant dense<0.000000e+00> : vector<128xf32>
    %11 = vector.multi_reduction <add>, %8, %cst_11 [1] : vector<128x256xf32> to vector<128xf32>
    %12 = vector.shape_cast %11 : vector<128xf32> to vector<128x1xf32>
    %cst_12 = arith.constant 2.560000e+02 : f32
    %13 = vector.broadcast %cst_12 : f32 to vector<128x1xf32>
    %14 = arith.divf %12, %13 : vector<128x1xf32>
    %15 = vector.broadcast %14 : vector<128x1xf32> to vector<128x256xf32>
    %16 = arith.subf %8, %15 : vector<128x256xf32>
    %17 = arith.mulf %16, %16 : vector<128x256xf32>
    %cst_13 = arith.constant dense<0.000000e+00> : vector<128xf32>
    %18 = vector.multi_reduction <add>, %17, %cst_13 [1] : vector<128x256xf32> to vector<128xf32>
    %19 = vector.shape_cast %18 : vector<128xf32> to vector<128x1xf32>
    %cst_14 = arith.constant 2.560000e+02 : f32
    %20 = vector.broadcast %cst_14 : f32 to vector<128x1xf32>
    %21 = arith.divf %19, %20 : vector<128x1xf32>
    %22 = vector.broadcast %14 : vector<128x1xf32> to vector<128x256xf32>
    %23 = arith.subf %8, %22 : vector<128x256xf32>
    %cst_15 = arith.constant 9.99999996E-13 : f32
    %24 = vector.broadcast %cst_15 : f32 to vector<128x1xf32>
    %25 = arith.addf %21, %24 : vector<128x1xf32>
    %26 = math.rsqrt %25 : vector<128x1xf32>
    %27 = vector.broadcast %26 : vector<128x1xf32> to vector<128x256xf32>
    %28 = arith.mulf %23, %27 : vector<128x256xf32>
    %29 = vector.broadcast %9 : vector<1x256xf32> to vector<128x256xf32>
    %30 = arith.mulf %28, %29 : vector<128x256xf32>
    %31 = vector.broadcast %10 : vector<1x256xf32> to vector<128x256xf32>
    %32 = arith.addf %30, %31 : vector<128x256xf32>
    %33 = arith.truncf %32 : vector<128x256xf32> to vector<128x256xbf16>
    %c0_16 = arith.constant 0 : index
    %c0_17 = arith.constant 0 : index
    %34 = vector.load %arg7[%c0_16, %c0_17] : memref<128x256xbf16, #tpu.memory_space<vmem>>, vector<128x256xbf16>
    tpu.vector_store %arg7[%c0_16, %c0_17], %33 {strides = array<i32>} : memref<128x256xbf16, #tpu.memory_space<vmem>>, vector<128x256xbf16>,
    return
  }
  func.func @transform_0(%arg0: i32) -> (i32, i32) {
    %c0_i32 = arith.constant 0 : i32
    %c0_i32_0 = arith.constant 0 : i32
    return %arg0, %c0_i32 : i32, i32
  }
  func.func @transform_1(%arg0: i32) -> (i32, i32) {
    %c0_i32 = arith.constant 0 : i32
    %c0_i32_0 = arith.constant 0 : i32
    %c0_i32_1 = arith.constant 0 : i32
    return %c0_i32, %c0_i32_0 : i32, i32
  }
  func.func @transform_2(%arg0: i32) -> (i32, i32) {
    %c0_i32 = arith.constant 0 : i32
    %c0_i32_0 = arith.constant 0 : i32
    %c0_i32_1 = arith.constant 0 : i32
    return %c0_i32, %c0_i32_0 : i32, i32
  }
  func.func @transform_3(%arg0: i32) -> (i32, i32) {
    %c0_i32 = arith.constant 0 : i32
    %c0_i32_0 = arith.constant 0 : i32
    return %arg0, %c0_i32 : i32, i32
  }
  func.func @transform_4(%arg0: i32) -> (i32, i32) {
    %c0_i32 = arith.constant 0 : i32
    %c0_i32_0 = arith.constant 0 : i32
    %c0_i32_1 = arith.constant 0 : i32
    return %c0_i32, %c0_i32_0 : i32, i32
  }
  func.func @transform_5(%arg0: i32) -> (i32, i32) {
    %c0_i32 = arith.constant 0 : i32
    %c0_i32_0 = arith.constant 0 : i32
    %c0_i32_1 = arith.constant 0 : i32
    return %c0_i32, %c0_i32_0 : i32, i32
  }
  func.func @transform_6(%arg0: i32) -> (i32, i32) {
    %c0_i32 = arith.constant 0 : i32
    %c0_i32_0 = arith.constant 0 : i32
    return %arg0, %c0_i32 : i32, i32
  }
}

module attributes {stable_mosaic.version = 11 : i64} {
  func.func @_ffn_add_ln_kernel(%arg0: i32, %arg1: memref<128x256xbf16, #tpu.memory_space<vmem>>, %arg2: memref<256x512xbf16, #tpu.memory_space<vmem>>, %arg3: memref<1x512xf32, #tpu.memory_space<vmem>>, %arg4: memref<512x256xbf16, #tpu.memory_space<vmem>>, %arg5: memref<1x256xf32, #tpu.memory_space<vmem>>, %arg6: memref<1x256xf32, #tpu.memory_space<vmem>>, %arg7: memref<1x256xf32, #tpu.memory_space<vmem>>, %arg8: memref<128x256xbf16, #tpu.memory_space<vmem>>) attributes {dimension_semantics = [#tpu.dimension_semantics<parallel>], iteration_bounds = array<i64: 3>, scalar_prefetch = 0 : i64, scratch_operands = 0 : i64, tpu.core_type = #tpu.core_type<tc>, window_params = [{transform_indices = @transform_0, window_bounds = array<i64: 128, 256>}, {pipeline_mode = #tpu.pipeline_mode<synchronous>, transform_indices = @transform_1, window_bounds = array<i64: 256, 512>}, {pipeline_mode = #tpu.pipeline_mode<synchronous>, transform_indices = @transform_2, window_bounds = array<i64: 1, 512>}, {pipeline_mode = #tpu.pipeline_mode<synchronous>, transform_indices = @transform_3, window_bounds = array<i64: 512, 256>}, {pipeline_mode = #tpu.pipeline_mode<synchronous>, transform_indices = @transform_4, window_bounds = array<i64: 1, 256>}, {pipeline_mode = #tpu.pipeline_mode<synchronous>, transform_indices = @transform_5, window_bounds = array<i64: 1, 256>}, {pipeline_mode = #tpu.pipeline_mode<synchronous>, transform_indices = @transform_6, window_bounds = array<i64: 1, 256>}, {transform_indices = @transform_7, window_bounds = array<i64: 128, 256>}]} {
    %c0 = arith.constant 0 : index
    %c0_0 = arith.constant 0 : index
    %0 = vector.load %arg1[%c0, %c0_0] : memref<128x256xbf16, #tpu.memory_space<vmem>>, vector<128x256xbf16>
    %c0_1 = arith.constant 0 : index
    %c0_2 = arith.constant 0 : index
    %1 = vector.load %arg2[%c0_1, %c0_2] : memref<256x512xbf16, #tpu.memory_space<vmem>>, vector<256x512xbf16>
    %cst = arith.constant dense<0.000000e+00> : vector<128x512xf32>
    %2 = tpu.matmul %0, %1, %cst {dimension_numbers = #tpu.dot_dimension_numbers<[1], [0], [0], [1], [0, 0, 1, 1], [], []>} : vector<128x256xbf16>, vector<256x512xbf16>, vector<128x512xf32> -> vector<128x512xf32>
    %c0_3 = arith.constant 0 : index
    %c0_4 = arith.constant 0 : index
    %3 = vector.load %arg3[%c0_3, %c0_4] : memref<1x512xf32, #tpu.memory_space<vmem>>, vector<1x512xf32>
    %4 = vector.broadcast %3 : vector<1x512xf32> to vector<128x512xf32>
    %5 = arith.addf %2, %4 : vector<128x512xf32>
    %cst_5 = arith.constant 5.000000e-01 : f32
    %6 = vector.broadcast %cst_5 : f32 to vector<128x512xf32>
    %7 = arith.mulf %6, %5 : vector<128x512xf32>
    %cst_6 = arith.constant 0.707106769 : f32
    %8 = vector.broadcast %cst_6 : f32 to vector<128x512xf32>
    %9 = arith.mulf %5, %8 : vector<128x512xf32>
    %10 = math.erf %9 : vector<128x512xf32>
    %cst_7 = arith.constant 1.000000e+00 : f32
    %11 = vector.broadcast %cst_7 : f32 to vector<128x512xf32>
    %12 = arith.addf %11, %10 : vector<128x512xf32>
    %13 = arith.mulf %7, %12 : vector<128x512xf32>
    %14 = arith.truncf %13 : vector<128x512xf32> to vector<128x512xbf16>
    %c0_8 = arith.constant 0 : index
    %c0_9 = arith.constant 0 : index
    %15 = vector.load %arg4[%c0_8, %c0_9] : memref<512x256xbf16, #tpu.memory_space<vmem>>, vector<512x256xbf16>
    %cst_10 = arith.constant dense<0.000000e+00> : vector<128x256xf32>
    %16 = tpu.matmul %14, %15, %cst_10 {dimension_numbers = #tpu.dot_dimension_numbers<[1], [0], [0], [1], [0, 0, 1, 1], [], []>} : vector<128x512xbf16>, vector<512x256xbf16>, vector<128x256xf32> -> vector<128x256xf32>
    %c0_11 = arith.constant 0 : index
    %c0_12 = arith.constant 0 : index
    %17 = vector.load %arg5[%c0_11, %c0_12] : memref<1x256xf32, #tpu.memory_space<vmem>>, vector<1x256xf32>
    %18 = vector.broadcast %17 : vector<1x256xf32> to vector<128x256xf32>
    %19 = arith.addf %16, %18 : vector<128x256xf32>
    %20 = arith.extf %0 : vector<128x256xbf16> to vector<128x256xf32>
    %21 = arith.addf %19, %20 : vector<128x256xf32>
    %c0_13 = arith.constant 0 : index
    %c0_14 = arith.constant 0 : index
    %22 = vector.load %arg6[%c0_13, %c0_14] : memref<1x256xf32, #tpu.memory_space<vmem>>, vector<1x256xf32>
    %c0_15 = arith.constant 0 : index
    %c0_16 = arith.constant 0 : index
    %23 = vector.load %arg7[%c0_15, %c0_16] : memref<1x256xf32, #tpu.memory_space<vmem>>, vector<1x256xf32>
    %cst_17 = arith.constant dense<0.000000e+00> : vector<128xf32>
    %24 = vector.multi_reduction <add>, %21, %cst_17 [1] : vector<128x256xf32> to vector<128xf32>
    %25 = vector.shape_cast %24 : vector<128xf32> to vector<128x1xf32>
    %cst_18 = arith.constant 2.560000e+02 : f32
    %26 = vector.broadcast %cst_18 : f32 to vector<128x1xf32>
    %27 = arith.divf %25, %26 : vector<128x1xf32>
    %28 = vector.broadcast %27 : vector<128x1xf32> to vector<128x256xf32>
    %29 = arith.subf %21, %28 : vector<128x256xf32>
    %30 = arith.mulf %29, %29 : vector<128x256xf32>
    %cst_19 = arith.constant dense<0.000000e+00> : vector<128xf32>
    %31 = vector.multi_reduction <add>, %30, %cst_19 [1] : vector<128x256xf32> to vector<128xf32>
    %32 = vector.shape_cast %31 : vector<128xf32> to vector<128x1xf32>
    %cst_20 = arith.constant 2.560000e+02 : f32
    %33 = vector.broadcast %cst_20 : f32 to vector<128x1xf32>
    %34 = arith.divf %32, %33 : vector<128x1xf32>
    %35 = vector.broadcast %27 : vector<128x1xf32> to vector<128x256xf32>
    %36 = arith.subf %21, %35 : vector<128x256xf32>
    %cst_21 = arith.constant 9.99999996E-13 : f32
    %37 = vector.broadcast %cst_21 : f32 to vector<128x1xf32>
    %38 = arith.addf %34, %37 : vector<128x1xf32>
    %39 = math.rsqrt %38 : vector<128x1xf32>
    %40 = vector.broadcast %39 : vector<128x1xf32> to vector<128x256xf32>
    %41 = arith.mulf %36, %40 : vector<128x256xf32>
    %42 = vector.broadcast %22 : vector<1x256xf32> to vector<128x256xf32>
    %43 = arith.mulf %41, %42 : vector<128x256xf32>
    %44 = vector.broadcast %23 : vector<1x256xf32> to vector<128x256xf32>
    %45 = arith.addf %43, %44 : vector<128x256xf32>
    %46 = arith.truncf %45 : vector<128x256xf32> to vector<128x256xbf16>
    %c0_22 = arith.constant 0 : index
    %c0_23 = arith.constant 0 : index
    %47 = vector.load %arg8[%c0_22, %c0_23] : memref<128x256xbf16, #tpu.memory_space<vmem>>, vector<128x256xbf16>
    tpu.vector_store %arg8[%c0_22, %c0_23], %46 {strides = array<i32>} : memref<128x256xbf16, #tpu.memory_space<vmem>>, vector<128x256xbf16>,
    return
  }
  func.func @transform_0(%arg0: i32) -> (i32, i32) {
    %c0_i32 = arith.constant 0 : i32
    %c0_i32_0 = arith.constant 0 : i32
    return %arg0, %c0_i32 : i32, i32
  }
  func.func @transform_1(%arg0: i32) -> (i32, i32) {
    %c0_i32 = arith.constant 0 : i32
    %c0_i32_0 = arith.constant 0 : i32
    %c0_i32_1 = arith.constant 0 : i32
    return %c0_i32, %c0_i32_0 : i32, i32
  }
  func.func @transform_2(%arg0: i32) -> (i32, i32) {
    %c0_i32 = arith.constant 0 : i32
    %c0_i32_0 = arith.constant 0 : i32
    %c0_i32_1 = arith.constant 0 : i32
    return %c0_i32, %c0_i32_0 : i32, i32
  }
  func.func @transform_3(%arg0: i32) -> (i32, i32) {
    %c0_i32 = arith.constant 0 : i32
    %c0_i32_0 = arith.constant 0 : i32
    %c0_i32_1 = arith.constant 0 : i32
    return %c0_i32, %c0_i32_0 : i32, i32
  }
  func.func @transform_4(%arg0: i32) -> (i32, i32) {
    %c0_i32 = arith.constant 0 : i32
    %c0_i32_0 = arith.constant 0 : i32
    %c0_i32_1 = arith.constant 0 : i32
    return %c0_i32, %c0_i32_0 : i32, i32
  }
  func.func @transform_5(%arg0: i32) -> (i32, i32) {
    %c0_i32 = arith.constant 0 : i32
    %c0_i32_0 = arith.constant 0 : i32
    %c0_i32_1 = arith.constant 0 : i32
    return %c0_i32, %c0_i32_0 : i32, i32
  }
  func.func @transform_6(%arg0: i32) -> (i32, i32) {
    %c0_i32 = arith.constant 0 : i32
    %c0_i32_0 = arith.constant 0 : i32
    %c0_i32_1 = arith.constant 0 : i32
    return %c0_i32, %c0_i32_0 : i32, i32
  }
  func.func @transform_7(%arg0: i32) -> (i32, i32) {
    %c0_i32 = arith.constant 0 : i32
    %c0_i32_0 = arith.constant 0 : i32
    return %arg0, %c0_i32 : i32, i32
  }
}

module attributes {stable_mosaic.version = 11 : i64} {
  func.func @_proj_score_ce_kernel(%arg0: memref<2x256xbf16, #tpu.memory_space<vmem>>, %arg1: memref<4x256xbf16, #tpu.memory_space<vmem>>, %arg2: memref<256x128xbf16, #tpu.memory_space<vmem>>, %arg3: memref<1x128xf32, #tpu.memory_space<vmem>>, %arg4: memref<256x128xbf16, #tpu.memory_space<vmem>>, %arg5: memref<1x128xf32, #tpu.memory_space<vmem>>, %arg6: memref<1x1xf32, #tpu.memory_space<vmem>>) attributes {dimension_semantics = [], scalar_prefetch = 0 : i64, scratch_operands = 0 : i64, tpu.core_type = #tpu.core_type<tc>} {
    %c0 = arith.constant 0 : index
    %c0_0 = arith.constant 0 : index
    %0 = vector.load %arg0[%c0, %c0_0] : memref<2x256xbf16, #tpu.memory_space<vmem>>, vector<2x256xbf16>
    %c0_1 = arith.constant 0 : index
    %c0_2 = arith.constant 0 : index
    %1 = vector.load %arg2[%c0_1, %c0_2] : memref<256x128xbf16, #tpu.memory_space<vmem>>, vector<256x128xbf16>
    %cst = arith.constant dense<0.000000e+00> : vector<2x128xf32>
    %2 = tpu.matmul %0, %1, %cst {dimension_numbers = #tpu.dot_dimension_numbers<[1], [0], [0], [1], [0, 0, 1, 1], [], []>} : vector<2x256xbf16>, vector<256x128xbf16>, vector<2x128xf32> -> vector<2x128xf32>
    %c0_3 = arith.constant 0 : index
    %c0_4 = arith.constant 0 : index
    %3 = vector.load %arg3[%c0_3, %c0_4] : memref<1x128xf32, #tpu.memory_space<vmem>>, vector<1x128xf32>
    %4 = vector.broadcast %3 : vector<1x128xf32> to vector<2x128xf32>
    %5 = arith.addf %2, %4 : vector<2x128xf32>
    %c0_5 = arith.constant 0 : index
    %c0_6 = arith.constant 0 : index
    %6 = vector.load %arg1[%c0_5, %c0_6] : memref<4x256xbf16, #tpu.memory_space<vmem>>, vector<4x256xbf16>
    %c0_7 = arith.constant 0 : index
    %c0_8 = arith.constant 0 : index
    %7 = vector.load %arg4[%c0_7, %c0_8] : memref<256x128xbf16, #tpu.memory_space<vmem>>, vector<256x128xbf16>
    %cst_9 = arith.constant dense<0.000000e+00> : vector<4x128xf32>
    %8 = tpu.matmul %6, %7, %cst_9 {dimension_numbers = #tpu.dot_dimension_numbers<[1], [0], [0], [1], [0, 0, 1, 1], [], []>} : vector<4x256xbf16>, vector<256x128xbf16>, vector<4x128xf32> -> vector<4x128xf32>
    %c0_10 = arith.constant 0 : index
    %c0_11 = arith.constant 0 : index
    %9 = vector.load %arg5[%c0_10, %c0_11] : memref<1x128xf32, #tpu.memory_space<vmem>>, vector<1x128xf32>
    %10 = vector.broadcast %9 : vector<1x128xf32> to vector<4x128xf32>
    %11 = arith.addf %8, %10 : vector<4x128xf32>
    %cst_12 = arith.constant dense<0.000000e+00> : vector<2x4xf32>
    %12 = tpu.matmul %5, %11, %cst_12 {dimension_numbers = #tpu.dot_dimension_numbers<[1], [1], [0], [0], [0, 0, 1, 0], [], []>} : vector<2x128xf32>, vector<4x128xf32>, vector<2x4xf32> -> vector<2x4xf32>
    %13 = tpu.iota {dimensions = array<i32: 0>} : vector<2x4xi32>
    %14 = tpu.iota {dimensions = array<i32: 1>} : vector<2x4xi32>
    %c2_i32 = arith.constant 2 : i32
    %15 = vector.broadcast %c2_i32 : i32 to vector<2x4xi32>
    %16 = arith.muli %13, %15 : vector<2x4xi32>
    %17 = arith.cmpi sge, %14, %16 : vector<2x4xi32>
    %c1_i32 = arith.constant 1 : i32
    %18 = vector.broadcast %c1_i32 : i32 to vector<2x4xi32>
    %19 = arith.addi %13, %18 : vector<2x4xi32>
    %c2_i32_13 = arith.constant 2 : i32
    %20 = vector.broadcast %c2_i32_13 : i32 to vector<2x4xi32>
    %21 = arith.muli %19, %20 : vector<2x4xi32>
    %22 = arith.cmpi slt, %14, %21 : vector<2x4xi32>
    %23 = arith.andi %17, %22 : vector<2x4xi1>
    %c2_i32_14 = arith.constant 2 : i32
    %24 = vector.broadcast %c2_i32_14 : i32 to vector<2x4xi32>
    %25 = arith.muli %13, %24 : vector<2x4xi32>
    %26 = arith.cmpi eq, %14, %25 : vector<2x4xi32>
    %cst_15 = arith.constant -1.000000e+30 : f32
    %27 = vector.broadcast %cst_15 : f32 to vector<2x4xf32>
    %28 = arith.select %23, %12, %27 : vector<2x4xi1>, vector<2x4xf32>
    %cst_16 = arith.constant dense<0xFF800000> : vector<2xf32>
    %29 = vector.multi_reduction <maximumf>, %28, %cst_16 [1] : vector<2x4xf32> to vector<2xf32>
    %30 = vector.shape_cast %29 : vector<2xf32> to vector<2x1xf32>
    %31 = vector.broadcast %30 : vector<2x1xf32> to vector<2x4xf32>
    %32 = arith.subf %28, %31 : vector<2x4xf32>
    %33 = math.exp %32 : vector<2x4xf32>
    %cst_17 = arith.constant dense<0.000000e+00> : vector<2xf32>
    %34 = vector.multi_reduction <add>, %33, %cst_17 [1] : vector<2x4xf32> to vector<2xf32>
    %35 = vector.shape_cast %34 : vector<2xf32> to vector<2x1xf32>
    %36 = math.log %35 : vector<2x1xf32>
    %37 = arith.addf %30, %36 : vector<2x1xf32>
    %cst_18 = arith.constant 0.000000e+00 : f32
    %38 = vector.broadcast %cst_18 : f32 to vector<2x4xf32>
    %39 = arith.select %26, %12, %38 : vector<2x4xi1>, vector<2x4xf32>
    %cst_19 = arith.constant dense<0.000000e+00> : vector<2xf32>
    %40 = vector.multi_reduction <add>, %39, %cst_19 [1] : vector<2x4xf32> to vector<2xf32>
    %41 = vector.shape_cast %40 : vector<2xf32> to vector<2x1xf32>
    %42 = arith.subf %37, %41 : vector<2x1xf32>
    %43 = vector.shape_cast %42 : vector<2x1xf32> to vector<1x2x1xf32>
    %cst_20 = arith.constant dense<0.000000e+00> : vector<1xf32>
    %44 = vector.multi_reduction <add>, %43, %cst_20 [1, 2] : vector<1x2x1xf32> to vector<1xf32>
    %45 = vector.shape_cast %44 : vector<1xf32> to vector<1x1x1xf32>
    %46 = vector.extract %45[0, 0, 0] : f32 from vector<1x1x1xf32>
    %cst_21 = arith.constant 2.000000e+00 : f32
    %47 = arith.divf %46, %cst_21 : f32
    %48 = vector.broadcast %47 : f32 to vector<1x1xf32>
    %c0_22 = arith.constant 0 : index
    %c0_23 = arith.constant 0 : index
    %49 = vector.load %arg6[%c0_22, %c0_23] : memref<1x1xf32, #tpu.memory_space<vmem>>, vector<1x1xf32>
    tpu.vector_store %arg6[%c0_22, %c0_23], %48 {strides = array<i32>} : memref<1x1xf32, #tpu.memory_space<vmem>>, vector<1x1xf32>,
    return
  }
}

</mosaic_0001>

<llo_original>
// kernel: albef_forward.10
$region0: #{albef_forward.10}
  #allocation0 [shape = 'u32[]', space=smem, size = 0x4, offset = 0x4, fixed_abs, tag = 'smem constant byte address 0x4 - core index']
  #allocation1 [shape = 'u32[144,128]{1,0:T(1,128)}', space=vmem, size = 0x12000, scoped, tag = 'internal scratch']
  %s0 = inlined_call_operand.vmem [shape: f32[384,256], index: 0, kind: input, shape index: {}]
  %s1 = inlined_call_operand.vmem [shape: f32[1,256], index: 1, kind: input, shape index: {}]
  %s2 = inlined_call_operand.vmem [shape: f32[1,256], index: 2, kind: input, shape index: {}]
  %s3 = inlined_call_operand.vmem [shape: bf16[384,256], index: 3, kind: output, shape index: {}]
  %s4 = sld [smem:[#allocation0]]
  $region45: #{albef_forward.10} parent=0
    _
  %s6 = ssub.s32 1, %s4
  %s7 = scalar_select 0, %s6, %s4
  loop: start=0, step=1, limit=5
  $region2: #{albef_forward.10} parent=0 // loop_pre_header
    _
  $region3: #{albef_forward.10} parent=0 // loop_header
    %s9 = sphi 0, %s13
    %p10 = scmp.ge.s32.totalorder %s9, 5
    %s19 = sphi 0, %s21
    %s22 = sphi 0, %s19
    %s23 = sphi 0, %s22
    %s39 = sphi 0, %s23
    %s43 = sphi 0, %s43
    %s45 = sphi 0, %s43
    %s46 = sphi 0, %s45
    %s60 = sphi 0, %s46
    %s64 = sphi 0, %s64
    %s66 = sphi 0, %s64
    %s67 = sphi 0, %s66
    %s81 = sphi 0, %s67
    %s87 = sphi 0, %s89
    %s90 = sphi 0, %s87
    %s91 = sphi 0, %s90
    %s107 = sphi 0, %s91
  $region4: #{albef_forward.10} parent=0 // loop_header_branch
    %12 = sbr.rel (%p10) target = $region8
  $region5: #{albef_forward.10} parent=0 // loop_body
    %s14 = ssub.s32 %s9, 1
    %s15 = ssub.s32 %s9, 2
    %s16 = sadd.s32 %s9, 1
    %s17 = ssub.s32 %s9, %s16
    %p18 = scmp.eq.s32.totalorder %s17, 0
    %s20 = sadd.s32 %s19, 1
    %s21 = scalar_select %p18, %s19, %s20
    %p24 = pneg %p18
    %p25 = scmp.eq.s32.totalorder %s9, 2
    %p26 = por %p24, %p25
    %p27 = scmp.ne.s32.totalorder %s19, %s22
    %p28 = scmp.eq.s32.totalorder %s9, 0
    %p29 = por %p27, %p28
    %p30 = scmp.ne.s32.totalorder %s19, %s22
    %p31 = scmp.eq.s32.totalorder %s14, 2
    %p32 = por %p30, %p31
    %p33 = scmp.ne.s32.totalorder %s22, %s23
    %p34 = scmp.eq.s32.totalorder %s14, 0
    %p35 = por %p33, %p34
    %p36 = scmp.ne.s32.totalorder %s22, %s23
    %p37 = scmp.eq.s32.totalorder %s15, 2
    %p38 = por %p36, %p37
    %p40 = scmp.ne.s32.totalorder %s23, %s39
    %p41 = scmp.eq.s32.totalorder %s15, 0
    %p42 = por %p40, %p41
    %s44 = sadd.s32 %s43, 1
    %p47 = scmp.eq.s32.totalorder %s9, 2
    %p48 = scmp.ne.s32.totalorder %s43, %s45
    %p49 = scmp.eq.s32.totalorder %s9, 0
    %p50 = por %p48, %p49
    %p51 = scmp.ne.s32.totalorder %s43, %s45
    %p52 = scmp.eq.s32.totalorder %s14, 2
    %p53 = por %p51, %p52
    %p54 = scmp.ne.s32.totalorder %s45, %s46
    %p55 = scmp.eq.s32.totalorder %s14, 0
    %p56 = por %p54, %p55
    %p57 = scmp.ne.s32.totalorder %s45, %s46
    %p58 = scmp.eq.s32.totalorder %s15, 2
    %p59 = por %p57, %p58
    %p61 = scmp.ne.s32.totalorder %s46, %s60
    %p62 = scmp.eq.s32.totalorder %s15, 0
    %p63 = por %p61, %p62
    %s65 = sadd.s32 %s64, 1
    %p68 = scmp.eq.s32.totalorder %s9, 2
    %p69 = scmp.ne.s32.totalorder %s64, %s66
    %p70 = scmp.eq.s32.totalorder %s9, 0
    %p71 = por %p69, %p70
    %p72 = scmp.ne.s32.totalorder %s64, %s66
    %p73 = scmp.eq.s32.totalorder %s14, 2
    %p74 = por %p72, %p73
    %p75 = scmp.ne.s32.totalorder %s66, %s67
    %p76 = scmp.eq.s32.totalorder %s14, 0
    %p77 = por %p75, %p76
    %p78 = scmp.ne.s32.totalorder %s66, %s67
    %p79 = scmp.eq.s32.totalorder %s15, 2
    %p80 = por %p78, %p79
    %p82 = scmp.ne.s32.totalorder %s67, %s81
    %p83 = scmp.eq.s32.totalorder %s15, 0
    %p84 = por %p82, %p83
    %s85 = ssub.s32 %s9, %s16
    %p86 = scmp.eq.s32.totalorder %s85, 0
    %s88 = sadd.s32 %s87, 1
    %s89 = scalar_select %p86, %s87, %s88
    %p92 = pneg %p86
    %p93 = scmp.eq.s32.totalorder %s9, 2
    %p94 = por %p92, %p93
    %p95 = scmp.ne.s32.totalorder %s87, %s90
    %p96 = scmp.eq.s32.totalorder %s9, 0
    %p97 = por %p95, %p96
    %p98 = scmp.ne.s32.totalorder %s87, %s90
    %p99 = scmp.eq.s32.totalorder %s14, 2
    %p100 = por %p98, %p99
    %p101 = scmp.ne.s32.totalorder %s90, %s91
    %p102 = scmp.eq.s32.totalorder %s14, 0
    %p103 = por %p101, %p102
    %p104 = scmp.ne.s32.totalorder %s90, %s91
    %p105 = scmp.eq.s32.totalorder %s15, 2
    %p106 = por %p104, %p105
    %p108 = scmp.ne.s32.totalorder %s91, %s107
    %p109 = scmp.eq.s32.totalorder %s15, 0
    %p110 = por %p108, %p109
    %p111 = scmp.le.s32.totalorder 1, %s9
    %p112 = scmp.lt.s32.totalorder %s9, 4
    %p113 = pnand %p111, %p112
    %p114 = pneg %p113
    // Predicated region
    $region9: #{albef_forward.10} parent=5 // pred_check
      _
    $region10: #{albef_forward.10} parent=5 // pred_check_branch
      %116 = sbr.rel (%p113) target = $region12
    $region11: #{albef_forward.10} parent=5 // pred_region
      %s117 = ssub.s32 %s9, 1
      // Predicated region
      $region13: #{albef_forward.10} parent=11 // pred_check
        %p118 = pneg %p56
      $region14: #{albef_forward.10} parent=11 // pred_check_branch
        %120 = sbr.rel (%p118) target = $region16
      $region15: #{albef_forward.10} parent=11 // pred_region
        _
      $region16: #{albef_forward.10} parent=11 // pred_fallthru
        _
      // Predicated region
      $region17: #{albef_forward.10} parent=11 // pred_check
        %p121 = pneg %p77
      $region18: #{albef_forward.10} parent=11 // pred_check_branch
        %123 = sbr.rel (%p121) target = $region20
      $region19: #{albef_forward.10} parent=11 // pred_region
        _
      $region20: #{albef_forward.10} parent=11 // pred_fallthru
        _
    $region12: #{albef_forward.10} parent=5 // pred_fallthru
      _
    %p124 = scmp.lt.s32.totalorder %s9, 3
    // Predicated region
    $region21: #{albef_forward.10} parent=5 // pred_check
      %p125 = pneg %p124
    $region22: #{albef_forward.10} parent=5 // pred_check_branch
      %127 = sbr.rel (%p125) target = $region24
    $region23: #{albef_forward.10} parent=5 // pred_region
      // Predicated region
      $region25: #{albef_forward.10} parent=23 // pred_check
        %p128 = pneg %p29
      $region26: #{albef_forward.10} parent=23 // pred_check_branch
        %130 = sbr.rel (%p128) target = $region28
      $region27: #{albef_forward.10} parent=23 // pred_region
        %s131 = smul.u32 16, %s9
        %p132 = scmp.lt.s32.totalorder %s131, 47
        %s133 = scalar_select %p132, %s131, 47
        %s134 = smul.addr %s133, 2
        %s135 = smul.addr %s134, 8
        %s136 = scalar_lea.vmem %s0, %s135
        %s137 = smul.u32 16, %s9
      $region28: #{albef_forward.10} parent=23 // pred_fallthru
        _
    $region24: #{albef_forward.10} parent=5 // pred_fallthru
      _
    %p138 = scmp.le.s32.totalorder 1, %s9
    %p139 = scmp.lt.s32.totalorder %s9, 4
    %p140 = pnand %p138, %p139
    %p141 = pneg %p140
    // Predicated region
    $region29: #{albef_forward.10} parent=5 // pred_check
      _
    $region30: #{albef_forward.10} parent=5 // pred_check_branch
      %143 = sbr.rel (%p140) target = $region32
    $region31: #{albef_forward.10} parent=5 // pred_region
      %s144 = ssub.s32 %s9, 1
      %s145 = smul.u32 16, %s14
      %p146 = scmp.lt.s32.totalorder %s145, 47
      %s147 = scalar_select %p146, %s145, 47
      %s148 = smul.addr %s147, 2
      %s149 = smul.addr %s148, 8
      %s150 = scalar_lea.vmem %s0, %s149
      %p151 = pneg %p35
      %p152 = pneg %p32
      %p153 = pneg %p56
      %p154 = pneg %p53
      %p155 = pneg %p77
      %p156 = pneg %p74
      %p157 = pneg %p103
      %p158 = pneg %p100
      %s159 = smul.u32 16, %s14
      %p160 = scmp.lt.s32.totalorder %s159, 47
      %s161 = scalar_select %p160, %s159, 47
      %s162 = smul.addr %s161, 2
      %s163 = smul.addr %s162, 4
      %s164 = scalar_lea.vmem %s3, %s163
      %s165 = smul.u32 16, %s14
      %p166 = scmp.lt.s32.totalorder %s165, 47
      %s167 = scalar_select %p166, %s165, 47
      %s168 = smul.addr %s167, 2
      %s169 = smul.addr %s168, 8
      %s170 = scalar_lea.vmem %s0, %s169
      %s171 = smul.u32 16, %s14
      %s172 = smul.u32 16, %s14
      %p173 = scmp.lt.s32.totalorder %s172, 47
      %s174 = scalar_select %p173, %s172, 47
      %s175 = smul.addr %s174, 2
      %s176 = smul.addr %s175, 4
      %s177 = scalar_lea.vmem %s3, %s176
      %s178 = smul.u32 16, %s14
      %v179 = vld [vmem:[%s170] sm:$0xff]
      %v180 = vld [vmem:[%s170 + $0x8] sm:$0xff]
      %v181 = vld [vmem:[%s170 + $0x10] sm:$0xff]
      %v182 = vld [vmem:[%s170 + $0x18] sm:$0xff]
      %v183 = vld [vmem:[%s170 + $0x20] sm:$0xff]
      %v184 = vld [vmem:[%s170 + $0x28] sm:$0xff]
      %v185 = vld [vmem:[%s170 + $0x30] sm:$0xff]
      %v186 = vld [vmem:[%s170 + $0x38] sm:$0xff]
      %v187 = vld [vmem:[%s170 + $0x40] sm:$0xff]
      %v188 = vld [vmem:[%s170 + $0x48] sm:$0xff]
      %v189 = vld [vmem:[%s170 + $0x50] sm:$0xff]
      %v190 = vld [vmem:[%s170 + $0x58] sm:$0xff]
      %v191 = vld [vmem:[%s170 + $0x60] sm:$0xff]
      %v192 = vld [vmem:[%s170 + $0x68] sm:$0xff]
      %v193 = vld [vmem:[%s170 + $0x70] sm:$0xff]
      %v194 = vld [vmem:[%s170 + $0x78] sm:$0xff]
      %v195 = vld [vmem:[%s170 + $0x80] sm:$0xff]
      %v196 = vld [vmem:[%s170 + $0x88] sm:$0xff]
      %v197 = vld [vmem:[%s170 + $0x90] sm:$0xff]
      %v198 = vld [vmem:[%s170 + $0x98] sm:$0xff]
      %v199 = vld [vmem:[%s170 + $0xa0] sm:$0xff]
      %v200 = vld [vmem:[%s170 + $0xa8] sm:$0xff]
      %v201 = vld [vmem:[%s170 + $0xb0] sm:$0xff]
      %v202 = vld [vmem:[%s170 + $0xb8] sm:$0xff]
      %v203 = vld [vmem:[%s170 + $0xc0] sm:$0xff]
      %v204 = vld [vmem:[%s170 + $0xc8] sm:$0xff]
      %v205 = vld [vmem:[%s170 + $0xd0] sm:$0xff]
      %v206 = vld [vmem:[%s170 + $0xd8] sm:$0xff]
      %v207 = vld [vmem:[%s170 + $0xe0] sm:$0xff]
      %v208 = vld [vmem:[%s170 + $0xe8] sm:$0xff]
      %v209 = vld [vmem:[%s170 + $0xf0] sm:$0xff]
      %v210 = vld [vmem:[%s170 + $0xf8] sm:$0xff]
      %v211 = vld [vmem:[%s1] sm:$0x3]
      %v212 = vld [vmem:[%s2] sm:$0x3]
      %v213 = vadd.f32 %v179, %v180
      %214 = vadd.xlane.f32.xlu0 %v213
      %v215 = vpop.xlane.xlu0 %214
      %v216 = vadd.f32 %v181, %v182
      %217 = vadd.xlane.f32.xlu0 %v216
      %v218 = vpop.xlane.xlu0 %217
      %v219 = vadd.f32 %v183, %v184
      %220 = vadd.xlane.f32.xlu0 %v219
      %v221 = vpop.xlane.xlu0 %220
      %v222 = vadd.f32 %v185, %v186
      %223 = vadd.xlane.f32.xlu0 %v222
      %v224 = vpop.xlane.xlu0 %223
      %v225 = vadd.f32 %v187, %v188
      %226 = vadd.xlane.f32.xlu0 %v225
      %v227 = vpop.xlane.xlu0 %226
      %v228 = vadd.f32 %v189, %v190
      %229 = vadd.xlane.f32.xlu0 %v228
      %v230 = vpop.xlane.xlu0 %229
      %v231 = vadd.f32 %v191, %v192
      %232 = vadd.xlane.f32.xlu0 %v231
      %v233 = vpop.xlane.xlu0 %232
      %v234 = vadd.f32 %v193, %v194
      %235 = vadd.xlane.f32.xlu0 %v234
      %v236 = vpop.xlane.xlu0 %235
      %v237 = vadd.f32 %v195, %v196
      %238 = vadd.xlane.f32.xlu0 %v237
      %v239 = vpop.xlane.xlu0 %238
      %v240 = vadd.f32 %v197, %v198
      %241 = vadd.xlane.f32.xlu0 %v240
      %v242 = vpop.xlane.xlu0 %241
      %v243 = vadd.f32 %v199, %v200
      %244 = vadd.xlane.f32.xlu0 %v243
      %v245 = vpop.xlane.xlu0 %244
      %v246 = vadd.f32 %v201, %v202
      %247 = vadd.xlane.f32.xlu0 %v246
      %v248 = vpop.xlane.xlu0 %247
      %v249 = vadd.f32 %v203, %v204
      %250 = vadd.xlane.f32.xlu0 %v249
      %v251 = vpop.xlane.xlu0 %250
      %v252 = vadd.f32 %v205, %v206
      %253 = vadd.xlane.f32.xlu0 %v252
      %v254 = vpop.xlane.xlu0 %253
      %v255 = vadd.f32 %v207, %v208
      %256 = vadd.xlane.f32.xlu0 %v255
      %v257 = vpop.xlane.xlu0 %256
      %v258 = vadd.f32 %v209, %v210
      %259 = vadd.xlane.f32.xlu0 %v258
      %v260 = vpop.xlane.xlu0 %259
      %v261 = vrcp.pop 256.0
      %v262 = vmul.f32 %v215, %v261
      %v263 = vmul.f32 %v218, %v261
      %v264 = vmul.f32 %v221, %v261
      %v265 = vmul.f32 %v224, %v261
      %v266 = vmul.f32 %v227, %v261
      %v267 = vmul.f32 %v230, %v261
      %v268 = vmul.f32 %v233, %v261
      %v269 = vmul.f32 %v236, %v261
      %v270 = vmul.f32 %v239, %v261
      %v271 = vmul.f32 %v242, %v261
      %v272 = vmul.f32 %v245, %v261
      %v273 = vmul.f32 %v248, %v261
      %v274 = vmul.f32 %v251, %v261
      %v275 = vmul.f32 %v254, %v261
      %v276 = vmul.f32 %v257, %v261
      %v277 = vmul.f32 %v260, %v261
      %v278 = vsub.f32 %v179, %v262
      %v279 = vsub.f32 %v180, %v262
      %v280 = vsub.f32 %v181, %v263
      %v281 = vsub.f32 %v182, %v263
      %v282 = vsub.f32 %v183, %v264
      %v283 = vsub.f32 %v184, %v264
      %v284 = vsub.f32 %v185, %v265
      %v285 = vsub.f32 %v186, %v265
      %v286 = vsub.f32 %v187, %v266
      %v287 = vsub.f32 %v188, %v266
      %v288 = vsub.f32 %v189, %v267
      %v289 = vsub.f32 %v190, %v267
      %v290 = vsub.f32 %v191, %v268
      %v291 = vsub.f32 %v192, %v268
      %v292 = vsub.f32 %v193, %v269
      %v293 = vsub.f32 %v194, %v269
      %v294 = vsub.f32 %v195, %v270
      %v295 = vsub.f32 %v196, %v270
      %v296 = vsub.f32 %v197, %v271
      %v297 = vsub.f32 %v198, %v271
      %v298 = vsub.f32 %v199, %v272
      %v299 = vsub.f32 %v200, %v272
      %v300 = vsub.f32 %v201, %v273
      %v301 = vsub.f32 %v202, %v273
      %v302 = vsub.f32 %v203, %v274
      %v303 = vsub.f32 %v204, %v274
      %v304 = vsub.f32 %v205, %v275
      %v305 = vsub.f32 %v206, %v275
      %v306 = vsub.f32 %v207, %v276
      %v307 = vsub.f32 %v208, %v276
      %v308 = vsub.f32 %v209, %v277
      %v309 = vsub.f32 %v210, %v277
      %v310 = vmul.f32 %v278, %v278
      %v311 = vmul.f32 %v279, %v279
      %v312 = vmul.f32 %v280, %v280
      %v313 = vmul.f32 %v281, %v281
      %v314 = vmul.f32 %v282, %v282
      %v315 = vmul.f32 %v283, %v283
      %v316 = vmul.f32 %v284, %v284
      %v317 = vmul.f32 %v285, %v285
      %v318 = vmul.f32 %v286, %v286
      %v319 = vmul.f32 %v287, %v287
      %v320 = vmul.f32 %v288, %v288
      %v321 = vmul.f32 %v289, %v289
      %v322 = vmul.f32 %v290, %v290
      %v323 = vmul.f32 %v291, %v291
      %v324 = vmul.f32 %v292, %v292
      %v325 = vmul.f32 %v293, %v293
      %v326 = vmul.f32 %v294, %v294
      %v327 = vmul.f32 %v295, %v295
      %v328 = vmul.f32 %v296, %v296
      %v329 = vmul.f32 %v297, %v297
      %v330 = vmul.f32 %v298, %v298
      %v331 = vmul.f32 %v299, %v299
      %v332 = vmul.f32 %v300, %v300
      %v333 = vmul.f32 %v301, %v301
      %v334 = vmul.f32 %v302, %v302
      %v335 = vmul.f32 %v303, %v303
      %v336 = vmul.f32 %v304, %v304
      %v337 = vmul.f32 %v305, %v305
      %v338 = vmul.f32 %v306, %v306
      %v339 = vmul.f32 %v307, %v307
      %v340 = vmul.f32 %v308, %v308
      %v341 = vmul.f32 %v309, %v309
      %v342 = vadd.f32 %v310, %v311
      %343 = vadd.xlane.f32.xlu0 %v342
      %v344 = vpop.xlane.xlu0 %343
      %v345 = vadd.f32 %v312, %v313
      %346 = vadd.xlane.f32.xlu0 %v345
      %v347 = vpop.xlane.xlu0 %346
      %v348 = vadd.f32 %v314, %v315
      %349 = vadd.xlane.f32.xlu0 %v348
      %v350 = vpop.xlane.xlu0 %349
      %v351 = vadd.f32 %v316, %v317
      %352 = vadd.xlane.f32.xlu0 %v351
      %v353 = vpop.xlane.xlu0 %352
      %v354 = vadd.f32 %v318, %v319
      %355 = vadd.xlane.f32.xlu0 %v354
      %v356 = vpop.xlane.xlu0 %355
      %v357 = vadd.f32 %v320, %v321
      %358 = vadd.xlane.f32.xlu0 %v357
      %v359 = vpop.xlane.xlu0 %358
      %v360 = vadd.f32 %v322, %v323
      %361 = vadd.xlane.f32.xlu0 %v360
      %v362 = vpop.xlane.xlu0 %361
      %v363 = vadd.f32 %v324, %v325
      %364 = vadd.xlane.f32.xlu0 %v363
      %v365 = vpop.xlane.xlu0 %364
      %v366 = vadd.f32 %v326, %v327
      %367 = vadd.xlane.f32.xlu0 %v366
      %v368 = vpop.xlane.xlu0 %367
      %v369 = vadd.f32 %v328, %v329
      %370 = vadd.xlane.f32.xlu0 %v369
      %v371 = vpop.xlane.xlu0 %370
      %v372 = vadd.f32 %v330, %v331
      %373 = vadd.xlane.f32.xlu0 %v372
      %v374 = vpop.xlane.xlu0 %373
      %v375 = vadd.f32 %v332, %v333
      %376 = vadd.xlane.f32.xlu0 %v375
      %v377 = vpop.xlane.xlu0 %376
      %v378 = vadd.f32 %v334, %v335
      %379 = vadd.xlane.f32.xlu0 %v378
      %v380 = vpop.xlane.xlu0 %379
      %v381 = vadd.f32 %v336, %v337
      %382 = vadd.xlane.f32.xlu0 %v381
      %v383 = vpop.xlane.xlu0 %382
      %v384 = vadd.f32 %v338, %v339
      %385 = vadd.xlane.f32.xlu0 %v384
      %v386 = vpop.xlane.xlu0 %385
      %v387 = vadd.f32 %v340, %v341
      %388 = vadd.xlane.f32.xlu0 %v387
      %v389 = vpop.xlane.xlu0 %388
      %v390 = vmul.f32 %v344, %v261
      %v391 = vmul.f32 %v347, %v261
      %v392 = vmul.f32 %v350, %v261
      %v393 = vmul.f32 %v353, %v261
      %v394 = vmul.f32 %v356, %v261
      %v395 = vmul.f32 %v359, %v261
      %v396 = vmul.f32 %v362, %v261
      %v397 = vmul.f32 %v365, %v261
      %v398 = vmul.f32 %v368, %v261
      %v399 = vmul.f32 %v371, %v261
      %v400 = vmul.f32 %v374, %v261
      %v401 = vmul.f32 %v377, %v261
      %v402 = vmul.f32 %v380, %v261
      %v403 = vmul.f32 %v383, %v261
      %v404 = vmul.f32 %v386, %v261
      %v405 = vmul.f32 %v389, %v261
      %v406 = vadd.f32 %v390, 1e-12
      %v407 = vadd.f32 %v391, 1e-12
      %v408 = vadd.f32 %v392, 1e-12
      %v409 = vadd.f32 %v393, 1e-12
      %v410 = vadd.f32 %v394, 1e-12
      %v411 = vadd.f32 %v395, 1e-12
      %v412 = vadd.f32 %v396, 1e-12
      %v413 = vadd.f32 %v397, 1e-12
      %v414 = vadd.f32 %v398, 1e-12
      %v415 = vadd.f32 %v399, 1e-12
      %v416 = vadd.f32 %v400, 1e-12
      %v417 = vadd.f32 %v401, 1e-12
      %v418 = vadd.f32 %v402, 1e-12
      %v419 = vadd.f32 %v403, 1e-12
      %v420 = vadd.f32 %v404, 1e-12
      %v421 = vadd.f32 %v405, 1e-12
      %v422 = vrsqrt.pop %v406
      %v423 = vrsqrt.pop %v407
      %v424 = vrsqrt.pop %v408
      %v425 = vrsqrt.pop %v409
      %v426 = vrsqrt.pop %v410
      %v427 = vrsqrt.pop %v411
      %v428 = vrsqrt.pop %v412
      %v429 = vrsqrt.pop %v413
      %v430 = vrsqrt.pop %v414
      %v431 = vrsqrt.pop %v415
      %v432 = vrsqrt.pop %v416
      %v433 = vrsqrt.pop %v417
      %v434 = vrsqrt.pop %v418
      %v435 = vrsqrt.pop %v419
      %v436 = vrsqrt.pop %v420
      %v437 = vrsqrt.pop %v421
      %v438 = vmul.f32 %v278, %v422
      %v439 = vmul.f32 %v279, %v422
      %v440 = vmul.f32 %v280, %v423
      %v441 = vmul.f32 %v281, %v423
      %v442 = vmul.f32 %v282, %v424
      %v443 = vmul.f32 %v283, %v424
      %v444 = vmul.f32 %v284, %v425
      %v445 = vmul.f32 %v285, %v425
      %v446 = vmul.f32 %v286, %v426
      %v447 = vmul.f32 %v287, %v426
      %v448 = vmul.f32 %v288, %v427
      %v449 = vmul.f32 %v289, %v427
      %v450 = vmul.f32 %v290, %v428
      %v451 = vmul.f32 %v291, %v428
      %v452 = vmul.f32 %v292, %v429
      %v453 = vmul.f32 %v293, %v429
      %v454 = vmul.f32 %v294, %v430
      %v455 = vmul.f32 %v295, %v430
      %v456 = vmul.f32 %v296, %v431
      %v457 = vmul.f32 %v297, %v431
      %v458 = vmul.f32 %v298, %v432
      %v459 = vmul.f32 %v299, %v432
      %v460 = vmul.f32 %v300, %v433
      %v461 = vmul.f32 %v301, %v433
      %v462 = vmul.f32 %v302, %v434
      %v463 = vmul.f32 %v303, %v434
      %v464 = vmul.f32 %v304, %v435
      %v465 = vmul.f32 %v305, %v435
      %v466 = vmul.f32 %v306, %v436
      %v467 = vmul.f32 %v307, %v436
      %v468 = vmul.f32 %v308, %v437
      %v469 = vmul.f32 %v309, %v437
      %v471 = vlaneseq
      %v472 = vshrl.u32 %v471, 7
      %v473 = vsub.s32 0, %v472
      %v474 = vrot.slane %v211, %v473
      %v475 = vlaneseq
      %v476 = vshrl.u32 %v475, 7
      %v477 = vsub.s32 1, %v476
      %v478 = vrot.slane %v211, %v477
      %v481 = vmul.f32 %v438, %v474
      %v482 = vmul.f32 %v439, %v478
      %v483 = vmul.f32 %v440, %v474
      %v484 = vmul.f32 %v441, %v478
      %v485 = vmul.f32 %v442, %v474
      %v486 = vmul.f32 %v443, %v478
      %v487 = vmul.f32 %v444, %v474
      %v488 = vmul.f32 %v445, %v478
      %v489 = vmul.f32 %v446, %v474
      %v490 = vmul.f32 %v447, %v478
      %v491 = vmul.f32 %v448, %v474
      %v492 = vmul.f32 %v449, %v478
      %v493 = vmul.f32 %v450, %v474
      %v494 = vmul.f32 %v451, %v478
      %v495 = vmul.f32 %v452, %v474
      %v496 = vmul.f32 %v453, %v478
      %v497 = vmul.f32 %v454, %v474
      %v498 = vmul.f32 %v455, %v478
      %v499 = vmul.f32 %v456, %v474
      %v500 = vmul.f32 %v457, %v478
      %v501 = vmul.f32 %v458, %v474
      %v502 = vmul.f32 %v459, %v478
      %v503 = vmul.f32 %v460, %v474
      %v504 = vmul.f32 %v461, %v478
      %v505 = vmul.f32 %v462, %v474
      %v506 = vmul.f32 %v463, %v478
      %v507 = vmul.f32 %v464, %v474
      %v508 = vmul.f32 %v465, %v478
      %v509 = vmul.f32 %v466, %v474
      %v510 = vmul.f32 %v467, %v478
      %v511 = vmul.f32 %v468, %v474
      %v512 = vmul.f32 %v469, %v478
      %v514 = vlaneseq
      %v515 = vshrl.u32 %v514, 7
      %v516 = vsub.s32 0, %v515
      %v517 = vrot.slane %v212, %v516
      %v518 = vlaneseq
      %v519 = vshrl.u32 %v518, 7
      %v520 = vsub.s32 1, %v519
      %v521 = vrot.slane %v212, %v520
      %v524 = vadd.f32 %v481, %v517
      %v525 = vadd.f32 %v482, %v521
      %v526 = vadd.f32 %v483, %v517
      %v527 = vadd.f32 %v484, %v521
      %v528 = vadd.f32 %v485, %v517
      %v529 = vadd.f32 %v486, %v521
      %v530 = vadd.f32 %v487, %v517
      %v531 = vadd.f32 %v488, %v521
      %v532 = vadd.f32 %v489, %v517
      %v533 = vadd.f32 %v490, %v521
      %v534 = vadd.f32 %v491, %v517
      %v535 = vadd.f32 %v492, %v521
      %v536 = vadd.f32 %v493, %v517
      %v537 = vadd.f32 %v494, %v521
      %v538 = vadd.f32 %v495, %v517
      %v539 = vadd.f32 %v496, %v521
      %v540 = vadd.f32 %v497, %v517
      %v541 = vadd.f32 %v498, %v521
      %v542 = vadd.f32 %v499, %v517
      %v543 = vadd.f32 %v500, %v521
      %v544 = vadd.f32 %v501, %v517
      %v545 = vadd.f32 %v502, %v521
      %v546 = vadd.f32 %v503, %v517
      %v547 = vadd.f32 %v504, %v521
      %v548 = vadd.f32 %v505, %v517
      %v549 = vadd.f32 %v506, %v521
      %v550 = vadd.f32 %v507, %v517
      %v551 = vadd.f32 %v508, %v521
      %v552 = vadd.f32 %v509, %v517
      %v553 = vadd.f32 %v510, %v521
      %v554 = vadd.f32 %v511, %v517
      %v555 = vadd.f32 %v512, %v521
      %v556 = vpack.c.bf16 %v526, %v524
      %v557 = vpack.c.bf16 %v527, %v525
      %v558 = vpack.c.bf16 %v530, %v528
      %v559 = vpack.c.bf16 %v531, %v529
      %v560 = vpack.c.bf16 %v534, %v532
      %v561 = vpack.c.bf16 %v535, %v533
      %v562 = vpack.c.bf16 %v538, %v536
      %v563 = vpack.c.bf16 %v539, %v537
      %v564 = vpack.c.bf16 %v542, %v540
      %v565 = vpack.c.bf16 %v543, %v541
      %v566 = vpack.c.bf16 %v546, %v544
      %v567 = vpack.c.bf16 %v547, %v545
      %v568 = vpack.c.bf16 %v550, %v548
      %v569 = vpack.c.bf16 %v551, %v549
      %v570 = vpack.c.bf16 %v554, %v552
      %v571 = vpack.c.bf16 %v555, %v553
      %v588 = vunpack.c.l.b16 %v556
      %v589 = vunpack.c.l.b16 %v557
      %v590 = vunpack.c.h.b16 %v556
      %v591 = vunpack.c.h.b16 %v557
      %v592 = vunpack.c.l.b16 %v558
      %v593 = vunpack.c.l.b16 %v559
      %v594 = vunpack.c.h.b16 %v558
      %v595 = vunpack.c.h.b16 %v559
      %v596 = vunpack.c.l.b16 %v560
      %v597 = vunpack.c.l.b16 %v561
      %v598 = vunpack.c.h.b16 %v560
      %v599 = vunpack.c.h.b16 %v561
      %v600 = vunpack.c.l.b16 %v562
      %v601 = vunpack.c.l.b16 %v563
      %v602 = vunpack.c.h.b16 %v562
      %v603 = vunpack.c.h.b16 %v563
      %v604 = vunpack.c.l.b16 %v564
      %v605 = vunpack.c.l.b16 %v565
      %v606 = vunpack.c.h.b16 %v564
      %v607 = vunpack.c.h.b16 %v565
      %v608 = vunpack.c.l.b16 %v566
      %v609 = vunpack.c.l.b16 %v567
      %v610 = vunpack.c.h.b16 %v566
      %v611 = vunpack.c.h.b16 %v567
      %v612 = vunpack.c.l.b16 %v568
      %v613 = vunpack.c.l.b16 %v569
      %v614 = vunpack.c.h.b16 %v568
      %v615 = vunpack.c.h.b16 %v569
      %v616 = vunpack.c.l.b16 %v570
      %v617 = vunpack.c.l.b16 %v571
      %v618 = vunpack.c.h.b16 %v570
      %v619 = vunpack.c.h.b16 %v571
      %v620 = vpack.c.b16 %v589, %v588
      %v621 = vpack.c.b16 %v591, %v590
      %v622 = vpack.c.b16 %v593, %v592
      %v623 = vpack.c.b16 %v595, %v594
      %v624 = vpack.c.b16 %v597, %v596
      %v625 = vpack.c.b16 %v599, %v598
      %v626 = vpack.c.b16 %v601, %v600
      %v627 = vpack.c.b16 %v603, %v602
      %v628 = vpack.c.b16 %v605, %v604
      %v629 = vpack.c.b16 %v607, %v606
      %v630 = vpack.c.b16 %v609, %v608
      %v631 = vpack.c.b16 %v611, %v610
      %v632 = vpack.c.b16 %v613, %v612
      %v633 = vpack.c.b16 %v615, %v614
      %v634 = vpack.c.b16 %v617, %v616
      %v635 = vpack.c.b16 %v619, %v618
      %652 = vst [vmem:[%s177] sm:$0xff] %v620
      %653 = vst [vmem:[%s177 + $0x8] sm:$0xff] %v621
      %654 = vst [vmem:[%s177 + $0x10] sm:$0xff] %v622
      %655 = vst [vmem:[%s177 + $0x18] sm:$0xff] %v623
      %656 = vst [vmem:[%s177 + $0x20] sm:$0xff] %v624
      %657 = vst [vmem:[%s177 + $0x28] sm:$0xff] %v625
      %658 = vst [vmem:[%s177 + $0x30] sm:$0xff] %v626
      %659 = vst [vmem:[%s177 + $0x38] sm:$0xff] %v627
      %660 = vst [vmem:[%s177 + $0x40] sm:$0xff] %v628
      %661 = vst [vmem:[%s177 + $0x48] sm:$0xff] %v629
      %662 = vst [vmem:[%s177 + $0x50] sm:$0xff] %v630
      %663 = vst [vmem:[%s177 + $0x58] sm:$0xff] %v631
      %664 = vst [vmem:[%s177 + $0x60] sm:$0xff] %v632
      %665 = vst [vmem:[%s177 + $0x68] sm:$0xff] %v633
      %666 = vst [vmem:[%s177 + $0x70] sm:$0xff] %v634
      %667 = vst [vmem:[%s177 + $0x78] sm:$0xff] %v635
      %s668 = smul.u32 16, %s14
      %p669 = scmp.lt.s32.totalorder %s668, 47
      %s670 = scalar_select %p669, %s668, 47
      %s671 = smul.addr %s670, 2
      %s672 = smul.addr %s671, 4
      %s673 = scalar_lea.vmem %s3, %s672
      // Predicated region
      $region33: #{albef_forward.10} parent=31 // pred_check
        %p674 = pneg %p100
      $region34: #{albef_forward.10} parent=31 // pred_check_branch
        %676 = sbr.rel (%p674) target = $region36
      $region35: #{albef_forward.10} parent=31 // pred_region
        %s677 = smul.u32 16, %s14
      $region36: #{albef_forward.10} parent=31 // pred_fallthru
        _
    $region32: #{albef_forward.10} parent=5 // pred_fallthru
      _
    %p678 = scmp.le.s32.totalorder 2, %s9
    // Predicated region
    $region37: #{albef_forward.10} parent=5 // pred_check
      %p679 = pneg %p678
    $region38: #{albef_forward.10} parent=5 // pred_check_branch
      %681 = sbr.rel (%p679) target = $region40
    $region39: #{albef_forward.10} parent=5 // pred_region
      %s682 = ssub.s32 %s9, 2
      // Predicated region
      $region41: #{albef_forward.10} parent=39 // pred_check
        %p683 = pneg %p106
      $region42: #{albef_forward.10} parent=39 // pred_check_branch
        %685 = sbr.rel (%p683) target = $region44
      $region43: #{albef_forward.10} parent=39 // pred_region
        %s686 = smul.u32 16, %s15
        %p687 = scmp.lt.s32.totalorder %s686, 47
        %s688 = scalar_select %p687, %s686, 47
        %s689 = smul.addr %s688, 2
        %s690 = smul.addr %s689, 4
        %s691 = scalar_lea.vmem %s3, %s690
      $region44: #{albef_forward.10} parent=39 // pred_fallthru
        _
    $region40: #{albef_forward.10} parent=5 // pred_fallthru
      _
  $region6: #{albef_forward.10} parent=0 // loop_footer
    %s13 = sadd.s32 1, %s9
  $region7: #{albef_forward.10} parent=0 // loop_footer_branch
    %8 = sbr.rel target = $region3
  $region8: #{albef_forward.10} parent=0 // loop_exit
    _

// kernel: albef_forward.11
$region0: #{albef_forward.11}
  #allocation0 [shape = 'u32[]', space=smem, size = 0x4, offset = 0x4, fixed_abs, tag = 'smem constant byte address 0x4 - core index']
  #allocation1 [shape = 'u32[144,128]{1,0:T(1,128)}', space=vmem, size = 0x12000, scoped, tag = 'internal scratch']
  %s0 = inlined_call_operand.vmem [shape: bf16[384,256], index: 0, kind: input, shape index: {}]
  %s1 = inlined_call_operand.vmem [shape: bf16[256,768], index: 1, kind: input, shape index: {}]
  %s2 = inlined_call_operand.vmem [shape: f32[1,768], index: 2, kind: input, shape index: {}]
  %s3 = inlined_call_operand.vmem [shape: bf16[384,768], index: 3, kind: output, shape index: {}]
  %s4 = sld [smem:[#allocation0]]
  $region93: #{albef_forward.11} parent=0
    _
  %s6 = ssub.s32 1, %s4
  %s7 = scalar_select 0, %s6, %s4
  $region1: #{albef_forward.11} parent=0
    #allocation2 [shape = 'u8[393216]{0}', space=vmem, size = 0x60000, scoped, tag = 'input window, operand 1']
    #allocation3 [shape = 'u8[196608]{0}', space=vmem, size = 0x30000, scoped, tag = 'output window, operand 0']
    loop: start=0, step=1, limit=8
    $region2: #{albef_forward.11} parent=1 // loop_pre_header
      _
    $region3: #{albef_forward.11} parent=1 // loop_header
      %s9 = sphi 0, %s13
      %p10 = scmp.ge.s32.totalorder %s9, 8
      %s16 = sphi 0, %s28
      %s17 = sphi 0, %s24
      %s18 = sphi 0, %s16
      %s19 = sphi 0, %s17
      %s20 = sphi 0, %s18
      %s21 = sphi 0, %s19
      %s31 = sphi 0, %s33
      %s34 = sphi 0, %s31
      %s35 = sphi 0, %s34
      %s51 = sphi 0, %s35
      %s57 = sphi 0, %s59
      %s60 = sphi 0, %s57
      %s61 = sphi 0, %s60
      %s77 = sphi 0, %s61
      %s83 = sphi 0, %s85
      %s86 = sphi 0, %s83
      %s87 = sphi 0, %s86
      %s103 = sphi 0, %s87
      %s111 = sphi 0, %s113
      %s114 = sphi 0, %s111
      %s115 = sphi 0, %s114
      %s131 = sphi 0, %s115
    $region4: #{albef_forward.11} parent=1 // loop_header_branch
      %12 = sbr.rel (%p10) target = $region8
    $region5: #{albef_forward.11} parent=1 // loop_body
      %s14 = ssub.s32 %s9, 1
      %s15 = ssub.s32 %s9, 2
      %s22 = sadd.s32 1, %s17
      %p23 = scmp.ge.s32.totalorder %s22, 2
      %s24 = scalar_select %p23, 0, %s22
      %s25 = sadd.s32 1, %s16
      %s26 = scalar_select %p23, %s25, %s16
      %p27 = scmp.ge.s32.totalorder %s26, 3
      %s28 = scalar_select %p27, 0, %s26
      %s29 = ssub.s32 %s16, %s28
      %p30 = scmp.eq.s32.totalorder %s29, 0
      %s32 = sadd.s32 %s31, 1
      %s33 = scalar_select %p30, %s31, %s32
      %p36 = pneg %p30
      %p37 = scmp.eq.s32.totalorder %s9, 5
      %p38 = por %p36, %p37
      %p39 = scmp.ne.s32.totalorder %s31, %s34
      %p40 = scmp.eq.s32.totalorder %s9, 0
      %p41 = por %p39, %p40
      %p42 = scmp.ne.s32.totalorder %s31, %s34
      %p43 = scmp.eq.s32.totalorder %s14, 5
      %p44 = por %p42, %p43
      %p45 = scmp.ne.s32.totalorder %s34, %s35
      %p46 = scmp.eq.s32.totalorder %s14, 0
      %p47 = por %p45, %p46
      %p48 = scmp.ne.s32.totalorder %s34, %s35
      %p49 = scmp.eq.s32.totalorder %s15, 5
      %p50 = por %p48, %p49
      %p52 = scmp.ne.s32.totalorder %s35, %s51
      %p53 = scmp.eq.s32.totalorder %s15, 0
      %p54 = por %p52, %p53
      %s55 = ssub.s32 %s17, %s24
      %p56 = scmp.eq.s32.totalorder %s55, 0
      %s58 = sadd.s32 %s57, 1
      %s59 = scalar_select %p56, %s57, %s58
      %p62 = pneg %p56
      %p63 = scmp.eq.s32.totalorder %s9, 5
      %p64 = por %p62, %p63
      %p65 = scmp.ne.s32.totalorder %s57, %s60
      %p66 = scmp.eq.s32.totalorder %s9, 0
      %p67 = por %p65, %p66
      %p68 = scmp.ne.s32.totalorder %s57, %s60
      %p69 = scmp.eq.s32.totalorder %s14, 5
      %p70 = por %p68, %p69
      %p71 = scmp.ne.s32.totalorder %s60, %s61
      %p72 = scmp.eq.s32.totalorder %s14, 0
      %p73 = por %p71, %p72
      %p74 = scmp.ne.s32.totalorder %s60, %s61
      %p75 = scmp.eq.s32.totalorder %s15, 5
      %p76 = por %p74, %p75
      %p78 = scmp.ne.s32.totalorder %s61, %s77
      %p79 = scmp.eq.s32.totalorder %s15, 0
      %p80 = por %p78, %p79
      %s81 = ssub.s32 %s17, %s24
      %p82 = scmp.eq.s32.totalorder %s81, 0
      %s84 = sadd.s32 %s83, 1
      %s85 = scalar_select %p82, %s83, %s84
      %p88 = pneg %p82
      %p89 = scmp.eq.s32.totalorder %s9, 5
      %p90 = por %p88, %p89
      %p91 = scmp.ne.s32.totalorder %s83, %s86
      %p92 = scmp.eq.s32.totalorder %s9, 0
      %p93 = por %p91, %p92
      %p94 = scmp.ne.s32.totalorder %s83, %s86
      %p95 = scmp.eq.s32.totalorder %s14, 5
      %p96 = por %p94, %p95
      %p97 = scmp.ne.s32.totalorder %s86, %s87
      %p98 = scmp.eq.s32.totalorder %s14, 0
      %p99 = por %p97, %p98
      %p100 = scmp.ne.s32.totalorder %s86, %s87
      %p101 = scmp.eq.s32.totalorder %s15, 5
      %p102 = por %p100, %p101
      %p104 = scmp.ne.s32.totalorder %s87, %s103
      %p105 = scmp.eq.s32.totalorder %s15, 0
      %p106 = por %p104, %p105
      %s107 = ssub.s32 %s16, %s28
      %s108 = ssub.s32 %s17, %s24
      %s109 = sor.u32 %s107, %s108
      %p110 = scmp.eq.s32.totalorder %s109, 0
      %s112 = sadd.s32 %s111, 1
      %s113 = scalar_select %p110, %s111, %s112
      %p116 = pneg %p110
      %p117 = scmp.eq.s32.totalorder %s9, 5
      %p118 = por %p116, %p117
      %p119 = scmp.ne.s32.totalorder %s111, %s114
      %p120 = scmp.eq.s32.totalorder %s9, 0
      %p121 = por %p119, %p120
      %p122 = scmp.ne.s32.totalorder %s111, %s114
      %p123 = scmp.eq.s32.totalorder %s14, 5
      %p124 = por %p122, %p123
      %p125 = scmp.ne.s32.totalorder %s114, %s115
      %p126 = scmp.eq.s32.totalorder %s14, 0
      %p127 = por %p125, %p126
      %p128 = scmp.ne.s32.totalorder %s114, %s115
      %p129 = scmp.eq.s32.totalorder %s15, 5
      %p130 = por %p128, %p129
      %p132 = scmp.ne.s32.totalorder %s115, %s131
      %p133 = scmp.eq.s32.totalorder %s15, 0
      %p134 = por %p132, %p133
      %p135 = scmp.le.s32.totalorder 1, %s9
      %p136 = scmp.lt.s32.totalorder %s9, 7
      %p137 = pnand %p135, %p136
      %p138 = pneg %p137
      // Predicated region
      $region9: #{albef_forward.11} parent=5 // pred_check
        _
      $region10: #{albef_forward.11} parent=5 // pred_check_branch
        %140 = sbr.rel (%p137) target = $region12
      $region11: #{albef_forward.11} parent=5 // pred_region
        %s141 = ssub.s32 %s9, 1
      $region12: #{albef_forward.11} parent=5 // pred_fallthru
        _
      %p142 = scmp.lt.s32.totalorder %s9, 6
      // Predicated region
      $region13: #{albef_forward.11} parent=5 // pred_check
        %p143 = pneg %p142
      $region14: #{albef_forward.11} parent=5 // pred_check_branch
        %145 = sbr.rel (%p143) target = $region16
      $region15: #{albef_forward.11} parent=5 // pred_region
        // Predicated region
        $region17: #{albef_forward.11} parent=15 // pred_check
          %p146 = pneg %p41
        $region18: #{albef_forward.11} parent=15 // pred_check_branch
          %148 = sbr.rel (%p146) target = $region20
        $region19: #{albef_forward.11} parent=15 // pred_region
          %s149 = smul.u32 16, %s16
          %p150 = scmp.lt.s32.totalorder %s149, 47
          %s151 = scalar_select %p150, %s149, 47
          %s152 = smul.addr %s151, 2
          %s153 = smul.addr %s152, 4
          %s154 = scalar_lea.vmem %s0, %s153
          %s155 = smul.u32 16, %s16
        $region20: #{albef_forward.11} parent=15 // pred_fallthru
          _
        // Predicated region
        $region21: #{albef_forward.11} parent=15 // pred_check
          %p156 = pneg %p67
        $region22: #{albef_forward.11} parent=15 // pred_check_branch
          %158 = sbr.rel (%p156) target = $region24
        $region23: #{albef_forward.11} parent=15 // pred_region
          %s159 = sand.u32 %s57, 1
          %s160 = sand.u32 %s57, 1
          %s161 = smul.addr %s160, 384
          %s162 = scalar_lea.vmem [#allocation2], %s161
          %s163 = smul.u32 3, %s17
          %s164 = smul.addr %s163, 4
          %s165 = scalar_lea.vmem %s1, %s164
          // Predicated region
          $region25: #{albef_forward.11} parent=23 // pred_check
            _
          $region26: #{albef_forward.11} parent=23 // pred_check_branch
            %167 = sbr.rel (0) target = $region28
          $region27: #{albef_forward.11} parent=23 // pred_region
            // Predicated region
            $region29: #{albef_forward.11} parent=27 // pred_check
              _
            $region30: #{albef_forward.11} parent=27 // pred_check_branch
              %169 = sbr.rel (0) target = $region32
            $region31: #{albef_forward.11} parent=27 // pred_region
              %s170 = scalar_lea.vmem %s165, 8
              %s171 = scalar_lea.vmem %s162, 8 [#allocation2]
              loop: start=0, step=1, limit=1
              $region33: #{albef_forward.11} parent=31 // loop_pre_header
                _
              $region34: #{albef_forward.11} parent=31 // loop_header
                %s173 = sphi 0, %s177
                %p174 = scmp.ge.s32.totalorder %s173, 1
                %s178 = sphi %s165, %s165
                %s179 = sphi %s162, %s162
              $region35: #{albef_forward.11} parent=31 // loop_header_branch
                %176 = sbr.rel (%p174) target = $region39
              $region36: #{albef_forward.11} parent=31 // loop_body
                %v180 = vld [vmem:[%s178] sm:$0xff]
                %181 = vst [vmem:[%s179] sm:$0xff] %v180
                %v182 = vld [vmem:[%s178 + $0x18] sm:$0xff]
                %183 = vst [vmem:[%s179 + $0xc] sm:$0xff] %v182
                %v184 = vld [vmem:[%s178 + $0x30] sm:$0xff]
                %185 = vst [vmem:[%s179 + $0x18] sm:$0xff] %v184
                %v186 = vld [vmem:[%s178 + $0x48] sm:$0xff]
                %187 = vst [vmem:[%s179 + $0x24] sm:$0xff] %v186
                %v188 = vld [vmem:[%s178 + $0x60] sm:$0xff]
                %189 = vst [vmem:[%s179 + $0x30] sm:$0xff] %v188
                %v190 = vld [vmem:[%s178 + $0x78] sm:$0xff]
                %191 = vst [vmem:[%s179 + $0x3c] sm:$0xff] %v190
                %v192 = vld [vmem:[%s178 + $0x90] sm:$0xff]
                %193 = vst [vmem:[%s179 + $0x48] sm:$0xff] %v192
                %v194 = vld [vmem:[%s178 + $0xa8] sm:$0xff]
                %195 = vst [vmem:[%s179 + $0x54] sm:$0xff] %v194
                %v196 = vld [vmem:[%s178 + $0xc0] sm:$0xff]
                %197 = vst [vmem:[%s179 + $0x60] sm:$0xff] %v196
                %v198 = vld [vmem:[%s178 + $0xd8] sm:$0xff]
                %199 = vst [vmem:[%s179 + $0x6c] sm:$0xff] %v198
                %v200 = vld [vmem:[%s178 + $0xf0] sm:$0xff]
                %201 = vst [vmem:[%s179 + $0x78] sm:$0xff] %v200
                %v202 = vld [vmem:[%s178 + $0x108] sm:$0xff]
                %203 = vst [vmem:[%s179 + $0x84] sm:$0xff] %v202
                %v204 = vld [vmem:[%s178 + $0x120] sm:$0xff]
                %205 = vst [vmem:[%s179 + $0x90] sm:$0xff] %v204
                %v206 = vld [vmem:[%s178 + $0x138] sm:$0xff]
                %207 = vst [vmem:[%s179 + $0x9c] sm:$0xff] %v206
                %v208 = vld [vmem:[%s178 + $0x150] sm:$0xff]
                %209 = vst [vmem:[%s179 + $0xa8] sm:$0xff] %v208
                %v210 = vld [vmem:[%s178 + $0x168] sm:$0xff]
                %211 = vst [vmem:[%s179 + $0xb4] sm:$0xff] %v210
                %v212 = vld [vmem:[%s178 + $0x180] sm:$0xff]
                %213 = vst [vmem:[%s179 + $0xc0] sm:$0xff] %v212
                %v214 = vld [vmem:[%s178 + $0x198] sm:$0xff]
                %215 = vst [vmem:[%s179 + $0xcc] sm:$0xff] %v214
                %v216 = vld [vmem:[%s178 + $0x1b0] sm:$0xff]
                %217 = vst [vmem:[%s179 + $0xd8] sm:$0xff] %v216
                %v218 = vld [vmem:[%s178 + $0x1c8] sm:$0xff]
                %219 = vst [vmem:[%s179 + $0xe4] sm:$0xff] %v218
                %v220 = vld [vmem:[%s178 + $0x1e0] sm:$0xff]
                %221 = vst [vmem:[%s179 + $0xf0] sm:$0xff] %v220
                %v222 = vld [vmem:[%s178 + $0x1f8] sm:$0xff]
                %223 = vst [vmem:[%s179 + $0xfc] sm:$0xff] %v222
                %v224 = vld [vmem:[%s178 + $0x210] sm:$0xff]
                %225 = vst [vmem:[%s179 + $0x108] sm:$0xff] %v224
                %v226 = vld [vmem:[%s178 + $0x228] sm:$0xff]
                %227 = vst [vmem:[%s179 + $0x114] sm:$0xff] %v226
                %v228 = vld [vmem:[%s178 + $0x240] sm:$0xff]
                %229 = vst [vmem:[%s179 + $0x120] sm:$0xff] %v228
                %v230 = vld [vmem:[%s178 + $0x258] sm:$0xff]
                %231 = vst [vmem:[%s179 + $0x12c] sm:$0xff] %v230
                %v232 = vld [vmem:[%s178 + $0x270] sm:$0xff]
                %233 = vst [vmem:[%s179 + $0x138] sm:$0xff] %v232
                %v234 = vld [vmem:[%s178 + $0x288] sm:$0xff]
                %235 = vst [vmem:[%s179 + $0x144] sm:$0xff] %v234
                %v236 = vld [vmem:[%s178 + $0x2a0] sm:$0xff]
                %237 = vst [vmem:[%s179 + $0x150] sm:$0xff] %v236
                %v238 = vld [vmem:[%s178 + $0x2b8] sm:$0xff]
                %239 = vst [vmem:[%s179 + $0x15c] sm:$0xff] %v238
                %v240 = vld [vmem:[%s178 + $0x2d0] sm:$0xff]
                %241 = vst [vmem:[%s179 + $0x168] sm:$0xff] %v240
                %v242 = vld [vmem:[%s178 + $0x2e8] sm:$0xff]
                %243 = vst [vmem:[%s179 + $0x174] sm:$0xff] %v242
              $region37: #{albef_forward.11} parent=31 // loop_footer
                %s177 = sadd.s32 1, %s173
              $region38: #{albef_forward.11} parent=31 // loop_footer_branch
                %172 = sbr.rel target = $region34
              $region39: #{albef_forward.11} parent=31 // loop_exit
                _
              %s245 = ssub.s32 16, 1
              loop: start=0, step=1, limit=1
              $region40: #{albef_forward.11} parent=31 // loop_pre_header
                _
              $region41: #{albef_forward.11} parent=31 // loop_header
                %s247 = sphi 0, %s251
                %p248 = scmp.ge.s32.totalorder %s247, 1
                %s252 = sphi %s170, %s170
                %s253 = sphi %s171, %s171
              $region42: #{albef_forward.11} parent=31 // loop_header_branch
                %250 = sbr.rel (%p248) target = $region46
              $region43: #{albef_forward.11} parent=31 // loop_body
                %v254 = vld [vmem:[%s252] sm:%s245]
                %255 = vst [vmem:[%s253] sm:%s245] %v254
                %v256 = vld [vmem:[%s252 + $0x18] sm:%s245]
                %257 = vst [vmem:[%s253 + $0xc] sm:%s245] %v256
                %v258 = vld [vmem:[%s252 + $0x30] sm:%s245]
                %259 = vst [vmem:[%s253 + $0x18] sm:%s245] %v258
                %v260 = vld [vmem:[%s252 + $0x48] sm:%s245]
                %261 = vst [vmem:[%s253 + $0x24] sm:%s245] %v260
                %v262 = vld [vmem:[%s252 + $0x60] sm:%s245]
                %263 = vst [vmem:[%s253 + $0x30] sm:%s245] %v262
                %v264 = vld [vmem:[%s252 + $0x78] sm:%s245]
                %265 = vst [vmem:[%s253 + $0x3c] sm:%s245] %v264
                %v266 = vld [vmem:[%s252 + $0x90] sm:%s245]
                %267 = vst [vmem:[%s253 + $0x48] sm:%s245] %v266
                %v268 = vld [vmem:[%s252 + $0xa8] sm:%s245]
                %269 = vst [vmem:[%s253 + $0x54] sm:%s245] %v268
                %v270 = vld [vmem:[%s252 + $0xc0] sm:%s245]
                %271 = vst [vmem:[%s253 + $0x60] sm:%s245] %v270
                %v272 = vld [vmem:[%s252 + $0xd8] sm:%s245]
                %273 = vst [vmem:[%s253 + $0x6c] sm:%s245] %v272
                %v274 = vld [vmem:[%s252 + $0xf0] sm:%s245]
                %275 = vst [vmem:[%s253 + $0x78] sm:%s245] %v274
                %v276 = vld [vmem:[%s252 + $0x108] sm:%s245]
                %277 = vst [vmem:[%s253 + $0x84] sm:%s245] %v276
                %v278 = vld [vmem:[%s252 + $0x120] sm:%s245]
                %279 = vst [vmem:[%s253 + $0x90] sm:%s245] %v278
                %v280 = vld [vmem:[%s252 + $0x138] sm:%s245]
                %281 = vst [vmem:[%s253 + $0x9c] sm:%s245] %v280
                %v282 = vld [vmem:[%s252 + $0x150] sm:%s245]
                %283 = vst [vmem:[%s253 + $0xa8] sm:%s245] %v282
                %v284 = vld [vmem:[%s252 + $0x168] sm:%s245]
                %285 = vst [vmem:[%s253 + $0xb4] sm:%s245] %v284
                %v286 = vld [vmem:[%s252 + $0x180] sm:%s245]
                %287 = vst [vmem:[%s253 + $0xc0] sm:%s245] %v286
                %v288 = vld [vmem:[%s252 + $0x198] sm:%s245]
                %289 = vst [vmem:[%s253 + $0xcc] sm:%s245] %v288
                %v290 = vld [vmem:[%s252 + $0x1b0] sm:%s245]
                %291 = vst [vmem:[%s253 + $0xd8] sm:%s245] %v290
                %v292 = vld [vmem:[%s252 + $0x1c8] sm:%s245]
                %293 = vst [vmem:[%s253 + $0xe4] sm:%s245] %v292
                %v294 = vld [vmem:[%s252 + $0x1e0] sm:%s245]
                %295 = vst [vmem:[%s253 + $0xf0] sm:%s245] %v294
                %v296 = vld [vmem:[%s252 + $0x1f8] sm:%s245]
                %297 = vst [vmem:[%s253 + $0xfc] sm:%s245] %v296
                %v298 = vld [vmem:[%s252 + $0x210] sm:%s245]
                %299 = vst [vmem:[%s253 + $0x108] sm:%s245] %v298
                %v300 = vld [vmem:[%s252 + $0x228] sm:%s245]
                %301 = vst [vmem:[%s253 + $0x114] sm:%s245] %v300
                %v302 = vld [vmem:[%s252 + $0x240] sm:%s245]
                %303 = vst [vmem:[%s253 + $0x120] sm:%s245] %v302
                %v304 = vld [vmem:[%s252 + $0x258] sm:%s245]
                %305 = vst [vmem:[%s253 + $0x12c] sm:%s245] %v304
                %v306 = vld [vmem:[%s252 + $0x270] sm:%s245]
                %307 = vst [vmem:[%s253 + $0x138] sm:%s245] %v306
                %v308 = vld [vmem:[%s252 + $0x288] sm:%s245]
                %309 = vst [vmem:[%s253 + $0x144] sm:%s245] %v308
                %v310 = vld [vmem:[%s252 + $0x2a0] sm:%s245]
                %311 = vst [vmem:[%s253 + $0x150] sm:%s245] %v310
                %v312 = vld [vmem:[%s252 + $0x2b8] sm:%s245]
                %313 = vst [vmem:[%s253 + $0x15c] sm:%s245] %v312
                %v314 = vld [vmem:[%s252 + $0x2d0] sm:%s245]
                %315 = vst [vmem:[%s253 + $0x168] sm:%s245] %v314
                %v316 = vld [vmem:[%s252 + $0x2e8] sm:%s245]
                %317 = vst [vmem:[%s253 + $0x174] sm:%s245] %v316
              $region44: #{albef_forward.11} parent=31 // loop_footer
                %s251 = sadd.s32 1, %s247
              $region45: #{albef_forward.11} parent=31 // loop_footer_branch
                %246 = sbr.rel target = $region41
              $region46: #{albef_forward.11} parent=31 // loop_exit
                _
            $region32: #{albef_forward.11} parent=27 // pred_fallthru
              _
          $region28: #{albef_forward.11} parent=23 // pred_fallthru
            _
          %318 = vnop
        $region24: #{albef_forward.11} parent=15 // pred_fallthru
          _
        // Predicated region
        $region47: #{albef_forward.11} parent=15 // pred_check
          %p319 = pneg %p93
        $region48: #{albef_forward.11} parent=15 // pred_check_branch
          %321 = sbr.rel (%p319) target = $region50
        $region49: #{albef_forward.11} parent=15 // pred_region
          %s322 = smul.u32 3, %s17
          %p323 = scmp.lt.s32.totalorder %s322, 5
          %s324 = scalar_select %p323, %s322, 5
          %s325 = scalar_lea.vmem %s2, %s324
          %s326 = smul.u32 3, %s17
        $region50: #{albef_forward.11} parent=15 // pred_fallthru
          _
      $region16: #{albef_forward.11} parent=5 // pred_fallthru
        _
      %p327 = scmp.le.s32.totalorder 1, %s9
      %p328 = scmp.lt.s32.totalorder %s9, 7
      %p329 = pnand %p327, %p328
      %p330 = pneg %p329
      // Predicated region
      $region51: #{albef_forward.11} parent=5 // pred_check
        _
      $region52: #{albef_forward.11} parent=5 // pred_check_branch
        %332 = sbr.rel (%p329) target = $region54
      $region53: #{albef_forward.11} parent=5 // pred_region
        %s333 = ssub.s32 %s9, 1
        %s334 = sand.u32 %s60, 1
        %s335 = sand.u32 %s60, 1
        %s336 = smul.addr %s335, 384
        %s337 = scalar_lea.vmem [#allocation2], %s336
        // Predicated region
        $region55: #{albef_forward.11} parent=53 // pred_check
          %p338 = pneg %p73
        $region56: #{albef_forward.11} parent=53 // pred_check_branch
          %340 = sbr.rel (%p338) target = $region58
        $region57: #{albef_forward.11} parent=53 // pred_region
          _
        $region58: #{albef_forward.11} parent=53 // pred_fallthru
          _
        %s341 = smul.u32 16, %s18
        %p342 = scmp.lt.s32.totalorder %s341, 47
        %s343 = scalar_select %p342, %s341, 47
        %s344 = smul.addr %s343, 2
        %s345 = smul.addr %s344, 4
        %s346 = scalar_lea.vmem %s0, %s345
        %p347 = pneg %p47
        %p348 = pneg %p44
        %s349 = sand.u32 %s60, 1
        %s350 = sand.u32 %s60, 1
        %s351 = smul.addr %s350, 384
        %s352 = scalar_lea.vmem [#allocation2], %s351
        %p353 = pneg %p73
        %p354 = pneg %p70
        %s355 = smul.u32 3, %s19
        %p356 = scmp.lt.s32.totalorder %s355, 5
        %s357 = scalar_select %p356, %s355, 5
        %s358 = scalar_lea.vmem %s2, %s357
        %p359 = pneg %p99
        %p360 = pneg %p96
        %p361 = pneg %p127
        %p362 = pneg %p124
        %s363 = sand.u32 %s114, 1
        %s364 = sand.u32 %s114, 1
        %s365 = smul.addr %s364, 192
        %s366 = scalar_lea.vmem [#allocation3], %s365
        %s367 = smul.u32 16, %s18
        %p368 = scmp.lt.s32.totalorder %s367, 47
        %s369 = scalar_select %p368, %s367, 47
        %s370 = smul.addr %s369, 2
        %s371 = smul.addr %s370, 4
        %s372 = scalar_lea.vmem %s0, %s371
        %s373 = smul.u32 16, %s18
        %s374 = smul.u32 3, %s19
        %s375 = smul.u32 3, %s19
        %p376 = scmp.lt.s32.totalorder %s375, 5
        %s377 = scalar_select %p376, %s375, 5
        %s378 = scalar_lea.vmem %s2, %s377
        %s379 = smul.u32 3, %s19
        %s380 = smul.u32 16, %s18
        %s381 = smul.u32 3, %s19
        %v383 = vld [vmem:[%s372] sm:$0xff]
        %v384 = vld [vmem:[%s372 + $0x8] sm:$0xff]
        %v385 = vld [vmem:[%s372 + $0x10] sm:$0xff]
        %v386 = vld [vmem:[%s372 + $0x18] sm:$0xff]
        %v387 = vld [vmem:[%s372 + $0x20] sm:$0xff]
        %v388 = vld [vmem:[%s372 + $0x28] sm:$0xff]
        %v389 = vld [vmem:[%s372 + $0x30] sm:$0xff]
        %v390 = vld [vmem:[%s372 + $0x38] sm:$0xff]
        %v391 = vld [vmem:[%s372 + $0x40] sm:$0xff]
        %v392 = vld [vmem:[%s372 + $0x48] sm:$0xff]
        %v393 = vld [vmem:[%s372 + $0x50] sm:$0xff]
        %v394 = vld [vmem:[%s372 + $0x58] sm:$0xff]
        %v395 = vld [vmem:[%s372 + $0x60] sm:$0xff]
        %v396 = vld [vmem:[%s372 + $0x68] sm:$0xff]
        %v397 = vld [vmem:[%s372 + $0x70] sm:$0xff]
        %v398 = vld [vmem:[%s372 + $0x78] sm:$0xff]
        %v399 = vld [vmem:[%s337] sm:$0xff]
        %v400 = vld [vmem:[%s337 + $0x8] sm:$0xf]
        %v401 = vld [vmem:[%s337 + $0xc] sm:$0xff]
        %v402 = vld [vmem:[%s337 + $0x14] sm:$0xf]
        %v403 = vld [vmem:[%s337 + $0x18] sm:$0xff]
        %v404 = vld [vmem:[%s337 + $0x20] sm:$0xf]
        %v405 = vld [vmem:[%s337 + $0x24] sm:$0xff]
        %v406 = vld [vmem:[%s337 + $0x2c] sm:$0xf]
        %v407 = vld [vmem:[%s337 + $0x30] sm:$0xff]
        %v408 = vld [vmem:[%s337 + $0x38] sm:$0xf]
        %v409 = vld [vmem:[%s337 + $0x3c] sm:$0xff]
        %v410 = vld [vmem:[%s337 + $0x44] sm:$0xf]
        %v411 = vld [vmem:[%s337 + $0x48] sm:$0xff]
        %v412 = vld [vmem:[%s337 + $0x50] sm:$0xf]
        %v413 = vld [vmem:[%s337 + $0x54] sm:$0xff]
        %v414 = vld [vmem:[%s337 + $0x5c] sm:$0xf]
        %v415 = vld [vmem:[%s337 + $0x60] sm:$0xff]
        %v416 = vld [vmem:[%s337 + $0x68] sm:$0xf]
        %v417 = vld [vmem:[%s337 + $0x6c] sm:$0xff]
        %v418 = vld [vmem:[%s337 + $0x74] sm:$0xf]
        %v419 = vld [vmem:[%s337 + $0x78] sm:$0xff]
        %v420 = vld [vmem:[%s337 + $0x80] sm:$0xf]
        %v421 = vld [vmem:[%s337 + $0x84] sm:$0xff]
        %v422 = vld [vmem:[%s337 + $0x8c] sm:$0xf]
        %v423 = vld [vmem:[%s337 + $0x90] sm:$0xff]
        %v424 = vld [vmem:[%s337 + $0x98] sm:$0xf]
        %v425 = vld [vmem:[%s337 + $0x9c] sm:$0xff]
        %v426 = vld [vmem:[%s337 + $0xa4] sm:$0xf]
        %v427 = vld [vmem:[%s337 + $0xa8] sm:$0xff]
        %v428 = vld [vmem:[%s337 + $0xb0] sm:$0xf]
        %v429 = vld [vmem:[%s337 + $0xb4] sm:$0xff]
        %v430 = vld [vmem:[%s337 + $0xbc] sm:$0xf]
        %v431 = vld [vmem:[%s337 + $0xc0] sm:$0xff]
        %v432 = vld [vmem:[%s337 + $0xc8] sm:$0xf]
        %v433 = vld [vmem:[%s337 + $0xcc] sm:$0xff]
        %v434 = vld [vmem:[%s337 + $0xd4] sm:$0xf]
        %v435 = vld [vmem:[%s337 + $0xd8] sm:$0xff]
        %v436 = vld [vmem:[%s337 + $0xe0] sm:$0xf]
        %v437 = vld [vmem:[%s337 + $0xe4] sm:$0xff]
        %v438 = vld [vmem:[%s337 + $0xec] sm:$0xf]
        %v439 = vld [vmem:[%s337 + $0xf0] sm:$0xff]
        %v440 = vld [vmem:[%s337 + $0xf8] sm:$0xf]
        %v441 = vld [vmem:[%s337 + $0xfc] sm:$0xff]
        %v442 = vld [vmem:[%s337 + $0x104] sm:$0xf]
        %v443 = vld [vmem:[%s337 + $0x108] sm:$0xff]
        %v444 = vld [vmem:[%s337 + $0x110] sm:$0xf]
        %v445 = vld [vmem:[%s337 + $0x114] sm:$0xff]
        %v446 = vld [vmem:[%s337 + $0x11c] sm:$0xf]
        %v447 = vld [vmem:[%s337 + $0x120] sm:$0xff]
        %v448 = vld [vmem:[%s337 + $0x128] sm:$0xf]
        %v449 = vld [vmem:[%s337 + $0x12c] sm:$0xff]
        %v450 = vld [vmem:[%s337 + $0x134] sm:$0xf]
        %v451 = vld [vmem:[%s337 + $0x138] sm:$0xff]
        %v452 = vld [vmem:[%s337 + $0x140] sm:$0xf]
        %v453 = vld [vmem:[%s337 + $0x144] sm:$0xff]
        %v454 = vld [vmem:[%s337 + $0x14c] sm:$0xf]
        %v455 = vld [vmem:[%s337 + $0x150] sm:$0xff]
        %v456 = vld [vmem:[%s337 + $0x158] sm:$0xf]
        %v457 = vld [vmem:[%s337 + $0x15c] sm:$0xff]
        %v458 = vld [vmem:[%s337 + $0x164] sm:$0xf]
        %v459 = vld [vmem:[%s337 + $0x168] sm:$0xff]
        %v460 = vld [vmem:[%s337 + $0x170] sm:$0xf]
        %v461 = vld [vmem:[%s337 + $0x174] sm:$0xff]
        %v462 = vld [vmem:[%s337 + $0x17c] sm:$0xf]
        %v463 = vld [vmem:[%s378] sm:$0x7]
        %v465 = vlaneseq
        %v466 = vshrl.u32 %v465, 7
        %v467 = vsub.s32 0, %v466
        %v468 = vrot.slane %v463, %v467
        %v469 = vlaneseq
        %v470 = vshrl.u32 %v469, 7
        %v471 = vsub.s32 1, %v470
        %v472 = vrot.slane %v463, %v471
        %v473 = vlaneseq
        %v474 = vshrl.u32 %v473, 7
        %v475 = vsub.s32 2, %v474
        %v476 = vrot.slane %v463, %v475
        %v496 = vunpack.c.l.b16 %v383
        %v497 = vunpack.c.h.b16 %v383
        %v498 = vunpack.c.l.b16 %v384
        %v499 = vunpack.c.h.b16 %v384
        %v500 = vunpack.c.l.b16 %v385
        %v501 = vunpack.c.h.b16 %v385
        %v502 = vunpack.c.l.b16 %v386
        %v503 = vunpack.c.h.b16 %v386
        %v504 = vunpack.c.l.b16 %v387
        %v505 = vunpack.c.h.b16 %v387
        %v506 = vunpack.c.l.b16 %v388
        %v507 = vunpack.c.h.b16 %v388
        %v508 = vunpack.c.l.b16 %v389
        %v509 = vunpack.c.h.b16 %v389
        %v510 = vunpack.c.l.b16 %v390
        %v511 = vunpack.c.h.b16 %v390
        %v512 = vunpack.c.l.b16 %v391
        %v513 = vunpack.c.h.b16 %v391
        %v514 = vunpack.c.l.b16 %v392
        %v515 = vunpack.c.h.b16 %v392
        %v516 = vunpack.c.l.b16 %v393
        %v517 = vunpack.c.h.b16 %v393
        %v518 = vunpack.c.l.b16 %v394
        %v519 = vunpack.c.h.b16 %v394
        %v520 = vunpack.c.l.b16 %v395
        %v521 = vunpack.c.h.b16 %v395
        %v522 = vunpack.c.l.b16 %v396
        %v523 = vunpack.c.h.b16 %v396
        %v524 = vunpack.c.l.b16 %v397
        %v525 = vunpack.c.h.b16 %v397
        %v526 = vunpack.c.l.b16 %v398
        %v527 = vunpack.c.h.b16 %v398
        %v528 = vpack.c.b16 %v498, %v496
        %v529 = vpack.c.b16 %v499, %v497
        %v530 = vpack.c.b16 %v502, %v500
        %v531 = vpack.c.b16 %v503, %v501
        %v532 = vpack.c.b16 %v506, %v504
        %v533 = vpack.c.b16 %v507, %v505
        %v534 = vpack.c.b16 %v510, %v508
        %v535 = vpack.c.b16 %v511, %v509
        %v536 = vpack.c.b16 %v514, %v512
        %v537 = vpack.c.b16 %v515, %v513
        %v538 = vpack.c.b16 %v518, %v516
        %v539 = vpack.c.b16 %v519, %v517
        %v540 = vpack.c.b16 %v522, %v520
        %v541 = vpack.c.b16 %v523, %v521
        %v542 = vpack.c.b16 %v526, %v524
        %v543 = vpack.c.b16 %v527, %v525
        %v624 = vunpack.c.l.b16 %v399
        %v625 = vunpack.c.h.b16 %v399
        %v626 = vunpack.c.l.b16 %v400
        %v627 = vunpack.c.l.b16 %v401
        %v628 = vunpack.c.h.b16 %v401
        %v629 = vunpack.c.l.b16 %v402
        %v630 = vunpack.c.l.b16 %v403
        %v631 = vunpack.c.h.b16 %v403
        %v632 = vunpack.c.l.b16 %v404
        %v633 = vunpack.c.l.b16 %v405
        %v634 = vunpack.c.h.b16 %v405
        %v635 = vunpack.c.l.b16 %v406
        %v636 = vunpack.c.l.b16 %v407
        %v637 = vunpack.c.h.b16 %v407
        %v638 = vunpack.c.l.b16 %v408
        %v639 = vunpack.c.l.b16 %v409
        %v640 = vunpack.c.h.b16 %v409
        %v641 = vunpack.c.l.b16 %v410
        %v642 = vunpack.c.l.b16 %v411
        %v643 = vunpack.c.h.b16 %v411
        %v644 = vunpack.c.l.b16 %v412
        %v645 = vunpack.c.l.b16 %v413
        %v646 = vunpack.c.h.b16 %v413
        %v647 = vunpack.c.l.b16 %v414
        %v648 = vunpack.c.l.b16 %v415
        %v649 = vunpack.c.h.b16 %v415
        %v650 = vunpack.c.l.b16 %v416
        %v651 = vunpack.c.l.b16 %v417
        %v652 = vunpack.c.h.b16 %v417
        %v653 = vunpack.c.l.b16 %v418
        %v654 = vunpack.c.l.b16 %v419
        %v655 = vunpack.c.h.b16 %v419
        %v656 = vunpack.c.l.b16 %v420
        %v657 = vunpack.c.l.b16 %v421
        %v658 = vunpack.c.h.b16 %v421
        %v659 = vunpack.c.l.b16 %v422
        %v660 = vunpack.c.l.b16 %v423
        %v661 = vunpack.c.h.b16 %v423
        %v662 = vunpack.c.l.b16 %v424
        %v663 = vunpack.c.l.b16 %v425
        %v664 = vunpack.c.h.b16 %v425
        %v665 = vunpack.c.l.b16 %v426
        %v666 = vunpack.c.l.b16 %v427
        %v667 = vunpack.c.h.b16 %v427
        %v668 = vunpack.c.l.b16 %v428
        %v669 = vunpack.c.l.b16 %v429
        %v670 = vunpack.c.h.b16 %v429
        %v671 = vunpack.c.l.b16 %v430
        %v672 = vunpack.c.l.b16 %v431
        %v673 = vunpack.c.h.b16 %v431
        %v674 = vunpack.c.l.b16 %v432
        %v675 = vunpack.c.l.b16 %v433
        %v676 = vunpack.c.h.b16 %v433
        %v677 = vunpack.c.l.b16 %v434
        %v678 = vunpack.c.l.b16 %v435
        %v679 = vunpack.c.h.b16 %v435
        %v680 = vunpack.c.l.b16 %v436
        %v681 = vunpack.c.l.b16 %v437
        %v682 = vunpack.c.h.b16 %v437
        %v683 = vunpack.c.l.b16 %v438
        %v684 = vunpack.c.l.b16 %v439
        %v685 = vunpack.c.h.b16 %v439
        %v686 = vunpack.c.l.b16 %v440
        %v687 = vunpack.c.l.b16 %v441
        %v688 = vunpack.c.h.b16 %v441
        %v689 = vunpack.c.l.b16 %v442
        %v690 = vunpack.c.l.b16 %v443
        %v691 = vunpack.c.h.b16 %v443
        %v692 = vunpack.c.l.b16 %v444
        %v693 = vunpack.c.l.b16 %v445
        %v694 = vunpack.c.h.b16 %v445
        %v695 = vunpack.c.l.b16 %v446
        %v696 = vunpack.c.l.b16 %v447
        %v697 = vunpack.c.h.b16 %v447
        %v698 = vunpack.c.l.b16 %v448
        %v699 = vunpack.c.l.b16 %v449
        %v700 = vunpack.c.h.b16 %v449
        %v701 = vunpack.c.l.b16 %v450
        %v702 = vunpack.c.l.b16 %v451
        %v703 = vunpack.c.h.b16 %v451
        %v704 = vunpack.c.l.b16 %v452
        %v705 = vunpack.c.l.b16 %v453
        %v706 = vunpack.c.h.b16 %v453
        %v707 = vunpack.c.l.b16 %v454
        %v708 = vunpack.c.l.b16 %v455
        %v709 = vunpack.c.h.b16 %v455
        %v710 = vunpack.c.l.b16 %v456
        %v711 = vunpack.c.l.b16 %v457
        %v712 = vunpack.c.h.b16 %v457
        %v713 = vunpack.c.l.b16 %v458
        %v714 = vunpack.c.l.b16 %v459
        %v715 = vunpack.c.h.b16 %v459
        %v716 = vunpack.c.l.b16 %v460
        %v717 = vunpack.c.l.b16 %v461
        %v718 = vunpack.c.h.b16 %v461
        %v719 = vunpack.c.l.b16 %v462
        %v720 = vpack.c.b16 %v627, %v624
        %v721 = vpack.c.b16 %v628, %v625
        %v722 = vpack.c.b16 %v629, %v626
        %v723 = vpack.c.b16 %v633, %v630
        %v724 = vpack.c.b16 %v634, %v631
        %v725 = vpack.c.b16 %v635, %v632
        %v726 = vpack.c.b16 %v639, %v636
        %v727 = vpack.c.b16 %v640, %v637
        %v728 = vpack.c.b16 %v641, %v638
        %v729 = vpack.c.b16 %v645, %v642
        %v730 = vpack.c.b16 %v646, %v643
        %v731 = vpack.c.b16 %v647, %v644
        %v732 = vpack.c.b16 %v651, %v648
        %v733 = vpack.c.b16 %v652, %v649
        %v734 = vpack.c.b16 %v653, %v650
        %v735 = vpack.c.b16 %v657, %v654
        %v736 = vpack.c.b16 %v658, %v655
        %v737 = vpack.c.b16 %v659, %v656
        %v738 = vpack.c.b16 %v663, %v660
        %v739 = vpack.c.b16 %v664, %v661
        %v740 = vpack.c.b16 %v665, %v662
        %v741 = vpack.c.b16 %v669, %v666
        %v742 = vpack.c.b16 %v670, %v667
        %v743 = vpack.c.b16 %v671, %v668
        %v744 = vpack.c.b16 %v675, %v672
        %v745 = vpack.c.b16 %v676, %v673
        %v746 = vpack.c.b16 %v677, %v674
        %v747 = vpack.c.b16 %v681, %v678
        %v748 = vpack.c.b16 %v682, %v679
        %v749 = vpack.c.b16 %v683, %v680
        %v750 = vpack.c.b16 %v687, %v684
        %v751 = vpack.c.b16 %v688, %v685
        %v752 = vpack.c.b16 %v689, %v686
        %v753 = vpack.c.b16 %v693, %v690
        %v754 = vpack.c.b16 %v694, %v691
        %v755 = vpack.c.b16 %v695, %v692
        %v756 = vpack.c.b16 %v699, %v696
        %v757 = vpack.c.b16 %v700, %v697
        %v758 = vpack.c.b16 %v701, %v698
        %v759 = vpack.c.b16 %v705, %v702
        %v760 = vpack.c.b16 %v706, %v703
        %v761 = vpack.c.b16 %v707, %v704
        %v762 = vpack.c.b16 %v711, %v708
        %v763 = vpack.c.b16 %v712, %v709
        %v764 = vpack.c.b16 %v713, %v710
        %v765 = vpack.c.b16 %v717, %v714
        %v766 = vpack.c.b16 %v718, %v715
        %v767 = vpack.c.b16 %v719, %v716
        %816 = vmatprep.subr.bf16.mxu0 %v742
        %817 = vmatpush1.bf16.msra.mxu0 %v741
        %818 = vmatprep.subr.bf16.mxu0 %v739
        %819 = vmatpush1.bf16.msra.mxu0 %v738
        %820 = vmatprep.subr.bf16.mxu0 %v736
        %821 = vmatpush1.bf16.msra.mxu0 %v735
        %822 = vmatprep.subr.bf16.mxu0 %v733
        %823 = vmatpush1.bf16.msra.mxu0 %v732
        %824 = vmatprep.subr.bf16.mxu0 %v730
        %825 = vmatpush1.bf16.msra.mxu0 %v729
        %826 = vmatprep.subr.bf16.mxu0 %v727
        %827 = vmatpush1.bf16.msra.mxu0 %v726
        %828 = vmatprep.subr.bf16.mxu0 %v724
        %829 = vmatpush1.bf16.msra.mxu0 %v723
        %830 = vmatprep.subr.bf16.mxu0 %v721
        %831 = vmatpush1.bf16.msra.mxu0 %v720
        %832 = vmatprep.subr.bf16.mxu0 %v766
        %833 = vmatpush2.bf16.msra.mxu0 %v765
        %834 = vmatprep.subr.bf16.mxu0 %v763
        %835 = vmatpush2.bf16.msra.mxu0 %v762
        %836 = vmatprep.subr.bf16.mxu0 %v760
        %837 = vmatpush2.bf16.msra.mxu0 %v759
        %838 = vmatprep.subr.bf16.mxu0 %v757
        %839 = vmatpush2.bf16.msra.mxu0 %v756
        %840 = vmatprep.subr.bf16.mxu0 %v754
        %841 = vmatpush2.bf16.msra.mxu0 %v753
        %842 = vmatprep.subr.bf16.mxu0 %v751
        %843 = vmatpush2.bf16.msra.mxu0 %v750
        %844 = vmatprep.subr.bf16.mxu0 %v748
        %845 = vmatpush2.bf16.msra.mxu0 %v747
        %846 = vmatprep.subr.bf16.mxu0 %v745
        %847 = vmatpush2.bf16.msra.mxu0 %v744
        %848 = vmatprep.mubr.bf16.mxu0 %v529
        %849 = vmatmul.mubr.bf16.gmra.mxu0 %v528
        %v850 = vpop.f32.mrf.mxu0
        %v851 = vadd.f32 %v468, %v850
        %v852 = vpop.f32.mrf.mxu0
        %v853 = vadd.f32 %v472, %v852
        %v854 = vpop.f32.mrf.mxu0
        %v855 = vadd.f32 %v468, %v854
        %v856 = vpop.f32.mrf.mxu0
        %v857 = vadd.f32 %v472, %v856
        %858 = vmatprep.mubr.bf16.mxu0 %v531
        %859 = vmatmul.mubr.bf16.gmra.mxu0 %v530
        %v860 = vpop.f32.mrf.mxu0
        %v861 = vadd.f32 %v468, %v860
        %v862 = vpop.f32.mrf.mxu0
        %v863 = vadd.f32 %v472, %v862
        %v864 = vpop.f32.mrf.mxu0
        %v865 = vadd.f32 %v468, %v864
        %v866 = vpop.f32.mrf.mxu0
        %v867 = vadd.f32 %v472, %v866
        %868 = vmatprep.mubr.bf16.mxu0 %v533
        %869 = vmatmul.mubr.bf16.gmra.mxu0 %v532
        %v870 = vpop.f32.mrf.mxu0
        %v871 = vadd.f32 %v468, %v870
        %v872 = vpop.f32.mrf.mxu0
        %v873 = vadd.f32 %v472, %v872
        %v874 = vpop.f32.mrf.mxu0
        %v875 = vadd.f32 %v468, %v874
        %v876 = vpop.f32.mrf.mxu0
        %v877 = vadd.f32 %v472, %v876
        %878 = vmatprep.mubr.bf16.mxu0 %v535
        %879 = vmatmul.mubr.bf16.gmra.mxu0 %v534
        %v880 = vpop.f32.mrf.mxu0
        %v881 = vadd.f32 %v468, %v880
        %v882 = vpop.f32.mrf.mxu0
        %v883 = vadd.f32 %v472, %v882
        %v884 = vpop.f32.mrf.mxu0
        %v885 = vadd.f32 %v468, %v884
        %v886 = vpop.f32.mrf.mxu0
        %v887 = vadd.f32 %v472, %v886
        %888 = vmatprep.mubr.bf16.mxu0 %v537
        %889 = vmatmul.mubr.bf16.gmra.mxu0 %v536
        %v890 = vpop.f32.mrf.mxu0
        %v891 = vadd.f32 %v468, %v890
        %v892 = vpop.f32.mrf.mxu0
        %v893 = vadd.f32 %v472, %v892
        %v894 = vpop.f32.mrf.mxu0
        %v895 = vadd.f32 %v468, %v894
        %v896 = vpop.f32.mrf.mxu0
        %v897 = vadd.f32 %v472, %v896
        %898 = vmatprep.mubr.bf16.mxu0 %v539
        %899 = vmatmul.mubr.bf16.gmra.mxu0 %v538
        %v900 = vpop.f32.mrf.mxu0
        %v901 = vadd.f32 %v468, %v900
        %v902 = vpop.f32.mrf.mxu0
        %v903 = vadd.f32 %v472, %v902
        %v904 = vpop.f32.mrf.mxu0
        %v905 = vadd.f32 %v468, %v904
        %v906 = vpop.f32.mrf.mxu0
        %v907 = vadd.f32 %v472, %v906
        %908 = vmatprep.mubr.bf16.mxu0 %v541
        %909 = vmatmul.mubr.bf16.gmra.mxu0 %v540
        %v910 = vpop.f32.mrf.mxu0
        %v911 = vadd.f32 %v468, %v910
        %v912 = vpop.f32.mrf.mxu0
        %v913 = vadd.f32 %v472, %v912
        %v914 = vpop.f32.mrf.mxu0
        %v915 = vadd.f32 %v468, %v914
        %v916 = vpop.f32.mrf.mxu0
        %v917 = vadd.f32 %v472, %v916
        %918 = vmatprep.mubr.bf16.mxu0 %v543
        %919 = vmatmul.mubr.bf16.gmra.mxu0 %v542
        %v920 = vpop.f32.mrf.mxu0
        %v921 = vadd.f32 %v468, %v920
        %v922 = vpop.f32.mrf.mxu0
        %v923 = vadd.f32 %v472, %v922
        %v924 = vpop.f32.mrf.mxu0
        %v925 = vadd.f32 %v468, %v924
        %v926 = vpop.f32.mrf.mxu0
        %v927 = vadd.f32 %v472, %v926
        %928 = vdwg.mxu0
        %929 = vmatprep.subr.bf16.mxu0 0
        %930 = vmatpush1.bf16.msra.mxu0 %v743
        %931 = vmatprep.subr.bf16.mxu0 0
        %932 = vmatpush1.bf16.msra.mxu0 %v740
        %933 = vmatprep.subr.bf16.mxu0 0
        %934 = vmatpush1.bf16.msra.mxu0 %v737
        %935 = vmatprep.subr.bf16.mxu0 0
        %936 = vmatpush1.bf16.msra.mxu0 %v734
        %937 = vmatprep.subr.bf16.mxu0 0
        %938 = vmatpush1.bf16.msra.mxu0 %v731
        %939 = vmatprep.subr.bf16.mxu0 0
        %940 = vmatpush1.bf16.msra.mxu0 %v728
        %941 = vmatprep.subr.bf16.mxu0 0
        %942 = vmatpush1.bf16.msra.mxu0 %v725
        %943 = vmatprep.subr.bf16.mxu0 0
        %944 = vmatpush1.bf16.msra.mxu0 %v722
        %945 = vmatprep.subr.bf16.mxu0 0
        %946 = vmatpush2.bf16.msra.mxu0 %v767
        %947 = vmatprep.subr.bf16.mxu0 0
        %948 = vmatpush2.bf16.msra.mxu0 %v764
        %949 = vmatprep.subr.bf16.mxu0 0
        %950 = vmatpush2.bf16.msra.mxu0 %v761
        %951 = vmatprep.subr.bf16.mxu0 0
        %952 = vmatpush2.bf16.msra.mxu0 %v758
        %953 = vmatprep.subr.bf16.mxu0 0
        %954 = vmatpush2.bf16.msra.mxu0 %v755
        %955 = vmatprep.subr.bf16.mxu0 0
        %956 = vmatpush2.bf16.msra.mxu0 %v752
        %957 = vmatprep.subr.bf16.mxu0 0
        %958 = vmatpush2.bf16.msra.mxu0 %v749
        %959 = vmatprep.subr.bf16.mxu0 0
        %960 = vmatpush2.bf16.msra.mxu0 %v746
        %961 = vmatprep.mubr.bf16.mxu0 %v529
        %962 = vmatmul.mubr.bf16.gmra.mxu0 %v528
        %v963 = vpop.f32.mrf.mxu0
        %v964 = vadd.f32 %v476, %v963
        %v965 = vpop.f32.mrf.mxu0
        %v966 = vpop.f32.mrf.mxu0
        %v967 = vadd.f32 %v476, %v966
        %v968 = vpop.f32.mrf.mxu0
        %969 = vmatprep.mubr.bf16.mxu0 %v531
        %970 = vmatmul.mubr.bf16.gmra.mxu0 %v530
        %v971 = vpop.f32.mrf.mxu0
        %v972 = vadd.f32 %v476, %v971
        %v973 = vpop.f32.mrf.mxu0
        %v974 = vpop.f32.mrf.mxu0
        %v975 = vadd.f32 %v476, %v974
        %v976 = vpop.f32.mrf.mxu0
        %977 = vmatprep.mubr.bf16.mxu0 %v533
        %978 = vmatmul.mubr.bf16.gmra.mxu0 %v532
        %v979 = vpop.f32.mrf.mxu0
        %v980 = vadd.f32 %v476, %v979
        %v981 = vpop.f32.mrf.mxu0
        %v982 = vpop.f32.mrf.mxu0
        %v983 = vadd.f32 %v476, %v982
        %v984 = vpop.f32.mrf.mxu0
        %985 = vmatprep.mubr.bf16.mxu0 %v535
        %986 = vmatmul.mubr.bf16.gmra.mxu0 %v534
        %v987 = vpop.f32.mrf.mxu0
        %v988 = vadd.f32 %v476, %v987
        %v989 = vpop.f32.mrf.mxu0
        %v990 = vpop.f32.mrf.mxu0
        %v991 = vadd.f32 %v476, %v990
        %v992 = vpop.f32.mrf.mxu0
        %993 = vmatprep.mubr.bf16.mxu0 %v537
        %994 = vmatmul.mubr.bf16.gmra.mxu0 %v536
        %v995 = vpop.f32.mrf.mxu0
        %v996 = vadd.f32 %v476, %v995
        %v997 = vpop.f32.mrf.mxu0
        %v998 = vpop.f32.mrf.mxu0
        %v999 = vadd.f32 %v476, %v998
        %v1000 = vpop.f32.mrf.mxu0
        %1001 = vmatprep.mubr.bf16.mxu0 %v539
        %1002 = vmatmul.mubr.bf16.gmra.mxu0 %v538
        %v1003 = vpop.f32.mrf.mxu0
        %v1004 = vadd.f32 %v476, %v1003
        %v1005 = vpop.f32.mrf.mxu0
        %v1006 = vpop.f32.mrf.mxu0
        %v1007 = vadd.f32 %v476, %v1006
        %v1008 = vpop.f32.mrf.mxu0
        %1009 = vmatprep.mubr.bf16.mxu0 %v541
        %1010 = vmatmul.mubr.bf16.gmra.mxu0 %v540
        %v1011 = vpop.f32.mrf.mxu0
        %v1012 = vadd.f32 %v476, %v1011
        %v1013 = vpop.f32.mrf.mxu0
        %v1014 = vpop.f32.mrf.mxu0
        %v1015 = vadd.f32 %v476, %v1014
        %v1016 = vpop.f32.mrf.mxu0
        %1017 = vmatprep.mubr.bf16.mxu0 %v543
        %1018 = vmatmul.mubr.bf16.gmra.mxu0 %v542
        %v1019 = vpop.f32.mrf.mxu0
        %v1020 = vadd.f32 %v476, %v1019
        %v1021 = vpop.f32.mrf.mxu0
        %v1022 = vpop.f32.mrf.mxu0
        %v1023 = vadd.f32 %v476, %v1022
        %v1024 = vpop.f32.mrf.mxu0
        %1025 = vdwg.mxu0
        %v1026 = vpack.c.bf16 %v855, %v851
        %v1027 = vpack.c.bf16 %v857, %v853
        %v1028 = vpack.c.bf16 %v967, %v964
        %v1029 = vpack.c.bf16 %v865, %v861
        %v1030 = vpack.c.bf16 %v867, %v863
        %v1031 = vpack.c.bf16 %v975, %v972
        %v1032 = vpack.c.bf16 %v875, %v871
        %v1033 = vpack.c.bf16 %v877, %v873
        %v1034 = vpack.c.bf16 %v983, %v980
        %v1035 = vpack.c.bf16 %v885, %v881
        %v1036 = vpack.c.bf16 %v887, %v883
        %v1037 = vpack.c.bf16 %v991, %v988
        %v1038 = vpack.c.bf16 %v895, %v891
        %v1039 = vpack.c.bf16 %v897, %v893
        %v1040 = vpack.c.bf16 %v999, %v996
        %v1041 = vpack.c.bf16 %v905, %v901
        %v1042 = vpack.c.bf16 %v907, %v903
        %v1043 = vpack.c.bf16 %v1007, %v1004
        %v1044 = vpack.c.bf16 %v915, %v911
        %v1045 = vpack.c.bf16 %v917, %v913
        %v1046 = vpack.c.bf16 %v1015, %v1012
        %v1047 = vpack.c.bf16 %v925, %v921
        %v1048 = vpack.c.bf16 %v927, %v923
        %v1049 = vpack.c.bf16 %v1023, %v1020
        %v1074 = vunpack.c.l.b16 %v1026
        %v1075 = vunpack.c.l.b16 %v1027
        %v1076 = vunpack.c.l.b16 %v1028
        %v1077 = vunpack.c.h.b16 %v1026
        %v1078 = vunpack.c.h.b16 %v1027
        %v1079 = vunpack.c.h.b16 %v1028
        %v1080 = vunpack.c.l.b16 %v1029
        %v1081 = vunpack.c.l.b16 %v1030
        %v1082 = vunpack.c.l.b16 %v1031
        %v1083 = vunpack.c.h.b16 %v1029
        %v1084 = vunpack.c.h.b16 %v1030
        %v1085 = vunpack.c.h.b16 %v1031
        %v1086 = vunpack.c.l.b16 %v1032
        %v1087 = vunpack.c.l.b16 %v1033
        %v1088 = vunpack.c.l.b16 %v1034
        %v1089 = vunpack.c.h.b16 %v1032
        %v1090 = vunpack.c.h.b16 %v1033
        %v1091 = vunpack.c.h.b16 %v1034
        %v1092 = vunpack.c.l.b16 %v1035
        %v1093 = vunpack.c.l.b16 %v1036
        %v1094 = vunpack.c.l.b16 %v1037
        %v1095 = vunpack.c.h.b16 %v1035
        %v1096 = vunpack.c.h.b16 %v1036
        %v1097 = vunpack.c.h.b16 %v1037
        %v1098 = vunpack.c.l.b16 %v1038
        %v1099 = vunpack.c.l.b16 %v1039
        %v1100 = vunpack.c.l.b16 %v1040
        %v1101 = vunpack.c.h.b16 %v1038
        %v1102 = vunpack.c.h.b16 %v1039
        %v1103 = vunpack.c.h.b16 %v1040
        %v1104 = vunpack.c.l.b16 %v1041
        %v1105 = vunpack.c.l.b16 %v1042
        %v1106 = vunpack.c.l.b16 %v1043
        %v1107 = vunpack.c.h.b16 %v1041
        %v1108 = vunpack.c.h.b16 %v1042
        %v1109 = vunpack.c.h.b16 %v1043
        %v1110 = vunpack.c.l.b16 %v1044
        %v1111 = vunpack.c.l.b16 %v1045
        %v1112 = vunpack.c.l.b16 %v1046
        %v1113 = vunpack.c.h.b16 %v1044
        %v1114 = vunpack.c.h.b16 %v1045
        %v1115 = vunpack.c.h.b16 %v1046
        %v1116 = vunpack.c.l.b16 %v1047
        %v1117 = vunpack.c.l.b16 %v1048
        %v1118 = vunpack.c.l.b16 %v1049
        %v1119 = vunpack.c.h.b16 %v1047
        %v1120 = vunpack.c.h.b16 %v1048
        %v1121 = vunpack.c.h.b16 %v1049
        %v1122 = vpack.c.b16 %v1075, %v1074
        %v1123 = vpack.c.b16 %v1076, %v1076
        %v1124 = vpack.c.b16 %v1078, %v1077
        %v1125 = vpack.c.b16 %v1079, %v1079
        %v1126 = vpack.c.b16 %v1081, %v1080
        %v1127 = vpack.c.b16 %v1082, %v1082
        %v1128 = vpack.c.b16 %v1084, %v1083
        %v1129 = vpack.c.b16 %v1085, %v1085
        %v1130 = vpack.c.b16 %v1087, %v1086
        %v1131 = vpack.c.b16 %v1088, %v1088
        %v1132 = vpack.c.b16 %v1090, %v1089
        %v1133 = vpack.c.b16 %v1091, %v1091
        %v1134 = vpack.c.b16 %v1093, %v1092
        %v1135 = vpack.c.b16 %v1094, %v1094
        %v1136 = vpack.c.b16 %v1096, %v1095
        %v1137 = vpack.c.b16 %v1097, %v1097
        %v1138 = vpack.c.b16 %v1099, %v1098
        %v1139 = vpack.c.b16 %v1100, %v1100
        %v1140 = vpack.c.b16 %v1102, %v1101
        %v1141 = vpack.c.b16 %v1103, %v1103
        %v1142 = vpack.c.b16 %v1105, %v1104
        %v1143 = vpack.c.b16 %v1106, %v1106
        %v1144 = vpack.c.b16 %v1108, %v1107
        %v1145 = vpack.c.b16 %v1109, %v1109
        %v1146 = vpack.c.b16 %v1111, %v1110
        %v1147 = vpack.c.b16 %v1112, %v1112
        %v1148 = vpack.c.b16 %v1114, %v1113
        %v1149 = vpack.c.b16 %v1115, %v1115
        %v1150 = vpack.c.b16 %v1117, %v1116
        %v1151 = vpack.c.b16 %v1118, %v1118
        %v1152 = vpack.c.b16 %v1120, %v1119
        %v1153 = vpack.c.b16 %v1121, %v1121
        %1186 = vst [vmem:[%s366] sm:$0xff] %v1122
        %1187 = vst [vmem:[%s366 + $0x8] sm:$0xf] %v1123
        %1188 = vst [vmem:[%s366 + $0xc] sm:$0xff] %v1124
        %1189 = vst [vmem:[%s366 + $0x14] sm:$0xf] %v1125
        %1190 = vst [vmem:[%s366 + $0x18] sm:$0xff] %v1126
        %1191 = vst [vmem:[%s366 + $0x20] sm:$0xf] %v1127
        %1192 = vst [vmem:[%s366 + $0x24] sm:$0xff] %v1128
        %1193 = vst [vmem:[%s366 + $0x2c] sm:$0xf] %v1129
        %1194 = vst [vmem:[%s366 + $0x30] sm:$0xff] %v1130
        %1195 = vst [vmem:[%s366 + $0x38] sm:$0xf] %v1131
        %1196 = vst [vmem:[%s366 + $0x3c] sm:$0xff] %v1132
        %1197 = vst [vmem:[%s366 + $0x44] sm:$0xf] %v1133
        %1198 = vst [vmem:[%s366 + $0x48] sm:$0xff] %v1134
        %1199 = vst [vmem:[%s366 + $0x50] sm:$0xf] %v1135
        %1200 = vst [vmem:[%s366 + $0x54] sm:$0xff] %v1136
        %1201 = vst [vmem:[%s366 + $0x5c] sm:$0xf] %v1137
        %1202 = vst [vmem:[%s366 + $0x60] sm:$0xff] %v1138
        %1203 = vst [vmem:[%s366 + $0x68] sm:$0xf] %v1139
        %1204 = vst [vmem:[%s366 + $0x6c] sm:$0xff] %v1140
        %1205 = vst [vmem:[%s366 + $0x74] sm:$0xf] %v1141
        %1206 = vst [vmem:[%s366 + $0x78] sm:$0xff] %v1142
        %1207 = vst [vmem:[%s366 + $0x80] sm:$0xf] %v1143
        %1208 = vst [vmem:[%s366 + $0x84] sm:$0xff] %v1144
        %1209 = vst [vmem:[%s366 + $0x8c] sm:$0xf] %v1145
        %1210 = vst [vmem:[%s366 + $0x90] sm:$0xff] %v1146
        %1211 = vst [vmem:[%s366 + $0x98] sm:$0xf] %v1147
        %1212 = vst [vmem:[%s366 + $0x9c] sm:$0xff] %v1148
        %1213 = vst [vmem:[%s366 + $0xa4] sm:$0xf] %v1149
        %1214 = vst [vmem:[%s366 + $0xa8] sm:$0xff] %v1150
        %1215 = vst [vmem:[%s366 + $0xb0] sm:$0xf] %v1151
        %1216 = vst [vmem:[%s366 + $0xb4] sm:$0xff] %v1152
        %1217 = vst [vmem:[%s366 + $0xbc] sm:$0xf] %v1153
        %s1218 = sand.u32 %s114, 1
        %s1219 = sand.u32 %s114, 1
        %s1220 = smul.addr %s1219, 192
        %s1221 = scalar_lea.vmem [#allocation3], %s1220
        // Predicated region
        $region59: #{albef_forward.11} parent=53 // pred_check
          %p1222 = pneg %p124
        $region60: #{albef_forward.11} parent=53 // pred_check_branch
          %1224 = sbr.rel (%p1222) target = $region62
        $region61: #{albef_forward.11} parent=53 // pred_region
          %s1225 = smul.u32 16, %s18
          %s1226 = smul.u32 3, %s19
          %s1227 = smul.addr %s1225, 6
          %s1228 = sadd.s32 %s1226, %s1227
          %s1229 = smul.addr %s1228, 4
          %s1230 = scalar_lea.vmem %s3, %s1229
          // Predicated region
          $region63: #{albef_forward.11} parent=61 // pred_check
            _
          $region64: #{albef_forward.11} parent=61 // pred_check_branch
            %1232 = sbr.rel (0) target = $region66
          $region65: #{albef_forward.11} parent=61 // pred_region
            // Predicated region
            $region67: #{albef_forward.11} parent=65 // pred_check
              _
            $region68: #{albef_forward.11} parent=65 // pred_check_branch
              %1234 = sbr.rel (0) target = $region70
            $region69: #{albef_forward.11} parent=65 // pred_region
              %s1235 = scalar_lea.vmem %s1221, 8 [#allocation3]
              %s1236 = scalar_lea.vmem %s1230, 8
              loop: start=0, step=1, limit=1
              $region71: #{albef_forward.11} parent=69 // loop_pre_header
                _
              $region72: #{albef_forward.11} parent=69 // loop_header
                %s1238 = sphi 0, %s1242
                %p1239 = scmp.ge.s32.totalorder %s1238, 1
                %s1243 = sphi %s1221, %s1221
                %s1244 = sphi %s1230, %s1230
              $region73: #{albef_forward.11} parent=69 // loop_header_branch
                %1241 = sbr.rel (%p1239) target = $region77
              $region74: #{albef_forward.11} parent=69 // loop_body
                %v1245 = vld [vmem:[%s1243] sm:$0xff]
                %1246 = vst [vmem:[%s1244] sm:$0xff] %v1245
                %v1247 = vld [vmem:[%s1243 + $0xc] sm:$0xff]
                %1248 = vst [vmem:[%s1244 + $0x18] sm:$0xff] %v1247
                %v1249 = vld [vmem:[%s1243 + $0x18] sm:$0xff]
                %1250 = vst [vmem:[%s1244 + $0x30] sm:$0xff] %v1249
                %v1251 = vld [vmem:[%s1243 + $0x24] sm:$0xff]
                %1252 = vst [vmem:[%s1244 + $0x48] sm:$0xff] %v1251
                %v1253 = vld [vmem:[%s1243 + $0x30] sm:$0xff]
                %1254 = vst [vmem:[%s1244 + $0x60] sm:$0xff] %v1253
                %v1255 = vld [vmem:[%s1243 + $0x3c] sm:$0xff]
                %1256 = vst [vmem:[%s1244 + $0x78] sm:$0xff] %v1255
                %v1257 = vld [vmem:[%s1243 + $0x48] sm:$0xff]
                %1258 = vst [vmem:[%s1244 + $0x90] sm:$0xff] %v1257
                %v1259 = vld [vmem:[%s1243 + $0x54] sm:$0xff]
                %1260 = vst [vmem:[%s1244 + $0xa8] sm:$0xff] %v1259
                %v1261 = vld [vmem:[%s1243 + $0x60] sm:$0xff]
                %1262 = vst [vmem:[%s1244 + $0xc0] sm:$0xff] %v1261
                %v1263 = vld [vmem:[%s1243 + $0x6c] sm:$0xff]
                %1264 = vst [vmem:[%s1244 + $0xd8] sm:$0xff] %v1263
                %v1265 = vld [vmem:[%s1243 + $0x78] sm:$0xff]
                %1266 = vst [vmem:[%s1244 + $0xf0] sm:$0xff] %v1265
                %v1267 = vld [vmem:[%s1243 + $0x84] sm:$0xff]
                %1268 = vst [vmem:[%s1244 + $0x108] sm:$0xff] %v1267
                %v1269 = vld [vmem:[%s1243 + $0x90] sm:$0xff]
                %1270 = vst [vmem:[%s1244 + $0x120] sm:$0xff] %v1269
                %v1271 = vld [vmem:[%s1243 + $0x9c] sm:$0xff]
                %1272 = vst [vmem:[%s1244 + $0x138] sm:$0xff] %v1271
                %v1273 = vld [vmem:[%s1243 + $0xa8] sm:$0xff]
                %1274 = vst [vmem:[%s1244 + $0x150] sm:$0xff] %v1273
                %v1275 = vld [vmem:[%s1243 + $0xb4] sm:$0xff]
                %1276 = vst [vmem:[%s1244 + $0x168] sm:$0xff] %v1275
              $region75: #{albef_forward.11} parent=69 // loop_footer
                %s1242 = sadd.s32 1, %s1238
              $region76: #{albef_forward.11} parent=69 // loop_footer_branch
                %1237 = sbr.rel target = $region72
              $region77: #{albef_forward.11} parent=69 // loop_exit
                _
              %s1278 = ssub.s32 16, 1
              loop: start=0, step=1, limit=1
              $region78: #{albef_forward.11} parent=69 // loop_pre_header
                _
              $region79: #{albef_forward.11} parent=69 // loop_header
                %s1280 = sphi 0, %s1284
                %p1281 = scmp.ge.s32.totalorder %s1280, 1
                %s1285 = sphi %s1235, %s1235
                %s1286 = sphi %s1236, %s1236
              $region80: #{albef_forward.11} parent=69 // loop_header_branch
                %1283 = sbr.rel (%p1281) target = $region84
              $region81: #{albef_forward.11} parent=69 // loop_body
                %v1287 = vld [vmem:[%s1285] sm:%s1278]
                %1288 = vst [vmem:[%s1286] sm:%s1278] %v1287
                %v1289 = vld [vmem:[%s1285 + $0xc] sm:%s1278]
                %1290 = vst [vmem:[%s1286 + $0x18] sm:%s1278] %v1289
                %v1291 = vld [vmem:[%s1285 + $0x18] sm:%s1278]
                %1292 = vst [vmem:[%s1286 + $0x30] sm:%s1278] %v1291
                %v1293 = vld [vmem:[%s1285 + $0x24] sm:%s1278]
                %1294 = vst [vmem:[%s1286 + $0x48] sm:%s1278] %v1293
                %v1295 = vld [vmem:[%s1285 + $0x30] sm:%s1278]
                %1296 = vst [vmem:[%s1286 + $0x60] sm:%s1278] %v1295
                %v1297 = vld [vmem:[%s1285 + $0x3c] sm:%s1278]
                %1298 = vst [vmem:[%s1286 + $0x78] sm:%s1278] %v1297
                %v1299 = vld [vmem:[%s1285 + $0x48] sm:%s1278]
                %1300 = vst [vmem:[%s1286 + $0x90] sm:%s1278] %v1299
                %v1301 = vld [vmem:[%s1285 + $0x54] sm:%s1278]
                %1302 = vst [vmem:[%s1286 + $0xa8] sm:%s1278] %v1301
                %v1303 = vld [vmem:[%s1285 + $0x60] sm:%s1278]
                %1304 = vst [vmem:[%s1286 + $0xc0] sm:%s1278] %v1303
                %v1305 = vld [vmem:[%s1285 + $0x6c] sm:%s1278]
                %1306 = vst [vmem:[%s1286 + $0xd8] sm:%s1278] %v1305
                %v1307 = vld [vmem:[%s1285 + $0x78] sm:%s1278]
                %1308 = vst [vmem:[%s1286 + $0xf0] sm:%s1278] %v1307
                %v1309 = vld [vmem:[%s1285 + $0x84] sm:%s1278]
                %1310 = vst [vmem:[%s1286 + $0x108] sm:%s1278] %v1309
                %v1311 = vld [vmem:[%s1285 + $0x90] sm:%s1278]
                %1312 = vst [vmem:[%s1286 + $0x120] sm:%s1278] %v1311
                %v1313 = vld [vmem:[%s1285 + $0x9c] sm:%s1278]
                %1314 = vst [vmem:[%s1286 + $0x138] sm:%s1278] %v1313
                %v1315 = vld [vmem:[%s1285 + $0xa8] sm:%s1278]
                %1316 = vst [vmem:[%s1286 + $0x150] sm:%s1278] %v1315
                %v1317 = vld [vmem:[%s1285 + $0xb4] sm:%s1278]
                %1318 = vst [vmem:[%s1286 + $0x168] sm:%s1278] %v1317
              $region82: #{albef_forward.11} parent=69 // loop_footer
                %s1284 = sadd.s32 1, %s1280
              $region83: #{albef_forward.11} parent=69 // loop_footer_branch
                %1279 = sbr.rel target = $region79
              $region84: #{albef_forward.11} parent=69 // loop_exit
                _
            $region70: #{albef_forward.11} parent=65 // pred_fallthru
              _
          $region66: #{albef_forward.11} parent=61 // pred_fallthru
            _
          %1319 = vnop
        $region62: #{albef_forward.11} parent=53 // pred_fallthru
          _
      $region54: #{albef_forward.11} parent=5 // pred_fallthru
        _
      %p1320 = scmp.le.s32.totalorder 2, %s9
      // Predicated region
      $region85: #{albef_forward.11} parent=5 // pred_check
        %p1321 = pneg %p1320
      $region86: #{albef_forward.11} parent=5 // pred_check_branch
        %1323 = sbr.rel (%p1321) target = $region88
      $region87: #{albef_forward.11} parent=5 // pred_region
        %s1324 = ssub.s32 %s9, 2
        // Predicated region
        $region89: #{albef_forward.11} parent=87 // pred_check
          %p1325 = pneg %p130
        $region90: #{albef_forward.11} parent=87 // pred_check_branch
          %1327 = sbr.rel (%p1325) target = $region92
        $region91: #{albef_forward.11} parent=87 // pred_region
          %s1328 = sand.u32 %s115, 1
          %s1329 = sand.u32 %s115, 1
          %s1330 = smul.addr %s1329, 192
          %s1331 = scalar_lea.vmem [#allocation3], %s1330
        $region92: #{albef_forward.11} parent=87 // pred_fallthru
          _
      $region88: #{albef_forward.11} parent=5 // pred_fallthru
        _
    $region6: #{albef_forward.11} parent=1 // loop_footer
      %s13 = sadd.s32 1, %s9
    $region7: #{albef_forward.11} parent=1 // loop_footer_branch
      %8 = sbr.rel target = $region3
    $region8: #{albef_forward.11} parent=1 // loop_exit
      _

// kernel: albef_forward.12
$region0: #{albef_forward.12}
  #allocation0 [shape = 'u32[]', space=smem, size = 0x4, offset = 0x4, fixed_abs, tag = 'smem constant byte address 0x4 - core index']
  #allocation1 [shape = 'u32[144,128]{1,0:T(1,128)}', space=vmem, size = 0x12000, scoped, tag = 'internal scratch']
  %s0 = inlined_call_operand.vmem [shape: bf16[6,64,768], index: 0, kind: input, shape index: {}]
  %s1 = inlined_call_operand.vmem [shape: f32[6,1,64], index: 1, kind: input, shape index: {}]
  %s2 = inlined_call_operand.vmem [shape: bf16[6,64,256], index: 2, kind: output, shape index: {}]
  %s3 = sld [smem:[#allocation0]]
  $region41: #{albef_forward.12} parent=0
    _
  %s5 = ssub.s32 1, %s3
  %s6 = scalar_select 0, %s5, %s3
  loop: start=0, step=1, limit=8
  $region2: #{albef_forward.12} parent=0 // loop_pre_header
    _
  $region3: #{albef_forward.12} parent=0 // loop_header
    %s8 = sphi 0, %s12
    %p9 = scmp.ge.s32.totalorder %s8, 8
    %s18 = sphi 0, %s20
    %s21 = sphi 0, %s18
    %s22 = sphi 0, %s21
    %s38 = sphi 0, %s22
    %s44 = sphi 0, %s46
    %s47 = sphi 0, %s44
    %s48 = sphi 0, %s47
    %s64 = sphi 0, %s48
    %s70 = sphi 0, %s72
    %s73 = sphi 0, %s70
    %s74 = sphi 0, %s73
    %s90 = sphi 0, %s74
  $region4: #{albef_forward.12} parent=0 // loop_header_branch
    %11 = sbr.rel (%p9) target = $region8
  $region5: #{albef_forward.12} parent=0 // loop_body
    %s13 = ssub.s32 %s8, 1
    %s14 = ssub.s32 %s8, 2
    %s15 = sadd.s32 %s8, 1
    %s16 = ssub.s32 %s8, %s15
    %p17 = scmp.eq.s32.totalorder %s16, 0
    %s19 = sadd.s32 %s18, 1
    %s20 = scalar_select %p17, %s18, %s19
    %p23 = pneg %p17
    %p24 = scmp.eq.s32.totalorder %s8, 5
    %p25 = por %p23, %p24
    %p26 = scmp.ne.s32.totalorder %s18, %s21
    %p27 = scmp.eq.s32.totalorder %s8, 0
    %p28 = por %p26, %p27
    %p29 = scmp.ne.s32.totalorder %s18, %s21
    %p30 = scmp.eq.s32.totalorder %s13, 5
    %p31 = por %p29, %p30
    %p32 = scmp.ne.s32.totalorder %s21, %s22
    %p33 = scmp.eq.s32.totalorder %s13, 0
    %p34 = por %p32, %p33
    %p35 = scmp.ne.s32.totalorder %s21, %s22
    %p36 = scmp.eq.s32.totalorder %s14, 5
    %p37 = por %p35, %p36
    %p39 = scmp.ne.s32.totalorder %s22, %s38
    %p40 = scmp.eq.s32.totalorder %s14, 0
    %p41 = por %p39, %p40
    %s42 = ssub.s32 %s8, %s15
    %p43 = scmp.eq.s32.totalorder %s42, 0
    %s45 = sadd.s32 %s44, 1
    %s46 = scalar_select %p43, %s44, %s45
    %p49 = pneg %p43
    %p50 = scmp.eq.s32.totalorder %s8, 5
    %p51 = por %p49, %p50
    %p52 = scmp.ne.s32.totalorder %s44, %s47
    %p53 = scmp.eq.s32.totalorder %s8, 0
    %p54 = por %p52, %p53
    %p55 = scmp.ne.s32.totalorder %s44, %s47
    %p56 = scmp.eq.s32.totalorder %s13, 5
    %p57 = por %p55, %p56
    %p58 = scmp.ne.s32.totalorder %s47, %s48
    %p59 = scmp.eq.s32.totalorder %s13, 0
    %p60 = por %p58, %p59
    %p61 = scmp.ne.s32.totalorder %s47, %s48
    %p62 = scmp.eq.s32.totalorder %s14, 5
    %p63 = por %p61, %p62
    %p65 = scmp.ne.s32.totalorder %s48, %s64
    %p66 = scmp.eq.s32.totalorder %s14, 0
    %p67 = por %p65, %p66
    %s68 = ssub.s32 %s8, %s15
    %p69 = scmp.eq.s32.totalorder %s68, 0
    %s71 = sadd.s32 %s70, 1
    %s72 = scalar_select %p69, %s70, %s71
    %p75 = pneg %p69
    %p76 = scmp.eq.s32.totalorder %s8, 5
    %p77 = por %p75, %p76
    %p78 = scmp.ne.s32.totalorder %s70, %s73
    %p79 = scmp.eq.s32.totalorder %s8, 0
    %p80 = por %p78, %p79
    %p81 = scmp.ne.s32.totalorder %s70, %s73
    %p82 = scmp.eq.s32.totalorder %s13, 5
    %p83 = por %p81, %p82
    %p84 = scmp.ne.s32.totalorder %s73, %s74
    %p85 = scmp.eq.s32.totalorder %s13, 0
    %p86 = por %p84, %p85
    %p87 = scmp.ne.s32.totalorder %s73, %s74
    %p88 = scmp.eq.s32.totalorder %s14, 5
    %p89 = por %p87, %p88
    %p91 = scmp.ne.s32.totalorder %s74, %s90
    %p92 = scmp.eq.s32.totalorder %s14, 0
    %p93 = por %p91, %p92
    %p94 = scmp.le.s32.totalorder 1, %s8
    %p95 = scmp.lt.s32.totalorder %s8, 7
    %p96 = pnand %p94, %p95
    %p97 = pneg %p96
    // Predicated region
    $region9: #{albef_forward.12} parent=5 // pred_check
      _
    $region10: #{albef_forward.12} parent=5 // pred_check_branch
      %99 = sbr.rel (%p96) target = $region12
    $region11: #{albef_forward.12} parent=5 // pred_region
      %s100 = ssub.s32 %s8, 1
    $region12: #{albef_forward.12} parent=5 // pred_fallthru
      _
    %p101 = scmp.lt.s32.totalorder %s8, 6
    // Predicated region
    $region13: #{albef_forward.12} parent=5 // pred_check
      %p102 = pneg %p101
    $region14: #{albef_forward.12} parent=5 // pred_check_branch
      %104 = sbr.rel (%p102) target = $region16
    $region15: #{albef_forward.12} parent=5 // pred_region
      // Predicated region
      $region17: #{albef_forward.12} parent=15 // pred_check
        %p105 = pneg %p28
      $region18: #{albef_forward.12} parent=15 // pred_check_branch
        %107 = sbr.rel (%p105) target = $region20
      $region19: #{albef_forward.12} parent=15 // pred_region
        %p108 = scmp.lt.s32.totalorder %s8, 5
        %s109 = scalar_select %p108, %s8, 5
        %s110 = smul.addr %s109, 48
        %s111 = smul.addr %s110, 4
        %s112 = scalar_lea.vmem %s0, %s111
      $region20: #{albef_forward.12} parent=15 // pred_fallthru
        _
      // Predicated region
      $region21: #{albef_forward.12} parent=15 // pred_check
        %p113 = pneg %p54
      $region22: #{albef_forward.12} parent=15 // pred_check_branch
        %115 = sbr.rel (%p113) target = $region24
      $region23: #{albef_forward.12} parent=15 // pred_region
        %p116 = scmp.lt.s32.totalorder %s8, 5
        %s117 = scalar_select %p116, %s8, 5
        %s118 = scalar_lea.vmem %s1, %s117
      $region24: #{albef_forward.12} parent=15 // pred_fallthru
        _
    $region16: #{albef_forward.12} parent=5 // pred_fallthru
      _
    %p119 = scmp.le.s32.totalorder 1, %s8
    %p120 = scmp.lt.s32.totalorder %s8, 7
    %p121 = pnand %p119, %p120
    %p122 = pneg %p121
    // Predicated region
    $region25: #{albef_forward.12} parent=5 // pred_check
      _
    $region26: #{albef_forward.12} parent=5 // pred_check_branch
      %124 = sbr.rel (%p121) target = $region28
    $region27: #{albef_forward.12} parent=5 // pred_region
      %s125 = ssub.s32 %s8, 1
      %p126 = scmp.lt.s32.totalorder %s13, 5
      %s127 = scalar_select %p126, %s13, 5
      %s128 = smul.addr %s127, 48
      %s129 = smul.addr %s128, 4
      %s130 = scalar_lea.vmem %s0, %s129
      %p131 = pneg %p34
      %p132 = pneg %p31
      %p133 = scmp.lt.s32.totalorder %s13, 5
      %s134 = scalar_select %p133, %s13, 5
      %s135 = scalar_lea.vmem %s1, %s134
      %p136 = pneg %p60
      %p137 = pneg %p57
      %p138 = pneg %p86
      %p139 = pneg %p83
      %p140 = scmp.lt.s32.totalorder %s13, 5
      %s141 = scalar_select %p140, %s13, 5
      %s142 = smul.addr %s141, 16
      %s143 = smul.addr %s142, 4
      %s144 = scalar_lea.vmem %s2, %s143
      %p145 = scmp.lt.s32.totalorder %s13, 5
      %s146 = scalar_select %p145, %s13, 5
      %s147 = smul.addr %s146, 48
      %s148 = smul.addr %s147, 4
      %s149 = scalar_lea.vmem %s0, %s148
      %p150 = scmp.lt.s32.totalorder %s13, 5
      %s151 = scalar_select %p150, %s13, 5
      %s152 = scalar_lea.vmem %s1, %s151
      %p153 = scmp.lt.s32.totalorder %s13, 5
      %s154 = scalar_select %p153, %s13, 5
      %s155 = smul.addr %s154, 16
      %s156 = smul.addr %s155, 4
      %s157 = scalar_lea.vmem %s2, %s156
      %v159 = vld [vmem:[%s152] sm:$0x1]
      %v160 = vld [vmem:[%s149] sm:$0xf]
      %v161 = vld [vmem:[%s149 + $0x18] sm:$0xf]
      %v162 = vld [vmem:[%s149 + $0x30] sm:$0xf]
      %v163 = vld [vmem:[%s149 + $0x48] sm:$0xf]
      %v164 = vld [vmem:[%s149 + $0x60] sm:$0xf]
      %v165 = vld [vmem:[%s149 + $0x78] sm:$0xf]
      %v166 = vld [vmem:[%s149 + $0x90] sm:$0xf]
      %v167 = vld [vmem:[%s149 + $0xa8] sm:$0xf]
      %v168 = vld [vmem:[%s149 + $0x8] sm:$0xf]
      %v169 = vld [vmem:[%s149 + $0x20] sm:$0xf]
      %v170 = vld [vmem:[%s149 + $0x38] sm:$0xf]
      %v171 = vld [vmem:[%s149 + $0x50] sm:$0xf]
      %v172 = vld [vmem:[%s149 + $0x68] sm:$0xf]
      %v173 = vld [vmem:[%s149 + $0x80] sm:$0xf]
      %v174 = vld [vmem:[%s149 + $0x98] sm:$0xf]
      %v175 = vld [vmem:[%s149 + $0xb0] sm:$0xf]
      %v176 = vld [vmem:[%s149 + $0x10] sm:$0xf]
      %v177 = vld [vmem:[%s149 + $0x28] sm:$0xf]
      %v178 = vld [vmem:[%s149 + $0x40] sm:$0xf]
      %v179 = vld [vmem:[%s149 + $0x58] sm:$0xf]
      %v180 = vld [vmem:[%s149 + $0x70] sm:$0xf]
      %v181 = vld [vmem:[%s149 + $0x88] sm:$0xf]
      %v182 = vld [vmem:[%s149 + $0xa0] sm:$0xf]
      %v183 = vld [vmem:[%s149 + $0xb8] sm:$0xf]
      %v192 = vunpack.c.l.b16 %v160
      %v193 = vunpack.c.l.b16 %v161
      %v194 = vunpack.c.l.b16 %v162
      %v195 = vunpack.c.l.b16 %v163
      %v196 = vunpack.c.l.b16 %v164
      %v197 = vunpack.c.l.b16 %v165
      %v198 = vunpack.c.l.b16 %v166
      %v199 = vunpack.c.l.b16 %v167
      %v200 = vpack.c.b16 %v193, %v192
      %v201 = vpack.c.b16 %v195, %v194
      %v202 = vpack.c.b16 %v197, %v196
      %v203 = vpack.c.b16 %v199, %v198
      %v216 = vunpack.c.l.b16 %v168
      %v217 = vunpack.c.l.b16 %v169
      %v218 = vunpack.c.l.b16 %v170
      %v219 = vunpack.c.l.b16 %v171
      %v220 = vunpack.c.l.b16 %v172
      %v221 = vunpack.c.l.b16 %v173
      %v222 = vunpack.c.l.b16 %v174
      %v223 = vunpack.c.l.b16 %v175
      %v224 = vpack.c.b16 %v217, %v216
      %v225 = vpack.c.b16 %v219, %v218
      %v226 = vpack.c.b16 %v221, %v220
      %v227 = vpack.c.b16 %v223, %v222
      %232 = vmatprep.subr.bf16.mxu0 0
      %233 = vmatpush1.bf16.xpose.msra.mxu0 0
      %234 = vmatprep.subr.bf16.mxu0 0
      %235 = vmatpush1.bf16.xpose.msra.mxu0 0
      %236 = vmatprep.subr.bf16.mxu0 0
      %237 = vmatpush1.bf16.xpose.msra.mxu0 0
      %238 = vmatprep.subr.bf16.mxu0 0
      %239 = vmatpush1.bf16.xpose.msra.mxu0 0
      %240 = vmatprep.subr.bf16.mxu0 0
      %241 = vmatpush1.bf16.xpose.msra.mxu0 %v227
      %242 = vmatprep.subr.bf16.mxu0 0
      %243 = vmatpush1.bf16.xpose.msra.mxu0 %v226
      %244 = vmatprep.subr.bf16.mxu0 0
      %245 = vmatpush1.bf16.xpose.msra.mxu0 %v225
      %246 = vmatprep.subr.bf16.mxu0 0
      %247 = vmatpush1.bf16.xpose.msra.mxu0 %v224
      %248 = vmatprep.subr.bf16.mxu0 0
      %249 = vmatpush2.bf16.xpose.msra.mxu0 0
      %250 = vmatprep.subr.bf16.mxu0 0
      %251 = vmatpush2.bf16.xpose.msra.mxu0 0
      %252 = vmatprep.subr.bf16.mxu0 0
      %253 = vmatpush2.bf16.xpose.msra.mxu0 0
      %254 = vmatprep.subr.bf16.mxu0 0
      %255 = vmatpush2.bf16.xpose.msra.mxu0 0
      %256 = vmatprep.subr.bf16.mxu0 0
      %257 = vmatpush2.bf16.xpose.msra.mxu0 0
      %258 = vmatprep.subr.bf16.mxu0 0
      %259 = vmatpush2.bf16.xpose.msra.mxu0 0
      %260 = vmatprep.subr.bf16.mxu0 0
      %261 = vmatpush2.bf16.xpose.msra.mxu0 0
      %262 = vmatprep.subr.bf16.mxu0 0
      %263 = vmatpush2.bf16.xpose.msra.mxu0 0
      %264 = vmatprep.mubr.bf16.mxu0 0
      %265 = vmatmul.mubr.bf16.gmra.mxu0 %v200
      %v266 = vpop.f32.mrf.mxu0
      %v267 = vadd.f32 0.0, %v266
      %v268 = vpop.f32.mrf.mxu0
      %v269 = vpop.f32.mrf.mxu0
      %v270 = vadd.f32 0.0, %v269
      %v271 = vpop.f32.mrf.mxu0
      %272 = vmatprep.mubr.bf16.mxu0 0
      %273 = vmatmul.mubr.bf16.gmra.mxu0 %v201
      %v274 = vpop.f32.mrf.mxu0
      %v275 = vadd.f32 0.0, %v274
      %v276 = vpop.f32.mrf.mxu0
      %v277 = vpop.f32.mrf.mxu0
      %v278 = vadd.f32 0.0, %v277
      %v279 = vpop.f32.mrf.mxu0
      %280 = vmatprep.mubr.bf16.mxu0 0
      %281 = vmatmul.mubr.bf16.gmra.mxu0 %v202
      %v282 = vpop.f32.mrf.mxu0
      %v283 = vadd.f32 0.0, %v282
      %v284 = vpop.f32.mrf.mxu0
      %v285 = vpop.f32.mrf.mxu0
      %v286 = vadd.f32 0.0, %v285
      %v287 = vpop.f32.mrf.mxu0
      %288 = vmatprep.mubr.bf16.mxu0 0
      %289 = vmatmul.mubr.bf16.gmra.mxu0 %v203
      %v290 = vpop.f32.mrf.mxu0
      %v291 = vadd.f32 0.0, %v290
      %v292 = vpop.f32.mrf.mxu0
      %v293 = vpop.f32.mrf.mxu0
      %v294 = vadd.f32 0.0, %v293
      %v295 = vpop.f32.mrf.mxu0
      %296 = vdwg.mxu0
      %v297 = vmul.f32 %v267, 0.088388346
      %v298 = vmul.f32 %v270, 0.088388346
      %v299 = vmul.f32 %v275, 0.088388346
      %v300 = vmul.f32 %v278, 0.088388346
      %v301 = vmul.f32 %v283, 0.088388346
      %v302 = vmul.f32 %v286, 0.088388346
      %v303 = vmul.f32 %v291, 0.088388346
      %v304 = vmul.f32 %v294, 0.088388346
      %v306 = vlaneseq
      %v307 = vshrl.u32 %v306, 7
      %v308 = vsub.s32 0, %v307
      %v309 = vrot.slane %v159, %v308
      %v311 = vadd.f32 %v297, %v309
      %v312 = vadd.f32 %v298, %v309
      %v313 = vadd.f32 %v299, %v309
      %v314 = vadd.f32 %v300, %v309
      %v315 = vadd.f32 %v301, %v309
      %v316 = vadd.f32 %v302, %v309
      %v317 = vadd.f32 %v303, %v309
      %v318 = vadd.f32 %v304, %v309
      %vm319 = vcmask 523264
      %v320 = vsel %vm319, %v311, -inf
      %321 = vmax.xlane.f32.xlu0 %v320
      %v322 = vpop.xlane.xlu0 %321
      %v323 = vsel %vm319, %v312, -inf
      %324 = vmax.xlane.f32.xlu0 %v323
      %v325 = vpop.xlane.xlu0 %324
      %v326 = vsel %vm319, %v313, -inf
      %327 = vmax.xlane.f32.xlu0 %v326
      %v328 = vpop.xlane.xlu0 %327
      %v329 = vsel %vm319, %v314, -inf
      %330 = vmax.xlane.f32.xlu0 %v329
      %v331 = vpop.xlane.xlu0 %330
      %v332 = vsel %vm319, %v315, -inf
      %333 = vmax.xlane.f32.xlu0 %v332
      %v334 = vpop.xlane.xlu0 %333
      %v335 = vsel %vm319, %v316, -inf
      %336 = vmax.xlane.f32.xlu0 %v335
      %v337 = vpop.xlane.xlu0 %336
      %v338 = vsel %vm319, %v317, -inf
      %339 = vmax.xlane.f32.xlu0 %v338
      %v340 = vpop.xlane.xlu0 %339
      %v341 = vsel %vm319, %v318, -inf
      %342 = vmax.xlane.f32.xlu0 %v341
      %v343 = vpop.xlane.xlu0 %342
      %v344 = vsub.f32 %v311, %v322
      %v345 = vsub.f32 %v312, %v325
      %v346 = vsub.f32 %v313, %v328
      %v347 = vsub.f32 %v314, %v331
      %v348 = vsub.f32 %v315, %v334
      %v349 = vsub.f32 %v316, %v337
      %v350 = vsub.f32 %v317, %v340
      %v351 = vsub.f32 %v318, %v343
      %v352 = vmul.f32 %v344, 1.442695
      %v353 = vpow.pop %v352
      %v354 = vmul.f32 %v345, 1.442695
      %v355 = vpow.pop %v354
      %v356 = vmul.f32 %v346, 1.442695
      %v357 = vpow.pop %v356
      %v358 = vmul.f32 %v347, 1.442695
      %v359 = vpow.pop %v358
      %v360 = vmul.f32 %v348, 1.442695
      %v361 = vpow.pop %v360
      %v362 = vmul.f32 %v349, 1.442695
      %v363 = vpow.pop %v362
      %v364 = vmul.f32 %v350, 1.442695
      %v365 = vpow.pop %v364
      %v366 = vmul.f32 %v351, 1.442695
      %v367 = vpow.pop %v366
      %v368 = vsel %vm319, %v353, 0.0
      %369 = vadd.xlane.f32.xlu0 %v368
      %v370 = vpop.xlane.xlu0 %369
      %v371 = vsel %vm319, %v355, 0.0
      %372 = vadd.xlane.f32.xlu0 %v371
      %v373 = vpop.xlane.xlu0 %372
      %v374 = vsel %vm319, %v357, 0.0
      %375 = vadd.xlane.f32.xlu0 %v374
      %v376 = vpop.xlane.xlu0 %375
      %v377 = vsel %vm319, %v359, 0.0
      %378 = vadd.xlane.f32.xlu0 %v377
      %v379 = vpop.xlane.xlu0 %378
      %v380 = vsel %vm319, %v361, 0.0
      %381 = vadd.xlane.f32.xlu0 %v380
      %v382 = vpop.xlane.xlu0 %381
      %v383 = vsel %vm319, %v363, 0.0
      %384 = vadd.xlane.f32.xlu0 %v383
      %v385 = vpop.xlane.xlu0 %384
      %v386 = vsel %vm319, %v365, 0.0
      %387 = vadd.xlane.f32.xlu0 %v386
      %v388 = vpop.xlane.xlu0 %387
      %v389 = vsel %vm319, %v367, 0.0
      %390 = vadd.xlane.f32.xlu0 %v389
      %v391 = vpop.xlane.xlu0 %390
      %v392 = vrcp.pop %v370
      %v393 = vmul.f32 %v353, %v392
      %v394 = vrcp.pop %v373
      %v395 = vmul.f32 %v355, %v394
      %v396 = vrcp.pop %v376
      %v397 = vmul.f32 %v357, %v396
      %v398 = vrcp.pop %v379
      %v399 = vmul.f32 %v359, %v398
      %v400 = vrcp.pop %v382
      %v401 = vmul.f32 %v361, %v400
      %v402 = vrcp.pop %v385
      %v403 = vmul.f32 %v363, %v402
      %v404 = vrcp.pop %v388
      %v405 = vmul.f32 %v365, %v404
      %v406 = vrcp.pop %v391
      %v407 = vmul.f32 %v367, %v406
      %v408 = vpack.c.bf16 %v395, %v393
      %v409 = vpack.c.bf16 %v399, %v397
      %v410 = vpack.c.bf16 %v403, %v401
      %v411 = vpack.c.bf16 %v407, %v405
      %v420 = vunpack.c.l.b16 %v176
      %v421 = vunpack.c.l.b16 %v177
      %v422 = vunpack.c.l.b16 %v178
      %v423 = vunpack.c.l.b16 %v179
      %v424 = vunpack.c.l.b16 %v180
      %v425 = vunpack.c.l.b16 %v181
      %v426 = vunpack.c.l.b16 %v182
      %v427 = vunpack.c.l.b16 %v183
      %v428 = vpack.c.b16 %v421, %v420
      %v429 = vpack.c.b16 %v423, %v422
      %v430 = vpack.c.b16 %v425, %v424
      %v431 = vpack.c.b16 %v427, %v426
      %v437 = vsel %vm319, %v408, 0
      %v440 = vsel %vm319, %v409, 0
      %v443 = vsel %vm319, %v410, 0
      %v446 = vsel %vm319, %v411, 0
      %448 = vmatprep.subr.bf16.mxu0 0
      %449 = vmatpush1.bf16.msra.mxu0 0
      %450 = vmatprep.subr.bf16.mxu0 0
      %451 = vmatpush1.bf16.msra.mxu0 0
      %452 = vmatprep.subr.bf16.mxu0 0
      %453 = vmatpush1.bf16.msra.mxu0 0
      %454 = vmatprep.subr.bf16.mxu0 0
      %455 = vmatpush1.bf16.msra.mxu0 0
      %456 = vmatprep.subr.bf16.mxu0 0
      %457 = vmatpush1.bf16.msra.mxu0 %v431
      %458 = vmatprep.subr.bf16.mxu0 0
      %459 = vmatpush1.bf16.msra.mxu0 %v430
      %460 = vmatprep.subr.bf16.mxu0 0
      %461 = vmatpush1.bf16.msra.mxu0 %v429
      %462 = vmatprep.subr.bf16.mxu0 0
      %463 = vmatpush1.bf16.msra.mxu0 %v428
      %464 = vmatprep.subr.bf16.mxu0 0
      %465 = vmatpush2.bf16.msra.mxu0 0
      %466 = vmatprep.subr.bf16.mxu0 0
      %467 = vmatpush2.bf16.msra.mxu0 0
      %468 = vmatprep.subr.bf16.mxu0 0
      %469 = vmatpush2.bf16.msra.mxu0 0
      %470 = vmatprep.subr.bf16.mxu0 0
      %471 = vmatpush2.bf16.msra.mxu0 0
      %472 = vmatprep.subr.bf16.mxu0 0
      %473 = vmatpush2.bf16.msra.mxu0 0
      %474 = vmatprep.subr.bf16.mxu0 0
      %475 = vmatpush2.bf16.msra.mxu0 0
      %476 = vmatprep.subr.bf16.mxu0 0
      %477 = vmatpush2.bf16.msra.mxu0 0
      %478 = vmatprep.subr.bf16.mxu0 0
      %479 = vmatpush2.bf16.msra.mxu0 0
      %480 = vmatprep.mubr.bf16.mxu0 0
      %481 = vmatmul.mubr.bf16.gmra.mxu0 %v437
      %v482 = vpop.f32.mrf.mxu0
      %v483 = vadd.f32 0.0, %v482
      %v484 = vpop.f32.mrf.mxu0
      %v485 = vpop.f32.mrf.mxu0
      %v486 = vadd.f32 0.0, %v485
      %v487 = vpop.f32.mrf.mxu0
      %488 = vmatprep.mubr.bf16.mxu0 0
      %489 = vmatmul.mubr.bf16.gmra.mxu0 %v440
      %v490 = vpop.f32.mrf.mxu0
      %v491 = vadd.f32 0.0, %v490
      %v492 = vpop.f32.mrf.mxu0
      %v493 = vpop.f32.mrf.mxu0
      %v494 = vadd.f32 0.0, %v493
      %v495 = vpop.f32.mrf.mxu0
      %496 = vmatprep.mubr.bf16.mxu0 0
      %497 = vmatmul.mubr.bf16.gmra.mxu0 %v443
      %v498 = vpop.f32.mrf.mxu0
      %v499 = vadd.f32 0.0, %v498
      %v500 = vpop.f32.mrf.mxu0
      %v501 = vpop.f32.mrf.mxu0
      %v502 = vadd.f32 0.0, %v501
      %v503 = vpop.f32.mrf.mxu0
      %504 = vmatprep.mubr.bf16.mxu0 0
      %505 = vmatmul.mubr.bf16.gmra.mxu0 %v446
      %v506 = vpop.f32.mrf.mxu0
      %v507 = vadd.f32 0.0, %v506
      %v508 = vpop.f32.mrf.mxu0
      %v509 = vpop.f32.mrf.mxu0
      %v510 = vadd.f32 0.0, %v509
      %v511 = vpop.f32.mrf.mxu0
      %512 = vdwg.mxu0
      %v513 = vpack.c.bf16 %v486, %v483
      %v514 = vpack.c.bf16 %v494, %v491
      %v515 = vpack.c.bf16 %v502, %v499
      %v516 = vpack.c.bf16 %v510, %v507
      %v521 = vunpack.c.l.b16 %v513
      %v522 = vunpack.c.h.b16 %v513
      %v523 = vunpack.c.l.b16 %v514
      %v524 = vunpack.c.h.b16 %v514
      %v525 = vunpack.c.l.b16 %v515
      %v526 = vunpack.c.h.b16 %v515
      %v527 = vunpack.c.l.b16 %v516
      %v528 = vunpack.c.h.b16 %v516
      %v529 = vpack.c.b16 %v521, %v521
      %v530 = vpack.c.b16 %v522, %v522
      %v531 = vpack.c.b16 %v523, %v523
      %v532 = vpack.c.b16 %v524, %v524
      %v533 = vpack.c.b16 %v525, %v525
      %v534 = vpack.c.b16 %v526, %v526
      %v535 = vpack.c.b16 %v527, %v527
      %v536 = vpack.c.b16 %v528, %v528
      %545 = vst [vmem:[%s157] sm:$0xf] %v529
      %546 = vst [vmem:[%s157 + $0x8] sm:$0xf] %v530
      %547 = vst [vmem:[%s157 + $0x10] sm:$0xf] %v531
      %548 = vst [vmem:[%s157 + $0x18] sm:$0xf] %v532
      %549 = vst [vmem:[%s157 + $0x20] sm:$0xf] %v533
      %550 = vst [vmem:[%s157 + $0x28] sm:$0xf] %v534
      %551 = vst [vmem:[%s157 + $0x30] sm:$0xf] %v535
      %552 = vst [vmem:[%s157 + $0x38] sm:$0xf] %v536
      %v553 = vld [vmem:[%s149 + $0x4] sm:$0xf]
      %v554 = vld [vmem:[%s149 + $0x1c] sm:$0xf]
      %v555 = vld [vmem:[%s149 + $0x34] sm:$0xf]
      %v556 = vld [vmem:[%s149 + $0x4c] sm:$0xf]
      %v557 = vld [vmem:[%s149 + $0x64] sm:$0xf]
      %v558 = vld [vmem:[%s149 + $0x7c] sm:$0xf]
      %v559 = vld [vmem:[%s149 + $0x94] sm:$0xf]
      %v560 = vld [vmem:[%s149 + $0xac] sm:$0xf]
      %v561 = vld [vmem:[%s149 + $0xc] sm:$0xf]
      %v562 = vld [vmem:[%s149 + $0x24] sm:$0xf]
      %v563 = vld [vmem:[%s149 + $0x3c] sm:$0xf]
      %v564 = vld [vmem:[%s149 + $0x54] sm:$0xf]
      %v565 = vld [vmem:[%s149 + $0x6c] sm:$0xf]
      %v566 = vld [vmem:[%s149 + $0x84] sm:$0xf]
      %v567 = vld [vmem:[%s149 + $0x9c] sm:$0xf]
      %v568 = vld [vmem:[%s149 + $0xb4] sm:$0xf]
      %v569 = vld [vmem:[%s149 + $0x14] sm:$0xf]
      %v570 = vld [vmem:[%s149 + $0x2c] sm:$0xf]
      %v571 = vld [vmem:[%s149 + $0x44] sm:$0xf]
      %v572 = vld [vmem:[%s149 + $0x5c] sm:$0xf]
      %v573 = vld [vmem:[%s149 + $0x74] sm:$0xf]
      %v574 = vld [vmem:[%s149 + $0x8c] sm:$0xf]
      %v575 = vld [vmem:[%s149 + $0xa4] sm:$0xf]
      %v576 = vld [vmem:[%s149 + $0xbc] sm:$0xf]
      %v585 = vunpack.c.l.b16 %v553
      %v586 = vunpack.c.l.b16 %v554
      %v587 = vunpack.c.l.b16 %v555
      %v588 = vunpack.c.l.b16 %v556
      %v589 = vunpack.c.l.b16 %v557
      %v590 = vunpack.c.l.b16 %v558
      %v591 = vunpack.c.l.b16 %v559
      %v592 = vunpack.c.l.b16 %v560
      %v593 = vpack.c.b16 %v586, %v585
      %v594 = vpack.c.b16 %v588, %v587
      %v595 = vpack.c.b16 %v590, %v589
      %v596 = vpack.c.b16 %v592, %v591
      %v609 = vunpack.c.l.b16 %v561
      %v610 = vunpack.c.l.b16 %v562
      %v611 = vunpack.c.l.b16 %v563
      %v612 = vunpack.c.l.b16 %v564
      %v613 = vunpack.c.l.b16 %v565
      %v614 = vunpack.c.l.b16 %v566
      %v615 = vunpack.c.l.b16 %v567
      %v616 = vunpack.c.l.b16 %v568
      %v617 = vpack.c.b16 %v610, %v609
      %v618 = vpack.c.b16 %v612, %v611
      %v619 = vpack.c.b16 %v614, %v613
      %v620 = vpack.c.b16 %v616, %v615
      %625 = vmatprep.subr.bf16.mxu0 0
      %626 = vmatpush1.bf16.xpose.msra.mxu0 0
      %627 = vmatprep.subr.bf16.mxu0 0
      %628 = vmatpush1.bf16.xpose.msra.mxu0 0
      %629 = vmatprep.subr.bf16.mxu0 0
      %630 = vmatpush1.bf16.xpose.msra.mxu0 0
      %631 = vmatprep.subr.bf16.mxu0 0
      %632 = vmatpush1.bf16.xpose.msra.mxu0 0
      %633 = vmatprep.subr.bf16.mxu0 0
      %634 = vmatpush1.bf16.xpose.msra.mxu0 %v620
      %635 = vmatprep.subr.bf16.mxu0 0
      %636 = vmatpush1.bf16.xpose.msra.mxu0 %v619
      %637 = vmatprep.subr.bf16.mxu0 0
      %638 = vmatpush1.bf16.xpose.msra.mxu0 %v618
      %639 = vmatprep.subr.bf16.mxu0 0
      %640 = vmatpush1.bf16.xpose.msra.mxu0 %v617
      %641 = vmatprep.subr.bf16.mxu0 0
      %642 = vmatpush2.bf16.xpose.msra.mxu0 0
      %643 = vmatprep.subr.bf16.mxu0 0
      %644 = vmatpush2.bf16.xpose.msra.mxu0 0
      %645 = vmatprep.subr.bf16.mxu0 0
      %646 = vmatpush2.bf16.xpose.msra.mxu0 0
      %647 = vmatprep.subr.bf16.mxu0 0
      %648 = vmatpush2.bf16.xpose.msra.mxu0 0
      %649 = vmatprep.subr.bf16.mxu0 0
      %650 = vmatpush2.bf16.xpose.msra.mxu0 0
      %651 = vmatprep.subr.bf16.mxu0 0
      %652 = vmatpush2.bf16.xpose.msra.mxu0 0
      %653 = vmatprep.subr.bf16.mxu0 0
      %654 = vmatpush2.bf16.xpose.msra.mxu0 0
      %655 = vmatprep.subr.bf16.mxu0 0
      %656 = vmatpush2.bf16.xpose.msra.mxu0 0
      %657 = vmatprep.mubr.bf16.mxu0 0
      %658 = vmatmul.mubr.bf16.gmra.mxu0 %v593
      %v659 = vpop.f32.mrf.mxu0
      %v660 = vadd.f32 0.0, %v659
      %v661 = vpop.f32.mrf.mxu0
      %v662 = vpop.f32.mrf.mxu0
      %v663 = vadd.f32 0.0, %v662
      %v664 = vpop.f32.mrf.mxu0
      %665 = vmatprep.mubr.bf16.mxu0 0
      %666 = vmatmul.mubr.bf16.gmra.mxu0 %v594
      %v667 = vpop.f32.mrf.mxu0
      %v668 = vadd.f32 0.0, %v667
      %v669 = vpop.f32.mrf.mxu0
      %v670 = vpop.f32.mrf.mxu0
      %v671 = vadd.f32 0.0, %v670
      %v672 = vpop.f32.mrf.mxu0
      %673 = vmatprep.mubr.bf16.mxu0 0
      %674 = vmatmul.mubr.bf16.gmra.mxu0 %v595
      %v675 = vpop.f32.mrf.mxu0
      %v676 = vadd.f32 0.0, %v675
      %v677 = vpop.f32.mrf.mxu0
      %v678 = vpop.f32.mrf.mxu0
      %v679 = vadd.f32 0.0, %v678
      %v680 = vpop.f32.mrf.mxu0
      %681 = vmatprep.mubr.bf16.mxu0 0
      %682 = vmatmul.mubr.bf16.gmra.mxu0 %v596
      %v683 = vpop.f32.mrf.mxu0
      %v684 = vadd.f32 0.0, %v683
      %v685 = vpop.f32.mrf.mxu0
      %v686 = vpop.f32.mrf.mxu0
      %v687 = vadd.f32 0.0, %v686
      %v688 = vpop.f32.mrf.mxu0
      %689 = vdwg.mxu0
      %v690 = vmul.f32 %v660, 0.088388346
      %v691 = vmul.f32 %v663, 0.088388346
      %v692 = vmul.f32 %v668, 0.088388346
      %v693 = vmul.f32 %v671, 0.088388346
      %v694 = vmul.f32 %v676, 0.088388346
      %v695 = vmul.f32 %v679, 0.088388346
      %v696 = vmul.f32 %v684, 0.088388346
      %v697 = vmul.f32 %v687, 0.088388346
      %v698 = vadd.f32 %v690, %v309
      %v699 = vadd.f32 %v691, %v309
      %v700 = vadd.f32 %v692, %v309
      %v701 = vadd.f32 %v693, %v309
      %v702 = vadd.f32 %v694, %v309
      %v703 = vadd.f32 %v695, %v309
      %v704 = vadd.f32 %v696, %v309
      %v705 = vadd.f32 %v697, %v309
      %v706 = vsel %vm319, %v698, -inf
      %707 = vmax.xlane.f32.xlu0 %v706
      %v708 = vpop.xlane.xlu0 %707
      %v709 = vsel %vm319, %v699, -inf
      %710 = vmax.xlane.f32.xlu0 %v709
      %v711 = vpop.xlane.xlu0 %710
      %v712 = vsel %vm319, %v700, -inf
      %713 = vmax.xlane.f32.xlu0 %v712
      %v714 = vpop.xlane.xlu0 %713
      %v715 = vsel %vm319, %v701, -inf
      %716 = vmax.xlane.f32.xlu0 %v715
      %v717 = vpop.xlane.xlu0 %716
      %v718 = vsel %vm319, %v702, -inf
      %719 = vmax.xlane.f32.xlu0 %v718
      %v720 = vpop.xlane.xlu0 %719
      %v721 = vsel %vm319, %v703, -inf
      %722 = vmax.xlane.f32.xlu0 %v721
      %v723 = vpop.xlane.xlu0 %722
      %v724 = vsel %vm319, %v704, -inf
      %725 = vmax.xlane.f32.xlu0 %v724
      %v726 = vpop.xlane.xlu0 %725
      %v727 = vsel %vm319, %v705, -inf
      %728 = vmax.xlane.f32.xlu0 %v727
      %v729 = vpop.xlane.xlu0 %728
      %v730 = vsub.f32 %v698, %v708
      %v731 = vsub.f32 %v699, %v711
      %v732 = vsub.f32 %v700, %v714
      %v733 = vsub.f32 %v701, %v717
      %v734 = vsub.f32 %v702, %v720
      %v735 = vsub.f32 %v703, %v723
      %v736 = vsub.f32 %v704, %v726
      %v737 = vsub.f32 %v705, %v729
      %v738 = vmul.f32 %v730, 1.442695
      %v739 = vpow.pop %v738
      %v740 = vmul.f32 %v731, 1.442695
      %v741 = vpow.pop %v740
      %v742 = vmul.f32 %v732, 1.442695
      %v743 = vpow.pop %v742
      %v744 = vmul.f32 %v733, 1.442695
      %v745 = vpow.pop %v744
      %v746 = vmul.f32 %v734, 1.442695
      %v747 = vpow.pop %v746
      %v748 = vmul.f32 %v735, 1.442695
      %v749 = vpow.pop %v748
      %v750 = vmul.f32 %v736, 1.442695
      %v751 = vpow.pop %v750
      %v752 = vmul.f32 %v737, 1.442695
      %v753 = vpow.pop %v752
      %v754 = vsel %vm319, %v739, 0.0
      %755 = vadd.xlane.f32.xlu0 %v754
      %v756 = vpop.xlane.xlu0 %755
      %v757 = vsel %vm319, %v741, 0.0
      %758 = vadd.xlane.f32.xlu0 %v757
      %v759 = vpop.xlane.xlu0 %758
      %v760 = vsel %vm319, %v743, 0.0
      %761 = vadd.xlane.f32.xlu0 %v760
      %v762 = vpop.xlane.xlu0 %761
      %v763 = vsel %vm319, %v745, 0.0
      %764 = vadd.xlane.f32.xlu0 %v763
      %v765 = vpop.xlane.xlu0 %764
      %v766 = vsel %vm319, %v747, 0.0
      %767 = vadd.xlane.f32.xlu0 %v766
      %v768 = vpop.xlane.xlu0 %767
      %v769 = vsel %vm319, %v749, 0.0
      %770 = vadd.xlane.f32.xlu0 %v769
      %v771 = vpop.xlane.xlu0 %770
      %v772 = vsel %vm319, %v751, 0.0
      %773 = vadd.xlane.f32.xlu0 %v772
      %v774 = vpop.xlane.xlu0 %773
      %v775 = vsel %vm319, %v753, 0.0
      %776 = vadd.xlane.f32.xlu0 %v775
      %v777 = vpop.xlane.xlu0 %776
      %v778 = vrcp.pop %v756
      %v779 = vmul.f32 %v739, %v778
      %v780 = vrcp.pop %v759
      %v781 = vmul.f32 %v741, %v780
      %v782 = vrcp.pop %v762
      %v783 = vmul.f32 %v743, %v782
      %v784 = vrcp.pop %v765
      %v785 = vmul.f32 %v745, %v784
      %v786 = vrcp.pop %v768
      %v787 = vmul.f32 %v747, %v786
      %v788 = vrcp.pop %v771
      %v789 = vmul.f32 %v749, %v788
      %v790 = vrcp.pop %v774
      %v791 = vmul.f32 %v751, %v790
      %v792 = vrcp.pop %v777
      %v793 = vmul.f32 %v753, %v792
      %v794 = vpack.c.bf16 %v781, %v779
      %v795 = vpack.c.bf16 %v785, %v783
      %v796 = vpack.c.bf16 %v789, %v787
      %v797 = vpack.c.bf16 %v793, %v791
      %v806 = vunpack.c.l.b16 %v569
      %v807 = vunpack.c.l.b16 %v570
      %v808 = vunpack.c.l.b16 %v571
      %v809 = vunpack.c.l.b16 %v572
      %v810 = vunpack.c.l.b16 %v573
      %v811 = vunpack.c.l.b16 %v574
      %v812 = vunpack.c.l.b16 %v575
      %v813 = vunpack.c.l.b16 %v576
      %v814 = vpack.c.b16 %v807, %v806
      %v815 = vpack.c.b16 %v809, %v808
      %v816 = vpack.c.b16 %v811, %v810
      %v817 = vpack.c.b16 %v813, %v812
      %v823 = vsel %vm319, %v794, 0
      %v826 = vsel %vm319, %v795, 0
      %v829 = vsel %vm319, %v796, 0
      %v832 = vsel %vm319, %v797, 0
      %834 = vmatprep.subr.bf16.mxu0 0
      %835 = vmatpush1.bf16.msra.mxu0 0
      %836 = vmatprep.subr.bf16.mxu0 0
      %837 = vmatpush1.bf16.msra.mxu0 0
      %838 = vmatprep.subr.bf16.mxu0 0
      %839 = vmatpush1.bf16.msra.mxu0 0
      %840 = vmatprep.subr.bf16.mxu0 0
      %841 = vmatpush1.bf16.msra.mxu0 0
      %842 = vmatprep.subr.bf16.mxu0 0
      %843 = vmatpush1.bf16.msra.mxu0 %v817
      %844 = vmatprep.subr.bf16.mxu0 0
      %845 = vmatpush1.bf16.msra.mxu0 %v816
      %846 = vmatprep.subr.bf16.mxu0 0
      %847 = vmatpush1.bf16.msra.mxu0 %v815
      %848 = vmatprep.subr.bf16.mxu0 0
      %849 = vmatpush1.bf16.msra.mxu0 %v814
      %850 = vmatprep.subr.bf16.mxu0 0
      %851 = vmatpush2.bf16.msra.mxu0 0
      %852 = vmatprep.subr.bf16.mxu0 0
      %853 = vmatpush2.bf16.msra.mxu0 0
      %854 = vmatprep.subr.bf16.mxu0 0
      %855 = vmatpush2.bf16.msra.mxu0 0
      %856 = vmatprep.subr.bf16.mxu0 0
      %857 = vmatpush2.bf16.msra.mxu0 0
      %858 = vmatprep.subr.bf16.mxu0 0
      %859 = vmatpush2.bf16.msra.mxu0 0
      %860 = vmatprep.subr.bf16.mxu0 0
      %861 = vmatpush2.bf16.msra.mxu0 0
      %862 = vmatprep.subr.bf16.mxu0 0
      %863 = vmatpush2.bf16.msra.mxu0 0
      %864 = vmatprep.subr.bf16.mxu0 0
      %865 = vmatpush2.bf16.msra.mxu0 0
      %866 = vmatprep.mubr.bf16.mxu0 0
      %867 = vmatmul.mubr.bf16.gmra.mxu0 %v823
      %v868 = vpop.f32.mrf.mxu0
      %v869 = vadd.f32 0.0, %v868
      %v870 = vpop.f32.mrf.mxu0
      %v871 = vpop.f32.mrf.mxu0
      %v872 = vadd.f32 0.0, %v871
      %v873 = vpop.f32.mrf.mxu0
      %874 = vmatprep.mubr.bf16.mxu0 0
      %875 = vmatmul.mubr.bf16.gmra.mxu0 %v826
      %v876 = vpop.f32.mrf.mxu0
      %v877 = vadd.f32 0.0, %v876
      %v878 = vpop.f32.mrf.mxu0
      %v879 = vpop.f32.mrf.mxu0
      %v880 = vadd.f32 0.0, %v879
      %v881 = vpop.f32.mrf.mxu0
      %882 = vmatprep.mubr.bf16.mxu0 0
      %883 = vmatmul.mubr.bf16.gmra.mxu0 %v829
      %v884 = vpop.f32.mrf.mxu0
      %v885 = vadd.f32 0.0, %v884
      %v886 = vpop.f32.mrf.mxu0
      %v887 = vpop.f32.mrf.mxu0
      %v888 = vadd.f32 0.0, %v887
      %v889 = vpop.f32.mrf.mxu0
      %890 = vmatprep.mubr.bf16.mxu0 0
      %891 = vmatmul.mubr.bf16.gmra.mxu0 %v832
      %v892 = vpop.f32.mrf.mxu0
      %v893 = vadd.f32 0.0, %v892
      %v894 = vpop.f32.mrf.mxu0
      %v895 = vpop.f32.mrf.mxu0
      %v896 = vadd.f32 0.0, %v895
      %v897 = vpop.f32.mrf.mxu0
      %898 = vdwg.mxu0
      %v899 = vpack.c.bf16 %v872, %v869
      %v900 = vpack.c.bf16 %v880, %v877
      %v901 = vpack.c.bf16 %v888, %v885
      %v902 = vpack.c.bf16 %v896, %v893
      %v907 = vunpack.c.l.b16 %v899
      %v908 = vunpack.c.h.b16 %v899
      %v909 = vunpack.c.l.b16 %v900
      %v910 = vunpack.c.h.b16 %v900
      %v911 = vunpack.c.l.b16 %v901
      %v912 = vunpack.c.h.b16 %v901
      %v913 = vunpack.c.l.b16 %v902
      %v914 = vunpack.c.h.b16 %v902
      %v915 = vpack.c.b16 %v907, %v907
      %v916 = vpack.c.b16 %v908, %v908
      %v917 = vpack.c.b16 %v909, %v909
      %v918 = vpack.c.b16 %v910, %v910
      %v919 = vpack.c.b16 %v911, %v911
      %v920 = vpack.c.b16 %v912, %v912
      %v921 = vpack.c.b16 %v913, %v913
      %v922 = vpack.c.b16 %v914, %v914
      %931 = vst [vmem:[%s157 + $0x4] sm:$0xf] %v915
      %932 = vst [vmem:[%s157 + $0xc] sm:$0xf] %v916
      %933 = vst [vmem:[%s157 + $0x14] sm:$0xf] %v917
      %934 = vst [vmem:[%s157 + $0x1c] sm:$0xf] %v918
      %935 = vst [vmem:[%s157 + $0x24] sm:$0xf] %v919
      %936 = vst [vmem:[%s157 + $0x2c] sm:$0xf] %v920
      %937 = vst [vmem:[%s157 + $0x34] sm:$0xf] %v921
      %938 = vst [vmem:[%s157 + $0x3c] sm:$0xf] %v922
      %p939 = scmp.lt.s32.totalorder %s13, 5
      %s940 = scalar_select %p939, %s13, 5
      %s941 = smul.addr %s940, 16
      %s942 = smul.addr %s941, 4
      %s943 = scalar_lea.vmem %s2, %s942
      // Predicated region
      $region29: #{albef_forward.12} parent=27 // pred_check
        %p944 = pneg %p83
      $region30: #{albef_forward.12} parent=27 // pred_check_branch
        %946 = sbr.rel (%p944) target = $region32
      $region31: #{albef_forward.12} parent=27 // pred_region
        _
      $region32: #{albef_forward.12} parent=27 // pred_fallthru
        _
    $region28: #{albef_forward.12} parent=5 // pred_fallthru
      _
    %p947 = scmp.le.s32.totalorder 2, %s8
    // Predicated region
    $region33: #{albef_forward.12} parent=5 // pred_check
      %p948 = pneg %p947
    $region34: #{albef_forward.12} parent=5 // pred_check_branch
      %950 = sbr.rel (%p948) target = $region36
    $region35: #{albef_forward.12} parent=5 // pred_region
      %s951 = ssub.s32 %s8, 2
      // Predicated region
      $region37: #{albef_forward.12} parent=35 // pred_check
        %p952 = pneg %p89
      $region38: #{albef_forward.12} parent=35 // pred_check_branch
        %954 = sbr.rel (%p952) target = $region40
      $region39: #{albef_forward.12} parent=35 // pred_region
        %p955 = scmp.lt.s32.totalorder %s14, 5
        %s956 = scalar_select %p955, %s14, 5
        %s957 = smul.addr %s956, 16
        %s958 = smul.addr %s957, 4
        %s959 = scalar_lea.vmem %s2, %s958
      $region40: #{albef_forward.12} parent=35 // pred_fallthru
        _
    $region36: #{albef_forward.12} parent=5 // pred_fallthru
      _
  $region6: #{albef_forward.12} parent=0 // loop_footer
    %s12 = sadd.s32 1, %s8
  $region7: #{albef_forward.12} parent=0 // loop_footer_branch
    %7 = sbr.rel target = $region3
  $region8: #{albef_forward.12} parent=0 // loop_exit
    _

// kernel: albef_forward.13
$region0: #{albef_forward.13}
  #allocation0 [shape = 'u32[]', space=smem, size = 0x4, offset = 0x4, fixed_abs, tag = 'smem constant byte address 0x4 - core index']
  #allocation1 [shape = 'u32[144,128]{1,0:T(1,128)}', space=vmem, size = 0x12000, scoped, tag = 'internal scratch']
  %s0 = inlined_call_operand.vmem [shape: bf16[384,256], index: 0, kind: input, shape index: {}]
  %s1 = inlined_call_operand.vmem [shape: bf16[256,256], index: 1, kind: input, shape index: {}]
  %s2 = inlined_call_operand.vmem [shape: f32[1,256], index: 2, kind: input, shape index: {}]
  %s3 = inlined_call_operand.vmem [shape: bf16[384,256], index: 3, kind: input, shape index: {}]
  %s4 = inlined_call_operand.vmem [shape: f32[1,256], index: 4, kind: input, shape index: {}]
  %s5 = inlined_call_operand.vmem [shape: f32[1,256], index: 5, kind: input, shape index: {}]
  %s6 = inlined_call_operand.vmem [shape: bf16[384,256], index: 6, kind: output, shape index: {}]
  %s7 = sld [smem:[#allocation0]]
  $region57: #{albef_forward.13} parent=0
    _
  %s9 = ssub.s32 1, %s7
  %s10 = scalar_select 0, %s9, %s7
  loop: start=0, step=1, limit=5
  $region2: #{albef_forward.13} parent=0 // loop_pre_header
    _
  $region3: #{albef_forward.13} parent=0 // loop_header
    %s12 = sphi 0, %s16
    %p13 = scmp.ge.s32.totalorder %s12, 5
    %s22 = sphi 0, %s24
    %s25 = sphi 0, %s22
    %s26 = sphi 0, %s25
    %s42 = sphi 0, %s26
    %s46 = sphi 0, %s46
    %s48 = sphi 0, %s46
    %s49 = sphi 0, %s48
    %s63 = sphi 0, %s49
    %s67 = sphi 0, %s67
    %s69 = sphi 0, %s67
    %s70 = sphi 0, %s69
    %s84 = sphi 0, %s70
    %s90 = sphi 0, %s92
    %s93 = sphi 0, %s90
    %s94 = sphi 0, %s93
    %s110 = sphi 0, %s94
    %s114 = sphi 0, %s114
    %s116 = sphi 0, %s114
    %s117 = sphi 0, %s116
    %s131 = sphi 0, %s117
    %s135 = sphi 0, %s135
    %s137 = sphi 0, %s135
    %s138 = sphi 0, %s137
    %s152 = sphi 0, %s138
    %s158 = sphi 0, %s160
    %s161 = sphi 0, %s158
    %s162 = sphi 0, %s161
    %s178 = sphi 0, %s162
  $region4: #{albef_forward.13} parent=0 // loop_header_branch
    %15 = sbr.rel (%p13) target = $region8
  $region5: #{albef_forward.13} parent=0 // loop_body
    %s17 = ssub.s32 %s12, 1
    %s18 = ssub.s32 %s12, 2
    %s19 = sadd.s32 %s12, 1
    %s20 = ssub.s32 %s12, %s19
    %p21 = scmp.eq.s32.totalorder %s20, 0
    %s23 = sadd.s32 %s22, 1
    %s24 = scalar_select %p21, %s22, %s23
    %p27 = pneg %p21
    %p28 = scmp.eq.s32.totalorder %s12, 2
    %p29 = por %p27, %p28
    %p30 = scmp.ne.s32.totalorder %s22, %s25
    %p31 = scmp.eq.s32.totalorder %s12, 0
    %p32 = por %p30, %p31
    %p33 = scmp.ne.s32.totalorder %s22, %s25
    %p34 = scmp.eq.s32.totalorder %s17, 2
    %p35 = por %p33, %p34
    %p36 = scmp.ne.s32.totalorder %s25, %s26
    %p37 = scmp.eq.s32.totalorder %s17, 0
    %p38 = por %p36, %p37
    %p39 = scmp.ne.s32.totalorder %s25, %s26
    %p40 = scmp.eq.s32.totalorder %s18, 2
    %p41 = por %p39, %p40
    %p43 = scmp.ne.s32.totalorder %s26, %s42
    %p44 = scmp.eq.s32.totalorder %s18, 0
    %p45 = por %p43, %p44
    %s47 = sadd.s32 %s46, 1
    %p50 = scmp.eq.s32.totalorder %s12, 2
    %p51 = scmp.ne.s32.totalorder %s46, %s48
    %p52 = scmp.eq.s32.totalorder %s12, 0
    %p53 = por %p51, %p52
    %p54 = scmp.ne.s32.totalorder %s46, %s48
    %p55 = scmp.eq.s32.totalorder %s17, 2
    %p56 = por %p54, %p55
    %p57 = scmp.ne.s32.totalorder %s48, %s49
    %p58 = scmp.eq.s32.totalorder %s17, 0
    %p59 = por %p57, %p58
    %p60 = scmp.ne.s32.totalorder %s48, %s49
    %p61 = scmp.eq.s32.totalorder %s18, 2
    %p62 = por %p60, %p61
    %p64 = scmp.ne.s32.totalorder %s49, %s63
    %p65 = scmp.eq.s32.totalorder %s18, 0
    %p66 = por %p64, %p65
    %s68 = sadd.s32 %s67, 1
    %p71 = scmp.eq.s32.totalorder %s12, 2
    %p72 = scmp.ne.s32.totalorder %s67, %s69
    %p73 = scmp.eq.s32.totalorder %s12, 0
    %p74 = por %p72, %p73
    %p75 = scmp.ne.s32.totalorder %s67, %s69
    %p76 = scmp.eq.s32.totalorder %s17, 2
    %p77 = por %p75, %p76
    %p78 = scmp.ne.s32.totalorder %s69, %s70
    %p79 = scmp.eq.s32.totalorder %s17, 0
    %p80 = por %p78, %p79
    %p81 = scmp.ne.s32.totalorder %s69, %s70
    %p82 = scmp.eq.s32.totalorder %s18, 2
    %p83 = por %p81, %p82
    %p85 = scmp.ne.s32.totalorder %s70, %s84
    %p86 = scmp.eq.s32.totalorder %s18, 0
    %p87 = por %p85, %p86
    %s88 = ssub.s32 %s12, %s19
    %p89 = scmp.eq.s32.totalorder %s88, 0
    %s91 = sadd.s32 %s90, 1
    %s92 = scalar_select %p89, %s90, %s91
    %p95 = pneg %p89
    %p96 = scmp.eq.s32.totalorder %s12, 2
    %p97 = por %p95, %p96
    %p98 = scmp.ne.s32.totalorder %s90, %s93
    %p99 = scmp.eq.s32.totalorder %s12, 0
    %p100 = por %p98, %p99
    %p101 = scmp.ne.s32.totalorder %s90, %s93
    %p102 = scmp.eq.s32.totalorder %s17, 2
    %p103 = por %p101, %p102
    %p104 = scmp.ne.s32.totalorder %s93, %s94
    %p105 = scmp.eq.s32.totalorder %s17, 0
    %p106 = por %p104, %p105
    %p107 = scmp.ne.s32.totalorder %s93, %s94
    %p108 = scmp.eq.s32.totalorder %s18, 2
    %p109 = por %p107, %p108
    %p111 = scmp.ne.s32.totalorder %s94, %s110
    %p112 = scmp.eq.s32.totalorder %s18, 0
    %p113 = por %p111, %p112
    %s115 = sadd.s32 %s114, 1
    %p118 = scmp.eq.s32.totalorder %s12, 2
    %p119 = scmp.ne.s32.totalorder %s114, %s116
    %p120 = scmp.eq.s32.totalorder %s12, 0
    %p121 = por %p119, %p120
    %p122 = scmp.ne.s32.totalorder %s114, %s116
    %p123 = scmp.eq.s32.totalorder %s17, 2
    %p124 = por %p122, %p123
    %p125 = scmp.ne.s32.totalorder %s116, %s117
    %p126 = scmp.eq.s32.totalorder %s17, 0
    %p127 = por %p125, %p126
    %p128 = scmp.ne.s32.totalorder %s116, %s117
    %p129 = scmp.eq.s32.totalorder %s18, 2
    %p130 = por %p128, %p129
    %p132 = scmp.ne.s32.totalorder %s117, %s131
    %p133 = scmp.eq.s32.totalorder %s18, 0
    %p134 = por %p132, %p133
    %s136 = sadd.s32 %s135, 1
    %p139 = scmp.eq.s32.totalorder %s12, 2
    %p140 = scmp.ne.s32.totalorder %s135, %s137
    %p141 = scmp.eq.s32.totalorder %s12, 0
    %p142 = por %p140, %p141
    %p143 = scmp.ne.s32.totalorder %s135, %s137
    %p144 = scmp.eq.s32.totalorder %s17, 2
    %p145 = por %p143, %p144
    %p146 = scmp.ne.s32.totalorder %s137, %s138
    %p147 = scmp.eq.s32.totalorder %s17, 0
    %p148 = por %p146, %p147
    %p149 = scmp.ne.s32.totalorder %s137, %s138
    %p150 = scmp.eq.s32.totalorder %s18, 2
    %p151 = por %p149, %p150
    %p153 = scmp.ne.s32.totalorder %s138, %s152
    %p154 = scmp.eq.s32.totalorder %s18, 0
    %p155 = por %p153, %p154
    %s156 = ssub.s32 %s12, %s19
    %p157 = scmp.eq.s32.totalorder %s156, 0
    %s159 = sadd.s32 %s158, 1
    %s160 = scalar_select %p157, %s158, %s159
    %p163 = pneg %p157
    %p164 = scmp.eq.s32.totalorder %s12, 2
    %p165 = por %p163, %p164
    %p166 = scmp.ne.s32.totalorder %s158, %s161
    %p167 = scmp.eq.s32.totalorder %s12, 0
    %p168 = por %p166, %p167
    %p169 = scmp.ne.s32.totalorder %s158, %s161
    %p170 = scmp.eq.s32.totalorder %s17, 2
    %p171 = por %p169, %p170
    %p172 = scmp.ne.s32.totalorder %s161, %s162
    %p173 = scmp.eq.s32.totalorder %s17, 0
    %p174 = por %p172, %p173
    %p175 = scmp.ne.s32.totalorder %s161, %s162
    %p176 = scmp.eq.s32.totalorder %s18, 2
    %p177 = por %p175, %p176
    %p179 = scmp.ne.s32.totalorder %s162, %s178
    %p180 = scmp.eq.s32.totalorder %s18, 0
    %p181 = por %p179, %p180
    %p182 = scmp.le.s32.totalorder 1, %s12
    %p183 = scmp.lt.s32.totalorder %s12, 4
    %p184 = pnand %p182, %p183
    %p185 = pneg %p184
    // Predicated region
    $region9: #{albef_forward.13} parent=5 // pred_check
      _
    $region10: #{albef_forward.13} parent=5 // pred_check_branch
      %187 = sbr.rel (%p184) target = $region12
    $region11: #{albef_forward.13} parent=5 // pred_region
      %s188 = ssub.s32 %s12, 1
      // Predicated region
      $region13: #{albef_forward.13} parent=11 // pred_check
        %p189 = pneg %p59
      $region14: #{albef_forward.13} parent=11 // pred_check_branch
        %191 = sbr.rel (%p189) target = $region16
      $region15: #{albef_forward.13} parent=11 // pred_region
        _
      $region16: #{albef_forward.13} parent=11 // pred_fallthru
        _
      // Predicated region
      $region17: #{albef_forward.13} parent=11 // pred_check
        %p192 = pneg %p80
      $region18: #{albef_forward.13} parent=11 // pred_check_branch
        %194 = sbr.rel (%p192) target = $region20
      $region19: #{albef_forward.13} parent=11 // pred_region
        _
      $region20: #{albef_forward.13} parent=11 // pred_fallthru
        _
      // Predicated region
      $region21: #{albef_forward.13} parent=11 // pred_check
        %p195 = pneg %p127
      $region22: #{albef_forward.13} parent=11 // pred_check_branch
        %197 = sbr.rel (%p195) target = $region24
      $region23: #{albef_forward.13} parent=11 // pred_region
        _
      $region24: #{albef_forward.13} parent=11 // pred_fallthru
        _
      // Predicated region
      $region25: #{albef_forward.13} parent=11 // pred_check
        %p198 = pneg %p148
      $region26: #{albef_forward.13} parent=11 // pred_check_branch
        %200 = sbr.rel (%p198) target = $region28
      $region27: #{albef_forward.13} parent=11 // pred_region
        _
      $region28: #{albef_forward.13} parent=11 // pred_fallthru
        _
    $region12: #{albef_forward.13} parent=5 // pred_fallthru
      _
    %p201 = scmp.lt.s32.totalorder %s12, 3
    // Predicated region
    $region29: #{albef_forward.13} parent=5 // pred_check
      %p202 = pneg %p201
    $region30: #{albef_forward.13} parent=5 // pred_check_branch
      %204 = sbr.rel (%p202) target = $region32
    $region31: #{albef_forward.13} parent=5 // pred_region
      // Predicated region
      $region33: #{albef_forward.13} parent=31 // pred_check
        %p205 = pneg %p32
      $region34: #{albef_forward.13} parent=31 // pred_check_branch
        %207 = sbr.rel (%p205) target = $region36
      $region35: #{albef_forward.13} parent=31 // pred_region
        %s208 = smul.u32 16, %s12
        %p209 = scmp.lt.s32.totalorder %s208, 47
        %s210 = scalar_select %p209, %s208, 47
        %s211 = smul.addr %s210, 2
        %s212 = smul.addr %s211, 4
        %s213 = scalar_lea.vmem %s0, %s212
        %s214 = smul.u32 16, %s12
      $region36: #{albef_forward.13} parent=31 // pred_fallthru
        _
      // Predicated region
      $region37: #{albef_forward.13} parent=31 // pred_check
        %p215 = pneg %p100
      $region38: #{albef_forward.13} parent=31 // pred_check_branch
        %217 = sbr.rel (%p215) target = $region40
      $region39: #{albef_forward.13} parent=31 // pred_region
        %s218 = smul.u32 16, %s12
        %p219 = scmp.lt.s32.totalorder %s218, 47
        %s220 = scalar_select %p219, %s218, 47
        %s221 = smul.addr %s220, 2
        %s222 = smul.addr %s221, 4
        %s223 = scalar_lea.vmem %s3, %s222
        %s224 = smul.u32 16, %s12
      $region40: #{albef_forward.13} parent=31 // pred_fallthru
        _
    $region32: #{albef_forward.13} parent=5 // pred_fallthru
      _
    %p225 = scmp.le.s32.totalorder 1, %s12
    %p226 = scmp.lt.s32.totalorder %s12, 4
    %p227 = pnand %p225, %p226
    %p228 = pneg %p227
    // Predicated region
    $region41: #{albef_forward.13} parent=5 // pred_check
      _
    $region42: #{albef_forward.13} parent=5 // pred_check_branch
      %230 = sbr.rel (%p227) target = $region44
    $region43: #{albef_forward.13} parent=5 // pred_region
      %s231 = ssub.s32 %s12, 1
      %s232 = smul.u32 16, %s17
      %p233 = scmp.lt.s32.totalorder %s232, 47
      %s234 = scalar_select %p233, %s232, 47
      %s235 = smul.addr %s234, 2
      %s236 = smul.addr %s235, 4
      %s237 = scalar_lea.vmem %s0, %s236
      %p238 = pneg %p38
      %p239 = pneg %p35
      %p240 = pneg %p59
      %p241 = pneg %p56
      %p242 = pneg %p80
      %p243 = pneg %p77
      %s244 = smul.u32 16, %s17
      %p245 = scmp.lt.s32.totalorder %s244, 47
      %s246 = scalar_select %p245, %s244, 47
      %s247 = smul.addr %s246, 2
      %s248 = smul.addr %s247, 4
      %s249 = scalar_lea.vmem %s3, %s248
      %p250 = pneg %p106
      %p251 = pneg %p103
      %p252 = pneg %p127
      %p253 = pneg %p124
      %p254 = pneg %p148
      %p255 = pneg %p145
      %p256 = pneg %p174
      %p257 = pneg %p171
      %s258 = smul.u32 16, %s17
      %p259 = scmp.lt.s32.totalorder %s258, 47
      %s260 = scalar_select %p259, %s258, 47
      %s261 = smul.addr %s260, 2
      %s262 = smul.addr %s261, 4
      %s263 = scalar_lea.vmem %s6, %s262
      %s264 = smul.u32 16, %s17
      %p265 = scmp.lt.s32.totalorder %s264, 47
      %s266 = scalar_select %p265, %s264, 47
      %s267 = smul.addr %s266, 2
      %s268 = smul.addr %s267, 4
      %s269 = scalar_lea.vmem %s0, %s268
      %s270 = smul.u32 16, %s17
      %s271 = smul.u32 16, %s17
      %p272 = scmp.lt.s32.totalorder %s271, 47
      %s273 = scalar_select %p272, %s271, 47
      %s274 = smul.addr %s273, 2
      %s275 = smul.addr %s274, 4
      %s276 = scalar_lea.vmem %s3, %s275
      %s277 = smul.u32 16, %s17
      %s278 = smul.u32 16, %s17
      %p279 = scmp.lt.s32.totalorder %s278, 47
      %s280 = scalar_select %p279, %s278, 47
      %s281 = smul.addr %s280, 2
      %s282 = smul.addr %s281, 4
      %s283 = scalar_lea.vmem %s6, %s282
      %s284 = smul.u32 16, %s17
      %v285 = vld [vmem:[%s269] sm:$0xff]
      %v286 = vld [vmem:[%s269 + $0x8] sm:$0xff]
      %v287 = vld [vmem:[%s269 + $0x10] sm:$0xff]
      %v288 = vld [vmem:[%s269 + $0x18] sm:$0xff]
      %v289 = vld [vmem:[%s269 + $0x20] sm:$0xff]
      %v290 = vld [vmem:[%s269 + $0x28] sm:$0xff]
      %v291 = vld [vmem:[%s269 + $0x30] sm:$0xff]
      %v292 = vld [vmem:[%s269 + $0x38] sm:$0xff]
      %v293 = vld [vmem:[%s269 + $0x40] sm:$0xff]
      %v294 = vld [vmem:[%s269 + $0x48] sm:$0xff]
      %v295 = vld [vmem:[%s269 + $0x50] sm:$0xff]
      %v296 = vld [vmem:[%s269 + $0x58] sm:$0xff]
      %v297 = vld [vmem:[%s269 + $0x60] sm:$0xff]
      %v298 = vld [vmem:[%s269 + $0x68] sm:$0xff]
      %v299 = vld [vmem:[%s269 + $0x70] sm:$0xff]
      %v300 = vld [vmem:[%s269 + $0x78] sm:$0xff]
      %v301 = vld [vmem:[%s1] sm:$0xff]
      %v302 = vld [vmem:[%s1 + $0x8] sm:$0xff]
      %v303 = vld [vmem:[%s1 + $0x10] sm:$0xff]
      %v304 = vld [vmem:[%s1 + $0x18] sm:$0xff]
      %v305 = vld [vmem:[%s1 + $0x20] sm:$0xff]
      %v306 = vld [vmem:[%s1 + $0x28] sm:$0xff]
      %v307 = vld [vmem:[%s1 + $0x30] sm:$0xff]
      %v308 = vld [vmem:[%s1 + $0x38] sm:$0xff]
      %v309 = vld [vmem:[%s1 + $0x40] sm:$0xff]
      %v310 = vld [vmem:[%s1 + $0x48] sm:$0xff]
      %v311 = vld [vmem:[%s1 + $0x50] sm:$0xff]
      %v312 = vld [vmem:[%s1 + $0x58] sm:$0xff]
      %v313 = vld [vmem:[%s1 + $0x60] sm:$0xff]
      %v314 = vld [vmem:[%s1 + $0x68] sm:$0xff]
      %v315 = vld [vmem:[%s1 + $0x70] sm:$0xff]
      %v316 = vld [vmem:[%s1 + $0x78] sm:$0xff]
      %v317 = vld [vmem:[%s1 + $0x80] sm:$0xff]
      %v318 = vld [vmem:[%s1 + $0x88] sm:$0xff]
      %v319 = vld [vmem:[%s1 + $0x90] sm:$0xff]
      %v320 = vld [vmem:[%s1 + $0x98] sm:$0xff]
      %v321 = vld [vmem:[%s1 + $0xa0] sm:$0xff]
      %v322 = vld [vmem:[%s1 + $0xa8] sm:$0xff]
      %v323 = vld [vmem:[%s1 + $0xb0] sm:$0xff]
      %v324 = vld [vmem:[%s1 + $0xb8] sm:$0xff]
      %v325 = vld [vmem:[%s1 + $0xc0] sm:$0xff]
      %v326 = vld [vmem:[%s1 + $0xc8] sm:$0xff]
      %v327 = vld [vmem:[%s1 + $0xd0] sm:$0xff]
      %v328 = vld [vmem:[%s1 + $0xd8] sm:$0xff]
      %v329 = vld [vmem:[%s1 + $0xe0] sm:$0xff]
      %v330 = vld [vmem:[%s1 + $0xe8] sm:$0xff]
      %v331 = vld [vmem:[%s1 + $0xf0] sm:$0xff]
      %v332 = vld [vmem:[%s1 + $0xf8] sm:$0xff]
      %v333 = vld [vmem:[%s2] sm:$0x3]
      %v335 = vlaneseq
      %v336 = vshrl.u32 %v335, 7
      %v337 = vsub.s32 0, %v336
      %v338 = vrot.slane %v333, %v337
      %v339 = vlaneseq
      %v340 = vshrl.u32 %v339, 7
      %v341 = vsub.s32 1, %v340
      %v342 = vrot.slane %v333, %v341
      %v361 = vunpack.c.l.b16 %v285
      %v362 = vunpack.c.h.b16 %v285
      %v363 = vunpack.c.l.b16 %v286
      %v364 = vunpack.c.h.b16 %v286
      %v365 = vunpack.c.l.b16 %v287
      %v366 = vunpack.c.h.b16 %v287
      %v367 = vunpack.c.l.b16 %v288
      %v368 = vunpack.c.h.b16 %v288
      %v369 = vunpack.c.l.b16 %v289
      %v370 = vunpack.c.h.b16 %v289
      %v371 = vunpack.c.l.b16 %v290
      %v372 = vunpack.c.h.b16 %v290
      %v373 = vunpack.c.l.b16 %v291
      %v374 = vunpack.c.h.b16 %v291
      %v375 = vunpack.c.l.b16 %v292
      %v376 = vunpack.c.h.b16 %v292
      %v377 = vunpack.c.l.b16 %v293
      %v378 = vunpack.c.h.b16 %v293
      %v379 = vunpack.c.l.b16 %v294
      %v380 = vunpack.c.h.b16 %v294
      %v381 = vunpack.c.l.b16 %v295
      %v382 = vunpack.c.h.b16 %v295
      %v383 = vunpack.c.l.b16 %v296
      %v384 = vunpack.c.h.b16 %v296
      %v385 = vunpack.c.l.b16 %v297
      %v386 = vunpack.c.h.b16 %v297
      %v387 = vunpack.c.l.b16 %v298
      %v388 = vunpack.c.h.b16 %v298
      %v389 = vunpack.c.l.b16 %v299
      %v390 = vunpack.c.h.b16 %v299
      %v391 = vunpack.c.l.b16 %v300
      %v392 = vunpack.c.h.b16 %v300
      %v393 = vpack.c.b16 %v363, %v361
      %v394 = vpack.c.b16 %v364, %v362
      %v395 = vpack.c.b16 %v367, %v365
      %v396 = vpack.c.b16 %v368, %v366
      %v397 = vpack.c.b16 %v371, %v369
      %v398 = vpack.c.b16 %v372, %v370
      %v399 = vpack.c.b16 %v375, %v373
      %v400 = vpack.c.b16 %v376, %v374
      %v401 = vpack.c.b16 %v379, %v377
      %v402 = vpack.c.b16 %v380, %v378
      %v403 = vpack.c.b16 %v383, %v381
      %v404 = vpack.c.b16 %v384, %v382
      %v405 = vpack.c.b16 %v387, %v385
      %v406 = vpack.c.b16 %v388, %v386
      %v407 = vpack.c.b16 %v391, %v389
      %v408 = vpack.c.b16 %v392, %v390
      %v457 = vunpack.c.l.b16 %v301
      %v458 = vunpack.c.h.b16 %v301
      %v459 = vunpack.c.l.b16 %v302
      %v460 = vunpack.c.h.b16 %v302
      %v461 = vunpack.c.l.b16 %v303
      %v462 = vunpack.c.h.b16 %v303
      %v463 = vunpack.c.l.b16 %v304
      %v464 = vunpack.c.h.b16 %v304
      %v465 = vunpack.c.l.b16 %v305
      %v466 = vunpack.c.h.b16 %v305
      %v467 = vunpack.c.l.b16 %v306
      %v468 = vunpack.c.h.b16 %v306
      %v469 = vunpack.c.l.b16 %v307
      %v470 = vunpack.c.h.b16 %v307
      %v471 = vunpack.c.l.b16 %v308
      %v472 = vunpack.c.h.b16 %v308
      %v473 = vunpack.c.l.b16 %v309
      %v474 = vunpack.c.h.b16 %v309
      %v475 = vunpack.c.l.b16 %v310
      %v476 = vunpack.c.h.b16 %v310
      %v477 = vunpack.c.l.b16 %v311
      %v478 = vunpack.c.h.b16 %v311
      %v479 = vunpack.c.l.b16 %v312
      %v480 = vunpack.c.h.b16 %v312
      %v481 = vunpack.c.l.b16 %v313
      %v482 = vunpack.c.h.b16 %v313
      %v483 = vunpack.c.l.b16 %v314
      %v484 = vunpack.c.h.b16 %v314
      %v485 = vunpack.c.l.b16 %v315
      %v486 = vunpack.c.h.b16 %v315
      %v487 = vunpack.c.l.b16 %v316
      %v488 = vunpack.c.h.b16 %v316
      %v489 = vunpack.c.l.b16 %v317
      %v490 = vunpack.c.h.b16 %v317
      %v491 = vunpack.c.l.b16 %v318
      %v492 = vunpack.c.h.b16 %v318
      %v493 = vunpack.c.l.b16 %v319
      %v494 = vunpack.c.h.b16 %v319
      %v495 = vunpack.c.l.b16 %v320
      %v496 = vunpack.c.h.b16 %v320
      %v497 = vunpack.c.l.b16 %v321
      %v498 = vunpack.c.h.b16 %v321
      %v499 = vunpack.c.l.b16 %v322
      %v500 = vunpack.c.h.b16 %v322
      %v501 = vunpack.c.l.b16 %v323
      %v502 = vunpack.c.h.b16 %v323
      %v503 = vunpack.c.l.b16 %v324
      %v504 = vunpack.c.h.b16 %v324
      %v505 = vunpack.c.l.b16 %v325
      %v506 = vunpack.c.h.b16 %v325
      %v507 = vunpack.c.l.b16 %v326
      %v508 = vunpack.c.h.b16 %v326
      %v509 = vunpack.c.l.b16 %v327
      %v510 = vunpack.c.h.b16 %v327
      %v511 = vunpack.c.l.b16 %v328
      %v512 = vunpack.c.h.b16 %v328
      %v513 = vunpack.c.l.b16 %v329
      %v514 = vunpack.c.h.b16 %v329
      %v515 = vunpack.c.l.b16 %v330
      %v516 = vunpack.c.h.b16 %v330
      %v517 = vunpack.c.l.b16 %v331
      %v518 = vunpack.c.h.b16 %v331
      %v519 = vunpack.c.l.b16 %v332
      %v520 = vunpack.c.h.b16 %v332
      %v521 = vpack.c.b16 %v459, %v457
      %v522 = vpack.c.b16 %v460, %v458
      %v523 = vpack.c.b16 %v463, %v461
      %v524 = vpack.c.b16 %v464, %v462
      %v525 = vpack.c.b16 %v467, %v465
      %v526 = vpack.c.b16 %v468, %v466
      %v527 = vpack.c.b16 %v471, %v469
      %v528 = vpack.c.b16 %v472, %v470
      %v529 = vpack.c.b16 %v475, %v473
      %v530 = vpack.c.b16 %v476, %v474
      %v531 = vpack.c.b16 %v479, %v477
      %v532 = vpack.c.b16 %v480, %v478
      %v533 = vpack.c.b16 %v483, %v481
      %v534 = vpack.c.b16 %v484, %v482
      %v535 = vpack.c.b16 %v487, %v485
      %v536 = vpack.c.b16 %v488, %v486
      %v537 = vpack.c.b16 %v491, %v489
      %v538 = vpack.c.b16 %v492, %v490
      %v539 = vpack.c.b16 %v495, %v493
      %v540 = vpack.c.b16 %v496, %v494
      %v541 = vpack.c.b16 %v499, %v497
      %v542 = vpack.c.b16 %v500, %v498
      %v543 = vpack.c.b16 %v503, %v501
      %v544 = vpack.c.b16 %v504, %v502
      %v545 = vpack.c.b16 %v507, %v505
      %v546 = vpack.c.b16 %v508, %v506
      %v547 = vpack.c.b16 %v511, %v509
      %v548 = vpack.c.b16 %v512, %v510
      %v549 = vpack.c.b16 %v515, %v513
      %v550 = vpack.c.b16 %v516, %v514
      %v551 = vpack.c.b16 %v519, %v517
      %v552 = vpack.c.b16 %v520, %v518
      %585 = vmatprep.subr.bf16.mxu0 %v536
      %586 = vmatpush1.bf16.msra.mxu0 %v535
      %587 = vmatprep.subr.bf16.mxu0 %v534
      %588 = vmatpush1.bf16.msra.mxu0 %v533
      %589 = vmatprep.subr.bf16.mxu0 %v532
      %590 = vmatpush1.bf16.msra.mxu0 %v531
      %591 = vmatprep.subr.bf16.mxu0 %v530
      %592 = vmatpush1.bf16.msra.mxu0 %v529
      %593 = vmatprep.subr.bf16.mxu0 %v528
      %594 = vmatpush1.bf16.msra.mxu0 %v527
      %595 = vmatprep.subr.bf16.mxu0 %v526
      %596 = vmatpush1.bf16.msra.mxu0 %v525
      %597 = vmatprep.subr.bf16.mxu0 %v524
      %598 = vmatpush1.bf16.msra.mxu0 %v523
      %599 = vmatprep.subr.bf16.mxu0 %v522
      %600 = vmatpush1.bf16.msra.mxu0 %v521
      %601 = vmatprep.subr.bf16.mxu0 %v552
      %602 = vmatpush2.bf16.msra.mxu0 %v551
      %603 = vmatprep.subr.bf16.mxu0 %v550
      %604 = vmatpush2.bf16.msra.mxu0 %v549
      %605 = vmatprep.subr.bf16.mxu0 %v548
      %606 = vmatpush2.bf16.msra.mxu0 %v547
      %607 = vmatprep.subr.bf16.mxu0 %v546
      %608 = vmatpush2.bf16.msra.mxu0 %v545
      %609 = vmatprep.subr.bf16.mxu0 %v544
      %610 = vmatpush2.bf16.msra.mxu0 %v543
      %611 = vmatprep.subr.bf16.mxu0 %v542
      %612 = vmatpush2.bf16.msra.mxu0 %v541
      %613 = vmatprep.subr.bf16.mxu0 %v540
      %614 = vmatpush2.bf16.msra.mxu0 %v539
      %615 = vmatprep.subr.bf16.mxu0 %v538
      %616 = vmatpush2.bf16.msra.mxu0 %v537
      %617 = vmatprep.mubr.bf16.mxu0 %v394
      %618 = vmatmul.mubr.bf16.gmra.mxu0 %v393
      %v619 = vpop.f32.mrf.mxu0
      %v620 = vadd.f32 %v338, %v619
      %v621 = vpop.f32.mrf.mxu0
      %v622 = vadd.f32 %v342, %v621
      %v623 = vpop.f32.mrf.mxu0
      %v624 = vadd.f32 %v338, %v623
      %v625 = vpop.f32.mrf.mxu0
      %v626 = vadd.f32 %v342, %v625
      %627 = vmatprep.mubr.bf16.mxu0 %v396
      %628 = vmatmul.mubr.bf16.gmra.mxu0 %v395
      %v629 = vpop.f32.mrf.mxu0
      %v630 = vadd.f32 %v338, %v629
      %v631 = vpop.f32.mrf.mxu0
      %v632 = vadd.f32 %v342, %v631
      %v633 = vpop.f32.mrf.mxu0
      %v634 = vadd.f32 %v338, %v633
      %v635 = vpop.f32.mrf.mxu0
      %v636 = vadd.f32 %v342, %v635
      %637 = vmatprep.mubr.bf16.mxu0 %v398
      %638 = vmatmul.mubr.bf16.gmra.mxu0 %v397
      %v639 = vpop.f32.mrf.mxu0
      %v640 = vadd.f32 %v338, %v639
      %v641 = vpop.f32.mrf.mxu0
      %v642 = vadd.f32 %v342, %v641
      %v643 = vpop.f32.mrf.mxu0
      %v644 = vadd.f32 %v338, %v643
      %v645 = vpop.f32.mrf.mxu0
      %v646 = vadd.f32 %v342, %v645
      %647 = vmatprep.mubr.bf16.mxu0 %v400
      %648 = vmatmul.mubr.bf16.gmra.mxu0 %v399
      %v649 = vpop.f32.mrf.mxu0
      %v650 = vadd.f32 %v338, %v649
      %v651 = vpop.f32.mrf.mxu0
      %v652 = vadd.f32 %v342, %v651
      %v653 = vpop.f32.mrf.mxu0
      %v654 = vadd.f32 %v338, %v653
      %v655 = vpop.f32.mrf.mxu0
      %v656 = vadd.f32 %v342, %v655
      %657 = vmatprep.mubr.bf16.mxu0 %v402
      %658 = vmatmul.mubr.bf16.gmra.mxu0 %v401
      %v659 = vpop.f32.mrf.mxu0
      %v660 = vadd.f32 %v338, %v659
      %v661 = vpop.f32.mrf.mxu0
      %v662 = vadd.f32 %v342, %v661
      %v663 = vpop.f32.mrf.mxu0
      %v664 = vadd.f32 %v338, %v663
      %v665 = vpop.f32.mrf.mxu0
      %v666 = vadd.f32 %v342, %v665
      %667 = vmatprep.mubr.bf16.mxu0 %v404
      %668 = vmatmul.mubr.bf16.gmra.mxu0 %v403
      %v669 = vpop.f32.mrf.mxu0
      %v670 = vadd.f32 %v338, %v669
      %v671 = vpop.f32.mrf.mxu0
      %v672 = vadd.f32 %v342, %v671
      %v673 = vpop.f32.mrf.mxu0
      %v674 = vadd.f32 %v338, %v673
      %v675 = vpop.f32.mrf.mxu0
      %v676 = vadd.f32 %v342, %v675
      %677 = vmatprep.mubr.bf16.mxu0 %v406
      %678 = vmatmul.mubr.bf16.gmra.mxu0 %v405
      %v679 = vpop.f32.mrf.mxu0
      %v680 = vadd.f32 %v338, %v679
      %v681 = vpop.f32.mrf.mxu0
      %v682 = vadd.f32 %v342, %v681
      %v683 = vpop.f32.mrf.mxu0
      %v684 = vadd.f32 %v338, %v683
      %v685 = vpop.f32.mrf.mxu0
      %v686 = vadd.f32 %v342, %v685
      %687 = vmatprep.mubr.bf16.mxu0 %v408
      %688 = vmatmul.mubr.bf16.gmra.mxu0 %v407
      %v689 = vpop.f32.mrf.mxu0
      %v690 = vadd.f32 %v338, %v689
      %v691 = vpop.f32.mrf.mxu0
      %v692 = vadd.f32 %v342, %v691
      %v693 = vpop.f32.mrf.mxu0
      %v694 = vadd.f32 %v338, %v693
      %v695 = vpop.f32.mrf.mxu0
      %v696 = vadd.f32 %v342, %v695
      %697 = vdwg.mxu0
      %v698 = vld [vmem:[%s276] sm:$0xff]
      %v699 = vld [vmem:[%s276 + $0x8] sm:$0xff]
      %v700 = vld [vmem:[%s276 + $0x10] sm:$0xff]
      %v701 = vld [vmem:[%s276 + $0x18] sm:$0xff]
      %v702 = vld [vmem:[%s276 + $0x20] sm:$0xff]
      %v703 = vld [vmem:[%s276 + $0x28] sm:$0xff]
      %v704 = vld [vmem:[%s276 + $0x30] sm:$0xff]
      %v705 = vld [vmem:[%s276 + $0x38] sm:$0xff]
      %v706 = vld [vmem:[%s276 + $0x40] sm:$0xff]
      %v707 = vld [vmem:[%s276 + $0x48] sm:$0xff]
      %v708 = vld [vmem:[%s276 + $0x50] sm:$0xff]
      %v709 = vld [vmem:[%s276 + $0x58] sm:$0xff]
      %v710 = vld [vmem:[%s276 + $0x60] sm:$0xff]
      %v711 = vld [vmem:[%s276 + $0x68] sm:$0xff]
      %v712 = vld [vmem:[%s276 + $0x70] sm:$0xff]
      %v713 = vld [vmem:[%s276 + $0x78] sm:$0xff]
      %v714 = vunpack.c.l.bf16 %v698
      %v715 = vunpack.c.h.bf16 %v698
      %v716 = vunpack.c.l.bf16 %v699
      %v717 = vunpack.c.h.bf16 %v699
      %v718 = vunpack.c.l.bf16 %v700
      %v719 = vunpack.c.h.bf16 %v700
      %v720 = vunpack.c.l.bf16 %v701
      %v721 = vunpack.c.h.bf16 %v701
      %v722 = vunpack.c.l.bf16 %v702
      %v723 = vunpack.c.h.bf16 %v702
      %v724 = vunpack.c.l.bf16 %v703
      %v725 = vunpack.c.h.bf16 %v703
      %v726 = vunpack.c.l.bf16 %v704
      %v727 = vunpack.c.h.bf16 %v704
      %v728 = vunpack.c.l.bf16 %v705
      %v729 = vunpack.c.h.bf16 %v705
      %v730 = vunpack.c.l.bf16 %v706
      %v731 = vunpack.c.h.bf16 %v706
      %v732 = vunpack.c.l.bf16 %v707
      %v733 = vunpack.c.h.bf16 %v707
      %v734 = vunpack.c.l.bf16 %v708
      %v735 = vunpack.c.h.bf16 %v708
      %v736 = vunpack.c.l.bf16 %v709
      %v737 = vunpack.c.h.bf16 %v709
      %v738 = vunpack.c.l.bf16 %v710
      %v739 = vunpack.c.h.bf16 %v710
      %v740 = vunpack.c.l.bf16 %v711
      %v741 = vunpack.c.h.bf16 %v711
      %v742 = vunpack.c.l.bf16 %v712
      %v743 = vunpack.c.h.bf16 %v712
      %v744 = vunpack.c.l.bf16 %v713
      %v745 = vunpack.c.h.bf16 %v713
      %v746 = vadd.f32 %v620, %v714
      %v747 = vadd.f32 %v622, %v715
      %v748 = vadd.f32 %v624, %v716
      %v749 = vadd.f32 %v626, %v717
      %v750 = vadd.f32 %v630, %v718
      %v751 = vadd.f32 %v632, %v719
      %v752 = vadd.f32 %v634, %v720
      %v753 = vadd.f32 %v636, %v721
      %v754 = vadd.f32 %v640, %v722
      %v755 = vadd.f32 %v642, %v723
      %v756 = vadd.f32 %v644, %v724
      %v757 = vadd.f32 %v646, %v725
      %v758 = vadd.f32 %v650, %v726
      %v759 = vadd.f32 %v652, %v727
      %v760 = vadd.f32 %v654, %v728
      %v761 = vadd.f32 %v656, %v729
      %v762 = vadd.f32 %v660, %v730
      %v763 = vadd.f32 %v662, %v731
      %v764 = vadd.f32 %v664, %v732
      %v765 = vadd.f32 %v666, %v733
      %v766 = vadd.f32 %v670, %v734
      %v767 = vadd.f32 %v672, %v735
      %v768 = vadd.f32 %v674, %v736
      %v769 = vadd.f32 %v676, %v737
      %v770 = vadd.f32 %v680, %v738
      %v771 = vadd.f32 %v682, %v739
      %v772 = vadd.f32 %v684, %v740
      %v773 = vadd.f32 %v686, %v741
      %v774 = vadd.f32 %v690, %v742
      %v775 = vadd.f32 %v692, %v743
      %v776 = vadd.f32 %v694, %v744
      %v777 = vadd.f32 %v696, %v745
      %v778 = vld [vmem:[%s4] sm:$0x3]
      %v779 = vld [vmem:[%s5] sm:$0x3]
      %v780 = vadd.f32 %v746, %v747
      %781 = vadd.xlane.f32.xlu0 %v780
      %v782 = vpop.xlane.xlu0 %781
      %v783 = vadd.f32 %v748, %v749
      %784 = vadd.xlane.f32.xlu0 %v783
      %v785 = vpop.xlane.xlu0 %784
      %v786 = vadd.f32 %v750, %v751
      %787 = vadd.xlane.f32.xlu0 %v786
      %v788 = vpop.xlane.xlu0 %787
      %v789 = vadd.f32 %v752, %v753
      %790 = vadd.xlane.f32.xlu0 %v789
      %v791 = vpop.xlane.xlu0 %790
      %v792 = vadd.f32 %v754, %v755
      %793 = vadd.xlane.f32.xlu0 %v792
      %v794 = vpop.xlane.xlu0 %793
      %v795 = vadd.f32 %v756, %v757
      %796 = vadd.xlane.f32.xlu0 %v795
      %v797 = vpop.xlane.xlu0 %796
      %v798 = vadd.f32 %v758, %v759
      %799 = vadd.xlane.f32.xlu0 %v798
      %v800 = vpop.xlane.xlu0 %799
      %v801 = vadd.f32 %v760, %v761
      %802 = vadd.xlane.f32.xlu0 %v801
      %v803 = vpop.xlane.xlu0 %802
      %v804 = vadd.f32 %v762, %v763
      %805 = vadd.xlane.f32.xlu0 %v804
      %v806 = vpop.xlane.xlu0 %805
      %v807 = vadd.f32 %v764, %v765
      %808 = vadd.xlane.f32.xlu0 %v807
      %v809 = vpop.xlane.xlu0 %808
      %v810 = vadd.f32 %v766, %v767
      %811 = vadd.xlane.f32.xlu0 %v810
      %v812 = vpop.xlane.xlu0 %811
      %v813 = vadd.f32 %v768, %v769
      %814 = vadd.xlane.f32.xlu0 %v813
      %v815 = vpop.xlane.xlu0 %814
      %v816 = vadd.f32 %v770, %v771
      %817 = vadd.xlane.f32.xlu0 %v816
      %v818 = vpop.xlane.xlu0 %817
      %v819 = vadd.f32 %v772, %v773
      %820 = vadd.xlane.f32.xlu0 %v819
      %v821 = vpop.xlane.xlu0 %820
      %v822 = vadd.f32 %v774, %v775
      %823 = vadd.xlane.f32.xlu0 %v822
      %v824 = vpop.xlane.xlu0 %823
      %v825 = vadd.f32 %v776, %v777
      %826 = vadd.xlane.f32.xlu0 %v825
      %v827 = vpop.xlane.xlu0 %826
      %v828 = vrcp.pop 256.0
      %v829 = vmul.f32 %v782, %v828
      %v830 = vmul.f32 %v785, %v828
      %v831 = vmul.f32 %v788, %v828
      %v832 = vmul.f32 %v791, %v828
      %v833 = vmul.f32 %v794, %v828
      %v834 = vmul.f32 %v797, %v828
      %v835 = vmul.f32 %v800, %v828
      %v836 = vmul.f32 %v803, %v828
      %v837 = vmul.f32 %v806, %v828
      %v838 = vmul.f32 %v809, %v828
      %v839 = vmul.f32 %v812, %v828
      %v840 = vmul.f32 %v815, %v828
      %v841 = vmul.f32 %v818, %v828
      %v842 = vmul.f32 %v821, %v828
      %v843 = vmul.f32 %v824, %v828
      %v844 = vmul.f32 %v827, %v828
      %v845 = vsub.f32 %v746, %v829
      %v846 = vsub.f32 %v747, %v829
      %v847 = vsub.f32 %v748, %v830
      %v848 = vsub.f32 %v749, %v830
      %v849 = vsub.f32 %v750, %v831
      %v850 = vsub.f32 %v751, %v831
      %v851 = vsub.f32 %v752, %v832
      %v852 = vsub.f32 %v753, %v832
      %v853 = vsub.f32 %v754, %v833
      %v854 = vsub.f32 %v755, %v833
      %v855 = vsub.f32 %v756, %v834
      %v856 = vsub.f32 %v757, %v834
      %v857 = vsub.f32 %v758, %v835
      %v858 = vsub.f32 %v759, %v835
      %v859 = vsub.f32 %v760, %v836
      %v860 = vsub.f32 %v761, %v836
      %v861 = vsub.f32 %v762, %v837
      %v862 = vsub.f32 %v763, %v837
      %v863 = vsub.f32 %v764, %v838
      %v864 = vsub.f32 %v765, %v838
      %v865 = vsub.f32 %v766, %v839
      %v866 = vsub.f32 %v767, %v839
      %v867 = vsub.f32 %v768, %v840
      %v868 = vsub.f32 %v769, %v840
      %v869 = vsub.f32 %v770, %v841
      %v870 = vsub.f32 %v771, %v841
      %v871 = vsub.f32 %v772, %v842
      %v872 = vsub.f32 %v773, %v842
      %v873 = vsub.f32 %v774, %v843
      %v874 = vsub.f32 %v775, %v843
      %v875 = vsub.f32 %v776, %v844
      %v876 = vsub.f32 %v777, %v844
      %v877 = vmul.f32 %v845, %v845
      %v878 = vmul.f32 %v846, %v846
      %v879 = vmul.f32 %v847, %v847
      %v880 = vmul.f32 %v848, %v848
      %v881 = vmul.f32 %v849, %v849
      %v882 = vmul.f32 %v850, %v850
      %v883 = vmul.f32 %v851, %v851
      %v884 = vmul.f32 %v852, %v852
      %v885 = vmul.f32 %v853, %v853
      %v886 = vmul.f32 %v854, %v854
      %v887 = vmul.f32 %v855, %v855
      %v888 = vmul.f32 %v856, %v856
      %v889 = vmul.f32 %v857, %v857
      %v890 = vmul.f32 %v858, %v858
      %v891 = vmul.f32 %v859, %v859
      %v892 = vmul.f32 %v860, %v860
      %v893 = vmul.f32 %v861, %v861
      %v894 = vmul.f32 %v862, %v862
      %v895 = vmul.f32 %v863, %v863
      %v896 = vmul.f32 %v864, %v864
      %v897 = vmul.f32 %v865, %v865
      %v898 = vmul.f32 %v866, %v866
      %v899 = vmul.f32 %v867, %v867
      %v900 = vmul.f32 %v868, %v868
      %v901 = vmul.f32 %v869, %v869
      %v902 = vmul.f32 %v870, %v870
      %v903 = vmul.f32 %v871, %v871
      %v904 = vmul.f32 %v872, %v872
      %v905 = vmul.f32 %v873, %v873
      %v906 = vmul.f32 %v874, %v874
      %v907 = vmul.f32 %v875, %v875
      %v908 = vmul.f32 %v876, %v876
      %v909 = vadd.f32 %v877, %v878
      %910 = vadd.xlane.f32.xlu0 %v909
      %v911 = vpop.xlane.xlu0 %910
      %v912 = vadd.f32 %v879, %v880
      %913 = vadd.xlane.f32.xlu0 %v912
      %v914 = vpop.xlane.xlu0 %913
      %v915 = vadd.f32 %v881, %v882
      %916 = vadd.xlane.f32.xlu0 %v915
      %v917 = vpop.xlane.xlu0 %916
      %v918 = vadd.f32 %v883, %v884
      %919 = vadd.xlane.f32.xlu0 %v918
      %v920 = vpop.xlane.xlu0 %919
      %v921 = vadd.f32 %v885, %v886
      %922 = vadd.xlane.f32.xlu0 %v921
      %v923 = vpop.xlane.xlu0 %922
      %v924 = vadd.f32 %v887, %v888
      %925 = vadd.xlane.f32.xlu0 %v924
      %v926 = vpop.xlane.xlu0 %925
      %v927 = vadd.f32 %v889, %v890
      %928 = vadd.xlane.f32.xlu0 %v927
      %v929 = vpop.xlane.xlu0 %928
      %v930 = vadd.f32 %v891, %v892
      %931 = vadd.xlane.f32.xlu0 %v930
      %v932 = vpop.xlane.xlu0 %931
      %v933 = vadd.f32 %v893, %v894
      %934 = vadd.xlane.f32.xlu0 %v933
      %v935 = vpop.xlane.xlu0 %934
      %v936 = vadd.f32 %v895, %v896
      %937 = vadd.xlane.f32.xlu0 %v936
      %v938 = vpop.xlane.xlu0 %937
      %v939 = vadd.f32 %v897, %v898
      %940 = vadd.xlane.f32.xlu0 %v939
      %v941 = vpop.xlane.xlu0 %940
      %v942 = vadd.f32 %v899, %v900
      %943 = vadd.xlane.f32.xlu0 %v942
      %v944 = vpop.xlane.xlu0 %943
      %v945 = vadd.f32 %v901, %v902
      %946 = vadd.xlane.f32.xlu0 %v945
      %v947 = vpop.xlane.xlu0 %946
      %v948 = vadd.f32 %v903, %v904
      %949 = vadd.xlane.f32.xlu0 %v948
      %v950 = vpop.xlane.xlu0 %949
      %v951 = vadd.f32 %v905, %v906
      %952 = vadd.xlane.f32.xlu0 %v951
      %v953 = vpop.xlane.xlu0 %952
      %v954 = vadd.f32 %v907, %v908
      %955 = vadd.xlane.f32.xlu0 %v954
      %v956 = vpop.xlane.xlu0 %955
      %v957 = vmul.f32 %v911, %v828
      %v958 = vmul.f32 %v914, %v828
      %v959 = vmul.f32 %v917, %v828
      %v960 = vmul.f32 %v920, %v828
      %v961 = vmul.f32 %v923, %v828
      %v962 = vmul.f32 %v926, %v828
      %v963 = vmul.f32 %v929, %v828
      %v964 = vmul.f32 %v932, %v828
      %v965 = vmul.f32 %v935, %v828
      %v966 = vmul.f32 %v938, %v828
      %v967 = vmul.f32 %v941, %v828
      %v968 = vmul.f32 %v944, %v828
      %v969 = vmul.f32 %v947, %v828
      %v970 = vmul.f32 %v950, %v828
      %v971 = vmul.f32 %v953, %v828
      %v972 = vmul.f32 %v956, %v828
      %v973 = vadd.f32 %v957, 1e-12
      %v974 = vadd.f32 %v958, 1e-12
      %v975 = vadd.f32 %v959, 1e-12
      %v976 = vadd.f32 %v960, 1e-12
      %v977 = vadd.f32 %v961, 1e-12
      %v978 = vadd.f32 %v962, 1e-12
      %v979 = vadd.f32 %v963, 1e-12
      %v980 = vadd.f32 %v964, 1e-12
      %v981 = vadd.f32 %v965, 1e-12
      %v982 = vadd.f32 %v966, 1e-12
      %v983 = vadd.f32 %v967, 1e-12
      %v984 = vadd.f32 %v968, 1e-12
      %v985 = vadd.f32 %v969, 1e-12
      %v986 = vadd.f32 %v970, 1e-12
      %v987 = vadd.f32 %v971, 1e-12
      %v988 = vadd.f32 %v972, 1e-12
      %v989 = vrsqrt.pop %v973
      %v990 = vrsqrt.pop %v974
      %v991 = vrsqrt.pop %v975
      %v992 = vrsqrt.pop %v976
      %v993 = vrsqrt.pop %v977
      %v994 = vrsqrt.pop %v978
      %v995 = vrsqrt.pop %v979
      %v996 = vrsqrt.pop %v980
      %v997 = vrsqrt.pop %v981
      %v998 = vrsqrt.pop %v982
      %v999 = vrsqrt.pop %v983
      %v1000 = vrsqrt.pop %v984
      %v1001 = vrsqrt.pop %v985
      %v1002 = vrsqrt.pop %v986
      %v1003 = vrsqrt.pop %v987
      %v1004 = vrsqrt.pop %v988
      %v1005 = vmul.f32 %v845, %v989
      %v1006 = vmul.f32 %v846, %v989
      %v1007 = vmul.f32 %v847, %v990
      %v1008 = vmul.f32 %v848, %v990
      %v1009 = vmul.f32 %v849, %v991
      %v1010 = vmul.f32 %v850, %v991
      %v1011 = vmul.f32 %v851, %v992
      %v1012 = vmul.f32 %v852, %v992
      %v1013 = vmul.f32 %v853, %v993
      %v1014 = vmul.f32 %v854, %v993
      %v1015 = vmul.f32 %v855, %v994
      %v1016 = vmul.f32 %v856, %v994
      %v1017 = vmul.f32 %v857, %v995
      %v1018 = vmul.f32 %v858, %v995
      %v1019 = vmul.f32 %v859, %v996
      %v1020 = vmul.f32 %v860, %v996
      %v1021 = vmul.f32 %v861, %v997
      %v1022 = vmul.f32 %v862, %v997
      %v1023 = vmul.f32 %v863, %v998
      %v1024 = vmul.f32 %v864, %v998
      %v1025 = vmul.f32 %v865, %v999
      %v1026 = vmul.f32 %v866, %v999
      %v1027 = vmul.f32 %v867, %v1000
      %v1028 = vmul.f32 %v868, %v1000
      %v1029 = vmul.f32 %v869, %v1001
      %v1030 = vmul.f32 %v870, %v1001
      %v1031 = vmul.f32 %v871, %v1002
      %v1032 = vmul.f32 %v872, %v1002
      %v1033 = vmul.f32 %v873, %v1003
      %v1034 = vmul.f32 %v874, %v1003
      %v1035 = vmul.f32 %v875, %v1004
      %v1036 = vmul.f32 %v876, %v1004
      %v1038 = vlaneseq
      %v1039 = vshrl.u32 %v1038, 7
      %v1040 = vsub.s32 0, %v1039
      %v1041 = vrot.slane %v778, %v1040
      %v1042 = vlaneseq
      %v1043 = vshrl.u32 %v1042, 7
      %v1044 = vsub.s32 1, %v1043
      %v1045 = vrot.slane %v778, %v1044
      %v1048 = vmul.f32 %v1005, %v1041
      %v1049 = vmul.f32 %v1006, %v1045
      %v1050 = vmul.f32 %v1007, %v1041
      %v1051 = vmul.f32 %v1008, %v1045
      %v1052 = vmul.f32 %v1009, %v1041
      %v1053 = vmul.f32 %v1010, %v1045
      %v1054 = vmul.f32 %v1011, %v1041
      %v1055 = vmul.f32 %v1012, %v1045
      %v1056 = vmul.f32 %v1013, %v1041
      %v1057 = vmul.f32 %v1014, %v1045
      %v1058 = vmul.f32 %v1015, %v1041
      %v1059 = vmul.f32 %v1016, %v1045
      %v1060 = vmul.f32 %v1017, %v1041
      %v1061 = vmul.f32 %v1018, %v1045
      %v1062 = vmul.f32 %v1019, %v1041
      %v1063 = vmul.f32 %v1020, %v1045
      %v1064 = vmul.f32 %v1021, %v1041
      %v1065 = vmul.f32 %v1022, %v1045
      %v1066 = vmul.f32 %v1023, %v1041
      %v1067 = vmul.f32 %v1024, %v1045
      %v1068 = vmul.f32 %v1025, %v1041
      %v1069 = vmul.f32 %v1026, %v1045
      %v1070 = vmul.f32 %v1027, %v1041
      %v1071 = vmul.f32 %v1028, %v1045
      %v1072 = vmul.f32 %v1029, %v1041
      %v1073 = vmul.f32 %v1030, %v1045
      %v1074 = vmul.f32 %v1031, %v1041
      %v1075 = vmul.f32 %v1032, %v1045
      %v1076 = vmul.f32 %v1033, %v1041
      %v1077 = vmul.f32 %v1034, %v1045
      %v1078 = vmul.f32 %v1035, %v1041
      %v1079 = vmul.f32 %v1036, %v1045
      %v1081 = vlaneseq
      %v1082 = vshrl.u32 %v1081, 7
      %v1083 = vsub.s32 0, %v1082
      %v1084 = vrot.slane %v779, %v1083
      %v1085 = vlaneseq
      %v1086 = vshrl.u32 %v1085, 7
      %v1087 = vsub.s32 1, %v1086
      %v1088 = vrot.slane %v779, %v1087
      %v1091 = vadd.f32 %v1048, %v1084
      %v1092 = vadd.f32 %v1049, %v1088
      %v1093 = vadd.f32 %v1050, %v1084
      %v1094 = vadd.f32 %v1051, %v1088
      %v1095 = vadd.f32 %v1052, %v1084
      %v1096 = vadd.f32 %v1053, %v1088
      %v1097 = vadd.f32 %v1054, %v1084
      %v1098 = vadd.f32 %v1055, %v1088
      %v1099 = vadd.f32 %v1056, %v1084
      %v1100 = vadd.f32 %v1057, %v1088
      %v1101 = vadd.f32 %v1058, %v1084
      %v1102 = vadd.f32 %v1059, %v1088
      %v1103 = vadd.f32 %v1060, %v1084
      %v1104 = vadd.f32 %v1061, %v1088
      %v1105 = vadd.f32 %v1062, %v1084
      %v1106 = vadd.f32 %v1063, %v1088
      %v1107 = vadd.f32 %v1064, %v1084
      %v1108 = vadd.f32 %v1065, %v1088
      %v1109 = vadd.f32 %v1066, %v1084
      %v1110 = vadd.f32 %v1067, %v1088
      %v1111 = vadd.f32 %v1068, %v1084
      %v1112 = vadd.f32 %v1069, %v1088
      %v1113 = vadd.f32 %v1070, %v1084
      %v1114 = vadd.f32 %v1071, %v1088
      %v1115 = vadd.f32 %v1072, %v1084
      %v1116 = vadd.f32 %v1073, %v1088
      %v1117 = vadd.f32 %v1074, %v1084
      %v1118 = vadd.f32 %v1075, %v1088
      %v1119 = vadd.f32 %v1076, %v1084
      %v1120 = vadd.f32 %v1077, %v1088
      %v1121 = vadd.f32 %v1078, %v1084
      %v1122 = vadd.f32 %v1079, %v1088
      %v1123 = vpack.c.bf16 %v1093, %v1091
      %v1124 = vpack.c.bf16 %v1094, %v1092
      %v1125 = vpack.c.bf16 %v1097, %v1095
      %v1126 = vpack.c.bf16 %v1098, %v1096
      %v1127 = vpack.c.bf16 %v1101, %v1099
      %v1128 = vpack.c.bf16 %v1102, %v1100
      %v1129 = vpack.c.bf16 %v1105, %v1103
      %v1130 = vpack.c.bf16 %v1106, %v1104
      %v1131 = vpack.c.bf16 %v1109, %v1107
      %v1132 = vpack.c.bf16 %v1110, %v1108
      %v1133 = vpack.c.bf16 %v1113, %v1111
      %v1134 = vpack.c.bf16 %v1114, %v1112
      %v1135 = vpack.c.bf16 %v1117, %v1115
      %v1136 = vpack.c.bf16 %v1118, %v1116
      %v1137 = vpack.c.bf16 %v1121, %v1119
      %v1138 = vpack.c.bf16 %v1122, %v1120
      %v1155 = vunpack.c.l.b16 %v1123
      %v1156 = vunpack.c.l.b16 %v1124
      %v1157 = vunpack.c.h.b16 %v1123
      %v1158 = vunpack.c.h.b16 %v1124
      %v1159 = vunpack.c.l.b16 %v1125
      %v1160 = vunpack.c.l.b16 %v1126
      %v1161 = vunpack.c.h.b16 %v1125
      %v1162 = vunpack.c.h.b16 %v1126
      %v1163 = vunpack.c.l.b16 %v1127
      %v1164 = vunpack.c.l.b16 %v1128
      %v1165 = vunpack.c.h.b16 %v1127
      %v1166 = vunpack.c.h.b16 %v1128
      %v1167 = vunpack.c.l.b16 %v1129
      %v1168 = vunpack.c.l.b16 %v1130
      %v1169 = vunpack.c.h.b16 %v1129
      %v1170 = vunpack.c.h.b16 %v1130
      %v1171 = vunpack.c.l.b16 %v1131
      %v1172 = vunpack.c.l.b16 %v1132
      %v1173 = vunpack.c.h.b16 %v1131
      %v1174 = vunpack.c.h.b16 %v1132
      %v1175 = vunpack.c.l.b16 %v1133
      %v1176 = vunpack.c.l.b16 %v1134
      %v1177 = vunpack.c.h.b16 %v1133
      %v1178 = vunpack.c.h.b16 %v1134
      %v1179 = vunpack.c.l.b16 %v1135
      %v1180 = vunpack.c.l.b16 %v1136
      %v1181 = vunpack.c.h.b16 %v1135
      %v1182 = vunpack.c.h.b16 %v1136
      %v1183 = vunpack.c.l.b16 %v1137
      %v1184 = vunpack.c.l.b16 %v1138
      %v1185 = vunpack.c.h.b16 %v1137
      %v1186 = vunpack.c.h.b16 %v1138
      %v1187 = vpack.c.b16 %v1156, %v1155
      %v1188 = vpack.c.b16 %v1158, %v1157
      %v1189 = vpack.c.b16 %v1160, %v1159
      %v1190 = vpack.c.b16 %v1162, %v1161
      %v1191 = vpack.c.b16 %v1164, %v1163
      %v1192 = vpack.c.b16 %v1166, %v1165
      %v1193 = vpack.c.b16 %v1168, %v1167
      %v1194 = vpack.c.b16 %v1170, %v1169
      %v1195 = vpack.c.b16 %v1172, %v1171
      %v1196 = vpack.c.b16 %v1174, %v1173
      %v1197 = vpack.c.b16 %v1176, %v1175
      %v1198 = vpack.c.b16 %v1178, %v1177
      %v1199 = vpack.c.b16 %v1180, %v1179
      %v1200 = vpack.c.b16 %v1182, %v1181
      %v1201 = vpack.c.b16 %v1184, %v1183
      %v1202 = vpack.c.b16 %v1186, %v1185
      %1219 = vst [vmem:[%s283] sm:$0xff] %v1187
      %1220 = vst [vmem:[%s283 + $0x8] sm:$0xff] %v1188
      %1221 = vst [vmem:[%s283 + $0x10] sm:$0xff] %v1189
      %1222 = vst [vmem:[%s283 + $0x18] sm:$0xff] %v1190
      %1223 = vst [vmem:[%s283 + $0x20] sm:$0xff] %v1191
      %1224 = vst [vmem:[%s283 + $0x28] sm:$0xff] %v1192
      %1225 = vst [vmem:[%s283 + $0x30] sm:$0xff] %v1193
      %1226 = vst [vmem:[%s283 + $0x38] sm:$0xff] %v1194
      %1227 = vst [vmem:[%s283 + $0x40] sm:$0xff] %v1195
      %1228 = vst [vmem:[%s283 + $0x48] sm:$0xff] %v1196
      %1229 = vst [vmem:[%s283 + $0x50] sm:$0xff] %v1197
      %1230 = vst [vmem:[%s283 + $0x58] sm:$0xff] %v1198
      %1231 = vst [vmem:[%s283 + $0x60] sm:$0xff] %v1199
      %1232 = vst [vmem:[%s283 + $0x68] sm:$0xff] %v1200
      %1233 = vst [vmem:[%s283 + $0x70] sm:$0xff] %v1201
      %1234 = vst [vmem:[%s283 + $0x78] sm:$0xff] %v1202
      %s1235 = smul.u32 16, %s17
      %p1236 = scmp.lt.s32.totalorder %s1235, 47
      %s1237 = scalar_select %p1236, %s1235, 47
      %s1238 = smul.addr %s1237, 2
      %s1239 = smul.addr %s1238, 4
      %s1240 = scalar_lea.vmem %s6, %s1239
      // Predicated region
      $region45: #{albef_forward.13} parent=43 // pred_check
        %p1241 = pneg %p171
      $region46: #{albef_forward.13} parent=43 // pred_check_branch
        %1243 = sbr.rel (%p1241) target = $region48
      $region47: #{albef_forward.13} parent=43 // pred_region
        %s1244 = smul.u32 16, %s17
      $region48: #{albef_forward.13} parent=43 // pred_fallthru
        _
    $region44: #{albef_forward.13} parent=5 // pred_fallthru
      _
    %p1245 = scmp.le.s32.totalorder 2, %s12
    // Predicated region
    $region49: #{albef_forward.13} parent=5 // pred_check
      %p1246 = pneg %p1245
    $region50: #{albef_forward.13} parent=5 // pred_check_branch
      %1248 = sbr.rel (%p1246) target = $region52
    $region51: #{albef_forward.13} parent=5 // pred_region
      %s1249 = ssub.s32 %s12, 2
      // Predicated region
      $region53: #{albef_forward.13} parent=51 // pred_check
        %p1250 = pneg %p177
      $region54: #{albef_forward.13} parent=51 // pred_check_branch
        %1252 = sbr.rel (%p1250) target = $region56
      $region55: #{albef_forward.13} parent=51 // pred_region
        %s1253 = smul.u32 16, %s18
        %p1254 = scmp.lt.s32.totalorder %s1253, 47
        %s1255 = scalar_select %p1254, %s1253, 47
        %s1256 = smul.addr %s1255, 2
        %s1257 = smul.addr %s1256, 4
        %s1258 = scalar_lea.vmem %s6, %s1257
      $region56: #{albef_forward.13} parent=51 // pred_fallthru
        _
    $region52: #{albef_forward.13} parent=5 // pred_fallthru
      _
  $region6: #{albef_forward.13} parent=0 // loop_footer
    %s16 = sadd.s32 1, %s12
  $region7: #{albef_forward.13} parent=0 // loop_footer_branch
    %11 = sbr.rel target = $region3
  $region8: #{albef_forward.13} parent=0 // loop_exit
    _

// kernel: albef_forward.19
$region0: #{albef_forward.19}
  #allocation0 [shape = 'u32[]', space=smem, size = 0x4, offset = 0x4, fixed_abs, tag = 'smem constant byte address 0x4 - core index']
  #allocation1 [shape = 'u32[144,128]{1,0:T(1,128)}', space=vmem, size = 0x12000, scoped, tag = 'internal scratch']
  %s0 = inlined_call_operand.vmem [shape: bf16[2,256], index: 0, kind: input, shape index: {}]
  %s1 = inlined_call_operand.vmem [shape: bf16[4,256], index: 1, kind: input, shape index: {}]
  %s2 = inlined_call_operand.vmem [shape: bf16[256,128], index: 2, kind: input, shape index: {}]
  %s3 = inlined_call_operand.vmem [shape: f32[1,128], index: 3, kind: input, shape index: {}]
  %s4 = inlined_call_operand.vmem [shape: bf16[256,128], index: 4, kind: input, shape index: {}]
  %s5 = inlined_call_operand.vmem [shape: f32[1,128], index: 5, kind: input, shape index: {}]
  %s6 = inlined_call_operand.hbm [shape: f32[1,1], index: 6, kind: output, shape index: {}]
  %s7 = sld [smem:[#allocation0]]
  $region34: #{albef_forward.19} parent=0
    _
  %s9 = ssub.s32 1, %s7
  %s10 = scalar_select 0, %s9, %s7
  $region1: #{albef_forward.19} parent=0
    #allocation2 [shape = 'u8[512]{0}', space=vmem, size = 0x400, scoped, tag = 'output window, operand 0, single buffered']
    #allocation3 [shape = 's32[1]{0}', space=sflag, size = 0x4, scoped, tag = 'scoped memory for albef_forward.19']
    %11 = vsyncpa [#allocation3], 0
    // Predicated region
    $region2: #{albef_forward.19} parent=1 // pred_check
      _
    $region3: #{albef_forward.19} parent=1 // pred_check_branch
      %13 = sbr.rel (0) target = $region5
    $region4: #{albef_forward.19} parent=1 // pred_region
      _
    $region5: #{albef_forward.19} parent=1 // pred_fallthru
      _
    // Predicated region
    $region6: #{albef_forward.19} parent=1 // pred_check
      _
    $region7: #{albef_forward.19} parent=1 // pred_check_branch
      %15 = sbr.rel (0) target = $region9
    $region8: #{albef_forward.19} parent=1 // pred_region
      _
    $region9: #{albef_forward.19} parent=1 // pred_fallthru
      _
    // Predicated region
    $region10: #{albef_forward.19} parent=1 // pred_check
      _
    $region11: #{albef_forward.19} parent=1 // pred_check_branch
      %17 = sbr.rel (0) target = $region13
    $region12: #{albef_forward.19} parent=1 // pred_region
      _
    $region13: #{albef_forward.19} parent=1 // pred_fallthru
      _
    // Predicated region
    $region14: #{albef_forward.19} parent=1 // pred_check
      _
    $region15: #{albef_forward.19} parent=1 // pred_check_branch
      %19 = sbr.rel (0) target = $region17
    $region16: #{albef_forward.19} parent=1 // pred_region
      _
    $region17: #{albef_forward.19} parent=1 // pred_fallthru
      _
    // Predicated region
    $region18: #{albef_forward.19} parent=1 // pred_check
      _
    $region19: #{albef_forward.19} parent=1 // pred_check_branch
      %21 = sbr.rel (0) target = $region21
    $region20: #{albef_forward.19} parent=1 // pred_region
      _
    $region21: #{albef_forward.19} parent=1 // pred_fallthru
      _
    // Predicated region
    $region22: #{albef_forward.19} parent=1 // pred_check
      _
    $region23: #{albef_forward.19} parent=1 // pred_check_branch
      %23 = sbr.rel (0) target = $region25
    $region24: #{albef_forward.19} parent=1 // pred_region
      _
    $region25: #{albef_forward.19} parent=1 // pred_fallthru
      _
    %v25 = vld [vmem:[%s0] sm:$0x3]
    %v26 = vld [vmem:[%s2] sm:$0xf]
    %v27 = vld [vmem:[%s2 + $0x4] sm:$0xf]
    %v28 = vld [vmem:[%s2 + $0x8] sm:$0xf]
    %v29 = vld [vmem:[%s2 + $0xc] sm:$0xf]
    %v30 = vld [vmem:[%s2 + $0x10] sm:$0xf]
    %v31 = vld [vmem:[%s2 + $0x14] sm:$0xf]
    %v32 = vld [vmem:[%s2 + $0x18] sm:$0xf]
    %v33 = vld [vmem:[%s2 + $0x1c] sm:$0xf]
    %v34 = vld [vmem:[%s2 + $0x20] sm:$0xf]
    %v35 = vld [vmem:[%s2 + $0x24] sm:$0xf]
    %v36 = vld [vmem:[%s2 + $0x28] sm:$0xf]
    %v37 = vld [vmem:[%s2 + $0x2c] sm:$0xf]
    %v38 = vld [vmem:[%s2 + $0x30] sm:$0xf]
    %v39 = vld [vmem:[%s2 + $0x34] sm:$0xf]
    %v40 = vld [vmem:[%s2 + $0x38] sm:$0xf]
    %v41 = vld [vmem:[%s2 + $0x3c] sm:$0xf]
    %v42 = vld [vmem:[%s2 + $0x40] sm:$0xf]
    %v43 = vld [vmem:[%s2 + $0x44] sm:$0xf]
    %v44 = vld [vmem:[%s2 + $0x48] sm:$0xf]
    %v45 = vld [vmem:[%s2 + $0x4c] sm:$0xf]
    %v46 = vld [vmem:[%s2 + $0x50] sm:$0xf]
    %v47 = vld [vmem:[%s2 + $0x54] sm:$0xf]
    %v48 = vld [vmem:[%s2 + $0x58] sm:$0xf]
    %v49 = vld [vmem:[%s2 + $0x5c] sm:$0xf]
    %v50 = vld [vmem:[%s2 + $0x60] sm:$0xf]
    %v51 = vld [vmem:[%s2 + $0x64] sm:$0xf]
    %v52 = vld [vmem:[%s2 + $0x68] sm:$0xf]
    %v53 = vld [vmem:[%s2 + $0x6c] sm:$0xf]
    %v54 = vld [vmem:[%s2 + $0x70] sm:$0xf]
    %v55 = vld [vmem:[%s2 + $0x74] sm:$0xf]
    %v56 = vld [vmem:[%s2 + $0x78] sm:$0xf]
    %v57 = vld [vmem:[%s2 + $0x7c] sm:$0xf]
    %v58 = vld [vmem:[%s3] sm:$0x1]
    %v60 = vlaneseq
    %v61 = vshrl.u32 %v60, 7
    %v62 = vsub.s32 0, %v61
    %v63 = vrot.slane %v58, %v62
    %v67 = vunpack.c.l.s4 1966171168
    %v68 = vunpack.c.0.s8 %v67
    %v69 = vlaneseq
    %v70 = vshrl.u32 %v69, 7
    %v71 = vsub.s32 %v68, %v70
    %v72 = vrot.slane %v25, %v71
    %v73 = vcombine.high %v72, %v72
    %v75 = vunpack.c.l.s4 1966171168
    %v76 = vunpack.c.0.s8 %v75
    %v77 = vlaneseq
    %v78 = vshrl.u32 %v77, 7
    %v79 = vsub.s32 %v76, %v78
    %v80 = vrot.slane %v72, %v79
    %v82 = vunpack.c.l.s4 1966171168
    %v83 = vunpack.c.0.s8 %v82
    %v84 = vlaneseq
    %v85 = vshrl.u32 %v84, 7
    %v86 = vsub.s32 %v83, %v85
    %v87 = vrot.slane %v73, %v86
    %v122 = vunpack.c.l.b16 %v26
    %v123 = vunpack.c.l.b16 %v27
    %v124 = vunpack.c.l.b16 %v28
    %v125 = vunpack.c.l.b16 %v29
    %v126 = vunpack.c.l.b16 %v30
    %v127 = vunpack.c.l.b16 %v31
    %v128 = vunpack.c.l.b16 %v32
    %v129 = vunpack.c.l.b16 %v33
    %v130 = vunpack.c.l.b16 %v34
    %v131 = vunpack.c.l.b16 %v35
    %v132 = vunpack.c.l.b16 %v36
    %v133 = vunpack.c.l.b16 %v37
    %v134 = vunpack.c.l.b16 %v38
    %v135 = vunpack.c.l.b16 %v39
    %v136 = vunpack.c.l.b16 %v40
    %v137 = vunpack.c.l.b16 %v41
    %v138 = vunpack.c.l.b16 %v42
    %v139 = vunpack.c.l.b16 %v43
    %v140 = vunpack.c.l.b16 %v44
    %v141 = vunpack.c.l.b16 %v45
    %v142 = vunpack.c.l.b16 %v46
    %v143 = vunpack.c.l.b16 %v47
    %v144 = vunpack.c.l.b16 %v48
    %v145 = vunpack.c.l.b16 %v49
    %v146 = vunpack.c.l.b16 %v50
    %v147 = vunpack.c.l.b16 %v51
    %v148 = vunpack.c.l.b16 %v52
    %v149 = vunpack.c.l.b16 %v53
    %v150 = vunpack.c.l.b16 %v54
    %v151 = vunpack.c.l.b16 %v55
    %v152 = vunpack.c.l.b16 %v56
    %v153 = vunpack.c.l.b16 %v57
    %v154 = vpack.c.b16 %v123, %v122
    %v155 = vpack.c.b16 %v125, %v124
    %v156 = vpack.c.b16 %v127, %v126
    %v157 = vpack.c.b16 %v129, %v128
    %v158 = vpack.c.b16 %v131, %v130
    %v159 = vpack.c.b16 %v133, %v132
    %v160 = vpack.c.b16 %v135, %v134
    %v161 = vpack.c.b16 %v137, %v136
    %v162 = vpack.c.b16 %v139, %v138
    %v163 = vpack.c.b16 %v141, %v140
    %v164 = vpack.c.b16 %v143, %v142
    %v165 = vpack.c.b16 %v145, %v144
    %v166 = vpack.c.b16 %v147, %v146
    %v167 = vpack.c.b16 %v149, %v148
    %v168 = vpack.c.b16 %v151, %v150
    %v169 = vpack.c.b16 %v153, %v152
    %186 = vmatprep.subr.bf16.mxu0 0
    %187 = vmatpush1.bf16.msra.mxu0 %v161
    %188 = vmatprep.subr.bf16.mxu0 0
    %189 = vmatpush1.bf16.msra.mxu0 %v160
    %190 = vmatprep.subr.bf16.mxu0 0
    %191 = vmatpush1.bf16.msra.mxu0 %v159
    %192 = vmatprep.subr.bf16.mxu0 0
    %193 = vmatpush1.bf16.msra.mxu0 %v158
    %194 = vmatprep.subr.bf16.mxu0 0
    %195 = vmatpush1.bf16.msra.mxu0 %v157
    %196 = vmatprep.subr.bf16.mxu0 0
    %197 = vmatpush1.bf16.msra.mxu0 %v156
    %198 = vmatprep.subr.bf16.mxu0 0
    %199 = vmatpush1.bf16.msra.mxu0 %v155
    %200 = vmatprep.subr.bf16.mxu0 0
    %201 = vmatpush1.bf16.msra.mxu0 %v154
    %202 = vmatprep.subr.bf16.mxu0 0
    %203 = vmatpush2.bf16.msra.mxu0 %v169
    %204 = vmatprep.subr.bf16.mxu0 0
    %205 = vmatpush2.bf16.msra.mxu0 %v168
    %206 = vmatprep.subr.bf16.mxu0 0
    %207 = vmatpush2.bf16.msra.mxu0 %v167
    %208 = vmatprep.subr.bf16.mxu0 0
    %209 = vmatpush2.bf16.msra.mxu0 %v166
    %210 = vmatprep.subr.bf16.mxu0 0
    %211 = vmatpush2.bf16.msra.mxu0 %v165
    %212 = vmatprep.subr.bf16.mxu0 0
    %213 = vmatpush2.bf16.msra.mxu0 %v164
    %214 = vmatprep.subr.bf16.mxu0 0
    %215 = vmatpush2.bf16.msra.mxu0 %v163
    %216 = vmatprep.subr.bf16.mxu0 0
    %217 = vmatpush2.bf16.msra.mxu0 %v162
    %218 = vmatprep.mubr.bf16.mxu0 %v87
    %219 = vmatmul.mubr.bf16.gmra.mxu0 %v80
    %v220 = vpop.f32.mrf.mxu0
    %v221 = vadd.f32 %v63, %v220
    %v222 = vpop.f32.mrf.mxu0
    %v223 = vpop.f32.mrf.mxu0
    %v224 = vpop.f32.mrf.mxu0
    %225 = vdwg.mxu0
    %v226 = vld [vmem:[%s1] sm:$0xf]
    %v227 = vld [vmem:[%s4] sm:$0xf]
    %v228 = vld [vmem:[%s4 + $0x4] sm:$0xf]
    %v229 = vld [vmem:[%s4 + $0x8] sm:$0xf]
    %v230 = vld [vmem:[%s4 + $0xc] sm:$0xf]
    %v231 = vld [vmem:[%s4 + $0x10] sm:$0xf]
    %v232 = vld [vmem:[%s4 + $0x14] sm:$0xf]
    %v233 = vld [vmem:[%s4 + $0x18] sm:$0xf]
    %v234 = vld [vmem:[%s4 + $0x1c] sm:$0xf]
    %v235 = vld [vmem:[%s4 + $0x20] sm:$0xf]
    %v236 = vld [vmem:[%s4 + $0x24] sm:$0xf]
    %v237 = vld [vmem:[%s4 + $0x28] sm:$0xf]
    %v238 = vld [vmem:[%s4 + $0x2c] sm:$0xf]
    %v239 = vld [vmem:[%s4 + $0x30] sm:$0xf]
    %v240 = vld [vmem:[%s4 + $0x34] sm:$0xf]
    %v241 = vld [vmem:[%s4 + $0x38] sm:$0xf]
    %v242 = vld [vmem:[%s4 + $0x3c] sm:$0xf]
    %v243 = vld [vmem:[%s4 + $0x40] sm:$0xf]
    %v244 = vld [vmem:[%s4 + $0x44] sm:$0xf]
    %v245 = vld [vmem:[%s4 + $0x48] sm:$0xf]
    %v246 = vld [vmem:[%s4 + $0x4c] sm:$0xf]
    %v247 = vld [vmem:[%s4 + $0x50] sm:$0xf]
    %v248 = vld [vmem:[%s4 + $0x54] sm:$0xf]
    %v249 = vld [vmem:[%s4 + $0x58] sm:$0xf]
    %v250 = vld [vmem:[%s4 + $0x5c] sm:$0xf]
    %v251 = vld [vmem:[%s4 + $0x60] sm:$0xf]
    %v252 = vld [vmem:[%s4 + $0x64] sm:$0xf]
    %v253 = vld [vmem:[%s4 + $0x68] sm:$0xf]
    %v254 = vld [vmem:[%s4 + $0x6c] sm:$0xf]
    %v255 = vld [vmem:[%s4 + $0x70] sm:$0xf]
    %v256 = vld [vmem:[%s4 + $0x74] sm:$0xf]
    %v257 = vld [vmem:[%s4 + $0x78] sm:$0xf]
    %v258 = vld [vmem:[%s4 + $0x7c] sm:$0xf]
    %v259 = vld [vmem:[%s5] sm:$0x1]
    %v261 = vlaneseq
    %v262 = vshrl.u32 %v261, 7
    %v263 = vsub.s32 0, %v262
    %v264 = vrot.slane %v259, %v263
    %v268 = vunpack.c.l.s4 1983009808
    %v269 = vunpack.c.0.s8 %v268
    %v270 = vlaneseq
    %v271 = vshrl.u32 %v270, 7
    %v272 = vsub.s32 %v269, %v271
    %v273 = vrot.slane %v226, %v272
    %v274 = vcombine.high %v273, %v273
    %v309 = vunpack.c.l.b16 %v227
    %v310 = vunpack.c.l.b16 %v228
    %v311 = vunpack.c.l.b16 %v229
    %v312 = vunpack.c.l.b16 %v230
    %v313 = vunpack.c.l.b16 %v231
    %v314 = vunpack.c.l.b16 %v232
    %v315 = vunpack.c.l.b16 %v233
    %v316 = vunpack.c.l.b16 %v234
    %v317 = vunpack.c.l.b16 %v235
    %v318 = vunpack.c.l.b16 %v236
    %v319 = vunpack.c.l.b16 %v237
    %v320 = vunpack.c.l.b16 %v238
    %v321 = vunpack.c.l.b16 %v239
    %v322 = vunpack.c.l.b16 %v240
    %v323 = vunpack.c.l.b16 %v241
    %v324 = vunpack.c.l.b16 %v242
    %v325 = vunpack.c.l.b16 %v243
    %v326 = vunpack.c.l.b16 %v244
    %v327 = vunpack.c.l.b16 %v245
    %v328 = vunpack.c.l.b16 %v246
    %v329 = vunpack.c.l.b16 %v247
    %v330 = vunpack.c.l.b16 %v248
    %v331 = vunpack.c.l.b16 %v249
    %v332 = vunpack.c.l.b16 %v250
    %v333 = vunpack.c.l.b16 %v251
    %v334 = vunpack.c.l.b16 %v252
    %v335 = vunpack.c.l.b16 %v253
    %v336 = vunpack.c.l.b16 %v254
    %v337 = vunpack.c.l.b16 %v255
    %v338 = vunpack.c.l.b16 %v256
    %v339 = vunpack.c.l.b16 %v257
    %v340 = vunpack.c.l.b16 %v258
    %v341 = vpack.c.b16 %v310, %v309
    %v342 = vpack.c.b16 %v312, %v311
    %v343 = vpack.c.b16 %v314, %v313
    %v344 = vpack.c.b16 %v316, %v315
    %v345 = vpack.c.b16 %v318, %v317
    %v346 = vpack.c.b16 %v320, %v319
    %v347 = vpack.c.b16 %v322, %v321
    %v348 = vpack.c.b16 %v324, %v323
    %v349 = vpack.c.b16 %v326, %v325
    %v350 = vpack.c.b16 %v328, %v327
    %v351 = vpack.c.b16 %v330, %v329
    %v352 = vpack.c.b16 %v332, %v331
    %v353 = vpack.c.b16 %v334, %v333
    %v354 = vpack.c.b16 %v336, %v335
    %v355 = vpack.c.b16 %v338, %v337
    %v356 = vpack.c.b16 %v340, %v339
    %373 = vmatprep.subr.bf16.mxu0 0
    %374 = vmatpush1.bf16.msra.mxu0 %v348
    %375 = vmatprep.subr.bf16.mxu0 0
    %376 = vmatpush1.bf16.msra.mxu0 %v347
    %377 = vmatprep.subr.bf16.mxu0 0
    %378 = vmatpush1.bf16.msra.mxu0 %v346
    %379 = vmatprep.subr.bf16.mxu0 0
    %380 = vmatpush1.bf16.msra.mxu0 %v345
    %381 = vmatprep.subr.bf16.mxu0 0
    %382 = vmatpush1.bf16.msra.mxu0 %v344
    %383 = vmatprep.subr.bf16.mxu0 0
    %384 = vmatpush1.bf16.msra.mxu0 %v343
    %385 = vmatprep.subr.bf16.mxu0 0
    %386 = vmatpush1.bf16.msra.mxu0 %v342
    %387 = vmatprep.subr.bf16.mxu0 0
    %388 = vmatpush1.bf16.msra.mxu0 %v341
    %389 = vmatprep.subr.bf16.mxu0 0
    %390 = vmatpush2.bf16.msra.mxu0 %v356
    %391 = vmatprep.subr.bf16.mxu0 0
    %392 = vmatpush2.bf16.msra.mxu0 %v355
    %393 = vmatprep.subr.bf16.mxu0 0
    %394 = vmatpush2.bf16.msra.mxu0 %v354
    %395 = vmatprep.subr.bf16.mxu0 0
    %396 = vmatpush2.bf16.msra.mxu0 %v353
    %397 = vmatprep.subr.bf16.mxu0 0
    %398 = vmatpush2.bf16.msra.mxu0 %v352
    %399 = vmatprep.subr.bf16.mxu0 0
    %400 = vmatpush2.bf16.msra.mxu0 %v351
    %401 = vmatprep.subr.bf16.mxu0 0
    %402 = vmatpush2.bf16.msra.mxu0 %v350
    %403 = vmatprep.subr.bf16.mxu0 0
    %404 = vmatpush2.bf16.msra.mxu0 %v349
    %405 = vmatprep.mubr.bf16.mxu0 %v274
    %406 = vmatmul.mubr.bf16.gmra.mxu0 %v273
    %v407 = vpop.f32.mrf.mxu0
    %v408 = vadd.f32 %v264, %v407
    %v409 = vpop.f32.mrf.mxu0
    %v410 = vpop.f32.mrf.mxu0
    %v411 = vpop.f32.mrf.mxu0
    %412 = vdwg.mxu0
    %413 = vmatprep.subr.mxu0 0.0
    %414 = vmatpush1.xpose.msra.mxu0 0.0
    %415 = vmatprep.subr.mxu0 0.0
    %416 = vmatpush1.xpose.msra.mxu0 0.0
    %417 = vmatprep.subr.mxu0 0.0
    %418 = vmatpush1.xpose.msra.mxu0 0.0
    %419 = vmatprep.subr.mxu0 0.0
    %420 = vmatpush1.xpose.msra.mxu0 0.0
    %421 = vmatprep.subr.mxu0 0.0
    %422 = vmatpush1.xpose.msra.mxu0 0.0
    %423 = vmatprep.subr.mxu0 0.0
    %424 = vmatpush1.xpose.msra.mxu0 0.0
    %425 = vmatprep.subr.mxu0 0.0
    %426 = vmatpush1.xpose.msra.mxu0 0.0
    %427 = vmatprep.subr.mxu0 0.0
    %428 = vmatpush1.xpose.msra.mxu0 0.0
    %429 = vmatprep.subr.mxu0 0.0
    %430 = vmatpush1.xpose.msra.mxu0 0.0
    %431 = vmatprep.subr.mxu0 0.0
    %432 = vmatpush1.xpose.msra.mxu0 0.0
    %433 = vmatprep.subr.mxu0 0.0
    %434 = vmatpush1.xpose.msra.mxu0 0.0
    %435 = vmatprep.subr.mxu0 0.0
    %436 = vmatpush1.xpose.msra.mxu0 0.0
    %437 = vmatprep.subr.mxu0 0.0
    %438 = vmatpush1.xpose.msra.mxu0 0.0
    %439 = vmatprep.subr.mxu0 0.0
    %440 = vmatpush1.xpose.msra.mxu0 0.0
    %441 = vmatprep.subr.mxu0 0.0
    %442 = vmatpush1.xpose.msra.mxu0 0.0
    %443 = vmatprep.subr.mxu0 0.0
    %444 = vmatpush1.xpose.msra.mxu0 %v408
    %445 = vmatprep.subr.mxu0 0.0
    %446 = vmatpush2.xpose.msra.mxu0 0.0
    %447 = vmatprep.subr.mxu0 0.0
    %448 = vmatpush2.xpose.msra.mxu0 0.0
    %449 = vmatprep.subr.mxu0 0.0
    %450 = vmatpush2.xpose.msra.mxu0 0.0
    %451 = vmatprep.subr.mxu0 0.0
    %452 = vmatpush2.xpose.msra.mxu0 0.0
    %453 = vmatprep.subr.mxu0 0.0
    %454 = vmatpush2.xpose.msra.mxu0 0.0
    %455 = vmatprep.subr.mxu0 0.0
    %456 = vmatpush2.xpose.msra.mxu0 0.0
    %457 = vmatprep.subr.mxu0 0.0
    %458 = vmatpush2.xpose.msra.mxu0 0.0
    %459 = vmatprep.subr.mxu0 0.0
    %460 = vmatpush2.xpose.msra.mxu0 0.0
    %461 = vmatprep.subr.mxu0 0.0
    %462 = vmatpush2.xpose.msra.mxu0 0.0
    %463 = vmatprep.subr.mxu0 0.0
    %464 = vmatpush2.xpose.msra.mxu0 0.0
    %465 = vmatprep.subr.mxu0 0.0
    %466 = vmatpush2.xpose.msra.mxu0 0.0
    %467 = vmatprep.subr.mxu0 0.0
    %468 = vmatpush2.xpose.msra.mxu0 0.0
    %469 = vmatprep.subr.mxu0 0.0
    %470 = vmatpush2.xpose.msra.mxu0 0.0
    %471 = vmatprep.subr.mxu0 0.0
    %472 = vmatpush2.xpose.msra.mxu0 0.0
    %473 = vmatprep.subr.mxu0 0.0
    %474 = vmatpush2.xpose.msra.mxu0 0.0
    %475 = vmatprep.subr.mxu0 0.0
    %476 = vmatpush2.xpose.msra.mxu0 0.0
    %477 = vmatprep.mubr.f32.mxu0 0.0
    %478 = vmatmul.mubr.f32.gmra.mxu0 %v221
    %v479 = vpop.f32.mrf.mxu0
    %v480 = vadd.f32 0.0, %v479
    %v481 = vpop.f32.mrf.mxu0
    %482 = vdwg.mxu0
    %v483 = vlaneseq
    %v484 = vshrl.u32 %v483, 7
    %v485 = vlaneseq
    %v486 = vand.u32 %v485, 127
    %v487 = vmul.u32 %v484, 2
    %vm488 = vcmp.ge.s32.totalorder %v486, %v487
    %v489 = vadd.s32 %v484, 1
    %v490 = vmul.u32 %v489, 2
    %vm491 = vcmp.lt.s32.totalorder %v486, %v490
    %vm492 = vmand %vm488, %vm491
    %vm493 = vcmp.eq.s32.totalorder %v486, %v487
    %v494 = vsel %vm492, %v480, -1e+30
    %vm495 = vcmask 25600
    %v496 = vsel %vm495, %v494, -inf
    %497 = vmax.xlane.f32.xlu0 %v496
    %v498 = vpop.xlane.xlu0 %497
    %v499 = vsub.f32 %v494, %v498
    %v500 = vmul.f32 %v499, 1.442695
    %v501 = vpow.pop %v500
    %v502 = vsel %vm495, %v501, 0.0
    %503 = vadd.xlane.f32.xlu0 %v502
    %v504 = vpop.xlane.xlu0 %503
    %v505 = vlog2.pop %v504
    %v506 = vmul.f32 %v505, 0.6931472
    %v507 = vadd.f32 %v498, %v506
    %v508 = vsel %vm493, %v480, 0.0
    %v509 = vsel %vm495, %v508, 0.0
    %510 = vadd.xlane.f32.xlu0 %v509
    %v511 = vpop.xlane.xlu0 %510
    %v512 = vsub.f32 %v507, %v511
    %vm513 = vcmask 1024
    %v514 = vsel %vm513, %v512, 0.0
    %515 = vadd.xlane.f32.xlu0 %v514
    %v516 = vpop.xlane.xlu0 %515
    %v517 = vrot.slane %v516, 4
    %v518 = vadd.f32 %v516, %v517
    %v519 = vrot.slane %v518, 2
    %v520 = vadd.f32 %v518, %v519
    %v521 = vrot.slane %v520, 1
    %v522 = vadd.f32 %v520, %v521
    %s523 = vtos %v522
    %v524 = vrcp.pop 2.0
    %s525 = vtos %v524
    %s526 = smul.f32 %s523, %s525
    %v527 = vstv %s526
    %vm528 = vcmask 0
    %529 = vst.msk [vmem:[#allocation2] sm:$0x1] %vm528, %v527
    // Predicated region
    $region26: #{albef_forward.19} parent=1 // pred_check
      _
    $region27: #{albef_forward.19} parent=1 // pred_check_branch
      %531 = sbr.rel (0) target = $region29
    $region28: #{albef_forward.19} parent=1 // pred_region
      %s533 = ssub.s32 16, 16
      %534 = vsyncadd [#allocation3], %s533
      %s536 = sshll.u32 [#allocation2], 4
      %s537 = int_to_ptr.vmem [resolvable:$true] %s536
      %539 = dma.vmem_to_hbm [thread:$0]  %s537, 16, %s6, [#allocation3]
    $region29: #{albef_forward.19} parent=1 // pred_fallthru
      _
    // Predicated region
    $region30: #{albef_forward.19} parent=1 // pred_check
      _
    $region31: #{albef_forward.19} parent=1 // pred_check_branch
      %541 = sbr.rel (0) target = $region33
    $region32: #{albef_forward.19} parent=1 // pred_region
      %542 = dma.done [#allocation3], 16
    $region33: #{albef_forward.19} parent=1 // pred_fallthru
      _
    %543 = vsyncpa [#allocation3], 1

// kernel: albef_forward.14
$region0: #{albef_forward.14}
  #allocation0 [shape = 'u32[]', space=smem, size = 0x4, offset = 0x4, fixed_abs, tag = 'smem constant byte address 0x4 - core index']
  #allocation1 [shape = 'u32[144,128]{1,0:T(1,128)}', space=vmem, size = 0x12000, scoped, tag = 'internal scratch']
  %s0 = inlined_call_operand.vmem [shape: bf16[384,256], index: 0, kind: input, shape index: {}]
  %s1 = inlined_call_operand.vmem [shape: bf16[256,512], index: 1, kind: input, shape index: {}]
  %s2 = inlined_call_operand.vmem [shape: f32[1,512], index: 2, kind: input, shape index: {}]
  %s3 = inlined_call_operand.vmem [shape: bf16[512,256], index: 3, kind: input, shape index: {}]
  %s4 = inlined_call_operand.vmem [shape: f32[1,256], index: 4, kind: input, shape index: {}]
  %s5 = inlined_call_operand.vmem [shape: f32[1,256], index: 5, kind: input, shape index: {}]
  %s6 = inlined_call_operand.vmem [shape: f32[1,256], index: 6, kind: input, shape index: {}]
  %s7 = inlined_call_operand.vmem [shape: bf16[384,256], index: 7, kind: output, shape index: {}]
  %s8 = sld [smem:[#allocation0]]
  $region61: #{albef_forward.14} parent=0
    _
  %s10 = ssub.s32 1, %s8
  %s11 = scalar_select 0, %s10, %s8
  loop: start=0, step=1, limit=5
  $region2: #{albef_forward.14} parent=0 // loop_pre_header
    _
  $region3: #{albef_forward.14} parent=0 // loop_header
    %s13 = sphi 0, %s17
    %p14 = scmp.ge.s32.totalorder %s13, 5
    %s23 = sphi 0, %s25
    %s26 = sphi 0, %s23
    %s27 = sphi 0, %s26
    %s43 = sphi 0, %s27
    %s47 = sphi 0, %s47
    %s49 = sphi 0, %s47
    %s50 = sphi 0, %s49
    %s64 = sphi 0, %s50
    %s68 = sphi 0, %s68
    %s70 = sphi 0, %s68
    %s71 = sphi 0, %s70
    %s85 = sphi 0, %s71
    %s89 = sphi 0, %s89
    %s91 = sphi 0, %s89
    %s92 = sphi 0, %s91
    %s106 = sphi 0, %s92
    %s110 = sphi 0, %s110
    %s112 = sphi 0, %s110
    %s113 = sphi 0, %s112
    %s127 = sphi 0, %s113
    %s131 = sphi 0, %s131
    %s133 = sphi 0, %s131
    %s134 = sphi 0, %s133
    %s148 = sphi 0, %s134
    %s152 = sphi 0, %s152
    %s154 = sphi 0, %s152
    %s155 = sphi 0, %s154
    %s169 = sphi 0, %s155
    %s175 = sphi 0, %s177
    %s178 = sphi 0, %s175
    %s179 = sphi 0, %s178
    %s195 = sphi 0, %s179
  $region4: #{albef_forward.14} parent=0 // loop_header_branch
    %16 = sbr.rel (%p14) target = $region8
  $region5: #{albef_forward.14} parent=0 // loop_body
    %s18 = ssub.s32 %s13, 1
    %s19 = ssub.s32 %s13, 2
    %s20 = sadd.s32 %s13, 1
    %s21 = ssub.s32 %s13, %s20
    %p22 = scmp.eq.s32.totalorder %s21, 0
    %s24 = sadd.s32 %s23, 1
    %s25 = scalar_select %p22, %s23, %s24
    %p28 = pneg %p22
    %p29 = scmp.eq.s32.totalorder %s13, 2
    %p30 = por %p28, %p29
    %p31 = scmp.ne.s32.totalorder %s23, %s26
    %p32 = scmp.eq.s32.totalorder %s13, 0
    %p33 = por %p31, %p32
    %p34 = scmp.ne.s32.totalorder %s23, %s26
    %p35 = scmp.eq.s32.totalorder %s18, 2
    %p36 = por %p34, %p35
    %p37 = scmp.ne.s32.totalorder %s26, %s27
    %p38 = scmp.eq.s32.totalorder %s18, 0
    %p39 = por %p37, %p38
    %p40 = scmp.ne.s32.totalorder %s26, %s27
    %p41 = scmp.eq.s32.totalorder %s19, 2
    %p42 = por %p40, %p41
    %p44 = scmp.ne.s32.totalorder %s27, %s43
    %p45 = scmp.eq.s32.totalorder %s19, 0
    %p46 = por %p44, %p45
    %s48 = sadd.s32 %s47, 1
    %p51 = scmp.eq.s32.totalorder %s13, 2
    %p52 = scmp.ne.s32.totalorder %s47, %s49
    %p53 = scmp.eq.s32.totalorder %s13, 0
    %p54 = por %p52, %p53
    %p55 = scmp.ne.s32.totalorder %s47, %s49
    %p56 = scmp.eq.s32.totalorder %s18, 2
    %p57 = por %p55, %p56
    %p58 = scmp.ne.s32.totalorder %s49, %s50
    %p59 = scmp.eq.s32.totalorder %s18, 0
    %p60 = por %p58, %p59
    %p61 = scmp.ne.s32.totalorder %s49, %s50
    %p62 = scmp.eq.s32.totalorder %s19, 2
    %p63 = por %p61, %p62
    %p65 = scmp.ne.s32.totalorder %s50, %s64
    %p66 = scmp.eq.s32.totalorder %s19, 0
    %p67 = por %p65, %p66
    %s69 = sadd.s32 %s68, 1
    %p72 = scmp.eq.s32.totalorder %s13, 2
    %p73 = scmp.ne.s32.totalorder %s68, %s70
    %p74 = scmp.eq.s32.totalorder %s13, 0
    %p75 = por %p73, %p74
    %p76 = scmp.ne.s32.totalorder %s68, %s70
    %p77 = scmp.eq.s32.totalorder %s18, 2
    %p78 = por %p76, %p77
    %p79 = scmp.ne.s32.totalorder %s70, %s71
    %p80 = scmp.eq.s32.totalorder %s18, 0
    %p81 = por %p79, %p80
    %p82 = scmp.ne.s32.totalorder %s70, %s71
    %p83 = scmp.eq.s32.totalorder %s19, 2
    %p84 = por %p82, %p83
    %p86 = scmp.ne.s32.totalorder %s71, %s85
    %p87 = scmp.eq.s32.totalorder %s19, 0
    %p88 = por %p86, %p87
    %s90 = sadd.s32 %s89, 1
    %p93 = scmp.eq.s32.totalorder %s13, 2
    %p94 = scmp.ne.s32.totalorder %s89, %s91
    %p95 = scmp.eq.s32.totalorder %s13, 0
    %p96 = por %p94, %p95
    %p97 = scmp.ne.s32.totalorder %s89, %s91
    %p98 = scmp.eq.s32.totalorder %s18, 2
    %p99 = por %p97, %p98
    %p100 = scmp.ne.s32.totalorder %s91, %s92
    %p101 = scmp.eq.s32.totalorder %s18, 0
    %p102 = por %p100, %p101
    %p103 = scmp.ne.s32.totalorder %s91, %s92
    %p104 = scmp.eq.s32.totalorder %s19, 2
    %p105 = por %p103, %p104
    %p107 = scmp.ne.s32.totalorder %s92, %s106
    %p108 = scmp.eq.s32.totalorder %s19, 0
    %p109 = por %p107, %p108
    %s111 = sadd.s32 %s110, 1
    %p114 = scmp.eq.s32.totalorder %s13, 2
    %p115 = scmp.ne.s32.totalorder %s110, %s112
    %p116 = scmp.eq.s32.totalorder %s13, 0
    %p117 = por %p115, %p116
    %p118 = scmp.ne.s32.totalorder %s110, %s112
    %p119 = scmp.eq.s32.totalorder %s18, 2
    %p120 = por %p118, %p119
    %p121 = scmp.ne.s32.totalorder %s112, %s113
    %p122 = scmp.eq.s32.totalorder %s18, 0
    %p123 = por %p121, %p122
    %p124 = scmp.ne.s32.totalorder %s112, %s113
    %p125 = scmp.eq.s32.totalorder %s19, 2
    %p126 = por %p124, %p125
    %p128 = scmp.ne.s32.totalorder %s113, %s127
    %p129 = scmp.eq.s32.totalorder %s19, 0
    %p130 = por %p128, %p129
    %s132 = sadd.s32 %s131, 1
    %p135 = scmp.eq.s32.totalorder %s13, 2
    %p136 = scmp.ne.s32.totalorder %s131, %s133
    %p137 = scmp.eq.s32.totalorder %s13, 0
    %p138 = por %p136, %p137
    %p139 = scmp.ne.s32.totalorder %s131, %s133
    %p140 = scmp.eq.s32.totalorder %s18, 2
    %p141 = por %p139, %p140
    %p142 = scmp.ne.s32.totalorder %s133, %s134
    %p143 = scmp.eq.s32.totalorder %s18, 0
    %p144 = por %p142, %p143
    %p145 = scmp.ne.s32.totalorder %s133, %s134
    %p146 = scmp.eq.s32.totalorder %s19, 2
    %p147 = por %p145, %p146
    %p149 = scmp.ne.s32.totalorder %s134, %s148
    %p150 = scmp.eq.s32.totalorder %s19, 0
    %p151 = por %p149, %p150
    %s153 = sadd.s32 %s152, 1
    %p156 = scmp.eq.s32.totalorder %s13, 2
    %p157 = scmp.ne.s32.totalorder %s152, %s154
    %p158 = scmp.eq.s32.totalorder %s13, 0
    %p159 = por %p157, %p158
    %p160 = scmp.ne.s32.totalorder %s152, %s154
    %p161 = scmp.eq.s32.totalorder %s18, 2
    %p162 = por %p160, %p161
    %p163 = scmp.ne.s32.totalorder %s154, %s155
    %p164 = scmp.eq.s32.totalorder %s18, 0
    %p165 = por %p163, %p164
    %p166 = scmp.ne.s32.totalorder %s154, %s155
    %p167 = scmp.eq.s32.totalorder %s19, 2
    %p168 = por %p166, %p167
    %p170 = scmp.ne.s32.totalorder %s155, %s169
    %p171 = scmp.eq.s32.totalorder %s19, 0
    %p172 = por %p170, %p171
    %s173 = ssub.s32 %s13, %s20
    %p174 = scmp.eq.s32.totalorder %s173, 0
    %s176 = sadd.s32 %s175, 1
    %s177 = scalar_select %p174, %s175, %s176
    %p180 = pneg %p174
    %p181 = scmp.eq.s32.totalorder %s13, 2
    %p182 = por %p180, %p181
    %p183 = scmp.ne.s32.totalorder %s175, %s178
    %p184 = scmp.eq.s32.totalorder %s13, 0
    %p185 = por %p183, %p184
    %p186 = scmp.ne.s32.totalorder %s175, %s178
    %p187 = scmp.eq.s32.totalorder %s18, 2
    %p188 = por %p186, %p187
    %p189 = scmp.ne.s32.totalorder %s178, %s179
    %p190 = scmp.eq.s32.totalorder %s18, 0
    %p191 = por %p189, %p190
    %p192 = scmp.ne.s32.totalorder %s178, %s179
    %p193 = scmp.eq.s32.totalorder %s19, 2
    %p194 = por %p192, %p193
    %p196 = scmp.ne.s32.totalorder %s179, %s195
    %p197 = scmp.eq.s32.totalorder %s19, 0
    %p198 = por %p196, %p197
    %p199 = scmp.le.s32.totalorder 1, %s13
    %p200 = scmp.lt.s32.totalorder %s13, 4
    %p201 = pnand %p199, %p200
    %p202 = pneg %p201
    // Predicated region
    $region9: #{albef_forward.14} parent=5 // pred_check
      _
    $region10: #{albef_forward.14} parent=5 // pred_check_branch
      %204 = sbr.rel (%p201) target = $region12
    $region11: #{albef_forward.14} parent=5 // pred_region
      %s205 = ssub.s32 %s13, 1
      // Predicated region
      $region13: #{albef_forward.14} parent=11 // pred_check
        %p206 = pneg %p60
      $region14: #{albef_forward.14} parent=11 // pred_check_branch
        %208 = sbr.rel (%p206) target = $region16
      $region15: #{albef_forward.14} parent=11 // pred_region
        _
      $region16: #{albef_forward.14} parent=11 // pred_fallthru
        _
      // Predicated region
      $region17: #{albef_forward.14} parent=11 // pred_check
        %p209 = pneg %p81
      $region18: #{albef_forward.14} parent=11 // pred_check_branch
        %211 = sbr.rel (%p209) target = $region20
      $region19: #{albef_forward.14} parent=11 // pred_region
        _
      $region20: #{albef_forward.14} parent=11 // pred_fallthru
        _
      // Predicated region
      $region21: #{albef_forward.14} parent=11 // pred_check
        %p212 = pneg %p102
      $region22: #{albef_forward.14} parent=11 // pred_check_branch
        %214 = sbr.rel (%p212) target = $region24
      $region23: #{albef_forward.14} parent=11 // pred_region
        _
      $region24: #{albef_forward.14} parent=11 // pred_fallthru
        _
      // Predicated region
      $region25: #{albef_forward.14} parent=11 // pred_check
        %p215 = pneg %p123
      $region26: #{albef_forward.14} parent=11 // pred_check_branch
        %217 = sbr.rel (%p215) target = $region28
      $region27: #{albef_forward.14} parent=11 // pred_region
        _
      $region28: #{albef_forward.14} parent=11 // pred_fallthru
        _
      // Predicated region
      $region29: #{albef_forward.14} parent=11 // pred_check
        %p218 = pneg %p144
      $region30: #{albef_forward.14} parent=11 // pred_check_branch
        %220 = sbr.rel (%p218) target = $region32
      $region31: #{albef_forward.14} parent=11 // pred_region
        _
      $region32: #{albef_forward.14} parent=11 // pred_fallthru
        _
      // Predicated region
      $region33: #{albef_forward.14} parent=11 // pred_check
        %p221 = pneg %p165
      $region34: #{albef_forward.14} parent=11 // pred_check_branch
        %223 = sbr.rel (%p221) target = $region36
      $region35: #{albef_forward.14} parent=11 // pred_region
        _
      $region36: #{albef_forward.14} parent=11 // pred_fallthru
        _
    $region12: #{albef_forward.14} parent=5 // pred_fallthru
      _
    %p224 = scmp.lt.s32.totalorder %s13, 3
    // Predicated region
    $region37: #{albef_forward.14} parent=5 // pred_check
      %p225 = pneg %p224
    $region38: #{albef_forward.14} parent=5 // pred_check_branch
      %227 = sbr.rel (%p225) target = $region40
    $region39: #{albef_forward.14} parent=5 // pred_region
      // Predicated region
      $region41: #{albef_forward.14} parent=39 // pred_check
        %p228 = pneg %p33
      $region42: #{albef_forward.14} parent=39 // pred_check_branch
        %230 = sbr.rel (%p228) target = $region44
      $region43: #{albef_forward.14} parent=39 // pred_region
        %s231 = smul.u32 16, %s13
        %p232 = scmp.lt.s32.totalorder %s231, 47
        %s233 = scalar_select %p232, %s231, 47
        %s234 = smul.addr %s233, 2
        %s235 = smul.addr %s234, 4
        %s236 = scalar_lea.vmem %s0, %s235
        %s237 = smul.u32 16, %s13
      $region44: #{albef_forward.14} parent=39 // pred_fallthru
        _
    $region40: #{albef_forward.14} parent=5 // pred_fallthru
      _
    %p238 = scmp.le.s32.totalorder 1, %s13
    %p239 = scmp.lt.s32.totalorder %s13, 4
    %p240 = pnand %p238, %p239
    %p241 = pneg %p240
    // Predicated region
    $region45: #{albef_forward.14} parent=5 // pred_check
      _
    $region46: #{albef_forward.14} parent=5 // pred_check_branch
      %243 = sbr.rel (%p240) target = $region48
    $region47: #{albef_forward.14} parent=5 // pred_region
      %s244 = ssub.s32 %s13, 1
      %s245 = smul.u32 16, %s18
      %p246 = scmp.lt.s32.totalorder %s245, 47
      %s247 = scalar_select %p246, %s245, 47
      %s248 = smul.addr %s247, 2
      %s249 = smul.addr %s248, 4
      %s250 = scalar_lea.vmem %s0, %s249
      %p251 = pneg %p39
      %p252 = pneg %p36
      %p253 = pneg %p60
      %p254 = pneg %p57
      %p255 = pneg %p81
      %p256 = pneg %p78
      %p257 = pneg %p102
      %p258 = pneg %p99
      %p259 = pneg %p123
      %p260 = pneg %p120
      %p261 = pneg %p144
      %p262 = pneg %p141
      %p263 = pneg %p165
      %p264 = pneg %p162
      %p265 = pneg %p191
      %p266 = pneg %p188
      %s267 = smul.u32 16, %s18
      %p268 = scmp.lt.s32.totalorder %s267, 47
      %s269 = scalar_select %p268, %s267, 47
      %s270 = smul.addr %s269, 2
      %s271 = smul.addr %s270, 4
      %s272 = scalar_lea.vmem %s7, %s271
      %s273 = smul.u32 16, %s18
      %p274 = scmp.lt.s32.totalorder %s273, 47
      %s275 = scalar_select %p274, %s273, 47
      %s276 = smul.addr %s275, 2
      %s277 = smul.addr %s276, 4
      %s278 = scalar_lea.vmem %s0, %s277
      %s279 = smul.u32 16, %s18
      %s280 = smul.u32 16, %s18
      %p281 = scmp.lt.s32.totalorder %s280, 47
      %s282 = scalar_select %p281, %s280, 47
      %s283 = smul.addr %s282, 2
      %s284 = smul.addr %s283, 4
      %s285 = scalar_lea.vmem %s7, %s284
      %s286 = smul.u32 16, %s18
      %v287 = vld [vmem:[%s278] sm:$0xff]
      %v288 = vld [vmem:[%s278 + $0x8] sm:$0xff]
      %v289 = vld [vmem:[%s278 + $0x10] sm:$0xff]
      %v290 = vld [vmem:[%s278 + $0x18] sm:$0xff]
      %v291 = vld [vmem:[%s278 + $0x20] sm:$0xff]
      %v292 = vld [vmem:[%s278 + $0x28] sm:$0xff]
      %v293 = vld [vmem:[%s278 + $0x30] sm:$0xff]
      %v294 = vld [vmem:[%s278 + $0x38] sm:$0xff]
      %v295 = vld [vmem:[%s278 + $0x40] sm:$0xff]
      %v296 = vld [vmem:[%s278 + $0x48] sm:$0xff]
      %v297 = vld [vmem:[%s278 + $0x50] sm:$0xff]
      %v298 = vld [vmem:[%s278 + $0x58] sm:$0xff]
      %v299 = vld [vmem:[%s278 + $0x60] sm:$0xff]
      %v300 = vld [vmem:[%s278 + $0x68] sm:$0xff]
      %v301 = vld [vmem:[%s278 + $0x70] sm:$0xff]
      %v302 = vld [vmem:[%s278 + $0x78] sm:$0xff]
      %v303 = vld [vmem:[%s1] sm:$0xff]
      %v304 = vld [vmem:[%s1 + $0x8] sm:$0xff]
      %v305 = vld [vmem:[%s1 + $0x10] sm:$0xff]
      %v306 = vld [vmem:[%s1 + $0x18] sm:$0xff]
      %v307 = vld [vmem:[%s1 + $0x20] sm:$0xff]
      %v308 = vld [vmem:[%s1 + $0x28] sm:$0xff]
      %v309 = vld [vmem:[%s1 + $0x30] sm:$0xff]
      %v310 = vld [vmem:[%s1 + $0x38] sm:$0xff]
      %v311 = vld [vmem:[%s1 + $0x40] sm:$0xff]
      %v312 = vld [vmem:[%s1 + $0x48] sm:$0xff]
      %v313 = vld [vmem:[%s1 + $0x50] sm:$0xff]
      %v314 = vld [vmem:[%s1 + $0x58] sm:$0xff]
      %v315 = vld [vmem:[%s1 + $0x60] sm:$0xff]
      %v316 = vld [vmem:[%s1 + $0x68] sm:$0xff]
      %v317 = vld [vmem:[%s1 + $0x70] sm:$0xff]
      %v318 = vld [vmem:[%s1 + $0x78] sm:$0xff]
      %v319 = vld [vmem:[%s1 + $0x80] sm:$0xff]
      %v320 = vld [vmem:[%s1 + $0x88] sm:$0xff]
      %v321 = vld [vmem:[%s1 + $0x90] sm:$0xff]
      %v322 = vld [vmem:[%s1 + $0x98] sm:$0xff]
      %v323 = vld [vmem:[%s1 + $0xa0] sm:$0xff]
      %v324 = vld [vmem:[%s1 + $0xa8] sm:$0xff]
      %v325 = vld [vmem:[%s1 + $0xb0] sm:$0xff]
      %v326 = vld [vmem:[%s1 + $0xb8] sm:$0xff]
      %v327 = vld [vmem:[%s1 + $0xc0] sm:$0xff]
      %v328 = vld [vmem:[%s1 + $0xc8] sm:$0xff]
      %v329 = vld [vmem:[%s1 + $0xd0] sm:$0xff]
      %v330 = vld [vmem:[%s1 + $0xd8] sm:$0xff]
      %v331 = vld [vmem:[%s1 + $0xe0] sm:$0xff]
      %v332 = vld [vmem:[%s1 + $0xe8] sm:$0xff]
      %v333 = vld [vmem:[%s1 + $0xf0] sm:$0xff]
      %v334 = vld [vmem:[%s1 + $0xf8] sm:$0xff]
      %v335 = vld [vmem:[%s1 + $0x100] sm:$0xff]
      %v336 = vld [vmem:[%s1 + $0x108] sm:$0xff]
      %v337 = vld [vmem:[%s1 + $0x110] sm:$0xff]
      %v338 = vld [vmem:[%s1 + $0x118] sm:$0xff]
      %v339 = vld [vmem:[%s1 + $0x120] sm:$0xff]
      %v340 = vld [vmem:[%s1 + $0x128] sm:$0xff]
      %v341 = vld [vmem:[%s1 + $0x130] sm:$0xff]
      %v342 = vld [vmem:[%s1 + $0x138] sm:$0xff]
      %v343 = vld [vmem:[%s1 + $0x140] sm:$0xff]
      %v344 = vld [vmem:[%s1 + $0x148] sm:$0xff]
      %v345 = vld [vmem:[%s1 + $0x150] sm:$0xff]
      %v346 = vld [vmem:[%s1 + $0x158] sm:$0xff]
      %v347 = vld [vmem:[%s1 + $0x160] sm:$0xff]
      %v348 = vld [vmem:[%s1 + $0x168] sm:$0xff]
      %v349 = vld [vmem:[%s1 + $0x170] sm:$0xff]
      %v350 = vld [vmem:[%s1 + $0x178] sm:$0xff]
      %v351 = vld [vmem:[%s1 + $0x180] sm:$0xff]
      %v352 = vld [vmem:[%s1 + $0x188] sm:$0xff]
      %v353 = vld [vmem:[%s1 + $0x190] sm:$0xff]
      %v354 = vld [vmem:[%s1 + $0x198] sm:$0xff]
      %v355 = vld [vmem:[%s1 + $0x1a0] sm:$0xff]
      %v356 = vld [vmem:[%s1 + $0x1a8] sm:$0xff]
      %v357 = vld [vmem:[%s1 + $0x1b0] sm:$0xff]
      %v358 = vld [vmem:[%s1 + $0x1b8] sm:$0xff]
      %v359 = vld [vmem:[%s1 + $0x1c0] sm:$0xff]
      %v360 = vld [vmem:[%s1 + $0x1c8] sm:$0xff]
      %v361 = vld [vmem:[%s1 + $0x1d0] sm:$0xff]
      %v362 = vld [vmem:[%s1 + $0x1d8] sm:$0xff]
      %v363 = vld [vmem:[%s1 + $0x1e0] sm:$0xff]
      %v364 = vld [vmem:[%s1 + $0x1e8] sm:$0xff]
      %v365 = vld [vmem:[%s1 + $0x1f0] sm:$0xff]
      %v366 = vld [vmem:[%s1 + $0x1f8] sm:$0xff]
      %v367 = vld [vmem:[%s2] sm:$0xf]
      %v369 = vlaneseq
      %v370 = vshrl.u32 %v369, 7
      %v371 = vsub.s32 0, %v370
      %v372 = vrot.slane %v367, %v371
      %v373 = vlaneseq
      %v374 = vshrl.u32 %v373, 7
      %v375 = vsub.s32 1, %v374
      %v376 = vrot.slane %v367, %v375
      %v377 = vlaneseq
      %v378 = vshrl.u32 %v377, 7
      %v379 = vsub.s32 2, %v378
      %v380 = vrot.slane %v367, %v379
      %v381 = vlaneseq
      %v382 = vshrl.u32 %v381, 7
      %v383 = vsub.s32 3, %v382
      %v384 = vrot.slane %v367, %v383
      %v405 = vunpack.c.l.b16 %v287
      %v406 = vunpack.c.h.b16 %v287
      %v407 = vunpack.c.l.b16 %v288
      %v408 = vunpack.c.h.b16 %v288
      %v409 = vunpack.c.l.b16 %v289
      %v410 = vunpack.c.h.b16 %v289
      %v411 = vunpack.c.l.b16 %v290
      %v412 = vunpack.c.h.b16 %v290
      %v413 = vunpack.c.l.b16 %v291
      %v414 = vunpack.c.h.b16 %v291
      %v415 = vunpack.c.l.b16 %v292
      %v416 = vunpack.c.h.b16 %v292
      %v417 = vunpack.c.l.b16 %v293
      %v418 = vunpack.c.h.b16 %v293
      %v419 = vunpack.c.l.b16 %v294
      %v420 = vunpack.c.h.b16 %v294
      %v421 = vunpack.c.l.b16 %v295
      %v422 = vunpack.c.h.b16 %v295
      %v423 = vunpack.c.l.b16 %v296
      %v424 = vunpack.c.h.b16 %v296
      %v425 = vunpack.c.l.b16 %v297
      %v426 = vunpack.c.h.b16 %v297
      %v427 = vunpack.c.l.b16 %v298
      %v428 = vunpack.c.h.b16 %v298
      %v429 = vunpack.c.l.b16 %v299
      %v430 = vunpack.c.h.b16 %v299
      %v431 = vunpack.c.l.b16 %v300
      %v432 = vunpack.c.h.b16 %v300
      %v433 = vunpack.c.l.b16 %v301
      %v434 = vunpack.c.h.b16 %v301
      %v435 = vunpack.c.l.b16 %v302
      %v436 = vunpack.c.h.b16 %v302
      %v437 = vpack.c.b16 %v407, %v405
      %v438 = vpack.c.b16 %v408, %v406
      %v439 = vpack.c.b16 %v411, %v409
      %v440 = vpack.c.b16 %v412, %v410
      %v441 = vpack.c.b16 %v415, %v413
      %v442 = vpack.c.b16 %v416, %v414
      %v443 = vpack.c.b16 %v419, %v417
      %v444 = vpack.c.b16 %v420, %v418
      %v445 = vpack.c.b16 %v423, %v421
      %v446 = vpack.c.b16 %v424, %v422
      %v447 = vpack.c.b16 %v427, %v425
      %v448 = vpack.c.b16 %v428, %v426
      %v449 = vpack.c.b16 %v431, %v429
      %v450 = vpack.c.b16 %v432, %v430
      %v451 = vpack.c.b16 %v435, %v433
      %v452 = vpack.c.b16 %v436, %v434
      %v533 = vunpack.c.l.b16 %v303
      %v534 = vunpack.c.h.b16 %v303
      %v535 = vunpack.c.l.b16 %v304
      %v536 = vunpack.c.h.b16 %v304
      %v537 = vunpack.c.l.b16 %v305
      %v538 = vunpack.c.h.b16 %v305
      %v539 = vunpack.c.l.b16 %v306
      %v540 = vunpack.c.h.b16 %v306
      %v541 = vunpack.c.l.b16 %v307
      %v542 = vunpack.c.h.b16 %v307
      %v543 = vunpack.c.l.b16 %v308
      %v544 = vunpack.c.h.b16 %v308
      %v545 = vunpack.c.l.b16 %v309
      %v546 = vunpack.c.h.b16 %v309
      %v547 = vunpack.c.l.b16 %v310
      %v548 = vunpack.c.h.b16 %v310
      %v549 = vunpack.c.l.b16 %v311
      %v550 = vunpack.c.h.b16 %v311
      %v551 = vunpack.c.l.b16 %v312
      %v552 = vunpack.c.h.b16 %v312
      %v553 = vunpack.c.l.b16 %v313
      %v554 = vunpack.c.h.b16 %v313
      %v555 = vunpack.c.l.b16 %v314
      %v556 = vunpack.c.h.b16 %v314
      %v557 = vunpack.c.l.b16 %v315
      %v558 = vunpack.c.h.b16 %v315
      %v559 = vunpack.c.l.b16 %v316
      %v560 = vunpack.c.h.b16 %v316
      %v561 = vunpack.c.l.b16 %v317
      %v562 = vunpack.c.h.b16 %v317
      %v563 = vunpack.c.l.b16 %v318
      %v564 = vunpack.c.h.b16 %v318
      %v565 = vunpack.c.l.b16 %v319
      %v566 = vunpack.c.h.b16 %v319
      %v567 = vunpack.c.l.b16 %v320
      %v568 = vunpack.c.h.b16 %v320
      %v569 = vunpack.c.l.b16 %v321
      %v570 = vunpack.c.h.b16 %v321
      %v571 = vunpack.c.l.b16 %v322
      %v572 = vunpack.c.h.b16 %v322
      %v573 = vunpack.c.l.b16 %v323
      %v574 = vunpack.c.h.b16 %v323
      %v575 = vunpack.c.l.b16 %v324
      %v576 = vunpack.c.h.b16 %v324
      %v577 = vunpack.c.l.b16 %v325
      %v578 = vunpack.c.h.b16 %v325
      %v579 = vunpack.c.l.b16 %v326
      %v580 = vunpack.c.h.b16 %v326
      %v581 = vunpack.c.l.b16 %v327
      %v582 = vunpack.c.h.b16 %v327
      %v583 = vunpack.c.l.b16 %v328
      %v584 = vunpack.c.h.b16 %v328
      %v585 = vunpack.c.l.b16 %v329
      %v586 = vunpack.c.h.b16 %v329
      %v587 = vunpack.c.l.b16 %v330
      %v588 = vunpack.c.h.b16 %v330
      %v589 = vunpack.c.l.b16 %v331
      %v590 = vunpack.c.h.b16 %v331
      %v591 = vunpack.c.l.b16 %v332
      %v592 = vunpack.c.h.b16 %v332
      %v593 = vunpack.c.l.b16 %v333
      %v594 = vunpack.c.h.b16 %v333
      %v595 = vunpack.c.l.b16 %v334
      %v596 = vunpack.c.h.b16 %v334
      %v597 = vunpack.c.l.b16 %v335
      %v598 = vunpack.c.h.b16 %v335
      %v599 = vunpack.c.l.b16 %v336
      %v600 = vunpack.c.h.b16 %v336
      %v601 = vunpack.c.l.b16 %v337
      %v602 = vunpack.c.h.b16 %v337
      %v603 = vunpack.c.l.b16 %v338
      %v604 = vunpack.c.h.b16 %v338
      %v605 = vunpack.c.l.b16 %v339
      %v606 = vunpack.c.h.b16 %v339
      %v607 = vunpack.c.l.b16 %v340
      %v608 = vunpack.c.h.b16 %v340
      %v609 = vunpack.c.l.b16 %v341
      %v610 = vunpack.c.h.b16 %v341
      %v611 = vunpack.c.l.b16 %v342
      %v612 = vunpack.c.h.b16 %v342
      %v613 = vunpack.c.l.b16 %v343
      %v614 = vunpack.c.h.b16 %v343
      %v615 = vunpack.c.l.b16 %v344
      %v616 = vunpack.c.h.b16 %v344
      %v617 = vunpack.c.l.b16 %v345
      %v618 = vunpack.c.h.b16 %v345
      %v619 = vunpack.c.l.b16 %v346
      %v620 = vunpack.c.h.b16 %v346
      %v621 = vunpack.c.l.b16 %v347
      %v622 = vunpack.c.h.b16 %v347
      %v623 = vunpack.c.l.b16 %v348
      %v624 = vunpack.c.h.b16 %v348
      %v625 = vunpack.c.l.b16 %v349
      %v626 = vunpack.c.h.b16 %v349
      %v627 = vunpack.c.l.b16 %v350
      %v628 = vunpack.c.h.b16 %v350
      %v629 = vunpack.c.l.b16 %v351
      %v630 = vunpack.c.h.b16 %v351
      %v631 = vunpack.c.l.b16 %v352
      %v632 = vunpack.c.h.b16 %v352
      %v633 = vunpack.c.l.b16 %v353
      %v634 = vunpack.c.h.b16 %v353
      %v635 = vunpack.c.l.b16 %v354
      %v636 = vunpack.c.h.b16 %v354
      %v637 = vunpack.c.l.b16 %v355
      %v638 = vunpack.c.h.b16 %v355
      %v639 = vunpack.c.l.b16 %v356
      %v640 = vunpack.c.h.b16 %v356
      %v641 = vunpack.c.l.b16 %v357
      %v642 = vunpack.c.h.b16 %v357
      %v643 = vunpack.c.l.b16 %v358
      %v644 = vunpack.c.h.b16 %v358
      %v645 = vunpack.c.l.b16 %v359
      %v646 = vunpack.c.h.b16 %v359
      %v647 = vunpack.c.l.b16 %v360
      %v648 = vunpack.c.h.b16 %v360
      %v649 = vunpack.c.l.b16 %v361
      %v650 = vunpack.c.h.b16 %v361
      %v651 = vunpack.c.l.b16 %v362
      %v652 = vunpack.c.h.b16 %v362
      %v653 = vunpack.c.l.b16 %v363
      %v654 = vunpack.c.h.b16 %v363
      %v655 = vunpack.c.l.b16 %v364
      %v656 = vunpack.c.h.b16 %v364
      %v657 = vunpack.c.l.b16 %v365
      %v658 = vunpack.c.h.b16 %v365
      %v659 = vunpack.c.l.b16 %v366
      %v660 = vunpack.c.h.b16 %v366
      %v661 = vpack.c.b16 %v537, %v533
      %v662 = vpack.c.b16 %v538, %v534
      %v663 = vpack.c.b16 %v539, %v535
      %v664 = vpack.c.b16 %v540, %v536
      %v665 = vpack.c.b16 %v545, %v541
      %v666 = vpack.c.b16 %v546, %v542
      %v667 = vpack.c.b16 %v547, %v543
      %v668 = vpack.c.b16 %v548, %v544
      %v669 = vpack.c.b16 %v553, %v549
      %v670 = vpack.c.b16 %v554, %v550
      %v671 = vpack.c.b16 %v555, %v551
      %v672 = vpack.c.b16 %v556, %v552
      %v673 = vpack.c.b16 %v561, %v557
      %v674 = vpack.c.b16 %v562, %v558
      %v675 = vpack.c.b16 %v563, %v559
      %v676 = vpack.c.b16 %v564, %v560
      %v677 = vpack.c.b16 %v569, %v565
      %v678 = vpack.c.b16 %v570, %v566
      %v679 = vpack.c.b16 %v571, %v567
      %v680 = vpack.c.b16 %v572, %v568
      %v681 = vpack.c.b16 %v577, %v573
      %v682 = vpack.c.b16 %v578, %v574
      %v683 = vpack.c.b16 %v579, %v575
      %v684 = vpack.c.b16 %v580, %v576
      %v685 = vpack.c.b16 %v585, %v581
      %v686 = vpack.c.b16 %v586, %v582
      %v687 = vpack.c.b16 %v587, %v583
      %v688 = vpack.c.b16 %v588, %v584
      %v689 = vpack.c.b16 %v593, %v589
      %v690 = vpack.c.b16 %v594, %v590
      %v691 = vpack.c.b16 %v595, %v591
      %v692 = vpack.c.b16 %v596, %v592
      %v693 = vpack.c.b16 %v601, %v597
      %v694 = vpack.c.b16 %v602, %v598
      %v695 = vpack.c.b16 %v603, %v599
      %v696 = vpack.c.b16 %v604, %v600
      %v697 = vpack.c.b16 %v609, %v605
      %v698 = vpack.c.b16 %v610, %v606
      %v699 = vpack.c.b16 %v611, %v607
      %v700 = vpack.c.b16 %v612, %v608
      %v701 = vpack.c.b16 %v617, %v613
      %v702 = vpack.c.b16 %v618, %v614
      %v703 = vpack.c.b16 %v619, %v615
      %v704 = vpack.c.b16 %v620, %v616
      %v705 = vpack.c.b16 %v625, %v621
      %v706 = vpack.c.b16 %v626, %v622
      %v707 = vpack.c.b16 %v627, %v623
      %v708 = vpack.c.b16 %v628, %v624
      %v709 = vpack.c.b16 %v633, %v629
      %v710 = vpack.c.b16 %v634, %v630
      %v711 = vpack.c.b16 %v635, %v631
      %v712 = vpack.c.b16 %v636, %v632
      %v713 = vpack.c.b16 %v641, %v637
      %v714 = vpack.c.b16 %v642, %v638
      %v715 = vpack.c.b16 %v643, %v639
      %v716 = vpack.c.b16 %v644, %v640
      %v717 = vpack.c.b16 %v649, %v645
      %v718 = vpack.c.b16 %v650, %v646
      %v719 = vpack.c.b16 %v651, %v647
      %v720 = vpack.c.b16 %v652, %v648
      %v721 = vpack.c.b16 %v657, %v653
      %v722 = vpack.c.b16 %v658, %v654
      %v723 = vpack.c.b16 %v659, %v655
      %v724 = vpack.c.b16 %v660, %v656
      %789 = vmatprep.subr.bf16.mxu0 %v690
      %790 = vmatpush1.bf16.msra.mxu0 %v689
      %791 = vmatprep.subr.bf16.mxu0 %v686
      %792 = vmatpush1.bf16.msra.mxu0 %v685
      %793 = vmatprep.subr.bf16.mxu0 %v682
      %794 = vmatpush1.bf16.msra.mxu0 %v681
      %795 = vmatprep.subr.bf16.mxu0 %v678
      %796 = vmatpush1.bf16.msra.mxu0 %v677
      %797 = vmatprep.subr.bf16.mxu0 %v674
      %798 = vmatpush1.bf16.msra.mxu0 %v673
      %799 = vmatprep.subr.bf16.mxu0 %v670
      %800 = vmatpush1.bf16.msra.mxu0 %v669
      %801 = vmatprep.subr.bf16.mxu0 %v666
      %802 = vmatpush1.bf16.msra.mxu0 %v665
      %803 = vmatprep.subr.bf16.mxu0 %v662
      %804 = vmatpush1.bf16.msra.mxu0 %v661
      %805 = vmatprep.subr.bf16.mxu0 %v722
      %806 = vmatpush2.bf16.msra.mxu0 %v721
      %807 = vmatprep.subr.bf16.mxu0 %v718
      %808 = vmatpush2.bf16.msra.mxu0 %v717
      %809 = vmatprep.subr.bf16.mxu0 %v714
      %810 = vmatpush2.bf16.msra.mxu0 %v713
      %811 = vmatprep.subr.bf16.mxu0 %v710
      %812 = vmatpush2.bf16.msra.mxu0 %v709
      %813 = vmatprep.subr.bf16.mxu0 %v706
      %814 = vmatpush2.bf16.msra.mxu0 %v705
      %815 = vmatprep.subr.bf16.mxu0 %v702
      %816 = vmatpush2.bf16.msra.mxu0 %v701
      %817 = vmatprep.subr.bf16.mxu0 %v698
      %818 = vmatpush2.bf16.msra.mxu0 %v697
      %819 = vmatprep.subr.bf16.mxu0 %v694
      %820 = vmatpush2.bf16.msra.mxu0 %v693
      %821 = vmatprep.mubr.bf16.mxu0 %v438
      %822 = vmatmul.mubr.bf16.gmra.mxu0 %v437
      %v823 = vpop.f32.mrf.mxu0
      %v824 = vadd.f32 %v372, %v823
      %v825 = vpop.f32.mrf.mxu0
      %v826 = vadd.f32 %v376, %v825
      %v827 = vpop.f32.mrf.mxu0
      %v828 = vadd.f32 %v372, %v827
      %v829 = vpop.f32.mrf.mxu0
      %v830 = vadd.f32 %v376, %v829
      %831 = vmatprep.mubr.bf16.mxu0 %v440
      %832 = vmatmul.mubr.bf16.gmra.mxu0 %v439
      %v833 = vpop.f32.mrf.mxu0
      %v834 = vadd.f32 %v372, %v833
      %v835 = vpop.f32.mrf.mxu0
      %v836 = vadd.f32 %v376, %v835
      %v837 = vpop.f32.mrf.mxu0
      %v838 = vadd.f32 %v372, %v837
      %v839 = vpop.f32.mrf.mxu0
      %v840 = vadd.f32 %v376, %v839
      %841 = vmatprep.mubr.bf16.mxu0 %v442
      %842 = vmatmul.mubr.bf16.gmra.mxu0 %v441
      %v843 = vpop.f32.mrf.mxu0
      %v844 = vadd.f32 %v372, %v843
      %v845 = vpop.f32.mrf.mxu0
      %v846 = vadd.f32 %v376, %v845
      %v847 = vpop.f32.mrf.mxu0
      %v848 = vadd.f32 %v372, %v847
      %v849 = vpop.f32.mrf.mxu0
      %v850 = vadd.f32 %v376, %v849
      %851 = vmatprep.mubr.bf16.mxu0 %v444
      %852 = vmatmul.mubr.bf16.gmra.mxu0 %v443
      %v853 = vpop.f32.mrf.mxu0
      %v854 = vadd.f32 %v372, %v853
      %v855 = vpop.f32.mrf.mxu0
      %v856 = vadd.f32 %v376, %v855
      %v857 = vpop.f32.mrf.mxu0
      %v858 = vadd.f32 %v372, %v857
      %v859 = vpop.f32.mrf.mxu0
      %v860 = vadd.f32 %v376, %v859
      %861 = vmatprep.mubr.bf16.mxu0 %v446
      %862 = vmatmul.mubr.bf16.gmra.mxu0 %v445
      %v863 = vpop.f32.mrf.mxu0
      %v864 = vadd.f32 %v372, %v863
      %v865 = vpop.f32.mrf.mxu0
      %v866 = vadd.f32 %v376, %v865
      %v867 = vpop.f32.mrf.mxu0
      %v868 = vadd.f32 %v372, %v867
      %v869 = vpop.f32.mrf.mxu0
      %v870 = vadd.f32 %v376, %v869
      %871 = vmatprep.mubr.bf16.mxu0 %v448
      %872 = vmatmul.mubr.bf16.gmra.mxu0 %v447
      %v873 = vpop.f32.mrf.mxu0
      %v874 = vadd.f32 %v372, %v873
      %v875 = vpop.f32.mrf.mxu0
      %v876 = vadd.f32 %v376, %v875
      %v877 = vpop.f32.mrf.mxu0
      %v878 = vadd.f32 %v372, %v877
      %v879 = vpop.f32.mrf.mxu0
      %v880 = vadd.f32 %v376, %v879
      %881 = vmatprep.mubr.bf16.mxu0 %v450
      %882 = vmatmul.mubr.bf16.gmra.mxu0 %v449
      %v883 = vpop.f32.mrf.mxu0
      %v884 = vadd.f32 %v372, %v883
      %v885 = vpop.f32.mrf.mxu0
      %v886 = vadd.f32 %v376, %v885
      %v887 = vpop.f32.mrf.mxu0
      %v888 = vadd.f32 %v372, %v887
      %v889 = vpop.f32.mrf.mxu0
      %v890 = vadd.f32 %v376, %v889
      %891 = vmatprep.mubr.bf16.mxu0 %v452
      %892 = vmatmul.mubr.bf16.gmra.mxu0 %v451
      %v893 = vpop.f32.mrf.mxu0
      %v894 = vadd.f32 %v372, %v893
      %v895 = vpop.f32.mrf.mxu0
      %v896 = vadd.f32 %v376, %v895
      %v897 = vpop.f32.mrf.mxu0
      %v898 = vadd.f32 %v372, %v897
      %v899 = vpop.f32.mrf.mxu0
      %v900 = vadd.f32 %v376, %v899
      %901 = vdwg.mxu0
      %902 = vmatprep.subr.bf16.mxu0 %v692
      %903 = vmatpush1.bf16.msra.mxu0 %v691
      %904 = vmatprep.subr.bf16.mxu0 %v688
      %905 = vmatpush1.bf16.msra.mxu0 %v687
      %906 = vmatprep.subr.bf16.mxu0 %v684
      %907 = vmatpush1.bf16.msra.mxu0 %v683
      %908 = vmatprep.subr.bf16.mxu0 %v680
      %909 = vmatpush1.bf16.msra.mxu0 %v679
      %910 = vmatprep.subr.bf16.mxu0 %v676
      %911 = vmatpush1.bf16.msra.mxu0 %v675
      %912 = vmatprep.subr.bf16.mxu0 %v672
      %913 = vmatpush1.bf16.msra.mxu0 %v671
      %914 = vmatprep.subr.bf16.mxu0 %v668
      %915 = vmatpush1.bf16.msra.mxu0 %v667
      %916 = vmatprep.subr.bf16.mxu0 %v664
      %917 = vmatpush1.bf16.msra.mxu0 %v663
      %918 = vmatprep.subr.bf16.mxu0 %v724
      %919 = vmatpush2.bf16.msra.mxu0 %v723
      %920 = vmatprep.subr.bf16.mxu0 %v720
      %921 = vmatpush2.bf16.msra.mxu0 %v719
      %922 = vmatprep.subr.bf16.mxu0 %v716
      %923 = vmatpush2.bf16.msra.mxu0 %v715
      %924 = vmatprep.subr.bf16.mxu0 %v712
      %925 = vmatpush2.bf16.msra.mxu0 %v711
      %926 = vmatprep.subr.bf16.mxu0 %v708
      %927 = vmatpush2.bf16.msra.mxu0 %v707
      %928 = vmatprep.subr.bf16.mxu0 %v704
      %929 = vmatpush2.bf16.msra.mxu0 %v703
      %930 = vmatprep.subr.bf16.mxu0 %v700
      %931 = vmatpush2.bf16.msra.mxu0 %v699
      %932 = vmatprep.subr.bf16.mxu0 %v696
      %933 = vmatpush2.bf16.msra.mxu0 %v695
      %934 = vmatprep.mubr.bf16.mxu0 %v438
      %935 = vmatmul.mubr.bf16.gmra.mxu0 %v437
      %v936 = vpop.f32.mrf.mxu0
      %v937 = vadd.f32 %v380, %v936
      %v938 = vpop.f32.mrf.mxu0
      %v939 = vadd.f32 %v384, %v938
      %v940 = vpop.f32.mrf.mxu0
      %v941 = vadd.f32 %v380, %v940
      %v942 = vpop.f32.mrf.mxu0
      %v943 = vadd.f32 %v384, %v942
      %944 = vmatprep.mubr.bf16.mxu0 %v440
      %945 = vmatmul.mubr.bf16.gmra.mxu0 %v439
      %v946 = vpop.f32.mrf.mxu0
      %v947 = vadd.f32 %v380, %v946
      %v948 = vpop.f32.mrf.mxu0
      %v949 = vadd.f32 %v384, %v948
      %v950 = vpop.f32.mrf.mxu0
      %v951 = vadd.f32 %v380, %v950
      %v952 = vpop.f32.mrf.mxu0
      %v953 = vadd.f32 %v384, %v952
      %954 = vmatprep.mubr.bf16.mxu0 %v442
      %955 = vmatmul.mubr.bf16.gmra.mxu0 %v441
      %v956 = vpop.f32.mrf.mxu0
      %v957 = vadd.f32 %v380, %v956
      %v958 = vpop.f32.mrf.mxu0
      %v959 = vadd.f32 %v384, %v958
      %v960 = vpop.f32.mrf.mxu0
      %v961 = vadd.f32 %v380, %v960
      %v962 = vpop.f32.mrf.mxu0
      %v963 = vadd.f32 %v384, %v962
      %964 = vmatprep.mubr.bf16.mxu0 %v444
      %965 = vmatmul.mubr.bf16.gmra.mxu0 %v443
      %v966 = vpop.f32.mrf.mxu0
      %v967 = vadd.f32 %v380, %v966
      %v968 = vpop.f32.mrf.mxu0
      %v969 = vadd.f32 %v384, %v968
      %v970 = vpop.f32.mrf.mxu0
      %v971 = vadd.f32 %v380, %v970
      %v972 = vpop.f32.mrf.mxu0
      %v973 = vadd.f32 %v384, %v972
      %974 = vmatprep.mubr.bf16.mxu0 %v446
      %975 = vmatmul.mubr.bf16.gmra.mxu0 %v445
      %v976 = vpop.f32.mrf.mxu0
      %v977 = vadd.f32 %v380, %v976
      %v978 = vpop.f32.mrf.mxu0
      %v979 = vadd.f32 %v384, %v978
      %v980 = vpop.f32.mrf.mxu0
      %v981 = vadd.f32 %v380, %v980
      %v982 = vpop.f32.mrf.mxu0
      %v983 = vadd.f32 %v384, %v982
      %984 = vmatprep.mubr.bf16.mxu0 %v448
      %985 = vmatmul.mubr.bf16.gmra.mxu0 %v447
      %v986 = vpop.f32.mrf.mxu0
      %v987 = vadd.f32 %v380, %v986
      %v988 = vpop.f32.mrf.mxu0
      %v989 = vadd.f32 %v384, %v988
      %v990 = vpop.f32.mrf.mxu0
      %v991 = vadd.f32 %v380, %v990
      %v992 = vpop.f32.mrf.mxu0
      %v993 = vadd.f32 %v384, %v992
      %994 = vmatprep.mubr.bf16.mxu0 %v450
      %995 = vmatmul.mubr.bf16.gmra.mxu0 %v449
      %v996 = vpop.f32.mrf.mxu0
      %v997 = vadd.f32 %v380, %v996
      %v998 = vpop.f32.mrf.mxu0
      %v999 = vadd.f32 %v384, %v998
      %v1000 = vpop.f32.mrf.mxu0
      %v1001 = vadd.f32 %v380, %v1000
      %v1002 = vpop.f32.mrf.mxu0
      %v1003 = vadd.f32 %v384, %v1002
      %1004 = vmatprep.mubr.bf16.mxu0 %v452
      %1005 = vmatmul.mubr.bf16.gmra.mxu0 %v451
      %v1006 = vpop.f32.mrf.mxu0
      %v1007 = vadd.f32 %v380, %v1006
      %v1008 = vpop.f32.mrf.mxu0
      %v1009 = vadd.f32 %v384, %v1008
      %v1010 = vpop.f32.mrf.mxu0
      %v1011 = vadd.f32 %v380, %v1010
      %v1012 = vpop.f32.mrf.mxu0
      %v1013 = vadd.f32 %v384, %v1012
      %1014 = vdwg.mxu0
      %v1015 = vmul.f32 %v824, 0.5
      %v1016 = vmul.f32 %v826, 0.5
      %v1017 = vmul.f32 %v937, 0.5
      %v1018 = vmul.f32 %v939, 0.5
      %v1019 = vmul.f32 %v828, 0.5
      %v1020 = vmul.f32 %v830, 0.5
      %v1021 = vmul.f32 %v941, 0.5
      %v1022 = vmul.f32 %v943, 0.5
      %v1023 = vmul.f32 %v834, 0.5
      %v1024 = vmul.f32 %v836, 0.5
      %v1025 = vmul.f32 %v947, 0.5
      %v1026 = vmul.f32 %v949, 0.5
      %v1027 = vmul.f32 %v838, 0.5
      %v1028 = vmul.f32 %v840, 0.5
      %v1029 = vmul.f32 %v951, 0.5
      %v1030 = vmul.f32 %v953, 0.5
      %v1031 = vmul.f32 %v844, 0.5
      %v1032 = vmul.f32 %v846, 0.5
      %v1033 = vmul.f32 %v957, 0.5
      %v1034 = vmul.f32 %v959, 0.5
      %v1035 = vmul.f32 %v848, 0.5
      %v1036 = vmul.f32 %v850, 0.5
      %v1037 = vmul.f32 %v961, 0.5
      %v1038 = vmul.f32 %v963, 0.5
      %v1039 = vmul.f32 %v854, 0.5
      %v1040 = vmul.f32 %v856, 0.5
      %v1041 = vmul.f32 %v967, 0.5
      %v1042 = vmul.f32 %v969, 0.5
      %v1043 = vmul.f32 %v858, 0.5
      %v1044 = vmul.f32 %v860, 0.5
      %v1045 = vmul.f32 %v971, 0.5
      %v1046 = vmul.f32 %v973, 0.5
      %v1047 = vmul.f32 %v864, 0.5
      %v1048 = vmul.f32 %v866, 0.5
      %v1049 = vmul.f32 %v977, 0.5
      %v1050 = vmul.f32 %v979, 0.5
      %v1051 = vmul.f32 %v868, 0.5
      %v1052 = vmul.f32 %v870, 0.5
      %v1053 = vmul.f32 %v981, 0.5
      %v1054 = vmul.f32 %v983, 0.5
      %v1055 = vmul.f32 %v874, 0.5
      %v1056 = vmul.f32 %v876, 0.5
      %v1057 = vmul.f32 %v987, 0.5
      %v1058 = vmul.f32 %v989, 0.5
      %v1059 = vmul.f32 %v878, 0.5
      %v1060 = vmul.f32 %v880, 0.5
      %v1061 = vmul.f32 %v991, 0.5
      %v1062 = vmul.f32 %v993, 0.5
      %v1063 = vmul.f32 %v884, 0.5
      %v1064 = vmul.f32 %v886, 0.5
      %v1065 = vmul.f32 %v997, 0.5
      %v1066 = vmul.f32 %v999, 0.5
      %v1067 = vmul.f32 %v888, 0.5
      %v1068 = vmul.f32 %v890, 0.5
      %v1069 = vmul.f32 %v1001, 0.5
      %v1070 = vmul.f32 %v1003, 0.5
      %v1071 = vmul.f32 %v894, 0.5
      %v1072 = vmul.f32 %v896, 0.5
      %v1073 = vmul.f32 %v1007, 0.5
      %v1074 = vmul.f32 %v1009, 0.5
      %v1075 = vmul.f32 %v898, 0.5
      %v1076 = vmul.f32 %v900, 0.5
      %v1077 = vmul.f32 %v1011, 0.5
      %v1078 = vmul.f32 %v1013, 0.5
      %v1079 = vmul.f32 %v824, 0.70710677
      %v1080 = vmul.f32 %v826, 0.70710677
      %v1081 = vmul.f32 %v937, 0.70710677
      %v1082 = vmul.f32 %v939, 0.70710677
      %v1083 = vmul.f32 %v828, 0.70710677
      %v1084 = vmul.f32 %v830, 0.70710677
      %v1085 = vmul.f32 %v941, 0.70710677
      %v1086 = vmul.f32 %v943, 0.70710677
      %v1087 = vmul.f32 %v834, 0.70710677
      %v1088 = vmul.f32 %v836, 0.70710677
      %v1089 = vmul.f32 %v947, 0.70710677
      %v1090 = vmul.f32 %v949, 0.70710677
      %v1091 = vmul.f32 %v838, 0.70710677
      %v1092 = vmul.f32 %v840, 0.70710677
      %v1093 = vmul.f32 %v951, 0.70710677
      %v1094 = vmul.f32 %v953, 0.70710677
      %v1095 = vmul.f32 %v844, 0.70710677
      %v1096 = vmul.f32 %v846, 0.70710677
      %v1097 = vmul.f32 %v957, 0.70710677
      %v1098 = vmul.f32 %v959, 0.70710677
      %v1099 = vmul.f32 %v848, 0.70710677
      %v1100 = vmul.f32 %v850, 0.70710677
      %v1101 = vmul.f32 %v961, 0.70710677
      %v1102 = vmul.f32 %v963, 0.70710677
      %v1103 = vmul.f32 %v854, 0.70710677
      %v1104 = vmul.f32 %v856, 0.70710677
      %v1105 = vmul.f32 %v967, 0.70710677
      %v1106 = vmul.f32 %v969, 0.70710677
      %v1107 = vmul.f32 %v858, 0.70710677
      %v1108 = vmul.f32 %v860, 0.70710677
      %v1109 = vmul.f32 %v971, 0.70710677
      %v1110 = vmul.f32 %v973, 0.70710677
      %v1111 = vmul.f32 %v864, 0.70710677
      %v1112 = vmul.f32 %v866, 0.70710677
      %v1113 = vmul.f32 %v977, 0.70710677
      %v1114 = vmul.f32 %v979, 0.70710677
      %v1115 = vmul.f32 %v868, 0.70710677
      %v1116 = vmul.f32 %v870, 0.70710677
      %v1117 = vmul.f32 %v981, 0.70710677
      %v1118 = vmul.f32 %v983, 0.70710677
      %v1119 = vmul.f32 %v874, 0.70710677
      %v1120 = vmul.f32 %v876, 0.70710677
      %v1121 = vmul.f32 %v987, 0.70710677
      %v1122 = vmul.f32 %v989, 0.70710677
      %v1123 = vmul.f32 %v878, 0.70710677
      %v1124 = vmul.f32 %v880, 0.70710677
      %v1125 = vmul.f32 %v991, 0.70710677
      %v1126 = vmul.f32 %v993, 0.70710677
      %v1127 = vmul.f32 %v884, 0.70710677
      %v1128 = vmul.f32 %v886, 0.70710677
      %v1129 = vmul.f32 %v997, 0.70710677
      %v1130 = vmul.f32 %v999, 0.70710677
      %v1131 = vmul.f32 %v888, 0.70710677
      %v1132 = vmul.f32 %v890, 0.70710677
      %v1133 = vmul.f32 %v1001, 0.70710677
      %v1134 = vmul.f32 %v1003, 0.70710677
      %v1135 = vmul.f32 %v894, 0.70710677
      %v1136 = vmul.f32 %v896, 0.70710677
      %v1137 = vmul.f32 %v1007, 0.70710677
      %v1138 = vmul.f32 %v1009, 0.70710677
      %v1139 = vmul.f32 %v898, 0.70710677
      %v1140 = vmul.f32 %v900, 0.70710677
      %v1141 = vmul.f32 %v1011, 0.70710677
      %v1142 = vmul.f32 %v1013, 0.70710677
      %v1143 = verf.f32.pop %v1079
      %v1144 = verf.f32.pop %v1080
      %v1145 = verf.f32.pop %v1081
      %v1146 = verf.f32.pop %v1082
      %v1147 = verf.f32.pop %v1083
      %v1148 = verf.f32.pop %v1084
      %v1149 = verf.f32.pop %v1085
      %v1150 = verf.f32.pop %v1086
      %v1151 = verf.f32.pop %v1087
      %v1152 = verf.f32.pop %v1088
      %v1153 = verf.f32.pop %v1089
      %v1154 = verf.f32.pop %v1090
      %v1155 = verf.f32.pop %v1091
      %v1156 = verf.f32.pop %v1092
      %v1157 = verf.f32.pop %v1093
      %v1158 = verf.f32.pop %v1094
      %v1159 = verf.f32.pop %v1095
      %v1160 = verf.f32.pop %v1096
      %v1161 = verf.f32.pop %v1097
      %v1162 = verf.f32.pop %v1098
      %v1163 = verf.f32.pop %v1099
      %v1164 = verf.f32.pop %v1100
      %v1165 = verf.f32.pop %v1101
      %v1166 = verf.f32.pop %v1102
      %v1167 = verf.f32.pop %v1103
      %v1168 = verf.f32.pop %v1104
      %v1169 = verf.f32.pop %v1105
      %v1170 = verf.f32.pop %v1106
      %v1171 = verf.f32.pop %v1107
      %v1172 = verf.f32.pop %v1108
      %v1173 = verf.f32.pop %v1109
      %v1174 = verf.f32.pop %v1110
      %v1175 = verf.f32.pop %v1111
      %v1176 = verf.f32.pop %v1112
      %v1177 = verf.f32.pop %v1113
      %v1178 = verf.f32.pop %v1114
      %v1179 = verf.f32.pop %v1115
      %v1180 = verf.f32.pop %v1116
      %v1181 = verf.f32.pop %v1117
      %v1182 = verf.f32.pop %v1118
      %v1183 = verf.f32.pop %v1119
      %v1184 = verf.f32.pop %v1120
      %v1185 = verf.f32.pop %v1121
      %v1186 = verf.f32.pop %v1122
      %v1187 = verf.f32.pop %v1123
      %v1188 = verf.f32.pop %v1124
      %v1189 = verf.f32.pop %v1125
      %v1190 = verf.f32.pop %v1126
      %v1191 = verf.f32.pop %v1127
      %v1192 = verf.f32.pop %v1128
      %v1193 = verf.f32.pop %v1129
      %v1194 = verf.f32.pop %v1130
      %v1195 = verf.f32.pop %v1131
      %v1196 = verf.f32.pop %v1132
      %v1197 = verf.f32.pop %v1133
      %v1198 = verf.f32.pop %v1134
      %v1199 = verf.f32.pop %v1135
      %v1200 = verf.f32.pop %v1136
      %v1201 = verf.f32.pop %v1137
      %v1202 = verf.f32.pop %v1138
      %v1203 = verf.f32.pop %v1139
      %v1204 = verf.f32.pop %v1140
      %v1205 = verf.f32.pop %v1141
      %v1206 = verf.f32.pop %v1142
      %v1207 = vadd.f32 %v1143, 1.0
      %v1208 = vadd.f32 %v1144, 1.0
      %v1209 = vadd.f32 %v1145, 1.0
      %v1210 = vadd.f32 %v1146, 1.0
      %v1211 = vadd.f32 %v1147, 1.0
      %v1212 = vadd.f32 %v1148, 1.0
      %v1213 = vadd.f32 %v1149, 1.0
      %v1214 = vadd.f32 %v1150, 1.0
      %v1215 = vadd.f32 %v1151, 1.0
      %v1216 = vadd.f32 %v1152, 1.0
      %v1217 = vadd.f32 %v1153, 1.0
      %v1218 = vadd.f32 %v1154, 1.0
      %v1219 = vadd.f32 %v1155, 1.0
      %v1220 = vadd.f32 %v1156, 1.0
      %v1221 = vadd.f32 %v1157, 1.0
      %v1222 = vadd.f32 %v1158, 1.0
      %v1223 = vadd.f32 %v1159, 1.0
      %v1224 = vadd.f32 %v1160, 1.0
      %v1225 = vadd.f32 %v1161, 1.0
      %v1226 = vadd.f32 %v1162, 1.0
      %v1227 = vadd.f32 %v1163, 1.0
      %v1228 = vadd.f32 %v1164, 1.0
      %v1229 = vadd.f32 %v1165, 1.0
      %v1230 = vadd.f32 %v1166, 1.0
      %v1231 = vadd.f32 %v1167, 1.0
      %v1232 = vadd.f32 %v1168, 1.0
      %v1233 = vadd.f32 %v1169, 1.0
      %v1234 = vadd.f32 %v1170, 1.0
      %v1235 = vadd.f32 %v1171, 1.0
      %v1236 = vadd.f32 %v1172, 1.0
      %v1237 = vadd.f32 %v1173, 1.0
      %v1238 = vadd.f32 %v1174, 1.0
      %v1239 = vadd.f32 %v1175, 1.0
      %v1240 = vadd.f32 %v1176, 1.0
      %v1241 = vadd.f32 %v1177, 1.0
      %v1242 = vadd.f32 %v1178, 1.0
      %v1243 = vadd.f32 %v1179, 1.0
      %v1244 = vadd.f32 %v1180, 1.0
      %v1245 = vadd.f32 %v1181, 1.0
      %v1246 = vadd.f32 %v1182, 1.0
      %v1247 = vadd.f32 %v1183, 1.0
      %v1248 = vadd.f32 %v1184, 1.0
      %v1249 = vadd.f32 %v1185, 1.0
      %v1250 = vadd.f32 %v1186, 1.0
      %v1251 = vadd.f32 %v1187, 1.0
      %v1252 = vadd.f32 %v1188, 1.0
      %v1253 = vadd.f32 %v1189, 1.0
      %v1254 = vadd.f32 %v1190, 1.0
      %v1255 = vadd.f32 %v1191, 1.0
      %v1256 = vadd.f32 %v1192, 1.0
      %v1257 = vadd.f32 %v1193, 1.0
      %v1258 = vadd.f32 %v1194, 1.0
      %v1259 = vadd.f32 %v1195, 1.0
      %v1260 = vadd.f32 %v1196, 1.0
      %v1261 = vadd.f32 %v1197, 1.0
      %v1262 = vadd.f32 %v1198, 1.0
      %v1263 = vadd.f32 %v1199, 1.0
      %v1264 = vadd.f32 %v1200, 1.0
      %v1265 = vadd.f32 %v1201, 1.0
      %v1266 = vadd.f32 %v1202, 1.0
      %v1267 = vadd.f32 %v1203, 1.0
      %v1268 = vadd.f32 %v1204, 1.0
      %v1269 = vadd.f32 %v1205, 1.0
      %v1270 = vadd.f32 %v1206, 1.0
      %v1271 = vmul.f32 %v1015, %v1207
      %v1272 = vmul.f32 %v1016, %v1208
      %v1273 = vmul.f32 %v1017, %v1209
      %v1274 = vmul.f32 %v1018, %v1210
      %v1275 = vmul.f32 %v1019, %v1211
      %v1276 = vmul.f32 %v1020, %v1212
      %v1277 = vmul.f32 %v1021, %v1213
      %v1278 = vmul.f32 %v1022, %v1214
      %v1279 = vmul.f32 %v1023, %v1215
      %v1280 = vmul.f32 %v1024, %v1216
      %v1281 = vmul.f32 %v1025, %v1217
      %v1282 = vmul.f32 %v1026, %v1218
      %v1283 = vmul.f32 %v1027, %v1219
      %v1284 = vmul.f32 %v1028, %v1220
      %v1285 = vmul.f32 %v1029, %v1221
      %v1286 = vmul.f32 %v1030, %v1222
      %v1287 = vmul.f32 %v1031, %v1223
      %v1288 = vmul.f32 %v1032, %v1224
      %v1289 = vmul.f32 %v1033, %v1225
      %v1290 = vmul.f32 %v1034, %v1226
      %v1291 = vmul.f32 %v1035, %v1227
      %v1292 = vmul.f32 %v1036, %v1228
      %v1293 = vmul.f32 %v1037, %v1229
      %v1294 = vmul.f32 %v1038, %v1230
      %v1295 = vmul.f32 %v1039, %v1231
      %v1296 = vmul.f32 %v1040, %v1232
      %v1297 = vmul.f32 %v1041, %v1233
      %v1298 = vmul.f32 %v1042, %v1234
      %v1299 = vmul.f32 %v1043, %v1235
      %v1300 = vmul.f32 %v1044, %v1236
      %v1301 = vmul.f32 %v1045, %v1237
      %v1302 = vmul.f32 %v1046, %v1238
      %v1303 = vmul.f32 %v1047, %v1239
      %v1304 = vmul.f32 %v1048, %v1240
      %v1305 = vmul.f32 %v1049, %v1241
      %v1306 = vmul.f32 %v1050, %v1242
      %v1307 = vmul.f32 %v1051, %v1243
      %v1308 = vmul.f32 %v1052, %v1244
      %v1309 = vmul.f32 %v1053, %v1245
      %v1310 = vmul.f32 %v1054, %v1246
      %v1311 = vmul.f32 %v1055, %v1247
      %v1312 = vmul.f32 %v1056, %v1248
      %v1313 = vmul.f32 %v1057, %v1249
      %v1314 = vmul.f32 %v1058, %v1250
      %v1315 = vmul.f32 %v1059, %v1251
      %v1316 = vmul.f32 %v1060, %v1252
      %v1317 = vmul.f32 %v1061, %v1253
      %v1318 = vmul.f32 %v1062, %v1254
      %v1319 = vmul.f32 %v1063, %v1255
      %v1320 = vmul.f32 %v1064, %v1256
      %v1321 = vmul.f32 %v1065, %v1257
      %v1322 = vmul.f32 %v1066, %v1258
      %v1323 = vmul.f32 %v1067, %v1259
      %v1324 = vmul.f32 %v1068, %v1260
      %v1325 = vmul.f32 %v1069, %v1261
      %v1326 = vmul.f32 %v1070, %v1262
      %v1327 = vmul.f32 %v1071, %v1263
      %v1328 = vmul.f32 %v1072, %v1264
      %v1329 = vmul.f32 %v1073, %v1265
      %v1330 = vmul.f32 %v1074, %v1266
      %v1331 = vmul.f32 %v1075, %v1267
      %v1332 = vmul.f32 %v1076, %v1268
      %v1333 = vmul.f32 %v1077, %v1269
      %v1334 = vmul.f32 %v1078, %v1270
      %v1335 = vpack.c.bf16 %v1275, %v1271
      %v1336 = vpack.c.bf16 %v1276, %v1272
      %v1337 = vpack.c.bf16 %v1277, %v1273
      %v1338 = vpack.c.bf16 %v1278, %v1274
      %v1339 = vpack.c.bf16 %v1283, %v1279
      %v1340 = vpack.c.bf16 %v1284, %v1280
      %v1341 = vpack.c.bf16 %v1285, %v1281
      %v1342 = vpack.c.bf16 %v1286, %v1282
      %v1343 = vpack.c.bf16 %v1291, %v1287
      %v1344 = vpack.c.bf16 %v1292, %v1288
      %v1345 = vpack.c.bf16 %v1293, %v1289
      %v1346 = vpack.c.bf16 %v1294, %v1290
      %v1347 = vpack.c.bf16 %v1299, %v1295
      %v1348 = vpack.c.bf16 %v1300, %v1296
      %v1349 = vpack.c.bf16 %v1301, %v1297
      %v1350 = vpack.c.bf16 %v1302, %v1298
      %v1351 = vpack.c.bf16 %v1307, %v1303
      %v1352 = vpack.c.bf16 %v1308, %v1304
      %v1353 = vpack.c.bf16 %v1309, %v1305
      %v1354 = vpack.c.bf16 %v1310, %v1306
      %v1355 = vpack.c.bf16 %v1315, %v1311
      %v1356 = vpack.c.bf16 %v1316, %v1312
      %v1357 = vpack.c.bf16 %v1317, %v1313
      %v1358 = vpack.c.bf16 %v1318, %v1314
      %v1359 = vpack.c.bf16 %v1323, %v1319
      %v1360 = vpack.c.bf16 %v1324, %v1320
      %v1361 = vpack.c.bf16 %v1325, %v1321
      %v1362 = vpack.c.bf16 %v1326, %v1322
      %v1363 = vpack.c.bf16 %v1331, %v1327
      %v1364 = vpack.c.bf16 %v1332, %v1328
      %v1365 = vpack.c.bf16 %v1333, %v1329
      %v1366 = vpack.c.bf16 %v1334, %v1330
      %v1367 = vld [vmem:[%s3] sm:$0xff]
      %v1368 = vld [vmem:[%s3 + $0x8] sm:$0xff]
      %v1369 = vld [vmem:[%s3 + $0x10] sm:$0xff]
      %v1370 = vld [vmem:[%s3 + $0x18] sm:$0xff]
      %v1371 = vld [vmem:[%s3 + $0x20] sm:$0xff]
      %v1372 = vld [vmem:[%s3 + $0x28] sm:$0xff]
      %v1373 = vld [vmem:[%s3 + $0x30] sm:$0xff]
      %v1374 = vld [vmem:[%s3 + $0x38] sm:$0xff]
      %v1375 = vld [vmem:[%s3 + $0x40] sm:$0xff]
      %v1376 = vld [vmem:[%s3 + $0x48] sm:$0xff]
      %v1377 = vld [vmem:[%s3 + $0x50] sm:$0xff]
      %v1378 = vld [vmem:[%s3 + $0x58] sm:$0xff]
      %v1379 = vld [vmem:[%s3 + $0x60] sm:$0xff]
      %v1380 = vld [vmem:[%s3 + $0x68] sm:$0xff]
      %v1381 = vld [vmem:[%s3 + $0x70] sm:$0xff]
      %v1382 = vld [vmem:[%s3 + $0x78] sm:$0xff]
      %v1383 = vld [vmem:[%s3 + $0x80] sm:$0xff]
      %v1384 = vld [vmem:[%s3 + $0x88] sm:$0xff]
      %v1385 = vld [vmem:[%s3 + $0x90] sm:$0xff]
      %v1386 = vld [vmem:[%s3 + $0x98] sm:$0xff]
      %v1387 = vld [vmem:[%s3 + $0xa0] sm:$0xff]
      %v1388 = vld [vmem:[%s3 + $0xa8] sm:$0xff]
      %v1389 = vld [vmem:[%s3 + $0xb0] sm:$0xff]
      %v1390 = vld [vmem:[%s3 + $0xb8] sm:$0xff]
      %v1391 = vld [vmem:[%s3 + $0xc0] sm:$0xff]
      %v1392 = vld [vmem:[%s3 + $0xc8] sm:$0xff]
      %v1393 = vld [vmem:[%s3 + $0xd0] sm:$0xff]
      %v1394 = vld [vmem:[%s3 + $0xd8] sm:$0xff]
      %v1395 = vld [vmem:[%s3 + $0xe0] sm:$0xff]
      %v1396 = vld [vmem:[%s3 + $0xe8] sm:$0xff]
      %v1397 = vld [vmem:[%s3 + $0xf0] sm:$0xff]
      %v1398 = vld [vmem:[%s3 + $0xf8] sm:$0xff]
      %v1399 = vld [vmem:[%s3 + $0x100] sm:$0xff]
      %v1400 = vld [vmem:[%s3 + $0x108] sm:$0xff]
      %v1401 = vld [vmem:[%s3 + $0x110] sm:$0xff]
      %v1402 = vld [vmem:[%s3 + $0x118] sm:$0xff]
      %v1403 = vld [vmem:[%s3 + $0x120] sm:$0xff]
      %v1404 = vld [vmem:[%s3 + $0x128] sm:$0xff]
      %v1405 = vld [vmem:[%s3 + $0x130] sm:$0xff]
      %v1406 = vld [vmem:[%s3 + $0x138] sm:$0xff]
      %v1407 = vld [vmem:[%s3 + $0x140] sm:$0xff]
      %v1408 = vld [vmem:[%s3 + $0x148] sm:$0xff]
      %v1409 = vld [vmem:[%s3 + $0x150] sm:$0xff]
      %v1410 = vld [vmem:[%s3 + $0x158] sm:$0xff]
      %v1411 = vld [vmem:[%s3 + $0x160] sm:$0xff]
      %v1412 = vld [vmem:[%s3 + $0x168] sm:$0xff]
      %v1413 = vld [vmem:[%s3 + $0x170] sm:$0xff]
      %v1414 = vld [vmem:[%s3 + $0x178] sm:$0xff]
      %v1415 = vld [vmem:[%s3 + $0x180] sm:$0xff]
      %v1416 = vld [vmem:[%s3 + $0x188] sm:$0xff]
      %v1417 = vld [vmem:[%s3 + $0x190] sm:$0xff]
      %v1418 = vld [vmem:[%s3 + $0x198] sm:$0xff]
      %v1419 = vld [vmem:[%s3 + $0x1a0] sm:$0xff]
      %v1420 = vld [vmem:[%s3 + $0x1a8] sm:$0xff]
      %v1421 = vld [vmem:[%s3 + $0x1b0] sm:$0xff]
      %v1422 = vld [vmem:[%s3 + $0x1b8] sm:$0xff]
      %v1423 = vld [vmem:[%s3 + $0x1c0] sm:$0xff]
      %v1424 = vld [vmem:[%s3 + $0x1c8] sm:$0xff]
      %v1425 = vld [vmem:[%s3 + $0x1d0] sm:$0xff]
      %v1426 = vld [vmem:[%s3 + $0x1d8] sm:$0xff]
      %v1427 = vld [vmem:[%s3 + $0x1e0] sm:$0xff]
      %v1428 = vld [vmem:[%s3 + $0x1e8] sm:$0xff]
      %v1429 = vld [vmem:[%s3 + $0x1f0] sm:$0xff]
      %v1430 = vld [vmem:[%s3 + $0x1f8] sm:$0xff]
      %v1431 = vld [vmem:[%s4] sm:$0x3]
      %v1433 = vlaneseq
      %v1434 = vshrl.u32 %v1433, 7
      %v1435 = vsub.s32 0, %v1434
      %v1436 = vrot.slane %v1431, %v1435
      %v1437 = vlaneseq
      %v1438 = vshrl.u32 %v1437, 7
      %v1439 = vsub.s32 1, %v1438
      %v1440 = vrot.slane %v1431, %v1439
      %v1507 = vunpack.c.l.b16 %v1367
      %v1508 = vunpack.c.h.b16 %v1367
      %v1509 = vunpack.c.l.b16 %v1368
      %v1510 = vunpack.c.h.b16 %v1368
      %v1511 = vunpack.c.l.b16 %v1369
      %v1512 = vunpack.c.h.b16 %v1369
      %v1513 = vunpack.c.l.b16 %v1370
      %v1514 = vunpack.c.h.b16 %v1370
      %v1515 = vunpack.c.l.b16 %v1371
      %v1516 = vunpack.c.h.b16 %v1371
      %v1517 = vunpack.c.l.b16 %v1372
      %v1518 = vunpack.c.h.b16 %v1372
      %v1519 = vunpack.c.l.b16 %v1373
      %v1520 = vunpack.c.h.b16 %v1373
      %v1521 = vunpack.c.l.b16 %v1374
      %v1522 = vunpack.c.h.b16 %v1374
      %v1523 = vunpack.c.l.b16 %v1375
      %v1524 = vunpack.c.h.b16 %v1375
      %v1525 = vunpack.c.l.b16 %v1376
      %v1526 = vunpack.c.h.b16 %v1376
      %v1527 = vunpack.c.l.b16 %v1377
      %v1528 = vunpack.c.h.b16 %v1377
      %v1529 = vunpack.c.l.b16 %v1378
      %v1530 = vunpack.c.h.b16 %v1378
      %v1531 = vunpack.c.l.b16 %v1379
      %v1532 = vunpack.c.h.b16 %v1379
      %v1533 = vunpack.c.l.b16 %v1380
      %v1534 = vunpack.c.h.b16 %v1380
      %v1535 = vunpack.c.l.b16 %v1381
      %v1536 = vunpack.c.h.b16 %v1381
      %v1537 = vunpack.c.l.b16 %v1382
      %v1538 = vunpack.c.h.b16 %v1382
      %v1539 = vunpack.c.l.b16 %v1383
      %v1540 = vunpack.c.h.b16 %v1383
      %v1541 = vunpack.c.l.b16 %v1384
      %v1542 = vunpack.c.h.b16 %v1384
      %v1543 = vunpack.c.l.b16 %v1385
      %v1544 = vunpack.c.h.b16 %v1385
      %v1545 = vunpack.c.l.b16 %v1386
      %v1546 = vunpack.c.h.b16 %v1386
      %v1547 = vunpack.c.l.b16 %v1387
      %v1548 = vunpack.c.h.b16 %v1387
      %v1549 = vunpack.c.l.b16 %v1388
      %v1550 = vunpack.c.h.b16 %v1388
      %v1551 = vunpack.c.l.b16 %v1389
      %v1552 = vunpack.c.h.b16 %v1389
      %v1553 = vunpack.c.l.b16 %v1390
      %v1554 = vunpack.c.h.b16 %v1390
      %v1555 = vunpack.c.l.b16 %v1391
      %v1556 = vunpack.c.h.b16 %v1391
      %v1557 = vunpack.c.l.b16 %v1392
      %v1558 = vunpack.c.h.b16 %v1392
      %v1559 = vunpack.c.l.b16 %v1393
      %v1560 = vunpack.c.h.b16 %v1393
      %v1561 = vunpack.c.l.b16 %v1394
      %v1562 = vunpack.c.h.b16 %v1394
      %v1563 = vunpack.c.l.b16 %v1395
      %v1564 = vunpack.c.h.b16 %v1395
      %v1565 = vunpack.c.l.b16 %v1396
      %v1566 = vunpack.c.h.b16 %v1396
      %v1567 = vunpack.c.l.b16 %v1397
      %v1568 = vunpack.c.h.b16 %v1397
      %v1569 = vunpack.c.l.b16 %v1398
      %v1570 = vunpack.c.h.b16 %v1398
      %v1571 = vunpack.c.l.b16 %v1399
      %v1572 = vunpack.c.h.b16 %v1399
      %v1573 = vunpack.c.l.b16 %v1400
      %v1574 = vunpack.c.h.b16 %v1400
      %v1575 = vunpack.c.l.b16 %v1401
      %v1576 = vunpack.c.h.b16 %v1401
      %v1577 = vunpack.c.l.b16 %v1402
      %v1578 = vunpack.c.h.b16 %v1402
      %v1579 = vunpack.c.l.b16 %v1403
      %v1580 = vunpack.c.h.b16 %v1403
      %v1581 = vunpack.c.l.b16 %v1404
      %v1582 = vunpack.c.h.b16 %v1404
      %v1583 = vunpack.c.l.b16 %v1405
      %v1584 = vunpack.c.h.b16 %v1405
      %v1585 = vunpack.c.l.b16 %v1406
      %v1586 = vunpack.c.h.b16 %v1406
      %v1587 = vunpack.c.l.b16 %v1407
      %v1588 = vunpack.c.h.b16 %v1407
      %v1589 = vunpack.c.l.b16 %v1408
      %v1590 = vunpack.c.h.b16 %v1408
      %v1591 = vunpack.c.l.b16 %v1409
      %v1592 = vunpack.c.h.b16 %v1409
      %v1593 = vunpack.c.l.b16 %v1410
      %v1594 = vunpack.c.h.b16 %v1410
      %v1595 = vunpack.c.l.b16 %v1411
      %v1596 = vunpack.c.h.b16 %v1411
      %v1597 = vunpack.c.l.b16 %v1412
      %v1598 = vunpack.c.h.b16 %v1412
      %v1599 = vunpack.c.l.b16 %v1413
      %v1600 = vunpack.c.h.b16 %v1413
      %v1601 = vunpack.c.l.b16 %v1414
      %v1602 = vunpack.c.h.b16 %v1414
      %v1603 = vunpack.c.l.b16 %v1415
      %v1604 = vunpack.c.h.b16 %v1415
      %v1605 = vunpack.c.l.b16 %v1416
      %v1606 = vunpack.c.h.b16 %v1416
      %v1607 = vunpack.c.l.b16 %v1417
      %v1608 = vunpack.c.h.b16 %v1417
      %v1609 = vunpack.c.l.b16 %v1418
      %v1610 = vunpack.c.h.b16 %v1418
      %v1611 = vunpack.c.l.b16 %v1419
      %v1612 = vunpack.c.h.b16 %v1419
      %v1613 = vunpack.c.l.b16 %v1420
      %v1614 = vunpack.c.h.b16 %v1420
      %v1615 = vunpack.c.l.b16 %v1421
      %v1616 = vunpack.c.h.b16 %v1421
      %v1617 = vunpack.c.l.b16 %v1422
      %v1618 = vunpack.c.h.b16 %v1422
      %v1619 = vunpack.c.l.b16 %v1423
      %v1620 = vunpack.c.h.b16 %v1423
      %v1621 = vunpack.c.l.b16 %v1424
      %v1622 = vunpack.c.h.b16 %v1424
      %v1623 = vunpack.c.l.b16 %v1425
      %v1624 = vunpack.c.h.b16 %v1425
      %v1625 = vunpack.c.l.b16 %v1426
      %v1626 = vunpack.c.h.b16 %v1426
      %v1627 = vunpack.c.l.b16 %v1427
      %v1628 = vunpack.c.h.b16 %v1427
      %v1629 = vunpack.c.l.b16 %v1428
      %v1630 = vunpack.c.h.b16 %v1428
      %v1631 = vunpack.c.l.b16 %v1429
      %v1632 = vunpack.c.h.b16 %v1429
      %v1633 = vunpack.c.l.b16 %v1430
      %v1634 = vunpack.c.h.b16 %v1430
      %v1635 = vpack.c.b16 %v1509, %v1507
      %v1636 = vpack.c.b16 %v1510, %v1508
      %v1637 = vpack.c.b16 %v1513, %v1511
      %v1638 = vpack.c.b16 %v1514, %v1512
      %v1639 = vpack.c.b16 %v1517, %v1515
      %v1640 = vpack.c.b16 %v1518, %v1516
      %v1641 = vpack.c.b16 %v1521, %v1519
      %v1642 = vpack.c.b16 %v1522, %v1520
      %v1643 = vpack.c.b16 %v1525, %v1523
      %v1644 = vpack.c.b16 %v1526, %v1524
      %v1645 = vpack.c.b16 %v1529, %v1527
      %v1646 = vpack.c.b16 %v1530, %v1528
      %v1647 = vpack.c.b16 %v1533, %v1531
      %v1648 = vpack.c.b16 %v1534, %v1532
      %v1649 = vpack.c.b16 %v1537, %v1535
      %v1650 = vpack.c.b16 %v1538, %v1536
      %v1651 = vpack.c.b16 %v1541, %v1539
      %v1652 = vpack.c.b16 %v1542, %v1540
      %v1653 = vpack.c.b16 %v1545, %v1543
      %v1654 = vpack.c.b16 %v1546, %v1544
      %v1655 = vpack.c.b16 %v1549, %v1547
      %v1656 = vpack.c.b16 %v1550, %v1548
      %v1657 = vpack.c.b16 %v1553, %v1551
      %v1658 = vpack.c.b16 %v1554, %v1552
      %v1659 = vpack.c.b16 %v1557, %v1555
      %v1660 = vpack.c.b16 %v1558, %v1556
      %v1661 = vpack.c.b16 %v1561, %v1559
      %v1662 = vpack.c.b16 %v1562, %v1560
      %v1663 = vpack.c.b16 %v1565, %v1563
      %v1664 = vpack.c.b16 %v1566, %v1564
      %v1665 = vpack.c.b16 %v1569, %v1567
      %v1666 = vpack.c.b16 %v1570, %v1568
      %v1667 = vpack.c.b16 %v1573, %v1571
      %v1668 = vpack.c.b16 %v1574, %v1572
      %v1669 = vpack.c.b16 %v1577, %v1575
      %v1670 = vpack.c.b16 %v1578, %v1576
      %v1671 = vpack.c.b16 %v1581, %v1579
      %v1672 = vpack.c.b16 %v1582, %v1580
      %v1673 = vpack.c.b16 %v1585, %v1583
      %v1674 = vpack.c.b16 %v1586, %v1584
      %v1675 = vpack.c.b16 %v1589, %v1587
      %v1676 = vpack.c.b16 %v1590, %v1588
      %v1677 = vpack.c.b16 %v1593, %v1591
      %v1678 = vpack.c.b16 %v1594, %v1592
      %v1679 = vpack.c.b16 %v1597, %v1595
      %v1680 = vpack.c.b16 %v1598, %v1596
      %v1681 = vpack.c.b16 %v1601, %v1599
      %v1682 = vpack.c.b16 %v1602, %v1600
      %v1683 = vpack.c.b16 %v1605, %v1603
      %v1684 = vpack.c.b16 %v1606, %v1604
      %v1685 = vpack.c.b16 %v1609, %v1607
      %v1686 = vpack.c.b16 %v1610, %v1608
      %v1687 = vpack.c.b16 %v1613, %v1611
      %v1688 = vpack.c.b16 %v1614, %v1612
      %v1689 = vpack.c.b16 %v1617, %v1615
      %v1690 = vpack.c.b16 %v1618, %v1616
      %v1691 = vpack.c.b16 %v1621, %v1619
      %v1692 = vpack.c.b16 %v1622, %v1620
      %v1693 = vpack.c.b16 %v1625, %v1623
      %v1694 = vpack.c.b16 %v1626, %v1624
      %v1695 = vpack.c.b16 %v1629, %v1627
      %v1696 = vpack.c.b16 %v1630, %v1628
      %v1697 = vpack.c.b16 %v1633, %v1631
      %v1698 = vpack.c.b16 %v1634, %v1632
      %1763 = vmatprep.subr.bf16.mxu0 %v1650
      %1764 = vmatpush1.bf16.msra.mxu0 %v1649
      %1765 = vmatprep.subr.bf16.mxu0 %v1648
      %1766 = vmatpush1.bf16.msra.mxu0 %v1647
      %1767 = vmatprep.subr.bf16.mxu0 %v1646
      %1768 = vmatpush1.bf16.msra.mxu0 %v1645
      %1769 = vmatprep.subr.bf16.mxu0 %v1644
      %1770 = vmatpush1.bf16.msra.mxu0 %v1643
      %1771 = vmatprep.subr.bf16.mxu0 %v1642
      %1772 = vmatpush1.bf16.msra.mxu0 %v1641
      %1773 = vmatprep.subr.bf16.mxu0 %v1640
      %1774 = vmatpush1.bf16.msra.mxu0 %v1639
      %1775 = vmatprep.subr.bf16.mxu0 %v1638
      %1776 = vmatpush1.bf16.msra.mxu0 %v1637
      %1777 = vmatprep.subr.bf16.mxu0 %v1636
      %1778 = vmatpush1.bf16.msra.mxu0 %v1635
      %1779 = vmatprep.subr.bf16.mxu0 %v1666
      %1780 = vmatpush2.bf16.msra.mxu0 %v1665
      %1781 = vmatprep.subr.bf16.mxu0 %v1664
      %1782 = vmatpush2.bf16.msra.mxu0 %v1663
      %1783 = vmatprep.subr.bf16.mxu0 %v1662
      %1784 = vmatpush2.bf16.msra.mxu0 %v1661
      %1785 = vmatprep.subr.bf16.mxu0 %v1660
      %1786 = vmatpush2.bf16.msra.mxu0 %v1659
      %1787 = vmatprep.subr.bf16.mxu0 %v1658
      %1788 = vmatpush2.bf16.msra.mxu0 %v1657
      %1789 = vmatprep.subr.bf16.mxu0 %v1656
      %1790 = vmatpush2.bf16.msra.mxu0 %v1655
      %1791 = vmatprep.subr.bf16.mxu0 %v1654
      %1792 = vmatpush2.bf16.msra.mxu0 %v1653
      %1793 = vmatprep.subr.bf16.mxu0 %v1652
      %1794 = vmatpush2.bf16.msra.mxu0 %v1651
      %1795 = vmatprep.mubr.bf16.mxu0 %v1336
      %1796 = vmatmul.mubr.bf16.gmra.mxu0 %v1335
      %v1797 = vpop.f32.mrf.mxu0
      %v1798 = vadd.f32 %v1436, %v1797
      %v1799 = vpop.f32.mrf.mxu0
      %v1800 = vadd.f32 %v1440, %v1799
      %v1801 = vpop.f32.mrf.mxu0
      %v1802 = vadd.f32 %v1436, %v1801
      %v1803 = vpop.f32.mrf.mxu0
      %v1804 = vadd.f32 %v1440, %v1803
      %1805 = vmatprep.mubr.bf16.mxu0 %v1340
      %1806 = vmatmul.mubr.bf16.gmra.mxu0 %v1339
      %v1807 = vpop.f32.mrf.mxu0
      %v1808 = vadd.f32 %v1436, %v1807
      %v1809 = vpop.f32.mrf.mxu0
      %v1810 = vadd.f32 %v1440, %v1809
      %v1811 = vpop.f32.mrf.mxu0
      %v1812 = vadd.f32 %v1436, %v1811
      %v1813 = vpop.f32.mrf.mxu0
      %v1814 = vadd.f32 %v1440, %v1813
      %1815 = vmatprep.mubr.bf16.mxu0 %v1344
      %1816 = vmatmul.mubr.bf16.gmra.mxu0 %v1343
      %v1817 = vpop.f32.mrf.mxu0
      %v1818 = vadd.f32 %v1436, %v1817
      %v1819 = vpop.f32.mrf.mxu0
      %v1820 = vadd.f32 %v1440, %v1819
      %v1821 = vpop.f32.mrf.mxu0
      %v1822 = vadd.f32 %v1436, %v1821
      %v1823 = vpop.f32.mrf.mxu0
      %v1824 = vadd.f32 %v1440, %v1823
      %1825 = vmatprep.mubr.bf16.mxu0 %v1348
      %1826 = vmatmul.mubr.bf16.gmra.mxu0 %v1347
      %v1827 = vpop.f32.mrf.mxu0
      %v1828 = vadd.f32 %v1436, %v1827
      %v1829 = vpop.f32.mrf.mxu0
      %v1830 = vadd.f32 %v1440, %v1829
      %v1831 = vpop.f32.mrf.mxu0
      %v1832 = vadd.f32 %v1436, %v1831
      %v1833 = vpop.f32.mrf.mxu0
      %v1834 = vadd.f32 %v1440, %v1833
      %1835 = vmatprep.mubr.bf16.mxu0 %v1352
      %1836 = vmatmul.mubr.bf16.gmra.mxu0 %v1351
      %v1837 = vpop.f32.mrf.mxu0
      %v1838 = vadd.f32 %v1436, %v1837
      %v1839 = vpop.f32.mrf.mxu0
      %v1840 = vadd.f32 %v1440, %v1839
      %v1841 = vpop.f32.mrf.mxu0
      %v1842 = vadd.f32 %v1436, %v1841
      %v1843 = vpop.f32.mrf.mxu0
      %v1844 = vadd.f32 %v1440, %v1843
      %1845 = vmatprep.mubr.bf16.mxu0 %v1356
      %1846 = vmatmul.mubr.bf16.gmra.mxu0 %v1355
      %v1847 = vpop.f32.mrf.mxu0
      %v1848 = vadd.f32 %v1436, %v1847
      %v1849 = vpop.f32.mrf.mxu0
      %v1850 = vadd.f32 %v1440, %v1849
      %v1851 = vpop.f32.mrf.mxu0
      %v1852 = vadd.f32 %v1436, %v1851
      %v1853 = vpop.f32.mrf.mxu0
      %v1854 = vadd.f32 %v1440, %v1853
      %1855 = vmatprep.mubr.bf16.mxu0 %v1360
      %1856 = vmatmul.mubr.bf16.gmra.mxu0 %v1359
      %v1857 = vpop.f32.mrf.mxu0
      %v1858 = vadd.f32 %v1436, %v1857
      %v1859 = vpop.f32.mrf.mxu0
      %v1860 = vadd.f32 %v1440, %v1859
      %v1861 = vpop.f32.mrf.mxu0
      %v1862 = vadd.f32 %v1436, %v1861
      %v1863 = vpop.f32.mrf.mxu0
      %v1864 = vadd.f32 %v1440, %v1863
      %1865 = vmatprep.mubr.bf16.mxu0 %v1364
      %1866 = vmatmul.mubr.bf16.gmra.mxu0 %v1363
      %v1867 = vpop.f32.mrf.mxu0
      %v1868 = vadd.f32 %v1436, %v1867
      %v1869 = vpop.f32.mrf.mxu0
      %v1870 = vadd.f32 %v1440, %v1869
      %v1871 = vpop.f32.mrf.mxu0
      %v1872 = vadd.f32 %v1436, %v1871
      %v1873 = vpop.f32.mrf.mxu0
      %v1874 = vadd.f32 %v1440, %v1873
      %1875 = vdwg.mxu0
      %1876 = vmatprep.subr.bf16.mxu0 %v1682
      %1877 = vmatpush1.bf16.msra.mxu0 %v1681
      %1878 = vmatprep.subr.bf16.mxu0 %v1680
      %1879 = vmatpush1.bf16.msra.mxu0 %v1679
      %1880 = vmatprep.subr.bf16.mxu0 %v1678
      %1881 = vmatpush1.bf16.msra.mxu0 %v1677
      %1882 = vmatprep.subr.bf16.mxu0 %v1676
      %1883 = vmatpush1.bf16.msra.mxu0 %v1675
      %1884 = vmatprep.subr.bf16.mxu0 %v1674
      %1885 = vmatpush1.bf16.msra.mxu0 %v1673
      %1886 = vmatprep.subr.bf16.mxu0 %v1672
      %1887 = vmatpush1.bf16.msra.mxu0 %v1671
      %1888 = vmatprep.subr.bf16.mxu0 %v1670
      %1889 = vmatpush1.bf16.msra.mxu0 %v1669
      %1890 = vmatprep.subr.bf16.mxu0 %v1668
      %1891 = vmatpush1.bf16.msra.mxu0 %v1667
      %1892 = vmatprep.subr.bf16.mxu0 %v1698
      %1893 = vmatpush2.bf16.msra.mxu0 %v1697
      %1894 = vmatprep.subr.bf16.mxu0 %v1696
      %1895 = vmatpush2.bf16.msra.mxu0 %v1695
      %1896 = vmatprep.subr.bf16.mxu0 %v1694
      %1897 = vmatpush2.bf16.msra.mxu0 %v1693
      %1898 = vmatprep.subr.bf16.mxu0 %v1692
      %1899 = vmatpush2.bf16.msra.mxu0 %v1691
      %1900 = vmatprep.subr.bf16.mxu0 %v1690
      %1901 = vmatpush2.bf16.msra.mxu0 %v1689
      %1902 = vmatprep.subr.bf16.mxu0 %v1688
      %1903 = vmatpush2.bf16.msra.mxu0 %v1687
      %1904 = vmatprep.subr.bf16.mxu0 %v1686
      %1905 = vmatpush2.bf16.msra.mxu0 %v1685
      %1906 = vmatprep.subr.bf16.mxu0 %v1684
      %1907 = vmatpush2.bf16.msra.mxu0 %v1683
      %1908 = vmatprep.mubr.bf16.mxu0 %v1338
      %1909 = vmatmul.mubr.bf16.gmra.mxu0 %v1337
      %v1910 = vpop.f32.mrf.mxu0
      %v1911 = vadd.f32 %v1798, %v1910
      %v1912 = vpop.f32.mrf.mxu0
      %v1913 = vadd.f32 %v1800, %v1912
      %v1914 = vpop.f32.mrf.mxu0
      %v1915 = vadd.f32 %v1802, %v1914
      %v1916 = vpop.f32.mrf.mxu0
      %v1917 = vadd.f32 %v1804, %v1916
      %1918 = vmatprep.mubr.bf16.mxu0 %v1342
      %1919 = vmatmul.mubr.bf16.gmra.mxu0 %v1341
      %v1920 = vpop.f32.mrf.mxu0
      %v1921 = vadd.f32 %v1808, %v1920
      %v1922 = vpop.f32.mrf.mxu0
      %v1923 = vadd.f32 %v1810, %v1922
      %v1924 = vpop.f32.mrf.mxu0
      %v1925 = vadd.f32 %v1812, %v1924
      %v1926 = vpop.f32.mrf.mxu0
      %v1927 = vadd.f32 %v1814, %v1926
      %1928 = vmatprep.mubr.bf16.mxu0 %v1346
      %1929 = vmatmul.mubr.bf16.gmra.mxu0 %v1345
      %v1930 = vpop.f32.mrf.mxu0
      %v1931 = vadd.f32 %v1818, %v1930
      %v1932 = vpop.f32.mrf.mxu0
      %v1933 = vadd.f32 %v1820, %v1932
      %v1934 = vpop.f32.mrf.mxu0
      %v1935 = vadd.f32 %v1822, %v1934
      %v1936 = vpop.f32.mrf.mxu0
      %v1937 = vadd.f32 %v1824, %v1936
      %1938 = vmatprep.mubr.bf16.mxu0 %v1350
      %1939 = vmatmul.mubr.bf16.gmra.mxu0 %v1349
      %v1940 = vpop.f32.mrf.mxu0
      %v1941 = vadd.f32 %v1828, %v1940
      %v1942 = vpop.f32.mrf.mxu0
      %v1943 = vadd.f32 %v1830, %v1942
      %v1944 = vpop.f32.mrf.mxu0
      %v1945 = vadd.f32 %v1832, %v1944
      %v1946 = vpop.f32.mrf.mxu0
      %v1947 = vadd.f32 %v1834, %v1946
      %1948 = vmatprep.mubr.bf16.mxu0 %v1354
      %1949 = vmatmul.mubr.bf16.gmra.mxu0 %v1353
      %v1950 = vpop.f32.mrf.mxu0
      %v1951 = vadd.f32 %v1838, %v1950
      %v1952 = vpop.f32.mrf.mxu0
      %v1953 = vadd.f32 %v1840, %v1952
      %v1954 = vpop.f32.mrf.mxu0
      %v1955 = vadd.f32 %v1842, %v1954
      %v1956 = vpop.f32.mrf.mxu0
      %v1957 = vadd.f32 %v1844, %v1956
      %1958 = vmatprep.mubr.bf16.mxu0 %v1358
      %1959 = vmatmul.mubr.bf16.gmra.mxu0 %v1357
      %v1960 = vpop.f32.mrf.mxu0
      %v1961 = vadd.f32 %v1848, %v1960
      %v1962 = vpop.f32.mrf.mxu0
      %v1963 = vadd.f32 %v1850, %v1962
      %v1964 = vpop.f32.mrf.mxu0
      %v1965 = vadd.f32 %v1852, %v1964
      %v1966 = vpop.f32.mrf.mxu0
      %v1967 = vadd.f32 %v1854, %v1966
      %1968 = vmatprep.mubr.bf16.mxu0 %v1362
      %1969 = vmatmul.mubr.bf16.gmra.mxu0 %v1361
      %v1970 = vpop.f32.mrf.mxu0
      %v1971 = vadd.f32 %v1858, %v1970
      %v1972 = vpop.f32.mrf.mxu0
      %v1973 = vadd.f32 %v1860, %v1972
      %v1974 = vpop.f32.mrf.mxu0
      %v1975 = vadd.f32 %v1862, %v1974
      %v1976 = vpop.f32.mrf.mxu0
      %v1977 = vadd.f32 %v1864, %v1976
      %1978 = vmatprep.mubr.bf16.mxu0 %v1366
      %1979 = vmatmul.mubr.bf16.gmra.mxu0 %v1365
      %v1980 = vpop.f32.mrf.mxu0
      %v1981 = vadd.f32 %v1868, %v1980
      %v1982 = vpop.f32.mrf.mxu0
      %v1983 = vadd.f32 %v1870, %v1982
      %v1984 = vpop.f32.mrf.mxu0
      %v1985 = vadd.f32 %v1872, %v1984
      %v1986 = vpop.f32.mrf.mxu0
      %v1987 = vadd.f32 %v1874, %v1986
      %1988 = vdwg.mxu0
      %v1989 = vunpack.c.l.bf16 %v287
      %v1990 = vunpack.c.h.bf16 %v287
      %v1991 = vunpack.c.l.bf16 %v288
      %v1992 = vunpack.c.h.bf16 %v288
      %v1993 = vunpack.c.l.bf16 %v289
      %v1994 = vunpack.c.h.bf16 %v289
      %v1995 = vunpack.c.l.bf16 %v290
      %v1996 = vunpack.c.h.bf16 %v290
      %v1997 = vunpack.c.l.bf16 %v291
      %v1998 = vunpack.c.h.bf16 %v291
      %v1999 = vunpack.c.l.bf16 %v292
      %v2000 = vunpack.c.h.bf16 %v292
      %v2001 = vunpack.c.l.bf16 %v293
      %v2002 = vunpack.c.h.bf16 %v293
      %v2003 = vunpack.c.l.bf16 %v294
      %v2004 = vunpack.c.h.bf16 %v294
      %v2005 = vunpack.c.l.bf16 %v295
      %v2006 = vunpack.c.h.bf16 %v295
      %v2007 = vunpack.c.l.bf16 %v296
      %v2008 = vunpack.c.h.bf16 %v296
      %v2009 = vunpack.c.l.bf16 %v297
      %v2010 = vunpack.c.h.bf16 %v297
      %v2011 = vunpack.c.l.bf16 %v298
      %v2012 = vunpack.c.h.bf16 %v298
      %v2013 = vunpack.c.l.bf16 %v299
      %v2014 = vunpack.c.h.bf16 %v299
      %v2015 = vunpack.c.l.bf16 %v300
      %v2016 = vunpack.c.h.bf16 %v300
      %v2017 = vunpack.c.l.bf16 %v301
      %v2018 = vunpack.c.h.bf16 %v301
      %v2019 = vunpack.c.l.bf16 %v302
      %v2020 = vunpack.c.h.bf16 %v302
      %v2021 = vadd.f32 %v1911, %v1989
      %v2022 = vadd.f32 %v1913, %v1990
      %v2023 = vadd.f32 %v1915, %v1991
      %v2024 = vadd.f32 %v1917, %v1992
      %v2025 = vadd.f32 %v1921, %v1993
      %v2026 = vadd.f32 %v1923, %v1994
      %v2027 = vadd.f32 %v1925, %v1995
      %v2028 = vadd.f32 %v1927, %v1996
      %v2029 = vadd.f32 %v1931, %v1997
      %v2030 = vadd.f32 %v1933, %v1998
      %v2031 = vadd.f32 %v1935, %v1999
      %v2032 = vadd.f32 %v1937, %v2000
      %v2033 = vadd.f32 %v1941, %v2001
      %v2034 = vadd.f32 %v1943, %v2002
      %v2035 = vadd.f32 %v1945, %v2003
      %v2036 = vadd.f32 %v1947, %v2004
      %v2037 = vadd.f32 %v1951, %v2005
      %v2038 = vadd.f32 %v1953, %v2006
      %v2039 = vadd.f32 %v1955, %v2007
      %v2040 = vadd.f32 %v1957, %v2008
      %v2041 = vadd.f32 %v1961, %v2009
      %v2042 = vadd.f32 %v1963, %v2010
      %v2043 = vadd.f32 %v1965, %v2011
      %v2044 = vadd.f32 %v1967, %v2012
      %v2045 = vadd.f32 %v1971, %v2013
      %v2046 = vadd.f32 %v1973, %v2014
      %v2047 = vadd.f32 %v1975, %v2015
      %v2048 = vadd.f32 %v1977, %v2016
      %v2049 = vadd.f32 %v1981, %v2017
      %v2050 = vadd.f32 %v1983, %v2018
      %v2051 = vadd.f32 %v1985, %v2019
      %v2052 = vadd.f32 %v1987, %v2020
      %v2053 = vld [vmem:[%s5] sm:$0x3]
      %v2054 = vld [vmem:[%s6] sm:$0x3]
      %v2055 = vadd.f32 %v2021, %v2022
      %2056 = vadd.xlane.f32.xlu0 %v2055
      %v2057 = vpop.xlane.xlu0 %2056
      %v2058 = vadd.f32 %v2023, %v2024
      %2059 = vadd.xlane.f32.xlu0 %v2058
      %v2060 = vpop.xlane.xlu0 %2059
      %v2061 = vadd.f32 %v2025, %v2026
      %2062 = vadd.xlane.f32.xlu0 %v2061
      %v2063 = vpop.xlane.xlu0 %2062
      %v2064 = vadd.f32 %v2027, %v2028
      %2065 = vadd.xlane.f32.xlu0 %v2064
      %v2066 = vpop.xlane.xlu0 %2065
      %v2067 = vadd.f32 %v2029, %v2030
      %2068 = vadd.xlane.f32.xlu0 %v2067
      %v2069 = vpop.xlane.xlu0 %2068
      %v2070 = vadd.f32 %v2031, %v2032
      %2071 = vadd.xlane.f32.xlu0 %v2070
      %v2072 = vpop.xlane.xlu0 %2071
      %v2073 = vadd.f32 %v2033, %v2034
      %2074 = vadd.xlane.f32.xlu0 %v2073
      %v2075 = vpop.xlane.xlu0 %2074
      %v2076 = vadd.f32 %v2035, %v2036
      %2077 = vadd.xlane.f32.xlu0 %v2076
      %v2078 = vpop.xlane.xlu0 %2077
      %v2079 = vadd.f32 %v2037, %v2038
      %2080 = vadd.xlane.f32.xlu0 %v2079
      %v2081 = vpop.xlane.xlu0 %2080
      %v2082 = vadd.f32 %v2039, %v2040
      %2083 = vadd.xlane.f32.xlu0 %v2082
      %v2084 = vpop.xlane.xlu0 %2083
      %v2085 = vadd.f32 %v2041, %v2042
      %2086 = vadd.xlane.f32.xlu0 %v2085
      %v2087 = vpop.xlane.xlu0 %2086
      %v2088 = vadd.f32 %v2043, %v2044
      %2089 = vadd.xlane.f32.xlu0 %v2088
      %v2090 = vpop.xlane.xlu0 %2089
      %v2091 = vadd.f32 %v2045, %v2046
      %2092 = vadd.xlane.f32.xlu0 %v2091
      %v2093 = vpop.xlane.xlu0 %2092
      %v2094 = vadd.f32 %v2047, %v2048
      %2095 = vadd.xlane.f32.xlu0 %v2094
      %v2096 = vpop.xlane.xlu0 %2095
      %v2097 = vadd.f32 %v2049, %v2050
      %2098 = vadd.xlane.f32.xlu0 %v2097
      %v2099 = vpop.xlane.xlu0 %2098
      %v2100 = vadd.f32 %v2051, %v2052
      %2101 = vadd.xlane.f32.xlu0 %v2100
      %v2102 = vpop.xlane.xlu0 %2101
      %v2103 = vrcp.pop 256.0
      %v2104 = vmul.f32 %v2057, %v2103
      %v2105 = vmul.f32 %v2060, %v2103
      %v2106 = vmul.f32 %v2063, %v2103
      %v2107 = vmul.f32 %v2066, %v2103
      %v2108 = vmul.f32 %v2069, %v2103
      %v2109 = vmul.f32 %v2072, %v2103
      %v2110 = vmul.f32 %v2075, %v2103
      %v2111 = vmul.f32 %v2078, %v2103
      %v2112 = vmul.f32 %v2081, %v2103
      %v2113 = vmul.f32 %v2084, %v2103
      %v2114 = vmul.f32 %v2087, %v2103
      %v2115 = vmul.f32 %v2090, %v2103
      %v2116 = vmul.f32 %v2093, %v2103
      %v2117 = vmul.f32 %v2096, %v2103
      %v2118 = vmul.f32 %v2099, %v2103
      %v2119 = vmul.f32 %v2102, %v2103
      %v2120 = vsub.f32 %v2021, %v2104
      %v2121 = vsub.f32 %v2022, %v2104
      %v2122 = vsub.f32 %v2023, %v2105
      %v2123 = vsub.f32 %v2024, %v2105
      %v2124 = vsub.f32 %v2025, %v2106
      %v2125 = vsub.f32 %v2026, %v2106
      %v2126 = vsub.f32 %v2027, %v2107
      %v2127 = vsub.f32 %v2028, %v2107
      %v2128 = vsub.f32 %v2029, %v2108
      %v2129 = vsub.f32 %v2030, %v2108
      %v2130 = vsub.f32 %v2031, %v2109
      %v2131 = vsub.f32 %v2032, %v2109
      %v2132 = vsub.f32 %v2033, %v2110
      %v2133 = vsub.f32 %v2034, %v2110
      %v2134 = vsub.f32 %v2035, %v2111
      %v2135 = vsub.f32 %v2036, %v2111
      %v2136 = vsub.f32 %v2037, %v2112
      %v2137 = vsub.f32 %v2038, %v2112
      %v2138 = vsub.f32 %v2039, %v2113
      %v2139 = vsub.f32 %v2040, %v2113
      %v2140 = vsub.f32 %v2041, %v2114
      %v2141 = vsub.f32 %v2042, %v2114
      %v2142 = vsub.f32 %v2043, %v2115
      %v2143 = vsub.f32 %v2044, %v2115
      %v2144 = vsub.f32 %v2045, %v2116
      %v2145 = vsub.f32 %v2046, %v2116
      %v2146 = vsub.f32 %v2047, %v2117
      %v2147 = vsub.f32 %v2048, %v2117
      %v2148 = vsub.f32 %v2049, %v2118
      %v2149 = vsub.f32 %v2050, %v2118
      %v2150 = vsub.f32 %v2051, %v2119
      %v2151 = vsub.f32 %v2052, %v2119
      %v2152 = vmul.f32 %v2120, %v2120
      %v2153 = vmul.f32 %v2121, %v2121
      %v2154 = vmul.f32 %v2122, %v2122
      %v2155 = vmul.f32 %v2123, %v2123
      %v2156 = vmul.f32 %v2124, %v2124
      %v2157 = vmul.f32 %v2125, %v2125
      %v2158 = vmul.f32 %v2126, %v2126
      %v2159 = vmul.f32 %v2127, %v2127
      %v2160 = vmul.f32 %v2128, %v2128
      %v2161 = vmul.f32 %v2129, %v2129
      %v2162 = vmul.f32 %v2130, %v2130
      %v2163 = vmul.f32 %v2131, %v2131
      %v2164 = vmul.f32 %v2132, %v2132
      %v2165 = vmul.f32 %v2133, %v2133
      %v2166 = vmul.f32 %v2134, %v2134
      %v2167 = vmul.f32 %v2135, %v2135
      %v2168 = vmul.f32 %v2136, %v2136
      %v2169 = vmul.f32 %v2137, %v2137
      %v2170 = vmul.f32 %v2138, %v2138
      %v2171 = vmul.f32 %v2139, %v2139
      %v2172 = vmul.f32 %v2140, %v2140
      %v2173 = vmul.f32 %v2141, %v2141
      %v2174 = vmul.f32 %v2142, %v2142
      %v2175 = vmul.f32 %v2143, %v2143
      %v2176 = vmul.f32 %v2144, %v2144
      %v2177 = vmul.f32 %v2145, %v2145
      %v2178 = vmul.f32 %v2146, %v2146
      %v2179 = vmul.f32 %v2147, %v2147
      %v2180 = vmul.f32 %v2148, %v2148
      %v2181 = vmul.f32 %v2149, %v2149
      %v2182 = vmul.f32 %v2150, %v2150
      %v2183 = vmul.f32 %v2151, %v2151
      %v2184 = vadd.f32 %v2152, %v2153
      %2185 = vadd.xlane.f32.xlu0 %v2184
      %v2186 = vpop.xlane.xlu0 %2185
      %v2187 = vadd.f32 %v2154, %v2155
      %2188 = vadd.xlane.f32.xlu0 %v2187
      %v2189 = vpop.xlane.xlu0 %2188
      %v2190 = vadd.f32 %v2156, %v2157
      %2191 = vadd.xlane.f32.xlu0 %v2190
      %v2192 = vpop.xlane.xlu0 %2191
      %v2193 = vadd.f32 %v2158, %v2159
      %2194 = vadd.xlane.f32.xlu0 %v2193
      %v2195 = vpop.xlane.xlu0 %2194
      %v2196 = vadd.f32 %v2160, %v2161
      %2197 = vadd.xlane.f32.xlu0 %v2196
      %v2198 = vpop.xlane.xlu0 %2197
      %v2199 = vadd.f32 %v2162, %v2163
      %2200 = vadd.xlane.f32.xlu0 %v2199
      %v2201 = vpop.xlane.xlu0 %2200
      %v2202 = vadd.f32 %v2164, %v2165
      %2203 = vadd.xlane.f32.xlu0 %v2202
      %v2204 = vpop.xlane.xlu0 %2203
      %v2205 = vadd.f32 %v2166, %v2167
      %2206 = vadd.xlane.f32.xlu0 %v2205
      %v2207 = vpop.xlane.xlu0 %2206
      %v2208 = vadd.f32 %v2168, %v2169
      %2209 = vadd.xlane.f32.xlu0 %v2208
      %v2210 = vpop.xlane.xlu0 %2209
      %v2211 = vadd.f32 %v2170, %v2171
      %2212 = vadd.xlane.f32.xlu0 %v2211
      %v2213 = vpop.xlane.xlu0 %2212
      %v2214 = vadd.f32 %v2172, %v2173
      %2215 = vadd.xlane.f32.xlu0 %v2214
      %v2216 = vpop.xlane.xlu0 %2215
      %v2217 = vadd.f32 %v2174, %v2175
      %2218 = vadd.xlane.f32.xlu0 %v2217
      %v2219 = vpop.xlane.xlu0 %2218
      %v2220 = vadd.f32 %v2176, %v2177
      %2221 = vadd.xlane.f32.xlu0 %v2220
      %v2222 = vpop.xlane.xlu0 %2221
      %v2223 = vadd.f32 %v2178, %v2179
      %2224 = vadd.xlane.f32.xlu0 %v2223
      %v2225 = vpop.xlane.xlu0 %2224
      %v2226 = vadd.f32 %v2180, %v2181
      %2227 = vadd.xlane.f32.xlu0 %v2226
      %v2228 = vpop.xlane.xlu0 %2227
      %v2229 = vadd.f32 %v2182, %v2183
      %2230 = vadd.xlane.f32.xlu0 %v2229
      %v2231 = vpop.xlane.xlu0 %2230
      %v2232 = vmul.f32 %v2186, %v2103
      %v2233 = vmul.f32 %v2189, %v2103
      %v2234 = vmul.f32 %v2192, %v2103
      %v2235 = vmul.f32 %v2195, %v2103
      %v2236 = vmul.f32 %v2198, %v2103
      %v2237 = vmul.f32 %v2201, %v2103
      %v2238 = vmul.f32 %v2204, %v2103
      %v2239 = vmul.f32 %v2207, %v2103
      %v2240 = vmul.f32 %v2210, %v2103
      %v2241 = vmul.f32 %v2213, %v2103
      %v2242 = vmul.f32 %v2216, %v2103
      %v2243 = vmul.f32 %v2219, %v2103
      %v2244 = vmul.f32 %v2222, %v2103
      %v2245 = vmul.f32 %v2225, %v2103
      %v2246 = vmul.f32 %v2228, %v2103
      %v2247 = vmul.f32 %v2231, %v2103
      %v2248 = vadd.f32 %v2232, 1e-12
      %v2249 = vadd.f32 %v2233, 1e-12
      %v2250 = vadd.f32 %v2234, 1e-12
      %v2251 = vadd.f32 %v2235, 1e-12
      %v2252 = vadd.f32 %v2236, 1e-12
      %v2253 = vadd.f32 %v2237, 1e-12
      %v2254 = vadd.f32 %v2238, 1e-12
      %v2255 = vadd.f32 %v2239, 1e-12
      %v2256 = vadd.f32 %v2240, 1e-12
      %v2257 = vadd.f32 %v2241, 1e-12
      %v2258 = vadd.f32 %v2242, 1e-12
      %v2259 = vadd.f32 %v2243, 1e-12
      %v2260 = vadd.f32 %v2244, 1e-12
      %v2261 = vadd.f32 %v2245, 1e-12
      %v2262 = vadd.f32 %v2246, 1e-12
      %v2263 = vadd.f32 %v2247, 1e-12
      %v2264 = vrsqrt.pop %v2248
      %v2265 = vrsqrt.pop %v2249
      %v2266 = vrsqrt.pop %v2250
      %v2267 = vrsqrt.pop %v2251
      %v2268 = vrsqrt.pop %v2252
      %v2269 = vrsqrt.pop %v2253
      %v2270 = vrsqrt.pop %v2254
      %v2271 = vrsqrt.pop %v2255
      %v2272 = vrsqrt.pop %v2256
      %v2273 = vrsqrt.pop %v2257
      %v2274 = vrsqrt.pop %v2258
      %v2275 = vrsqrt.pop %v2259
      %v2276 = vrsqrt.pop %v2260
      %v2277 = vrsqrt.pop %v2261
      %v2278 = vrsqrt.pop %v2262
      %v2279 = vrsqrt.pop %v2263
      %v2280 = vmul.f32 %v2120, %v2264
      %v2281 = vmul.f32 %v2121, %v2264
      %v2282 = vmul.f32 %v2122, %v2265
      %v2283 = vmul.f32 %v2123, %v2265
      %v2284 = vmul.f32 %v2124, %v2266
      %v2285 = vmul.f32 %v2125, %v2266
      %v2286 = vmul.f32 %v2126, %v2267
      %v2287 = vmul.f32 %v2127, %v2267
      %v2288 = vmul.f32 %v2128, %v2268
      %v2289 = vmul.f32 %v2129, %v2268
      %v2290 = vmul.f32 %v2130, %v2269
      %v2291 = vmul.f32 %v2131, %v2269
      %v2292 = vmul.f32 %v2132, %v2270
      %v2293 = vmul.f32 %v2133, %v2270
      %v2294 = vmul.f32 %v2134, %v2271
      %v2295 = vmul.f32 %v2135, %v2271
      %v2296 = vmul.f32 %v2136, %v2272
      %v2297 = vmul.f32 %v2137, %v2272
      %v2298 = vmul.f32 %v2138, %v2273
      %v2299 = vmul.f32 %v2139, %v2273
      %v2300 = vmul.f32 %v2140, %v2274
      %v2301 = vmul.f32 %v2141, %v2274
      %v2302 = vmul.f32 %v2142, %v2275
      %v2303 = vmul.f32 %v2143, %v2275
      %v2304 = vmul.f32 %v2144, %v2276
      %v2305 = vmul.f32 %v2145, %v2276
      %v2306 = vmul.f32 %v2146, %v2277
      %v2307 = vmul.f32 %v2147, %v2277
      %v2308 = vmul.f32 %v2148, %v2278
      %v2309 = vmul.f32 %v2149, %v2278
      %v2310 = vmul.f32 %v2150, %v2279
      %v2311 = vmul.f32 %v2151, %v2279
      %v2313 = vlaneseq
      %v2314 = vshrl.u32 %v2313, 7
      %v2315 = vsub.s32 0, %v2314
      %v2316 = vrot.slane %v2053, %v2315
      %v2317 = vlaneseq
      %v2318 = vshrl.u32 %v2317, 7
      %v2319 = vsub.s32 1, %v2318
      %v2320 = vrot.slane %v2053, %v2319
      %v2323 = vmul.f32 %v2280, %v2316
      %v2324 = vmul.f32 %v2281, %v2320
      %v2325 = vmul.f32 %v2282, %v2316
      %v2326 = vmul.f32 %v2283, %v2320
      %v2327 = vmul.f32 %v2284, %v2316
      %v2328 = vmul.f32 %v2285, %v2320
      %v2329 = vmul.f32 %v2286, %v2316
      %v2330 = vmul.f32 %v2287, %v2320
      %v2331 = vmul.f32 %v2288, %v2316
      %v2332 = vmul.f32 %v2289, %v2320
      %v2333 = vmul.f32 %v2290, %v2316
      %v2334 = vmul.f32 %v2291, %v2320
      %v2335 = vmul.f32 %v2292, %v2316
      %v2336 = vmul.f32 %v2293, %v2320
      %v2337 = vmul.f32 %v2294, %v2316
      %v2338 = vmul.f32 %v2295, %v2320
      %v2339 = vmul.f32 %v2296, %v2316
      %v2340 = vmul.f32 %v2297, %v2320
      %v2341 = vmul.f32 %v2298, %v2316
      %v2342 = vmul.f32 %v2299, %v2320
      %v2343 = vmul.f32 %v2300, %v2316
      %v2344 = vmul.f32 %v2301, %v2320
      %v2345 = vmul.f32 %v2302, %v2316
      %v2346 = vmul.f32 %v2303, %v2320
      %v2347 = vmul.f32 %v2304, %v2316
      %v2348 = vmul.f32 %v2305, %v2320
      %v2349 = vmul.f32 %v2306, %v2316
      %v2350 = vmul.f32 %v2307, %v2320
      %v2351 = vmul.f32 %v2308, %v2316
      %v2352 = vmul.f32 %v2309, %v2320
      %v2353 = vmul.f32 %v2310, %v2316
      %v2354 = vmul.f32 %v2311, %v2320
      %v2356 = vlaneseq
      %v2357 = vshrl.u32 %v2356, 7
      %v2358 = vsub.s32 0, %v2357
      %v2359 = vrot.slane %v2054, %v2358
      %v2360 = vlaneseq
      %v2361 = vshrl.u32 %v2360, 7
      %v2362 = vsub.s32 1, %v2361
      %v2363 = vrot.slane %v2054, %v2362
      %v2366 = vadd.f32 %v2323, %v2359
      %v2367 = vadd.f32 %v2324, %v2363
      %v2368 = vadd.f32 %v2325, %v2359
      %v2369 = vadd.f32 %v2326, %v2363
      %v2370 = vadd.f32 %v2327, %v2359
      %v2371 = vadd.f32 %v2328, %v2363
      %v2372 = vadd.f32 %v2329, %v2359
      %v2373 = vadd.f32 %v2330, %v2363
      %v2374 = vadd.f32 %v2331, %v2359
      %v2375 = vadd.f32 %v2332, %v2363
      %v2376 = vadd.f32 %v2333, %v2359
      %v2377 = vadd.f32 %v2334, %v2363
      %v2378 = vadd.f32 %v2335, %v2359
      %v2379 = vadd.f32 %v2336, %v2363
      %v2380 = vadd.f32 %v2337, %v2359
      %v2381 = vadd.f32 %v2338, %v2363
      %v2382 = vadd.f32 %v2339, %v2359
      %v2383 = vadd.f32 %v2340, %v2363
      %v2384 = vadd.f32 %v2341, %v2359
      %v2385 = vadd.f32 %v2342, %v2363
      %v2386 = vadd.f32 %v2343, %v2359
      %v2387 = vadd.f32 %v2344, %v2363
      %v2388 = vadd.f32 %v2345, %v2359
      %v2389 = vadd.f32 %v2346, %v2363
      %v2390 = vadd.f32 %v2347, %v2359
      %v2391 = vadd.f32 %v2348, %v2363
      %v2392 = vadd.f32 %v2349, %v2359
      %v2393 = vadd.f32 %v2350, %v2363
      %v2394 = vadd.f32 %v2351, %v2359
      %v2395 = vadd.f32 %v2352, %v2363
      %v2396 = vadd.f32 %v2353, %v2359
      %v2397 = vadd.f32 %v2354, %v2363
      %v2398 = vpack.c.bf16 %v2368, %v2366
      %v2399 = vpack.c.bf16 %v2369, %v2367
      %v2400 = vpack.c.bf16 %v2372, %v2370
      %v2401 = vpack.c.bf16 %v2373, %v2371
      %v2402 = vpack.c.bf16 %v2376, %v2374
      %v2403 = vpack.c.bf16 %v2377, %v2375
      %v2404 = vpack.c.bf16 %v2380, %v2378
      %v2405 = vpack.c.bf16 %v2381, %v2379
      %v2406 = vpack.c.bf16 %v2384, %v2382
      %v2407 = vpack.c.bf16 %v2385, %v2383
      %v2408 = vpack.c.bf16 %v2388, %v2386
      %v2409 = vpack.c.bf16 %v2389, %v2387
      %v2410 = vpack.c.bf16 %v2392, %v2390
      %v2411 = vpack.c.bf16 %v2393, %v2391
      %v2412 = vpack.c.bf16 %v2396, %v2394
      %v2413 = vpack.c.bf16 %v2397, %v2395
      %v2430 = vunpack.c.l.b16 %v2398
      %v2431 = vunpack.c.l.b16 %v2399
      %v2432 = vunpack.c.h.b16 %v2398
      %v2433 = vunpack.c.h.b16 %v2399
      %v2434 = vunpack.c.l.b16 %v2400
      %v2435 = vunpack.c.l.b16 %v2401
      %v2436 = vunpack.c.h.b16 %v2400
      %v2437 = vunpack.c.h.b16 %v2401
      %v2438 = vunpack.c.l.b16 %v2402
      %v2439 = vunpack.c.l.b16 %v2403
      %v2440 = vunpack.c.h.b16 %v2402
      %v2441 = vunpack.c.h.b16 %v2403
      %v2442 = vunpack.c.l.b16 %v2404
      %v2443 = vunpack.c.l.b16 %v2405
      %v2444 = vunpack.c.h.b16 %v2404
      %v2445 = vunpack.c.h.b16 %v2405
      %v2446 = vunpack.c.l.b16 %v2406
      %v2447 = vunpack.c.l.b16 %v2407
      %v2448 = vunpack.c.h.b16 %v2406
      %v2449 = vunpack.c.h.b16 %v2407
      %v2450 = vunpack.c.l.b16 %v2408
      %v2451 = vunpack.c.l.b16 %v2409
      %v2452 = vunpack.c.h.b16 %v2408
      %v2453 = vunpack.c.h.b16 %v2409
      %v2454 = vunpack.c.l.b16 %v2410
      %v2455 = vunpack.c.l.b16 %v2411
      %v2456 = vunpack.c.h.b16 %v2410
      %v2457 = vunpack.c.h.b16 %v2411
      %v2458 = vunpack.c.l.b16 %v2412
      %v2459 = vunpack.c.l.b16 %v2413
      %v2460 = vunpack.c.h.b16 %v2412
      %v2461 = vunpack.c.h.b16 %v2413
      %v2462 = vpack.c.b16 %v2431, %v2430
      %v2463 = vpack.c.b16 %v2433, %v2432
      %v2464 = vpack.c.b16 %v2435, %v2434
      %v2465 = vpack.c.b16 %v2437, %v2436
      %v2466 = vpack.c.b16 %v2439, %v2438
      %v2467 = vpack.c.b16 %v2441, %v2440
      %v2468 = vpack.c.b16 %v2443, %v2442
      %v2469 = vpack.c.b16 %v2445, %v2444
      %v2470 = vpack.c.b16 %v2447, %v2446
      %v2471 = vpack.c.b16 %v2449, %v2448
      %v2472 = vpack.c.b16 %v2451, %v2450
      %v2473 = vpack.c.b16 %v2453, %v2452
      %v2474 = vpack.c.b16 %v2455, %v2454
      %v2475 = vpack.c.b16 %v2457, %v2456
      %v2476 = vpack.c.b16 %v2459, %v2458
      %v2477 = vpack.c.b16 %v2461, %v2460
      %2494 = vst [vmem:[%s285] sm:$0xff] %v2462
      %2495 = vst [vmem:[%s285 + $0x8] sm:$0xff] %v2463
      %2496 = vst [vmem:[%s285 + $0x10] sm:$0xff] %v2464
      %2497 = vst [vmem:[%s285 + $0x18] sm:$0xff] %v2465
      %2498 = vst [vmem:[%s285 + $0x20] sm:$0xff] %v2466
      %2499 = vst [vmem:[%s285 + $0x28] sm:$0xff] %v2467
      %2500 = vst [vmem:[%s285 + $0x30] sm:$0xff] %v2468
      %2501 = vst [vmem:[%s285 + $0x38] sm:$0xff] %v2469
      %2502 = vst [vmem:[%s285 + $0x40] sm:$0xff] %v2470
      %2503 = vst [vmem:[%s285 + $0x48] sm:$0xff] %v2471
      %2504 = vst [vmem:[%s285 + $0x50] sm:$0xff] %v2472
      %2505 = vst [vmem:[%s285 + $0x58] sm:$0xff] %v2473
      %2506 = vst [vmem:[%s285 + $0x60] sm:$0xff] %v2474
      %2507 = vst [vmem:[%s285 + $0x68] sm:$0xff] %v2475
      %2508 = vst [vmem:[%s285 + $0x70] sm:$0xff] %v2476
      %2509 = vst [vmem:[%s285 + $0x78] sm:$0xff] %v2477
      %s2510 = smul.u32 16, %s18
      %p2511 = scmp.lt.s32.totalorder %s2510, 47
      %s2512 = scalar_select %p2511, %s2510, 47
      %s2513 = smul.addr %s2512, 2
      %s2514 = smul.addr %s2513, 4
      %s2515 = scalar_lea.vmem %s7, %s2514
      // Predicated region
      $region49: #{albef_forward.14} parent=47 // pred_check
        %p2516 = pneg %p188
      $region50: #{albef_forward.14} parent=47 // pred_check_branch
        %2518 = sbr.rel (%p2516) target = $region52
      $region51: #{albef_forward.14} parent=47 // pred_region
        %s2519 = smul.u32 16, %s18
      $region52: #{albef_forward.14} parent=47 // pred_fallthru
        _
    $region48: #{albef_forward.14} parent=5 // pred_fallthru
      _
    %p2520 = scmp.le.s32.totalorder 2, %s13
    // Predicated region
    $region53: #{albef_forward.14} parent=5 // pred_check
      %p2521 = pneg %p2520
    $region54: #{albef_forward.14} parent=5 // pred_check_branch
      %2523 = sbr.rel (%p2521) target = $region56
    $region55: #{albef_forward.14} parent=5 // pred_region
      %s2524 = ssub.s32 %s13, 2
      // Predicated region
      $region57: #{albef_forward.14} parent=55 // pred_check
        %p2525 = pneg %p194
      $region58: #{albef_forward.14} parent=55 // pred_check_branch
        %2527 = sbr.rel (%p2525) target = $region60
      $region59: #{albef_forward.14} parent=55 // pred_region
        %s2528 = smul.u32 16, %s19
        %p2529 = scmp.lt.s32.totalorder %s2528, 47
        %s2530 = scalar_select %p2529, %s2528, 47
        %s2531 = smul.addr %s2530, 2
        %s2532 = smul.addr %s2531, 4
        %s2533 = scalar_lea.vmem %s7, %s2532
      $region60: #{albef_forward.14} parent=55 // pred_fallthru
        _
    $region56: #{albef_forward.14} parent=5 // pred_fallthru
      _
  $region6: #{albef_forward.14} parent=0 // loop_footer
    %s17 = sadd.s32 1, %s13
  $region7: #{albef_forward.14} parent=0 // loop_footer_branch
    %12 = sbr.rel target = $region3
  $region8: #{albef_forward.14} parent=0 // loop_exit
    _

</llo_original>
